<compile_context>
chip_gen: v7x
topology: tpu7x:2x2x1
jax: 0.10.0
libtpu: 0.0.40
codegen_flags: <defaults>
</compile_context>

<pallas_src>
import functools

import numpy as np
import jax
import jax.numpy as jnp
from jax.experimental import pallas as pl
from jax.experimental.pallas import tpu as pltpu

EPS = 1e-5
C_REAL = 24     # real channel count of every conv in ConvInputModel
C_PAD = 32      # channel lane padding (was 128)
K1_PAD = 32     # layer-1 im2col contraction (27 = 3x3x3 real, padded to 32)


def _out_hw(h):
    """Output spatial extent of a k=3 / stride=2 / pad=1 conv."""
    return (h - 1) // 2 + 1


# ----------------------------------------------------------------------------
# In-kernel helpers.
# ----------------------------------------------------------------------------
def _bias_relu_bn(y, bias, gamma, beta):
    """conv-bias + ReLU + training-mode BatchNorm (batch stats, biased var).

    Single pass over y (sum and sum-of-squares), applied as scale/shift.
    Padded lanes have gamma = beta = 0 so they remain exactly 0.
    """
    y = jnp.maximum(y + bias, 0.0)
    inv_m = 1.0 / y.shape[0]
    mean = jnp.sum(y, axis=0, keepdims=True) * inv_m
    ex2 = jnp.sum(y * y, axis=0, keepdims=True) * inv_m
    var = jnp.maximum(ex2 - mean * mean, 0.0)      # guard tiny negative cancel.
    scale = gamma * jax.lax.rsqrt(var + EPS)
    shift = beta - mean * scale
    return y * scale + shift


def _fused_convnet_kernel(p1_ref, g2_ref, g3_ref, g4_ref,
                          w1_ref, w234_ref, b_ref, gamma_ref, beta_ref,
                          o_ref, *, n, s_sizes):
    """Fused conv1..4 + ReLU + BatchNorm, everything resident in VMEM.

    p1_ref    : [n*s1, 32]   f32  layer-1 im2col patches (27 real cols)
    g{l}_ref  : [9, s_l, s_{l-1}] bf16 per-SAMPLE 0/1 tap-gather matrices
    w1_ref    : [32, 32]     bf16 layer-1 weights ((kh,kw,cin) rows, cout cols)
    w234_ref  : [3, 288, 32] bf16 layers 2-4 tap-concatenated weights
    b/gamma/beta_ref : [4, 1, 32] f32 (padded lanes = 0)
    o_ref     : [n*s4, 32]   f32  final normalized activations
    """
    # ---- layer 1: host im2col -> one small matmul (no gather matrix at all).
    y = jnp.dot(p1_ref[...], w1_ref[...].astype(jnp.float32),
                preferred_element_type=jnp.float32)             # [n*s1, 32]
    x = _bias_relu_bn(y, b_ref[0], gamma_ref[0], beta_ref[0])

    # ---- layers 2..4: per-sample tap gather, lane-concat, one weight matmul.
    g_refs = (g2_ref, g3_ref, g4_ref)
    for l in range(3):
        s_in, s_out = s_sizes[l], s_sizes[l + 1]
        g = g_refs[l][...].astype(jnp.float32)                  # [9, s_out, s_in]
        w = w234_ref[l].astype(jnp.float32)                     # [288, 32]
        per_tap = []
        for t in range(9):
            rows = []
            for b in range(n):                                  # batch block-diag
                xb = x[b * s_in:(b + 1) * s_in, :]              # [s_in, 32]
                rows.append(jnp.dot(g[t], xb,
                                    preferred_element_type=jnp.float32))
            per_tap.append(rows[0] if n == 1
                           else jnp.concatenate(rows, axis=0))  # [n*s_out, 32]
        patches = jnp.concatenate(per_tap, axis=1)              # [n*s_out, 288]
        y = jnp.dot(patches, w, preferred_element_type=jnp.float32)
        x = _bias_relu_bn(y, b_ref[l + 1], gamma_ref[l + 1], beta_ref[l + 1])

    o_ref[...] = x.astype(o_ref.dtype)


# ----------------------------------------------------------------------------
# Host-side constants: per-sample gather matrices + packed weights.
# ----------------------------------------------------------------------------
def _tap_gather_per_sample(h, w):
    """[9, ho*wo, h*w] one-hot gather for 3x3 / stride-2 / pad-1 taps (1 sample)."""
    ho, wo = _out_hw(h), _out_hw(w)
    g = np.zeros((9, ho * wo, h * w), np.float32)
    for kh in range(3):
        for kw in range(3):
            t = kh * 3 + kw
            for oh in range(ho):
                hi = 2 * oh + kh - 1
                if not (0 <= hi < h):
                    continue
                for ow in range(wo):
                    wi = 2 * ow + kw - 1
                    if not (0 <= wi < w):
                        continue
                    g[t, oh * wo + ow, hi * w + wi] = 1.0
    return g


def build_plan(params, h, w):
    """Precompute kernel constants for a given spatial input size."""
    # layer-1 weights: im2col column order is (kh, kw, cin) row-major.
    w1_hwio = np.asarray(params[0][0])                          # [3,3,3,24]
    w1 = np.zeros((K1_PAD, C_PAD), np.float32)
    w1[:27, :C_REAL] = w1_hwio.reshape(27, C_REAL)

    # layers 2..4: tap-concatenated weights, rows = t*C_PAD + cin.
    w234 = np.zeros((3, 9 * C_PAD, C_PAD), np.float32)
    for l in range(3):
        w_hwio = np.asarray(params[l + 1][0])                   # [3,3,24,24]
        for kh in range(3):
            for kw in range(3):
                t = kh * 3 + kw
                w234[l, t * C_PAD: t * C_PAD + C_REAL, :C_REAL] = w_hwio[kh, kw]

    b_all = np.zeros((4, 1, C_PAD), np.float32)
    gamma_all = np.zeros((4, 1, C_PAD), np.float32)   # padded lanes keep gamma=0
    beta_all = np.zeros((4, 1, C_PAD), np.float32)    # padded lanes keep beta=0
    for l, (_, bias, gamma, beta) in enumerate(params):
        b_all[l, 0, :C_REAL] = np.asarray(bias)
        gamma_all[l, 0, :C_REAL] = np.asarray(gamma)
        beta_all[l, 0, :C_REAL] = np.asarray(beta)

    # per-sample gather matrices for layers 2..4 (0/1 values -> exact in bf16)
    hw = []
    hh, ww = h, w
    for _ in range(4):
        hh, ww = _out_hw(hh), _out_hw(ww)
        hw.append((hh, ww))
    g2 = _tap_gather_per_sample(*hw[0])
    g3 = _tap_gather_per_sample(*hw[1])
    g4 = _tap_gather_per_sample(*hw[2])

    return dict(
        g2=jnp.asarray(g2, jnp.bfloat16),
        g3=jnp.asarray(g3, jnp.bfloat16),
        g4=jnp.asarray(g4, jnp.bfloat16),
        w1=jnp.asarray(w1, jnp.bfloat16),        # exact: params pre-rounded to bf16
        w234=jnp.asarray(w234, jnp.bfloat16),
        b=jnp.asarray(b_all),
        gamma=jnp.asarray(gamma_all),
        beta=jnp.asarray(beta_all),
    )


# ----------------------------------------------------------------------------
# Forward pass (NCHW in / NCHW out, like PyTorch).
# ----------------------------------------------------------------------------
def _im2col_s2_p1(x_nhwc):
    """3x3 / stride-2 / pad-1 patches; columns ordered (kh, kw, cin) row-major."""
    n, h, w, c = x_nhwc.shape
    ho, wo = _out_hw(h), _out_hw(w)
    xp = jnp.pad(x_nhwc, ((0, 0), (1, 1), (1, 1), (0, 0)))
    cols = []
    for kh in range(3):
        for kw in range(3):
            sl = jax.lax.slice(
                xp, (0, kh, kw, 0),
                (n, kh + 2 * (ho - 1) + 1, kw + 2 * (wo - 1) + 1, c),
                (1, 2, 2, 1))
            cols.append(sl.reshape(n * ho * wo, c))
    return jnp.concatenate(cols, axis=1)                        # [n*ho*wo, 9*c]


@jax.jit
def conv_input_model(img_nchw, plan):
    n, cin, h, w = img_nchw.shape
    s_sizes = []
    hh, ww = h, w
    for _ in range(4):
        hh, ww = _out_hw(hh), _out_hw(ww)
        s_sizes.append(hh * ww)
    m4 = n * s_sizes[-1]

    # Host-side im2col for layer 1 only (cin = 3 -> 27 columns, pad to 32).
    x_nhwc = jnp.transpose(img_nchw, (0, 2, 3, 1))
    p1 = _im2col_s2_p1(x_nhwc)
    p1 = jnp.pad(p1, ((0, 0), (0, K1_PAD - p1.shape[1])))

    kernel = functools.partial(_fused_convnet_kernel, n=n, s_sizes=tuple(s_sizes))
    vmem = pl.BlockSpec(memory_space=pltpu.MemorySpace.VMEM)
    out_flat = pl.pallas_call(
        kernel,
        out_shape=jax.ShapeDtypeStruct((m4, C_PAD), jnp.float32),
        in_specs=[vmem] * 9,
        out_specs=vmem,
        # Working set is a few MiB at these shapes; stated explicitly so the
        # budget is deliberate on v5e (16 MiB default) / v6e / v7x (32 MiB).
        compiler_params=pltpu.CompilerParams(vmem_limit_bytes=32 * 1024 * 1024),
    )(p1, plan["g2"], plan["g3"], plan["g4"], plan["w1"], plan["w234"],
      plan["b"], plan["gamma"], plan["beta"])

    out = out_flat.reshape(n, hh, ww, C_PAD)[..., :C_REAL]
    return jnp.transpose(out, (0, 3, 1, 2))                     # NHWC -> NCHW


# ----------------------------------------------------------------------------
# Parameters + pure-JAX reference (sanity check).
# ----------------------------------------------------------------------------
def init_params(key):
    """Synthetic parameters matching ConvInputModel.__init__ shapes (HWIO
    weights; real PyTorch OIHW weights would be transposed with (2,3,1,0)).
    Weights are rounded through bf16 so the kernel's bf16 storage is exact."""
    chans = [(3, 24), (24, 24), (24, 24), (24, 24)]
    params = []
    for cin, cout in chans:
        key, kw_, kb_ = jax.random.split(key, 3)
        std = (2.0 / (9 * cin)) ** 0.5
        wgt = jax.random.normal(kw_, (3, 3, cin, cout), jnp.float32) * std
        wgt = wgt.astype(jnp.bfloat16).astype(jnp.float32)
        bias = jax.random.normal(kb_, (cout,), jnp.float32) * 0.01
        gamma = jnp.ones((cout,), jnp.float32)     # BatchNorm2d default weight
        beta = jnp.zeros((cout,), jnp.float32)     # BatchNorm2d default bias
        params.append((wgt, bias, gamma, beta))
    return params


def _reference_forward(img_nchw, params):
    x = jnp.transpose(img_nchw, (0, 2, 3, 1))                   # NHWC
    for (w_hwio, bias, gamma, beta) in params:
        x = jax.lax.conv_general_dilated(
            x, w_hwio, window_strides=(2, 2), padding=((1, 1), (1, 1)),
            dimension_numbers=("NHWC", "HWIO", "NHWC"),
            precision=jax.lax.Precision.HIGHEST)
        x = jnp.maximum(x + bias, 0.0)
        mean = jnp.mean(x, axis=(0, 1, 2), keepdims=True)
        var = jnp.mean(jnp.square(x - mean), axis=(0, 1, 2), keepdims=True)
        x = gamma * (x - mean) * jax.lax.rsqrt(var + EPS) + beta
    return jnp.transpose(x, (0, 3, 1, 2))


if __name__ == "__main__":
    key = jax.random.PRNGKey(0)
    key, kimg = jax.random.split(key)
    # batch=2, 3 input channels, 32x32 -> final feature map 2x2 (so the last
    # BatchNorm averages 8 values per channel and the check is meaningful).
    img = jax.random.normal(kimg, (2, 3, 32, 32), jnp.float32)   # NCHW
    params = init_params(key)

    plan = build_plan(params, img.shape[2], img.shape[3])
    out = jax.block_until_ready(conv_input_model(img, plan))
    assert out.shape == (2, 24, 2, 2), out.shape
    assert bool(jnp.all(jnp.isfinite(out)))

    ref = jax.block_until_ready(_reference_forward(img, params))
    max_err = float(jnp.max(jnp.abs(out - ref)))
    assert max_err < 5e-2, f"mismatch vs reference, max abs err = {max_err}"

    print("KERNEL_OK")
</pallas_src>

<mosaic_0001>
module attributes {stable_mosaic.version = 11 : i64} {
  func.func @_fused_convnet_kernel(%arg0: memref<512x32xf32, #tpu.memory_space<vmem>>, %arg1: memref<9x64x256xbf16, #tpu.memory_space<vmem>>, %arg2: memref<9x16x64xbf16, #tpu.memory_space<vmem>>, %arg3: memref<9x4x16xbf16, #tpu.memory_space<vmem>>, %arg4: memref<32x32xbf16, #tpu.memory_space<vmem>>, %arg5: memref<3x288x32xbf16, #tpu.memory_space<vmem>>, %arg6: memref<4x1x32xf32, #tpu.memory_space<vmem>>, %arg7: memref<4x1x32xf32, #tpu.memory_space<vmem>>, %arg8: memref<4x1x32xf32, #tpu.memory_space<vmem>>, %arg9: memref<8x32xf32, #tpu.memory_space<vmem>>) attributes {dimension_semantics = [], scalar_prefetch = 0 : i64, scratch_operands = 0 : i64, tpu.core_type = #tpu.core_type<tc>} {
    %c0 = arith.constant 0 : index
    %c0_0 = arith.constant 0 : index
    %0 = vector.load %arg0[%c0, %c0_0] : memref<512x32xf32, #tpu.memory_space<vmem>>, vector<512x32xf32>
    %c0_1 = arith.constant 0 : index
    %c0_2 = arith.constant 0 : index
    %1 = vector.load %arg4[%c0_1, %c0_2] : memref<32x32xbf16, #tpu.memory_space<vmem>>, vector<32x32xbf16>
    %2 = arith.extf %1 : vector<32x32xbf16> to vector<32x32xf32>
    %cst = arith.constant dense<0.000000e+00> : vector<512x32xf32>
    %3 = tpu.matmul %0, %2, %cst {dimension_numbers = #tpu.dot_dimension_numbers<[1], [0], [0], [1], [0, 0, 1, 1], [], []>} : vector<512x32xf32>, vector<32x32xf32>, vector<512x32xf32> -> vector<512x32xf32>
    %c0_3 = arith.constant 0 : index
    %c0_4 = arith.constant 0 : index
    %c0_5 = arith.constant 0 : index
    %4 = vector.load %arg6[%c0_3, %c0_4, %c0_5] : memref<4x1x32xf32, #tpu.memory_space<vmem>>, vector<1x1x32xf32>
    %5 = vector.shape_cast %4 : vector<1x1x32xf32> to vector<1x32xf32>
    %c0_6 = arith.constant 0 : index
    %c0_7 = arith.constant 0 : index
    %c0_8 = arith.constant 0 : index
    %6 = vector.load %arg7[%c0_6, %c0_7, %c0_8] : memref<4x1x32xf32, #tpu.memory_space<vmem>>, vector<1x1x32xf32>
    %7 = vector.shape_cast %6 : vector<1x1x32xf32> to vector<1x32xf32>
    %c0_9 = arith.constant 0 : index
    %c0_10 = arith.constant 0 : index
    %c0_11 = arith.constant 0 : index
    %8 = vector.load %arg8[%c0_9, %c0_10, %c0_11] : memref<4x1x32xf32, #tpu.memory_space<vmem>>, vector<1x1x32xf32>
    %9 = vector.shape_cast %8 : vector<1x1x32xf32> to vector<1x32xf32>
    %10 = vector.broadcast %5 : vector<1x32xf32> to vector<512x32xf32>
    %11 = arith.addf %3, %10 : vector<512x32xf32>
    %cst_12 = arith.constant 0.000000e+00 : f32
    %12 = vector.broadcast %cst_12 : f32 to vector<512x32xf32>
    %13 = arith.maximumf %11, %12 : vector<512x32xf32>
    %cst_13 = arith.constant dense<0.000000e+00> : vector<32xf32>
    %14 = vector.multi_reduction <add>, %13, %cst_13 [0] : vector<512x32xf32> to vector<32xf32>
    %15 = vector.shape_cast %14 : vector<32xf32> to vector<1x32xf32>
    %cst_14 = arith.constant 0.001953125 : f32
    %16 = vector.broadcast %cst_14 : f32 to vector<1x32xf32>
    %17 = arith.mulf %15, %16 : vector<1x32xf32>
    %18 = arith.mulf %13, %13 : vector<512x32xf32>
    %cst_15 = arith.constant dense<0.000000e+00> : vector<32xf32>
    %19 = vector.multi_reduction <add>, %18, %cst_15 [0] : vector<512x32xf32> to vector<32xf32>
    %20 = vector.shape_cast %19 : vector<32xf32> to vector<1x32xf32>
    %cst_16 = arith.constant 0.001953125 : f32
    %21 = vector.broadcast %cst_16 : f32 to vector<1x32xf32>
    %22 = arith.mulf %20, %21 : vector<1x32xf32>
    %23 = arith.mulf %17, %17 : vector<1x32xf32>
    %24 = arith.subf %22, %23 : vector<1x32xf32>
    %cst_17 = arith.constant 0.000000e+00 : f32
    %25 = vector.broadcast %cst_17 : f32 to vector<1x32xf32>
    %26 = arith.maximumf %24, %25 : vector<1x32xf32>
    %cst_18 = arith.constant 9.99999974E-6 : f32
    %27 = vector.broadcast %cst_18 : f32 to vector<1x32xf32>
    %28 = arith.addf %26, %27 : vector<1x32xf32>
    %29 = math.rsqrt %28 : vector<1x32xf32>
    %30 = arith.mulf %7, %29 : vector<1x32xf32>
    %31 = arith.mulf %17, %30 : vector<1x32xf32>
    %32 = arith.subf %9, %31 : vector<1x32xf32>
    %33 = vector.broadcast %30 : vector<1x32xf32> to vector<512x32xf32>
    %34 = arith.mulf %13, %33 : vector<512x32xf32>
    %35 = vector.broadcast %32 : vector<1x32xf32> to vector<512x32xf32>
    %36 = arith.addf %34, %35 : vector<512x32xf32>
    %c0_19 = arith.constant 0 : index
    %c0_20 = arith.constant 0 : index
    %c0_21 = arith.constant 0 : index
    %37 = vector.load %arg1[%c0_19, %c0_20, %c0_21] : memref<9x64x256xbf16, #tpu.memory_space<vmem>>, vector<9x64x256xbf16>
    %38 = arith.extf %37 : vector<9x64x256xbf16> to vector<9x64x256xf32>
    %c0_22 = arith.constant 0 : index
    %c0_23 = arith.constant 0 : index
    %c0_24 = arith.constant 0 : index
    %39 = vector.load %arg5[%c0_22, %c0_23, %c0_24] : memref<3x288x32xbf16, #tpu.memory_space<vmem>>, vector<1x288x32xbf16>
    %40 = vector.shape_cast %39 : vector<1x288x32xbf16> to vector<288x32xbf16>
    %41 = arith.extf %40 : vector<288x32xbf16> to vector<288x32xf32>
    %42 = vector.extract_strided_slice %36 {offsets = [0, 0], sizes = [256, 32], strides = [1, 1]} : vector<512x32xf32> to vector<256x32xf32>
    %43 = vector.extract_strided_slice %38 {offsets = [0, 0, 0], sizes = [1, 64, 256], strides = [1, 1, 1]} : vector<9x64x256xf32> to vector<1x64x256xf32>
    %44 = vector.shape_cast %43 : vector<1x64x256xf32> to vector<64x256xf32>
    %cst_25 = arith.constant dense<0.000000e+00> : vector<64x32xf32>
    %45 = tpu.matmul %44, %42, %cst_25 {dimension_numbers = #tpu.dot_dimension_numbers<[1], [0], [0], [1], [0, 0, 1, 1], [], []>} : vector<64x256xf32>, vector<256x32xf32>, vector<64x32xf32> -> vector<64x32xf32>
    %46 = vector.extract_strided_slice %36 {offsets = [256, 0], sizes = [256, 32], strides = [1, 1]} : vector<512x32xf32> to vector<256x32xf32>
    %47 = vector.extract_strided_slice %38 {offsets = [0, 0, 0], sizes = [1, 64, 256], strides = [1, 1, 1]} : vector<9x64x256xf32> to vector<1x64x256xf32>
    %48 = vector.shape_cast %47 : vector<1x64x256xf32> to vector<64x256xf32>
    %cst_26 = arith.constant dense<0.000000e+00> : vector<64x32xf32>
    %49 = tpu.matmul %48, %46, %cst_26 {dimension_numbers = #tpu.dot_dimension_numbers<[1], [0], [0], [1], [0, 0, 1, 1], [], []>} : vector<64x256xf32>, vector<256x32xf32>, vector<64x32xf32> -> vector<64x32xf32>
    %50 = tpu.concatenate %45, %49 in 0 : vector<64x32xf32>, vector<64x32xf32> -> vector<128x32xf32>
    %51 = vector.extract_strided_slice %36 {offsets = [0, 0], sizes = [256, 32], strides = [1, 1]} : vector<512x32xf32> to vector<256x32xf32>
    %52 = vector.extract_strided_slice %38 {offsets = [1, 0, 0], sizes = [1, 64, 256], strides = [1, 1, 1]} : vector<9x64x256xf32> to vector<1x64x256xf32>
    %53 = vector.shape_cast %52 : vector<1x64x256xf32> to vector<64x256xf32>
    %cst_27 = arith.constant dense<0.000000e+00> : vector<64x32xf32>
    %54 = tpu.matmul %53, %51, %cst_27 {dimension_numbers = #tpu.dot_dimension_numbers<[1], [0], [0], [1], [0, 0, 1, 1], [], []>} : vector<64x256xf32>, vector<256x32xf32>, vector<64x32xf32> -> vector<64x32xf32>
    %55 = vector.extract_strided_slice %36 {offsets = [256, 0], sizes = [256, 32], strides = [1, 1]} : vector<512x32xf32> to vector<256x32xf32>
    %56 = vector.extract_strided_slice %38 {offsets = [1, 0, 0], sizes = [1, 64, 256], strides = [1, 1, 1]} : vector<9x64x256xf32> to vector<1x64x256xf32>
    %57 = vector.shape_cast %56 : vector<1x64x256xf32> to vector<64x256xf32>
    %cst_28 = arith.constant dense<0.000000e+00> : vector<64x32xf32>
    %58 = tpu.matmul %57, %55, %cst_28 {dimension_numbers = #tpu.dot_dimension_numbers<[1], [0], [0], [1], [0, 0, 1, 1], [], []>} : vector<64x256xf32>, vector<256x32xf32>, vector<64x32xf32> -> vector<64x32xf32>
    %59 = tpu.concatenate %54, %58 in 0 : vector<64x32xf32>, vector<64x32xf32> -> vector<128x32xf32>
    %60 = vector.extract_strided_slice %36 {offsets = [0, 0], sizes = [256, 32], strides = [1, 1]} : vector<512x32xf32> to vector<256x32xf32>
    %61 = vector.extract_strided_slice %38 {offsets = [2, 0, 0], sizes = [1, 64, 256], strides = [1, 1, 1]} : vector<9x64x256xf32> to vector<1x64x256xf32>
    %62 = vector.shape_cast %61 : vector<1x64x256xf32> to vector<64x256xf32>
    %cst_29 = arith.constant dense<0.000000e+00> : vector<64x32xf32>
    %63 = tpu.matmul %62, %60, %cst_29 {dimension_numbers = #tpu.dot_dimension_numbers<[1], [0], [0], [1], [0, 0, 1, 1], [], []>} : vector<64x256xf32>, vector<256x32xf32>, vector<64x32xf32> -> vector<64x32xf32>
    %64 = vector.extract_strided_slice %36 {offsets = [256, 0], sizes = [256, 32], strides = [1, 1]} : vector<512x32xf32> to vector<256x32xf32>
    %65 = vector.extract_strided_slice %38 {offsets = [2, 0, 0], sizes = [1, 64, 256], strides = [1, 1, 1]} : vector<9x64x256xf32> to vector<1x64x256xf32>
    %66 = vector.shape_cast %65 : vector<1x64x256xf32> to vector<64x256xf32>
    %cst_30 = arith.constant dense<0.000000e+00> : vector<64x32xf32>
    %67 = tpu.matmul %66, %64, %cst_30 {dimension_numbers = #tpu.dot_dimension_numbers<[1], [0], [0], [1], [0, 0, 1, 1], [], []>} : vector<64x256xf32>, vector<256x32xf32>, vector<64x32xf32> -> vector<64x32xf32>
    %68 = tpu.concatenate %63, %67 in 0 : vector<64x32xf32>, vector<64x32xf32> -> vector<128x32xf32>
    %69 = vector.extract_strided_slice %36 {offsets = [0, 0], sizes = [256, 32], strides = [1, 1]} : vector<512x32xf32> to vector<256x32xf32>
    %70 = vector.extract_strided_slice %38 {offsets = [3, 0, 0], sizes = [1, 64, 256], strides = [1, 1, 1]} : vector<9x64x256xf32> to vector<1x64x256xf32>
    %71 = vector.shape_cast %70 : vector<1x64x256xf32> to vector<64x256xf32>
    %cst_31 = arith.constant dense<0.000000e+00> : vector<64x32xf32>
    %72 = tpu.matmul %71, %69, %cst_31 {dimension_numbers = #tpu.dot_dimension_numbers<[1], [0], [0], [1], [0, 0, 1, 1], [], []>} : vector<64x256xf32>, vector<256x32xf32>, vector<64x32xf32> -> vector<64x32xf32>
    %73 = vector.extract_strided_slice %36 {offsets = [256, 0], sizes = [256, 32], strides = [1, 1]} : vector<512x32xf32> to vector<256x32xf32>
    %74 = vector.extract_strided_slice %38 {offsets = [3, 0, 0], sizes = [1, 64, 256], strides = [1, 1, 1]} : vector<9x64x256xf32> to vector<1x64x256xf32>
    %75 = vector.shape_cast %74 : vector<1x64x256xf32> to vector<64x256xf32>
    %cst_32 = arith.constant dense<0.000000e+00> : vector<64x32xf32>
    %76 = tpu.matmul %75, %73, %cst_32 {dimension_numbers = #tpu.dot_dimension_numbers<[1], [0], [0], [1], [0, 0, 1, 1], [], []>} : vector<64x256xf32>, vector<256x32xf32>, vector<64x32xf32> -> vector<64x32xf32>
    %77 = tpu.concatenate %72, %76 in 0 : vector<64x32xf32>, vector<64x32xf32> -> vector<128x32xf32>
    %78 = vector.extract_strided_slice %36 {offsets = [0, 0], sizes = [256, 32], strides = [1, 1]} : vector<512x32xf32> to vector<256x32xf32>
    %79 = vector.extract_strided_slice %38 {offsets = [4, 0, 0], sizes = [1, 64, 256], strides = [1, 1, 1]} : vector<9x64x256xf32> to vector<1x64x256xf32>
    %80 = vector.shape_cast %79 : vector<1x64x256xf32> to vector<64x256xf32>
    %cst_33 = arith.constant dense<0.000000e+00> : vector<64x32xf32>
    %81 = tpu.matmul %80, %78, %cst_33 {dimension_numbers = #tpu.dot_dimension_numbers<[1], [0], [0], [1], [0, 0, 1, 1], [], []>} : vector<64x256xf32>, vector<256x32xf32>, vector<64x32xf32> -> vector<64x32xf32>
    %82 = vector.extract_strided_slice %36 {offsets = [256, 0], sizes = [256, 32], strides = [1, 1]} : vector<512x32xf32> to vector<256x32xf32>
    %83 = vector.extract_strided_slice %38 {offsets = [4, 0, 0], sizes = [1, 64, 256], strides = [1, 1, 1]} : vector<9x64x256xf32> to vector<1x64x256xf32>
    %84 = vector.shape_cast %83 : vector<1x64x256xf32> to vector<64x256xf32>
    %cst_34 = arith.constant dense<0.000000e+00> : vector<64x32xf32>
    %85 = tpu.matmul %84, %82, %cst_34 {dimension_numbers = #tpu.dot_dimension_numbers<[1], [0], [0], [1], [0, 0, 1, 1], [], []>} : vector<64x256xf32>, vector<256x32xf32>, vector<64x32xf32> -> vector<64x32xf32>
    %86 = tpu.concatenate %81, %85 in 0 : vector<64x32xf32>, vector<64x32xf32> -> vector<128x32xf32>
    %87 = vector.extract_strided_slice %36 {offsets = [0, 0], sizes = [256, 32], strides = [1, 1]} : vector<512x32xf32> to vector<256x32xf32>
    %88 = vector.extract_strided_slice %38 {offsets = [5, 0, 0], sizes = [1, 64, 256], strides = [1, 1, 1]} : vector<9x64x256xf32> to vector<1x64x256xf32>
    %89 = vector.shape_cast %88 : vector<1x64x256xf32> to vector<64x256xf32>
    %cst_35 = arith.constant dense<0.000000e+00> : vector<64x32xf32>
    %90 = tpu.matmul %89, %87, %cst_35 {dimension_numbers = #tpu.dot_dimension_numbers<[1], [0], [0], [1], [0, 0, 1, 1], [], []>} : vector<64x256xf32>, vector<256x32xf32>, vector<64x32xf32> -> vector<64x32xf32>
    %91 = vector.extract_strided_slice %36 {offsets = [256, 0], sizes = [256, 32], strides = [1, 1]} : vector<512x32xf32> to vector<256x32xf32>
    %92 = vector.extract_strided_slice %38 {offsets = [5, 0, 0], sizes = [1, 64, 256], strides = [1, 1, 1]} : vector<9x64x256xf32> to vector<1x64x256xf32>
    %93 = vector.shape_cast %92 : vector<1x64x256xf32> to vector<64x256xf32>
    %cst_36 = arith.constant dense<0.000000e+00> : vector<64x32xf32>
    %94 = tpu.matmul %93, %91, %cst_36 {dimension_numbers = #tpu.dot_dimension_numbers<[1], [0], [0], [1], [0, 0, 1, 1], [], []>} : vector<64x256xf32>, vector<256x32xf32>, vector<64x32xf32> -> vector<64x32xf32>
    %95 = tpu.concatenate %90, %94 in 0 : vector<64x32xf32>, vector<64x32xf32> -> vector<128x32xf32>
    %96 = vector.extract_strided_slice %36 {offsets = [0, 0], sizes = [256, 32], strides = [1, 1]} : vector<512x32xf32> to vector<256x32xf32>
    %97 = vector.extract_strided_slice %38 {offsets = [6, 0, 0], sizes = [1, 64, 256], strides = [1, 1, 1]} : vector<9x64x256xf32> to vector<1x64x256xf32>
    %98 = vector.shape_cast %97 : vector<1x64x256xf32> to vector<64x256xf32>
    %cst_37 = arith.constant dense<0.000000e+00> : vector<64x32xf32>
    %99 = tpu.matmul %98, %96, %cst_37 {dimension_numbers = #tpu.dot_dimension_numbers<[1], [0], [0], [1], [0, 0, 1, 1], [], []>} : vector<64x256xf32>, vector<256x32xf32>, vector<64x32xf32> -> vector<64x32xf32>
    %100 = vector.extract_strided_slice %36 {offsets = [256, 0], sizes = [256, 32], strides = [1, 1]} : vector<512x32xf32> to vector<256x32xf32>
    %101 = vector.extract_strided_slice %38 {offsets = [6, 0, 0], sizes = [1, 64, 256], strides = [1, 1, 1]} : vector<9x64x256xf32> to vector<1x64x256xf32>
    %102 = vector.shape_cast %101 : vector<1x64x256xf32> to vector<64x256xf32>
    %cst_38 = arith.constant dense<0.000000e+00> : vector<64x32xf32>
    %103 = tpu.matmul %102, %100, %cst_38 {dimension_numbers = #tpu.dot_dimension_numbers<[1], [0], [0], [1], [0, 0, 1, 1], [], []>} : vector<64x256xf32>, vector<256x32xf32>, vector<64x32xf32> -> vector<64x32xf32>
    %104 = tpu.concatenate %99, %103 in 0 : vector<64x32xf32>, vector<64x32xf32> -> vector<128x32xf32>
    %105 = vector.extract_strided_slice %36 {offsets = [0, 0], sizes = [256, 32], strides = [1, 1]} : vector<512x32xf32> to vector<256x32xf32>
    %106 = vector.extract_strided_slice %38 {offsets = [7, 0, 0], sizes = [1, 64, 256], strides = [1, 1, 1]} : vector<9x64x256xf32> to vector<1x64x256xf32>
    %107 = vector.shape_cast %106 : vector<1x64x256xf32> to vector<64x256xf32>
    %cst_39 = arith.constant dense<0.000000e+00> : vector<64x32xf32>
    %108 = tpu.matmul %107, %105, %cst_39 {dimension_numbers = #tpu.dot_dimension_numbers<[1], [0], [0], [1], [0, 0, 1, 1], [], []>} : vector<64x256xf32>, vector<256x32xf32>, vector<64x32xf32> -> vector<64x32xf32>
    %109 = vector.extract_strided_slice %36 {offsets = [256, 0], sizes = [256, 32], strides = [1, 1]} : vector<512x32xf32> to vector<256x32xf32>
    %110 = vector.extract_strided_slice %38 {offsets = [7, 0, 0], sizes = [1, 64, 256], strides = [1, 1, 1]} : vector<9x64x256xf32> to vector<1x64x256xf32>
    %111 = vector.shape_cast %110 : vector<1x64x256xf32> to vector<64x256xf32>
    %cst_40 = arith.constant dense<0.000000e+00> : vector<64x32xf32>
    %112 = tpu.matmul %111, %109, %cst_40 {dimension_numbers = #tpu.dot_dimension_numbers<[1], [0], [0], [1], [0, 0, 1, 1], [], []>} : vector<64x256xf32>, vector<256x32xf32>, vector<64x32xf32> -> vector<64x32xf32>
    %113 = tpu.concatenate %108, %112 in 0 : vector<64x32xf32>, vector<64x32xf32> -> vector<128x32xf32>
    %114 = vector.extract_strided_slice %36 {offsets = [0, 0], sizes = [256, 32], strides = [1, 1]} : vector<512x32xf32> to vector<256x32xf32>
    %115 = vector.extract_strided_slice %38 {offsets = [8, 0, 0], sizes = [1, 64, 256], strides = [1, 1, 1]} : vector<9x64x256xf32> to vector<1x64x256xf32>
    %116 = vector.shape_cast %115 : vector<1x64x256xf32> to vector<64x256xf32>
    %cst_41 = arith.constant dense<0.000000e+00> : vector<64x32xf32>
    %117 = tpu.matmul %116, %114, %cst_41 {dimension_numbers = #tpu.dot_dimension_numbers<[1], [0], [0], [1], [0, 0, 1, 1], [], []>} : vector<64x256xf32>, vector<256x32xf32>, vector<64x32xf32> -> vector<64x32xf32>
    %118 = vector.extract_strided_slice %36 {offsets = [256, 0], sizes = [256, 32], strides = [1, 1]} : vector<512x32xf32> to vector<256x32xf32>
    %119 = vector.extract_strided_slice %38 {offsets = [8, 0, 0], sizes = [1, 64, 256], strides = [1, 1, 1]} : vector<9x64x256xf32> to vector<1x64x256xf32>
    %120 = vector.shape_cast %119 : vector<1x64x256xf32> to vector<64x256xf32>
    %cst_42 = arith.constant dense<0.000000e+00> : vector<64x32xf32>
    %121 = tpu.matmul %120, %118, %cst_42 {dimension_numbers = #tpu.dot_dimension_numbers<[1], [0], [0], [1], [0, 0, 1, 1], [], []>} : vector<64x256xf32>, vector<256x32xf32>, vector<64x32xf32> -> vector<64x32xf32>
    %122 = tpu.concatenate %117, %121 in 0 : vector<64x32xf32>, vector<64x32xf32> -> vector<128x32xf32>
    %123 = tpu.concatenate %50, %59, %68, %77, %86, %95, %104, %113, %122 in 1 : vector<128x32xf32>, vector<128x32xf32>, vector<128x32xf32>, vector<128x32xf32>, vector<128x32xf32>, vector<128x32xf32>, vector<128x32xf32>, vector<128x32xf32>, vector<128x32xf32> -> vector<128x288xf32>
    %cst_43 = arith.constant dense<0.000000e+00> : vector<128x32xf32>
    %124 = tpu.matmul %123, %41, %cst_43 {dimension_numbers = #tpu.dot_dimension_numbers<[1], [0], [0], [1], [0, 0, 1, 1], [], []>} : vector<128x288xf32>, vector<288x32xf32>, vector<128x32xf32> -> vector<128x32xf32>
    %c1 = arith.constant 1 : index
    %c0_44 = arith.constant 0 : index
    %c0_45 = arith.constant 0 : index
    %125 = vector.load %arg6[%c1, %c0_44, %c0_45] : memref<4x1x32xf32, #tpu.memory_space<vmem>>, vector<1x1x32xf32>
    %126 = vector.shape_cast %125 : vector<1x1x32xf32> to vector<1x32xf32>
    %c1_46 = arith.constant 1 : index
    %c0_47 = arith.constant 0 : index
    %c0_48 = arith.constant 0 : index
    %127 = vector.load %arg7[%c1_46, %c0_47, %c0_48] : memref<4x1x32xf32, #tpu.memory_space<vmem>>, vector<1x1x32xf32>
    %128 = vector.shape_cast %127 : vector<1x1x32xf32> to vector<1x32xf32>
    %c1_49 = arith.constant 1 : index
    %c0_50 = arith.constant 0 : index
    %c0_51 = arith.constant 0 : index
    %129 = vector.load %arg8[%c1_49, %c0_50, %c0_51] : memref<4x1x32xf32, #tpu.memory_space<vmem>>, vector<1x1x32xf32>
    %130 = vector.shape_cast %129 : vector<1x1x32xf32> to vector<1x32xf32>
    %131 = vector.broadcast %126 : vector<1x32xf32> to vector<128x32xf32>
    %132 = arith.addf %124, %131 : vector<128x32xf32>
    %cst_52 = arith.constant 0.000000e+00 : f32
    %133 = vector.broadcast %cst_52 : f32 to vector<128x32xf32>
    %134 = arith.maximumf %132, %133 : vector<128x32xf32>
    %cst_53 = arith.constant dense<0.000000e+00> : vector<32xf32>
    %135 = vector.multi_reduction <add>, %134, %cst_53 [0] : vector<128x32xf32> to vector<32xf32>
    %136 = vector.shape_cast %135 : vector<32xf32> to vector<1x32xf32>
    %cst_54 = arith.constant 7.812500e-03 : f32
    %137 = vector.broadcast %cst_54 : f32 to vector<1x32xf32>
    %138 = arith.mulf %136, %137 : vector<1x32xf32>
    %139 = arith.mulf %134, %134 : vector<128x32xf32>
    %cst_55 = arith.constant dense<0.000000e+00> : vector<32xf32>
    %140 = vector.multi_reduction <add>, %139, %cst_55 [0] : vector<128x32xf32> to vector<32xf32>
    %141 = vector.shape_cast %140 : vector<32xf32> to vector<1x32xf32>
    %cst_56 = arith.constant 7.812500e-03 : f32
    %142 = vector.broadcast %cst_56 : f32 to vector<1x32xf32>
    %143 = arith.mulf %141, %142 : vector<1x32xf32>
    %144 = arith.mulf %138, %138 : vector<1x32xf32>
    %145 = arith.subf %143, %144 : vector<1x32xf32>
    %cst_57 = arith.constant 0.000000e+00 : f32
    %146 = vector.broadcast %cst_57 : f32 to vector<1x32xf32>
    %147 = arith.maximumf %145, %146 : vector<1x32xf32>
    %cst_58 = arith.constant 9.99999974E-6 : f32
    %148 = vector.broadcast %cst_58 : f32 to vector<1x32xf32>
    %149 = arith.addf %147, %148 : vector<1x32xf32>
    %150 = math.rsqrt %149 : vector<1x32xf32>
    %151 = arith.mulf %128, %150 : vector<1x32xf32>
    %152 = arith.mulf %138, %151 : vector<1x32xf32>
    %153 = arith.subf %130, %152 : vector<1x32xf32>
    %154 = vector.broadcast %151 : vector<1x32xf32> to vector<128x32xf32>
    %155 = arith.mulf %134, %154 : vector<128x32xf32>
    %156 = vector.broadcast %153 : vector<1x32xf32> to vector<128x32xf32>
    %157 = arith.addf %155, %156 : vector<128x32xf32>
    %c0_59 = arith.constant 0 : index
    %c0_60 = arith.constant 0 : index
    %c0_61 = arith.constant 0 : index
    %158 = vector.load %arg2[%c0_59, %c0_60, %c0_61] : memref<9x16x64xbf16, #tpu.memory_space<vmem>>, vector<9x16x64xbf16>
    %159 = arith.extf %158 : vector<9x16x64xbf16> to vector<9x16x64xf32>
    %c1_62 = arith.constant 1 : index
    %c0_63 = arith.constant 0 : index
    %c0_64 = arith.constant 0 : index
    %160 = vector.load %arg5[%c1_62, %c0_63, %c0_64] : memref<3x288x32xbf16, #tpu.memory_space<vmem>>, vector<1x288x32xbf16>
    %161 = vector.shape_cast %160 : vector<1x288x32xbf16> to vector<288x32xbf16>
    %162 = arith.extf %161 : vector<288x32xbf16> to vector<288x32xf32>
    %163 = vector.extract_strided_slice %157 {offsets = [0, 0], sizes = [64, 32], strides = [1, 1]} : vector<128x32xf32> to vector<64x32xf32>
    %164 = vector.extract_strided_slice %159 {offsets = [0, 0, 0], sizes = [1, 16, 64], strides = [1, 1, 1]} : vector<9x16x64xf32> to vector<1x16x64xf32>
    %165 = vector.shape_cast %164 : vector<1x16x64xf32> to vector<16x64xf32>
    %cst_65 = arith.constant dense<0.000000e+00> : vector<16x32xf32>
    %166 = tpu.matmul %165, %163, %cst_65 {dimension_numbers = #tpu.dot_dimension_numbers<[1], [0], [0], [1], [0, 0, 1, 1], [], []>} : vector<16x64xf32>, vector<64x32xf32>, vector<16x32xf32> -> vector<16x32xf32>
    %167 = vector.extract_strided_slice %157 {offsets = [64, 0], sizes = [64, 32], strides = [1, 1]} : vector<128x32xf32> to vector<64x32xf32>
    %168 = vector.extract_strided_slice %159 {offsets = [0, 0, 0], sizes = [1, 16, 64], strides = [1, 1, 1]} : vector<9x16x64xf32> to vector<1x16x64xf32>
    %169 = vector.shape_cast %168 : vector<1x16x64xf32> to vector<16x64xf32>
    %cst_66 = arith.constant dense<0.000000e+00> : vector<16x32xf32>
    %170 = tpu.matmul %169, %167, %cst_66 {dimension_numbers = #tpu.dot_dimension_numbers<[1], [0], [0], [1], [0, 0, 1, 1], [], []>} : vector<16x64xf32>, vector<64x32xf32>, vector<16x32xf32> -> vector<16x32xf32>
    %171 = tpu.concatenate %166, %170 in 0 : vector<16x32xf32>, vector<16x32xf32> -> vector<32x32xf32>
    %172 = vector.extract_strided_slice %157 {offsets = [0, 0], sizes = [64, 32], strides = [1, 1]} : vector<128x32xf32> to vector<64x32xf32>
    %173 = vector.extract_strided_slice %159 {offsets = [1, 0, 0], sizes = [1, 16, 64], strides = [1, 1, 1]} : vector<9x16x64xf32> to vector<1x16x64xf32>
    %174 = vector.shape_cast %173 : vector<1x16x64xf32> to vector<16x64xf32>
    %cst_67 = arith.constant dense<0.000000e+00> : vector<16x32xf32>
    %175 = tpu.matmul %174, %172, %cst_67 {dimension_numbers = #tpu.dot_dimension_numbers<[1], [0], [0], [1], [0, 0, 1, 1], [], []>} : vector<16x64xf32>, vector<64x32xf32>, vector<16x32xf32> -> vector<16x32xf32>
    %176 = vector.extract_strided_slice %157 {offsets = [64, 0], sizes = [64, 32], strides = [1, 1]} : vector<128x32xf32> to vector<64x32xf32>
    %177 = vector.extract_strided_slice %159 {offsets = [1, 0, 0], sizes = [1, 16, 64], strides = [1, 1, 1]} : vector<9x16x64xf32> to vector<1x16x64xf32>
    %178 = vector.shape_cast %177 : vector<1x16x64xf32> to vector<16x64xf32>
    %cst_68 = arith.constant dense<0.000000e+00> : vector<16x32xf32>
    %179 = tpu.matmul %178, %176, %cst_68 {dimension_numbers = #tpu.dot_dimension_numbers<[1], [0], [0], [1], [0, 0, 1, 1], [], []>} : vector<16x64xf32>, vector<64x32xf32>, vector<16x32xf32> -> vector<16x32xf32>
    %180 = tpu.concatenate %175, %179 in 0 : vector<16x32xf32>, vector<16x32xf32> -> vector<32x32xf32>
    %181 = vector.extract_strided_slice %157 {offsets = [0, 0], sizes = [64, 32], strides = [1, 1]} : vector<128x32xf32> to vector<64x32xf32>
    %182 = vector.extract_strided_slice %159 {offsets = [2, 0, 0], sizes = [1, 16, 64], strides = [1, 1, 1]} : vector<9x16x64xf32> to vector<1x16x64xf32>
    %183 = vector.shape_cast %182 : vector<1x16x64xf32> to vector<16x64xf32>
    %cst_69 = arith.constant dense<0.000000e+00> : vector<16x32xf32>
    %184 = tpu.matmul %183, %181, %cst_69 {dimension_numbers = #tpu.dot_dimension_numbers<[1], [0], [0], [1], [0, 0, 1, 1], [], []>} : vector<16x64xf32>, vector<64x32xf32>, vector<16x32xf32> -> vector<16x32xf32>
    %185 = vector.extract_strided_slice %157 {offsets = [64, 0], sizes = [64, 32], strides = [1, 1]} : vector<128x32xf32> to vector<64x32xf32>
    %186 = vector.extract_strided_slice %159 {offsets = [2, 0, 0], sizes = [1, 16, 64], strides = [1, 1, 1]} : vector<9x16x64xf32> to vector<1x16x64xf32>
    %187 = vector.shape_cast %186 : vector<1x16x64xf32> to vector<16x64xf32>
    %cst_70 = arith.constant dense<0.000000e+00> : vector<16x32xf32>
    %188 = tpu.matmul %187, %185, %cst_70 {dimension_numbers = #tpu.dot_dimension_numbers<[1], [0], [0], [1], [0, 0, 1, 1], [], []>} : vector<16x64xf32>, vector<64x32xf32>, vector<16x32xf32> -> vector<16x32xf32>
    %189 = tpu.concatenate %184, %188 in 0 : vector<16x32xf32>, vector<16x32xf32> -> vector<32x32xf32>
    %190 = vector.extract_strided_slice %157 {offsets = [0, 0], sizes = [64, 32], strides = [1, 1]} : vector<128x32xf32> to vector<64x32xf32>
    %191 = vector.extract_strided_slice %159 {offsets = [3, 0, 0], sizes = [1, 16, 64], strides = [1, 1, 1]} : vector<9x16x64xf32> to vector<1x16x64xf32>
    %192 = vector.shape_cast %191 : vector<1x16x64xf32> to vector<16x64xf32>
    %cst_71 = arith.constant dense<0.000000e+00> : vector<16x32xf32>
    %193 = tpu.matmul %192, %190, %cst_71 {dimension_numbers = #tpu.dot_dimension_numbers<[1], [0], [0], [1], [0, 0, 1, 1], [], []>} : vector<16x64xf32>, vector<64x32xf32>, vector<16x32xf32> -> vector<16x32xf32>
    %194 = vector.extract_strided_slice %157 {offsets = [64, 0], sizes = [64, 32], strides = [1, 1]} : vector<128x32xf32> to vector<64x32xf32>
    %195 = vector.extract_strided_slice %159 {offsets = [3, 0, 0], sizes = [1, 16, 64], strides = [1, 1, 1]} : vector<9x16x64xf32> to vector<1x16x64xf32>
    %196 = vector.shape_cast %195 : vector<1x16x64xf32> to vector<16x64xf32>
    %cst_72 = arith.constant dense<0.000000e+00> : vector<16x32xf32>
    %197 = tpu.matmul %196, %194, %cst_72 {dimension_numbers = #tpu.dot_dimension_numbers<[1], [0], [0], [1], [0, 0, 1, 1], [], []>} : vector<16x64xf32>, vector<64x32xf32>, vector<16x32xf32> -> vector<16x32xf32>
    %198 = tpu.concatenate %193, %197 in 0 : vector<16x32xf32>, vector<16x32xf32> -> vector<32x32xf32>
    %199 = vector.extract_strided_slice %157 {offsets = [0, 0], sizes = [64, 32], strides = [1, 1]} : vector<128x32xf32> to vector<64x32xf32>
    %200 = vector.extract_strided_slice %159 {offsets = [4, 0, 0], sizes = [1, 16, 64], strides = [1, 1, 1]} : vector<9x16x64xf32> to vector<1x16x64xf32>
    %201 = vector.shape_cast %200 : vector<1x16x64xf32> to vector<16x64xf32>
    %cst_73 = arith.constant dense<0.000000e+00> : vector<16x32xf32>
    %202 = tpu.matmul %201, %199, %cst_73 {dimension_numbers = #tpu.dot_dimension_numbers<[1], [0], [0], [1], [0, 0, 1, 1], [], []>} : vector<16x64xf32>, vector<64x32xf32>, vector<16x32xf32> -> vector<16x32xf32>
    %203 = vector.extract_strided_slice %157 {offsets = [64, 0], sizes = [64, 32], strides = [1, 1]} : vector<128x32xf32> to vector<64x32xf32>
    %204 = vector.extract_strided_slice %159 {offsets = [4, 0, 0], sizes = [1, 16, 64], strides = [1, 1, 1]} : vector<9x16x64xf32> to vector<1x16x64xf32>
    %205 = vector.shape_cast %204 : vector<1x16x64xf32> to vector<16x64xf32>
    %cst_74 = arith.constant dense<0.000000e+00> : vector<16x32xf32>
    %206 = tpu.matmul %205, %203, %cst_74 {dimension_numbers = #tpu.dot_dimension_numbers<[1], [0], [0], [1], [0, 0, 1, 1], [], []>} : vector<16x64xf32>, vector<64x32xf32>, vector<16x32xf32> -> vector<16x32xf32>
    %207 = tpu.concatenate %202, %206 in 0 : vector<16x32xf32>, vector<16x32xf32> -> vector<32x32xf32>
    %208 = vector.extract_strided_slice %157 {offsets = [0, 0], sizes = [64, 32], strides = [1, 1]} : vector<128x32xf32> to vector<64x32xf32>
    %209 = vector.extract_strided_slice %159 {offsets = [5, 0, 0], sizes = [1, 16, 64], strides = [1, 1, 1]} : vector<9x16x64xf32> to vector<1x16x64xf32>
    %210 = vector.shape_cast %209 : vector<1x16x64xf32> to vector<16x64xf32>
    %cst_75 = arith.constant dense<0.000000e+00> : vector<16x32xf32>
    %211 = tpu.matmul %210, %208, %cst_75 {dimension_numbers = #tpu.dot_dimension_numbers<[1], [0], [0], [1], [0, 0, 1, 1], [], []>} : vector<16x64xf32>, vector<64x32xf32>, vector<16x32xf32> -> vector<16x32xf32>
    %212 = vector.extract_strided_slice %157 {offsets = [64, 0], sizes = [64, 32], strides = [1, 1]} : vector<128x32xf32> to vector<64x32xf32>
    %213 = vector.extract_strided_slice %159 {offsets = [5, 0, 0], sizes = [1, 16, 64], strides = [1, 1, 1]} : vector<9x16x64xf32> to vector<1x16x64xf32>
    %214 = vector.shape_cast %213 : vector<1x16x64xf32> to vector<16x64xf32>
    %cst_76 = arith.constant dense<0.000000e+00> : vector<16x32xf32>
    %215 = tpu.matmul %214, %212, %cst_76 {dimension_numbers = #tpu.dot_dimension_numbers<[1], [0], [0], [1], [0, 0, 1, 1], [], []>} : vector<16x64xf32>, vector<64x32xf32>, vector<16x32xf32> -> vector<16x32xf32>
    %216 = tpu.concatenate %211, %215 in 0 : vector<16x32xf32>, vector<16x32xf32> -> vector<32x32xf32>
    %217 = vector.extract_strided_slice %157 {offsets = [0, 0], sizes = [64, 32], strides = [1, 1]} : vector<128x32xf32> to vector<64x32xf32>
    %218 = vector.extract_strided_slice %159 {offsets = [6, 0, 0], sizes = [1, 16, 64], strides = [1, 1, 1]} : vector<9x16x64xf32> to vector<1x16x64xf32>
    %219 = vector.shape_cast %218 : vector<1x16x64xf32> to vector<16x64xf32>
    %cst_77 = arith.constant dense<0.000000e+00> : vector<16x32xf32>
    %220 = tpu.matmul %219, %217, %cst_77 {dimension_numbers = #tpu.dot_dimension_numbers<[1], [0], [0], [1], [0, 0, 1, 1], [], []>} : vector<16x64xf32>, vector<64x32xf32>, vector<16x32xf32> -> vector<16x32xf32>
    %221 = vector.extract_strided_slice %157 {offsets = [64, 0], sizes = [64, 32], strides = [1, 1]} : vector<128x32xf32> to vector<64x32xf32>
    %222 = vector.extract_strided_slice %159 {offsets = [6, 0, 0], sizes = [1, 16, 64], strides = [1, 1, 1]} : vector<9x16x64xf32> to vector<1x16x64xf32>
    %223 = vector.shape_cast %222 : vector<1x16x64xf32> to vector<16x64xf32>
    %cst_78 = arith.constant dense<0.000000e+00> : vector<16x32xf32>
    %224 = tpu.matmul %223, %221, %cst_78 {dimension_numbers = #tpu.dot_dimension_numbers<[1], [0], [0], [1], [0, 0, 1, 1], [], []>} : vector<16x64xf32>, vector<64x32xf32>, vector<16x32xf32> -> vector<16x32xf32>
    %225 = tpu.concatenate %220, %224 in 0 : vector<16x32xf32>, vector<16x32xf32> -> vector<32x32xf32>
    %226 = vector.extract_strided_slice %157 {offsets = [0, 0], sizes = [64, 32], strides = [1, 1]} : vector<128x32xf32> to vector<64x32xf32>
    %227 = vector.extract_strided_slice %159 {offsets = [7, 0, 0], sizes = [1, 16, 64], strides = [1, 1, 1]} : vector<9x16x64xf32> to vector<1x16x64xf32>
    %228 = vector.shape_cast %227 : vector<1x16x64xf32> to vector<16x64xf32>
    %cst_79 = arith.constant dense<0.000000e+00> : vector<16x32xf32>
    %229 = tpu.matmul %228, %226, %cst_79 {dimension_numbers = #tpu.dot_dimension_numbers<[1], [0], [0], [1], [0, 0, 1, 1], [], []>} : vector<16x64xf32>, vector<64x32xf32>, vector<16x32xf32> -> vector<16x32xf32>
    %230 = vector.extract_strided_slice %157 {offsets = [64, 0], sizes = [64, 32], strides = [1, 1]} : vector<128x32xf32> to vector<64x32xf32>
    %231 = vector.extract_strided_slice %159 {offsets = [7, 0, 0], sizes = [1, 16, 64], strides = [1, 1, 1]} : vector<9x16x64xf32> to vector<1x16x64xf32>
    %232 = vector.shape_cast %231 : vector<1x16x64xf32> to vector<16x64xf32>
    %cst_80 = arith.constant dense<0.000000e+00> : vector<16x32xf32>
    %233 = tpu.matmul %232, %230, %cst_80 {dimension_numbers = #tpu.dot_dimension_numbers<[1], [0], [0], [1], [0, 0, 1, 1], [], []>} : vector<16x64xf32>, vector<64x32xf32>, vector<16x32xf32> -> vector<16x32xf32>
    %234 = tpu.concatenate %229, %233 in 0 : vector<16x32xf32>, vector<16x32xf32> -> vector<32x32xf32>
    %235 = vector.extract_strided_slice %157 {offsets = [0, 0], sizes = [64, 32], strides = [1, 1]} : vector<128x32xf32> to vector<64x32xf32>
    %236 = vector.extract_strided_slice %159 {offsets = [8, 0, 0], sizes = [1, 16, 64], strides = [1, 1, 1]} : vector<9x16x64xf32> to vector<1x16x64xf32>
    %237 = vector.shape_cast %236 : vector<1x16x64xf32> to vector<16x64xf32>
    %cst_81 = arith.constant dense<0.000000e+00> : vector<16x32xf32>
    %238 = tpu.matmul %237, %235, %cst_81 {dimension_numbers = #tpu.dot_dimension_numbers<[1], [0], [0], [1], [0, 0, 1, 1], [], []>} : vector<16x64xf32>, vector<64x32xf32>, vector<16x32xf32> -> vector<16x32xf32>
    %239 = vector.extract_strided_slice %157 {offsets = [64, 0], sizes = [64, 32], strides = [1, 1]} : vector<128x32xf32> to vector<64x32xf32>
    %240 = vector.extract_strided_slice %159 {offsets = [8, 0, 0], sizes = [1, 16, 64], strides = [1, 1, 1]} : vector<9x16x64xf32> to vector<1x16x64xf32>
    %241 = vector.shape_cast %240 : vector<1x16x64xf32> to vector<16x64xf32>
    %cst_82 = arith.constant dense<0.000000e+00> : vector<16x32xf32>
    %242 = tpu.matmul %241, %239, %cst_82 {dimension_numbers = #tpu.dot_dimension_numbers<[1], [0], [0], [1], [0, 0, 1, 1], [], []>} : vector<16x64xf32>, vector<64x32xf32>, vector<16x32xf32> -> vector<16x32xf32>
    %243 = tpu.concatenate %238, %242 in 0 : vector<16x32xf32>, vector<16x32xf32> -> vector<32x32xf32>
    %244 = tpu.concatenate %171, %180, %189, %198, %207, %216, %225, %234, %243 in 1 : vector<32x32xf32>, vector<32x32xf32>, vector<32x32xf32>, vector<32x32xf32>, vector<32x32xf32>, vector<32x32xf32>, vector<32x32xf32>, vector<32x32xf32>, vector<32x32xf32> -> vector<32x288xf32>
    %cst_83 = arith.constant dense<0.000000e+00> : vector<32x32xf32>
    %245 = tpu.matmul %244, %162, %cst_83 {dimension_numbers = #tpu.dot_dimension_numbers<[1], [0], [0], [1], [0, 0, 1, 1], [], []>} : vector<32x288xf32>, vector<288x32xf32>, vector<32x32xf32> -> vector<32x32xf32>
    %c2 = arith.constant 2 : index
    %c0_84 = arith.constant 0 : index
    %c0_85 = arith.constant 0 : index
    %246 = vector.load %arg6[%c2, %c0_84, %c0_85] : memref<4x1x32xf32, #tpu.memory_space<vmem>>, vector<1x1x32xf32>
    %247 = vector.shape_cast %246 : vector<1x1x32xf32> to vector<1x32xf32>
    %c2_86 = arith.constant 2 : index
    %c0_87 = arith.constant 0 : index
    %c0_88 = arith.constant 0 : index
    %248 = vector.load %arg7[%c2_86, %c0_87, %c0_88] : memref<4x1x32xf32, #tpu.memory_space<vmem>>, vector<1x1x32xf32>
    %249 = vector.shape_cast %248 : vector<1x1x32xf32> to vector<1x32xf32>
    %c2_89 = arith.constant 2 : index
    %c0_90 = arith.constant 0 : index
    %c0_91 = arith.constant 0 : index
    %250 = vector.load %arg8[%c2_89, %c0_90, %c0_91] : memref<4x1x32xf32, #tpu.memory_space<vmem>>, vector<1x1x32xf32>
    %251 = vector.shape_cast %250 : vector<1x1x32xf32> to vector<1x32xf32>
    %252 = vector.broadcast %247 : vector<1x32xf32> to vector<32x32xf32>
    %253 = arith.addf %245, %252 : vector<32x32xf32>
    %cst_92 = arith.constant 0.000000e+00 : f32
    %254 = vector.broadcast %cst_92 : f32 to vector<32x32xf32>
    %255 = arith.maximumf %253, %254 : vector<32x32xf32>
    %cst_93 = arith.constant dense<0.000000e+00> : vector<32xf32>
    %256 = vector.multi_reduction <add>, %255, %cst_93 [0] : vector<32x32xf32> to vector<32xf32>
    %257 = vector.shape_cast %256 : vector<32xf32> to vector<1x32xf32>
    %cst_94 = arith.constant 3.125000e-02 : f32
    %258 = vector.broadcast %cst_94 : f32 to vector<1x32xf32>
    %259 = arith.mulf %257, %258 : vector<1x32xf32>
    %260 = arith.mulf %255, %255 : vector<32x32xf32>
    %cst_95 = arith.constant dense<0.000000e+00> : vector<32xf32>
    %261 = vector.multi_reduction <add>, %260, %cst_95 [0] : vector<32x32xf32> to vector<32xf32>
    %262 = vector.shape_cast %261 : vector<32xf32> to vector<1x32xf32>
    %cst_96 = arith.constant 3.125000e-02 : f32
    %263 = vector.broadcast %cst_96 : f32 to vector<1x32xf32>
    %264 = arith.mulf %262, %263 : vector<1x32xf32>
    %265 = arith.mulf %259, %259 : vector<1x32xf32>
    %266 = arith.subf %264, %265 : vector<1x32xf32>
    %cst_97 = arith.constant 0.000000e+00 : f32
    %267 = vector.broadcast %cst_97 : f32 to vector<1x32xf32>
    %268 = arith.maximumf %266, %267 : vector<1x32xf32>
    %cst_98 = arith.constant 9.99999974E-6 : f32
    %269 = vector.broadcast %cst_98 : f32 to vector<1x32xf32>
    %270 = arith.addf %268, %269 : vector<1x32xf32>
    %271 = math.rsqrt %270 : vector<1x32xf32>
    %272 = arith.mulf %249, %271 : vector<1x32xf32>
    %273 = arith.mulf %259, %272 : vector<1x32xf32>
    %274 = arith.subf %251, %273 : vector<1x32xf32>
    %275 = vector.broadcast %272 : vector<1x32xf32> to vector<32x32xf32>
    %276 = arith.mulf %255, %275 : vector<32x32xf32>
    %277 = vector.broadcast %274 : vector<1x32xf32> to vector<32x32xf32>
    %278 = arith.addf %276, %277 : vector<32x32xf32>
    %c0_99 = arith.constant 0 : index
    %c0_100 = arith.constant 0 : index
    %c0_101 = arith.constant 0 : index
    %279 = vector.load %arg3[%c0_99, %c0_100, %c0_101] : memref<9x4x16xbf16, #tpu.memory_space<vmem>>, vector<9x4x16xbf16>
    %280 = arith.extf %279 : vector<9x4x16xbf16> to vector<9x4x16xf32>
    %c2_102 = arith.constant 2 : index
    %c0_103 = arith.constant 0 : index
    %c0_104 = arith.constant 0 : index
    %281 = vector.load %arg5[%c2_102, %c0_103, %c0_104] : memref<3x288x32xbf16, #tpu.memory_space<vmem>>, vector<1x288x32xbf16>
    %282 = vector.shape_cast %281 : vector<1x288x32xbf16> to vector<288x32xbf16>
    %283 = arith.extf %282 : vector<288x32xbf16> to vector<288x32xf32>
    %284 = vector.extract_strided_slice %278 {offsets = [0, 0], sizes = [16, 32], strides = [1, 1]} : vector<32x32xf32> to vector<16x32xf32>
    %285 = vector.extract_strided_slice %280 {offsets = [0, 0, 0], sizes = [1, 4, 16], strides = [1, 1, 1]} : vector<9x4x16xf32> to vector<1x4x16xf32>
    %286 = vector.shape_cast %285 : vector<1x4x16xf32> to vector<4x16xf32>
    %cst_105 = arith.constant dense<0.000000e+00> : vector<4x32xf32>
    %287 = tpu.matmul %286, %284, %cst_105 {dimension_numbers = #tpu.dot_dimension_numbers<[1], [0], [0], [1], [0, 0, 1, 1], [], []>} : vector<4x16xf32>, vector<16x32xf32>, vector<4x32xf32> -> vector<4x32xf32>
    %288 = vector.extract_strided_slice %278 {offsets = [16, 0], sizes = [16, 32], strides = [1, 1]} : vector<32x32xf32> to vector<16x32xf32>
    %289 = vector.extract_strided_slice %280 {offsets = [0, 0, 0], sizes = [1, 4, 16], strides = [1, 1, 1]} : vector<9x4x16xf32> to vector<1x4x16xf32>
    %290 = vector.shape_cast %289 : vector<1x4x16xf32> to vector<4x16xf32>
    %cst_106 = arith.constant dense<0.000000e+00> : vector<4x32xf32>
    %291 = tpu.matmul %290, %288, %cst_106 {dimension_numbers = #tpu.dot_dimension_numbers<[1], [0], [0], [1], [0, 0, 1, 1], [], []>} : vector<4x16xf32>, vector<16x32xf32>, vector<4x32xf32> -> vector<4x32xf32>
    %292 = tpu.concatenate %287, %291 in 0 : vector<4x32xf32>, vector<4x32xf32> -> vector<8x32xf32>
    %293 = vector.extract_strided_slice %278 {offsets = [0, 0], sizes = [16, 32], strides = [1, 1]} : vector<32x32xf32> to vector<16x32xf32>
    %294 = vector.extract_strided_slice %280 {offsets = [1, 0, 0], sizes = [1, 4, 16], strides = [1, 1, 1]} : vector<9x4x16xf32> to vector<1x4x16xf32>
    %295 = vector.shape_cast %294 : vector<1x4x16xf32> to vector<4x16xf32>
    %cst_107 = arith.constant dense<0.000000e+00> : vector<4x32xf32>
    %296 = tpu.matmul %295, %293, %cst_107 {dimension_numbers = #tpu.dot_dimension_numbers<[1], [0], [0], [1], [0, 0, 1, 1], [], []>} : vector<4x16xf32>, vector<16x32xf32>, vector<4x32xf32> -> vector<4x32xf32>
    %297 = vector.extract_strided_slice %278 {offsets = [16, 0], sizes = [16, 32], strides = [1, 1]} : vector<32x32xf32> to vector<16x32xf32>
    %298 = vector.extract_strided_slice %280 {offsets = [1, 0, 0], sizes = [1, 4, 16], strides = [1, 1, 1]} : vector<9x4x16xf32> to vector<1x4x16xf32>
    %299 = vector.shape_cast %298 : vector<1x4x16xf32> to vector<4x16xf32>
    %cst_108 = arith.constant dense<0.000000e+00> : vector<4x32xf32>
    %300 = tpu.matmul %299, %297, %cst_108 {dimension_numbers = #tpu.dot_dimension_numbers<[1], [0], [0], [1], [0, 0, 1, 1], [], []>} : vector<4x16xf32>, vector<16x32xf32>, vector<4x32xf32> -> vector<4x32xf32>
    %301 = tpu.concatenate %296, %300 in 0 : vector<4x32xf32>, vector<4x32xf32> -> vector<8x32xf32>
    %302 = vector.extract_strided_slice %278 {offsets = [0, 0], sizes = [16, 32], strides = [1, 1]} : vector<32x32xf32> to vector<16x32xf32>
    %303 = vector.extract_strided_slice %280 {offsets = [2, 0, 0], sizes = [1, 4, 16], strides = [1, 1, 1]} : vector<9x4x16xf32> to vector<1x4x16xf32>
    %304 = vector.shape_cast %303 : vector<1x4x16xf32> to vector<4x16xf32>
    %cst_109 = arith.constant dense<0.000000e+00> : vector<4x32xf32>
    %305 = tpu.matmul %304, %302, %cst_109 {dimension_numbers = #tpu.dot_dimension_numbers<[1], [0], [0], [1], [0, 0, 1, 1], [], []>} : vector<4x16xf32>, vector<16x32xf32>, vector<4x32xf32> -> vector<4x32xf32>
    %306 = vector.extract_strided_slice %278 {offsets = [16, 0], sizes = [16, 32], strides = [1, 1]} : vector<32x32xf32> to vector<16x32xf32>
    %307 = vector.extract_strided_slice %280 {offsets = [2, 0, 0], sizes = [1, 4, 16], strides = [1, 1, 1]} : vector<9x4x16xf32> to vector<1x4x16xf32>
    %308 = vector.shape_cast %307 : vector<1x4x16xf32> to vector<4x16xf32>
    %cst_110 = arith.constant dense<0.000000e+00> : vector<4x32xf32>
    %309 = tpu.matmul %308, %306, %cst_110 {dimension_numbers = #tpu.dot_dimension_numbers<[1], [0], [0], [1], [0, 0, 1, 1], [], []>} : vector<4x16xf32>, vector<16x32xf32>, vector<4x32xf32> -> vector<4x32xf32>
    %310 = tpu.concatenate %305, %309 in 0 : vector<4x32xf32>, vector<4x32xf32> -> vector<8x32xf32>
    %311 = vector.extract_strided_slice %278 {offsets = [0, 0], sizes = [16, 32], strides = [1, 1]} : vector<32x32xf32> to vector<16x32xf32>
    %312 = vector.extract_strided_slice %280 {offsets = [3, 0, 0], sizes = [1, 4, 16], strides = [1, 1, 1]} : vector<9x4x16xf32> to vector<1x4x16xf32>
    %313 = vector.shape_cast %312 : vector<1x4x16xf32> to vector<4x16xf32>
    %cst_111 = arith.constant dense<0.000000e+00> : vector<4x32xf32>
    %314 = tpu.matmul %313, %311, %cst_111 {dimension_numbers = #tpu.dot_dimension_numbers<[1], [0], [0], [1], [0, 0, 1, 1], [], []>} : vector<4x16xf32>, vector<16x32xf32>, vector<4x32xf32> -> vector<4x32xf32>
    %315 = vector.extract_strided_slice %278 {offsets = [16, 0], sizes = [16, 32], strides = [1, 1]} : vector<32x32xf32> to vector<16x32xf32>
    %316 = vector.extract_strided_slice %280 {offsets = [3, 0, 0], sizes = [1, 4, 16], strides = [1, 1, 1]} : vector<9x4x16xf32> to vector<1x4x16xf32>
    %317 = vector.shape_cast %316 : vector<1x4x16xf32> to vector<4x16xf32>
    %cst_112 = arith.constant dense<0.000000e+00> : vector<4x32xf32>
    %318 = tpu.matmul %317, %315, %cst_112 {dimension_numbers = #tpu.dot_dimension_numbers<[1], [0], [0], [1], [0, 0, 1, 1], [], []>} : vector<4x16xf32>, vector<16x32xf32>, vector<4x32xf32> -> vector<4x32xf32>
    %319 = tpu.concatenate %314, %318 in 0 : vector<4x32xf32>, vector<4x32xf32> -> vector<8x32xf32>
    %320 = vector.extract_strided_slice %278 {offsets = [0, 0], sizes = [16, 32], strides = [1, 1]} : vector<32x32xf32> to vector<16x32xf32>
    %321 = vector.extract_strided_slice %280 {offsets = [4, 0, 0], sizes = [1, 4, 16], strides = [1, 1, 1]} : vector<9x4x16xf32> to vector<1x4x16xf32>
    %322 = vector.shape_cast %321 : vector<1x4x16xf32> to vector<4x16xf32>
    %cst_113 = arith.constant dense<0.000000e+00> : vector<4x32xf32>
    %323 = tpu.matmul %322, %320, %cst_113 {dimension_numbers = #tpu.dot_dimension_numbers<[1], [0], [0], [1], [0, 0, 1, 1], [], []>} : vector<4x16xf32>, vector<16x32xf32>, vector<4x32xf32> -> vector<4x32xf32>
    %324 = vector.extract_strided_slice %278 {offsets = [16, 0], sizes = [16, 32], strides = [1, 1]} : vector<32x32xf32> to vector<16x32xf32>
    %325 = vector.extract_strided_slice %280 {offsets = [4, 0, 0], sizes = [1, 4, 16], strides = [1, 1, 1]} : vector<9x4x16xf32> to vector<1x4x16xf32>
    %326 = vector.shape_cast %325 : vector<1x4x16xf32> to vector<4x16xf32>
    %cst_114 = arith.constant dense<0.000000e+00> : vector<4x32xf32>
    %327 = tpu.matmul %326, %324, %cst_114 {dimension_numbers = #tpu.dot_dimension_numbers<[1], [0], [0], [1], [0, 0, 1, 1], [], []>} : vector<4x16xf32>, vector<16x32xf32>, vector<4x32xf32> -> vector<4x32xf32>
    %328 = tpu.concatenate %323, %327 in 0 : vector<4x32xf32>, vector<4x32xf32> -> vector<8x32xf32>
    %329 = vector.extract_strided_slice %278 {offsets = [0, 0], sizes = [16, 32], strides = [1, 1]} : vector<32x32xf32> to vector<16x32xf32>
    %330 = vector.extract_strided_slice %280 {offsets = [5, 0, 0], sizes = [1, 4, 16], strides = [1, 1, 1]} : vector<9x4x16xf32> to vector<1x4x16xf32>
    %331 = vector.shape_cast %330 : vector<1x4x16xf32> to vector<4x16xf32>
    %cst_115 = arith.constant dense<0.000000e+00> : vector<4x32xf32>
    %332 = tpu.matmul %331, %329, %cst_115 {dimension_numbers = #tpu.dot_dimension_numbers<[1], [0], [0], [1], [0, 0, 1, 1], [], []>} : vector<4x16xf32>, vector<16x32xf32>, vector<4x32xf32> -> vector<4x32xf32>
    %333 = vector.extract_strided_slice %278 {offsets = [16, 0], sizes = [16, 32], strides = [1, 1]} : vector<32x32xf32> to vector<16x32xf32>
    %334 = vector.extract_strided_slice %280 {offsets = [5, 0, 0], sizes = [1, 4, 16], strides = [1, 1, 1]} : vector<9x4x16xf32> to vector<1x4x16xf32>
    %335 = vector.shape_cast %334 : vector<1x4x16xf32> to vector<4x16xf32>
    %cst_116 = arith.constant dense<0.000000e+00> : vector<4x32xf32>
    %336 = tpu.matmul %335, %333, %cst_116 {dimension_numbers = #tpu.dot_dimension_numbers<[1], [0], [0], [1], [0, 0, 1, 1], [], []>} : vector<4x16xf32>, vector<16x32xf32>, vector<4x32xf32> -> vector<4x32xf32>
    %337 = tpu.concatenate %332, %336 in 0 : vector<4x32xf32>, vector<4x32xf32> -> vector<8x32xf32>
    %338 = vector.extract_strided_slice %278 {offsets = [0, 0], sizes = [16, 32], strides = [1, 1]} : vector<32x32xf32> to vector<16x32xf32>
    %339 = vector.extract_strided_slice %280 {offsets = [6, 0, 0], sizes = [1, 4, 16], strides = [1, 1, 1]} : vector<9x4x16xf32> to vector<1x4x16xf32>
    %340 = vector.shape_cast %339 : vector<1x4x16xf32> to vector<4x16xf32>
    %cst_117 = arith.constant dense<0.000000e+00> : vector<4x32xf32>
    %341 = tpu.matmul %340, %338, %cst_117 {dimension_numbers = #tpu.dot_dimension_numbers<[1], [0], [0], [1], [0, 0, 1, 1], [], []>} : vector<4x16xf32>, vector<16x32xf32>, vector<4x32xf32> -> vector<4x32xf32>
    %342 = vector.extract_strided_slice %278 {offsets = [16, 0], sizes = [16, 32], strides = [1, 1]} : vector<32x32xf32> to vector<16x32xf32>
    %343 = vector.extract_strided_slice %280 {offsets = [6, 0, 0], sizes = [1, 4, 16], strides = [1, 1, 1]} : vector<9x4x16xf32> to vector<1x4x16xf32>
    %344 = vector.shape_cast %343 : vector<1x4x16xf32> to vector<4x16xf32>
    %cst_118 = arith.constant dense<0.000000e+00> : vector<4x32xf32>
    %345 = tpu.matmul %344, %342, %cst_118 {dimension_numbers = #tpu.dot_dimension_numbers<[1], [0], [0], [1], [0, 0, 1, 1], [], []>} : vector<4x16xf32>, vector<16x32xf32>, vector<4x32xf32> -> vector<4x32xf32>
    %346 = tpu.concatenate %341, %345 in 0 : vector<4x32xf32>, vector<4x32xf32> -> vector<8x32xf32>
    %347 = vector.extract_strided_slice %278 {offsets = [0, 0], sizes = [16, 32], strides = [1, 1]} : vector<32x32xf32> to vector<16x32xf32>
    %348 = vector.extract_strided_slice %280 {offsets = [7, 0, 0], sizes = [1, 4, 16], strides = [1, 1, 1]} : vector<9x4x16xf32> to vector<1x4x16xf32>
    %349 = vector.shape_cast %348 : vector<1x4x16xf32> to vector<4x16xf32>
    %cst_119 = arith.constant dense<0.000000e+00> : vector<4x32xf32>
    %350 = tpu.matmul %349, %347, %cst_119 {dimension_numbers = #tpu.dot_dimension_numbers<[1], [0], [0], [1], [0, 0, 1, 1], [], []>} : vector<4x16xf32>, vector<16x32xf32>, vector<4x32xf32> -> vector<4x32xf32>
    %351 = vector.extract_strided_slice %278 {offsets = [16, 0], sizes = [16, 32], strides = [1, 1]} : vector<32x32xf32> to vector<16x32xf32>
    %352 = vector.extract_strided_slice %280 {offsets = [7, 0, 0], sizes = [1, 4, 16], strides = [1, 1, 1]} : vector<9x4x16xf32> to vector<1x4x16xf32>
    %353 = vector.shape_cast %352 : vector<1x4x16xf32> to vector<4x16xf32>
    %cst_120 = arith.constant dense<0.000000e+00> : vector<4x32xf32>
    %354 = tpu.matmul %353, %351, %cst_120 {dimension_numbers = #tpu.dot_dimension_numbers<[1], [0], [0], [1], [0, 0, 1, 1], [], []>} : vector<4x16xf32>, vector<16x32xf32>, vector<4x32xf32> -> vector<4x32xf32>
    %355 = tpu.concatenate %350, %354 in 0 : vector<4x32xf32>, vector<4x32xf32> -> vector<8x32xf32>
    %356 = vector.extract_strided_slice %278 {offsets = [0, 0], sizes = [16, 32], strides = [1, 1]} : vector<32x32xf32> to vector<16x32xf32>
    %357 = vector.extract_strided_slice %280 {offsets = [8, 0, 0], sizes = [1, 4, 16], strides = [1, 1, 1]} : vector<9x4x16xf32> to vector<1x4x16xf32>
    %358 = vector.shape_cast %357 : vector<1x4x16xf32> to vector<4x16xf32>
    %cst_121 = arith.constant dense<0.000000e+00> : vector<4x32xf32>
    %359 = tpu.matmul %358, %356, %cst_121 {dimension_numbers = #tpu.dot_dimension_numbers<[1], [0], [0], [1], [0, 0, 1, 1], [], []>} : vector<4x16xf32>, vector<16x32xf32>, vector<4x32xf32> -> vector<4x32xf32>
    %360 = vector.extract_strided_slice %278 {offsets = [16, 0], sizes = [16, 32], strides = [1, 1]} : vector<32x32xf32> to vector<16x32xf32>
    %361 = vector.extract_strided_slice %280 {offsets = [8, 0, 0], sizes = [1, 4, 16], strides = [1, 1, 1]} : vector<9x4x16xf32> to vector<1x4x16xf32>
    %362 = vector.shape_cast %361 : vector<1x4x16xf32> to vector<4x16xf32>
    %cst_122 = arith.constant dense<0.000000e+00> : vector<4x32xf32>
    %363 = tpu.matmul %362, %360, %cst_122 {dimension_numbers = #tpu.dot_dimension_numbers<[1], [0], [0], [1], [0, 0, 1, 1], [], []>} : vector<4x16xf32>, vector<16x32xf32>, vector<4x32xf32> -> vector<4x32xf32>
    %364 = tpu.concatenate %359, %363 in 0 : vector<4x32xf32>, vector<4x32xf32> -> vector<8x32xf32>
    %365 = tpu.concatenate %292, %301, %310, %319, %328, %337, %346, %355, %364 in 1 : vector<8x32xf32>, vector<8x32xf32>, vector<8x32xf32>, vector<8x32xf32>, vector<8x32xf32>, vector<8x32xf32>, vector<8x32xf32>, vector<8x32xf32>, vector<8x32xf32> -> vector<8x288xf32>
    %cst_123 = arith.constant dense<0.000000e+00> : vector<8x32xf32>
    %366 = tpu.matmul %365, %283, %cst_123 {dimension_numbers = #tpu.dot_dimension_numbers<[1], [0], [0], [1], [0, 0, 1, 1], [], []>} : vector<8x288xf32>, vector<288x32xf32>, vector<8x32xf32> -> vector<8x32xf32>
    %c3 = arith.constant 3 : index
    %c0_124 = arith.constant 0 : index
    %c0_125 = arith.constant 0 : index
    %367 = vector.load %arg6[%c3, %c0_124, %c0_125] : memref<4x1x32xf32, #tpu.memory_space<vmem>>, vector<1x1x32xf32>
    %368 = vector.shape_cast %367 : vector<1x1x32xf32> to vector<1x32xf32>
    %c3_126 = arith.constant 3 : index
    %c0_127 = arith.constant 0 : index
    %c0_128 = arith.constant 0 : index
    %369 = vector.load %arg7[%c3_126, %c0_127, %c0_128] : memref<4x1x32xf32, #tpu.memory_space<vmem>>, vector<1x1x32xf32>
    %370 = vector.shape_cast %369 : vector<1x1x32xf32> to vector<1x32xf32>
    %c3_129 = arith.constant 3 : index
    %c0_130 = arith.constant 0 : index
    %c0_131 = arith.constant 0 : index
    %371 = vector.load %arg8[%c3_129, %c0_130, %c0_131] : memref<4x1x32xf32, #tpu.memory_space<vmem>>, vector<1x1x32xf32>
    %372 = vector.shape_cast %371 : vector<1x1x32xf32> to vector<1x32xf32>
    %373 = vector.broadcast %368 : vector<1x32xf32> to vector<8x32xf32>
    %374 = arith.addf %366, %373 : vector<8x32xf32>
    %cst_132 = arith.constant 0.000000e+00 : f32
    %375 = vector.broadcast %cst_132 : f32 to vector<8x32xf32>
    %376 = arith.maximumf %374, %375 : vector<8x32xf32>
    %cst_133 = arith.constant dense<0.000000e+00> : vector<32xf32>
    %377 = vector.multi_reduction <add>, %376, %cst_133 [0] : vector<8x32xf32> to vector<32xf32>
    %378 = vector.shape_cast %377 : vector<32xf32> to vector<1x32xf32>
    %cst_134 = arith.constant 1.250000e-01 : f32
    %379 = vector.broadcast %cst_134 : f32 to vector<1x32xf32>
    %380 = arith.mulf %378, %379 : vector<1x32xf32>
    %381 = arith.mulf %376, %376 : vector<8x32xf32>
    %cst_135 = arith.constant dense<0.000000e+00> : vector<32xf32>
    %382 = vector.multi_reduction <add>, %381, %cst_135 [0] : vector<8x32xf32> to vector<32xf32>
    %383 = vector.shape_cast %382 : vector<32xf32> to vector<1x32xf32>
    %cst_136 = arith.constant 1.250000e-01 : f32
    %384 = vector.broadcast %cst_136 : f32 to vector<1x32xf32>
    %385 = arith.mulf %383, %384 : vector<1x32xf32>
    %386 = arith.mulf %380, %380 : vector<1x32xf32>
    %387 = arith.subf %385, %386 : vector<1x32xf32>
    %cst_137 = arith.constant 0.000000e+00 : f32
    %388 = vector.broadcast %cst_137 : f32 to vector<1x32xf32>
    %389 = arith.maximumf %387, %388 : vector<1x32xf32>
    %cst_138 = arith.constant 9.99999974E-6 : f32
    %390 = vector.broadcast %cst_138 : f32 to vector<1x32xf32>
    %391 = arith.addf %389, %390 : vector<1x32xf32>
    %392 = math.rsqrt %391 : vector<1x32xf32>
    %393 = arith.mulf %370, %392 : vector<1x32xf32>
    %394 = arith.mulf %380, %393 : vector<1x32xf32>
    %395 = arith.subf %372, %394 : vector<1x32xf32>
    %396 = vector.broadcast %393 : vector<1x32xf32> to vector<8x32xf32>
    %397 = arith.mulf %376, %396 : vector<8x32xf32>
    %398 = vector.broadcast %395 : vector<1x32xf32> to vector<8x32xf32>
    %399 = arith.addf %397, %398 : vector<8x32xf32>
    %c0_139 = arith.constant 0 : index
    %c0_140 = arith.constant 0 : index
    %400 = vector.load %arg9[%c0_139, %c0_140] : memref<8x32xf32, #tpu.memory_space<vmem>>, vector<8x32xf32>
    tpu.vector_store %arg9[%c0_139, %c0_140], %399 {strides = array<i32>} : memref<8x32xf32, #tpu.memory_space<vmem>>, vector<8x32xf32>,
    return
  }
}

</mosaic_0001>

<llo_original>
// kernel: conv_input_model.1
$region0: #{conv_input_model.1}
  #allocation0 [shape = 'u32[]', space=smem, size = 0x4, offset = 0x4, fixed_abs, tag = 'smem constant byte address 0x4 - core index']
  #allocation1 [shape = 'u32[144,128]{1,0:T(1,128)}', space=vmem, size = 0x12000, scoped, tag = 'internal scratch']
  %s0 = inlined_call_operand.vmem [shape: f32[512,32], index: 0, kind: input, shape index: {}]
  %s1 = inlined_call_operand.vmem [shape: bf16[9,64,256], index: 1, kind: input, shape index: {}]
  %s2 = inlined_call_operand.vmem [shape: bf16[9,16,64], index: 2, kind: input, shape index: {}]
  %s3 = inlined_call_operand.vmem [shape: bf16[9,4,16], index: 3, kind: input, shape index: {}]
  %s4 = inlined_call_operand.vmem [shape: bf16[32,32], index: 4, kind: input, shape index: {}]
  %s5 = inlined_call_operand.vmem [shape: bf16[3,288,32], index: 5, kind: input, shape index: {}]
  %s6 = inlined_call_operand.vmem [shape: f32[4,1,32], index: 6, kind: input, shape index: {}]
  %s7 = inlined_call_operand.vmem [shape: f32[4,1,32], index: 7, kind: input, shape index: {}]
  %s8 = inlined_call_operand.vmem [shape: f32[4,1,32], index: 8, kind: input, shape index: {}]
  %s9 = inlined_call_operand.vmem [shape: f32[8,32], index: 9, kind: output, shape index: {}]
  %s10 = sld [smem:[#allocation0]]
  $region46: #{conv_input_model.1} parent=0
    _
  %s12 = ssub.s32 1, %s10
  %s13 = scalar_select 0, %s12, %s10
  // Predicated region
  $region2: #{conv_input_model.1} parent=0 // pred_check
    _
  $region3: #{conv_input_model.1} parent=0 // pred_check_branch
    %15 = sbr.rel (0) target = $region5
  $region4: #{conv_input_model.1} parent=0 // pred_region
    _
  $region5: #{conv_input_model.1} parent=0 // pred_fallthru
    _
  // Predicated region
  $region6: #{conv_input_model.1} parent=0 // pred_check
    _
  $region7: #{conv_input_model.1} parent=0 // pred_check_branch
    %17 = sbr.rel (0) target = $region9
  $region8: #{conv_input_model.1} parent=0 // pred_region
    _
  $region9: #{conv_input_model.1} parent=0 // pred_fallthru
    _
  // Predicated region
  $region10: #{conv_input_model.1} parent=0 // pred_check
    _
  $region11: #{conv_input_model.1} parent=0 // pred_check_branch
    %19 = sbr.rel (0) target = $region13
  $region12: #{conv_input_model.1} parent=0 // pred_region
    _
  $region13: #{conv_input_model.1} parent=0 // pred_fallthru
    _
  // Predicated region
  $region14: #{conv_input_model.1} parent=0 // pred_check
    _
  $region15: #{conv_input_model.1} parent=0 // pred_check_branch
    %21 = sbr.rel (0) target = $region17
  $region16: #{conv_input_model.1} parent=0 // pred_region
    _
  $region17: #{conv_input_model.1} parent=0 // pred_fallthru
    _
  // Predicated region
  $region18: #{conv_input_model.1} parent=0 // pred_check
    _
  $region19: #{conv_input_model.1} parent=0 // pred_check_branch
    %23 = sbr.rel (0) target = $region21
  $region20: #{conv_input_model.1} parent=0 // pred_region
    _
  $region21: #{conv_input_model.1} parent=0 // pred_fallthru
    _
  // Predicated region
  $region22: #{conv_input_model.1} parent=0 // pred_check
    _
  $region23: #{conv_input_model.1} parent=0 // pred_check_branch
    %25 = sbr.rel (0) target = $region25
  $region24: #{conv_input_model.1} parent=0 // pred_region
    _
  $region25: #{conv_input_model.1} parent=0 // pred_fallthru
    _
  // Predicated region
  $region26: #{conv_input_model.1} parent=0 // pred_check
    _
  $region27: #{conv_input_model.1} parent=0 // pred_check_branch
    %27 = sbr.rel (0) target = $region29
  $region28: #{conv_input_model.1} parent=0 // pred_region
    _
  $region29: #{conv_input_model.1} parent=0 // pred_fallthru
    _
  // Predicated region
  $region30: #{conv_input_model.1} parent=0 // pred_check
    _
  $region31: #{conv_input_model.1} parent=0 // pred_check_branch
    %29 = sbr.rel (0) target = $region33
  $region32: #{conv_input_model.1} parent=0 // pred_region
    _
  $region33: #{conv_input_model.1} parent=0 // pred_fallthru
    _
  // Predicated region
  $region34: #{conv_input_model.1} parent=0 // pred_check
    _
  $region35: #{conv_input_model.1} parent=0 // pred_check_branch
    %31 = sbr.rel (0) target = $region37
  $region36: #{conv_input_model.1} parent=0 // pred_region
    _
  $region37: #{conv_input_model.1} parent=0 // pred_fallthru
    _
  %v32 = vld [vmem:[%s0] sm:$0xff]
  %v33 = vld [vmem:[%s0 + $0x8] sm:$0xff]
  %v34 = vld [vmem:[%s0 + $0x10] sm:$0xff]
  %v35 = vld [vmem:[%s0 + $0x18] sm:$0xff]
  %v36 = vld [vmem:[%s0 + $0x20] sm:$0xff]
  %v37 = vld [vmem:[%s0 + $0x28] sm:$0xff]
  %v38 = vld [vmem:[%s0 + $0x30] sm:$0xff]
  %v39 = vld [vmem:[%s0 + $0x38] sm:$0xff]
  %v40 = vld [vmem:[%s0 + $0x40] sm:$0xff]
  %v41 = vld [vmem:[%s0 + $0x48] sm:$0xff]
  %v42 = vld [vmem:[%s0 + $0x50] sm:$0xff]
  %v43 = vld [vmem:[%s0 + $0x58] sm:$0xff]
  %v44 = vld [vmem:[%s0 + $0x60] sm:$0xff]
  %v45 = vld [vmem:[%s0 + $0x68] sm:$0xff]
  %v46 = vld [vmem:[%s0 + $0x70] sm:$0xff]
  %v47 = vld [vmem:[%s0 + $0x78] sm:$0xff]
  %v48 = vld [vmem:[%s0 + $0x80] sm:$0xff]
  %v49 = vld [vmem:[%s0 + $0x88] sm:$0xff]
  %v50 = vld [vmem:[%s0 + $0x90] sm:$0xff]
  %v51 = vld [vmem:[%s0 + $0x98] sm:$0xff]
  %v52 = vld [vmem:[%s0 + $0xa0] sm:$0xff]
  %v53 = vld [vmem:[%s0 + $0xa8] sm:$0xff]
  %v54 = vld [vmem:[%s0 + $0xb0] sm:$0xff]
  %v55 = vld [vmem:[%s0 + $0xb8] sm:$0xff]
  %v56 = vld [vmem:[%s0 + $0xc0] sm:$0xff]
  %v57 = vld [vmem:[%s0 + $0xc8] sm:$0xff]
  %v58 = vld [vmem:[%s0 + $0xd0] sm:$0xff]
  %v59 = vld [vmem:[%s0 + $0xd8] sm:$0xff]
  %v60 = vld [vmem:[%s0 + $0xe0] sm:$0xff]
  %v61 = vld [vmem:[%s0 + $0xe8] sm:$0xff]
  %v62 = vld [vmem:[%s0 + $0xf0] sm:$0xff]
  %v63 = vld [vmem:[%s0 + $0xf8] sm:$0xff]
  %v64 = vld [vmem:[%s0 + $0x100] sm:$0xff]
  %v65 = vld [vmem:[%s0 + $0x108] sm:$0xff]
  %v66 = vld [vmem:[%s0 + $0x110] sm:$0xff]
  %v67 = vld [vmem:[%s0 + $0x118] sm:$0xff]
  %v68 = vld [vmem:[%s0 + $0x120] sm:$0xff]
  %v69 = vld [vmem:[%s0 + $0x128] sm:$0xff]
  %v70 = vld [vmem:[%s0 + $0x130] sm:$0xff]
  %v71 = vld [vmem:[%s0 + $0x138] sm:$0xff]
  %v72 = vld [vmem:[%s0 + $0x140] sm:$0xff]
  %v73 = vld [vmem:[%s0 + $0x148] sm:$0xff]
  %v74 = vld [vmem:[%s0 + $0x150] sm:$0xff]
  %v75 = vld [vmem:[%s0 + $0x158] sm:$0xff]
  %v76 = vld [vmem:[%s0 + $0x160] sm:$0xff]
  %v77 = vld [vmem:[%s0 + $0x168] sm:$0xff]
  %v78 = vld [vmem:[%s0 + $0x170] sm:$0xff]
  %v79 = vld [vmem:[%s0 + $0x178] sm:$0xff]
  %v80 = vld [vmem:[%s0 + $0x180] sm:$0xff]
  %v81 = vld [vmem:[%s0 + $0x188] sm:$0xff]
  %v82 = vld [vmem:[%s0 + $0x190] sm:$0xff]
  %v83 = vld [vmem:[%s0 + $0x198] sm:$0xff]
  %v84 = vld [vmem:[%s0 + $0x1a0] sm:$0xff]
  %v85 = vld [vmem:[%s0 + $0x1a8] sm:$0xff]
  %v86 = vld [vmem:[%s0 + $0x1b0] sm:$0xff]
  %v87 = vld [vmem:[%s0 + $0x1b8] sm:$0xff]
  %v88 = vld [vmem:[%s0 + $0x1c0] sm:$0xff]
  %v89 = vld [vmem:[%s0 + $0x1c8] sm:$0xff]
  %v90 = vld [vmem:[%s0 + $0x1d0] sm:$0xff]
  %v91 = vld [vmem:[%s0 + $0x1d8] sm:$0xff]
  %v92 = vld [vmem:[%s0 + $0x1e0] sm:$0xff]
  %v93 = vld [vmem:[%s0 + $0x1e8] sm:$0xff]
  %v94 = vld [vmem:[%s0 + $0x1f0] sm:$0xff]
  %v95 = vld [vmem:[%s0 + $0x1f8] sm:$0xff]
  %v96 = vld [vmem:[%s4] sm:$0xf]
  %v97 = vld [vmem:[%s4 + $0x4] sm:$0xf]
  %v98 = vld [vmem:[%s4 + $0x8] sm:$0xf]
  %v99 = vld [vmem:[%s4 + $0xc] sm:$0xf]
  %v100 = vunpack.c.l.bf16 %v96
  %v101 = vunpack.c.l.bf16 %v97
  %v102 = vunpack.c.l.bf16 %v98
  %v103 = vunpack.c.l.bf16 %v99
  %v104 = vld [vmem:[%s6] sm:$0x1]
  %v105 = vld [vmem:[%s7] sm:$0x1]
  %v106 = vld [vmem:[%s8] sm:$0x1]
  %v108 = vlaneseq
  %v109 = vshrl.u32 %v108, 7
  %v110 = vsub.s32 0, %v109
  %v111 = vrot.slane %v104, %v110
  %vm113 = vcmask 261120
  %v115 = vsel %vm113, %v32, 0
  %v118 = vsel %vm113, %v33, 0
  %v121 = vsel %vm113, %v34, 0
  %v124 = vsel %vm113, %v35, 0
  %v127 = vsel %vm113, %v36, 0
  %v130 = vsel %vm113, %v37, 0
  %v133 = vsel %vm113, %v38, 0
  %v136 = vsel %vm113, %v39, 0
  %v139 = vsel %vm113, %v40, 0
  %v142 = vsel %vm113, %v41, 0
  %v145 = vsel %vm113, %v42, 0
  %v148 = vsel %vm113, %v43, 0
  %v151 = vsel %vm113, %v44, 0
  %v154 = vsel %vm113, %v45, 0
  %v157 = vsel %vm113, %v46, 0
  %v160 = vsel %vm113, %v47, 0
  %v163 = vsel %vm113, %v48, 0
  %v166 = vsel %vm113, %v49, 0
  %v169 = vsel %vm113, %v50, 0
  %v172 = vsel %vm113, %v51, 0
  %v175 = vsel %vm113, %v52, 0
  %v178 = vsel %vm113, %v53, 0
  %v181 = vsel %vm113, %v54, 0
  %v184 = vsel %vm113, %v55, 0
  %v187 = vsel %vm113, %v56, 0
  %v190 = vsel %vm113, %v57, 0
  %v193 = vsel %vm113, %v58, 0
  %v196 = vsel %vm113, %v59, 0
  %v199 = vsel %vm113, %v60, 0
  %v202 = vsel %vm113, %v61, 0
  %v205 = vsel %vm113, %v62, 0
  %v208 = vsel %vm113, %v63, 0
  %v211 = vsel %vm113, %v64, 0
  %v214 = vsel %vm113, %v65, 0
  %v217 = vsel %vm113, %v66, 0
  %v220 = vsel %vm113, %v67, 0
  %v223 = vsel %vm113, %v68, 0
  %v226 = vsel %vm113, %v69, 0
  %v229 = vsel %vm113, %v70, 0
  %v232 = vsel %vm113, %v71, 0
  %v235 = vsel %vm113, %v72, 0
  %v238 = vsel %vm113, %v73, 0
  %v241 = vsel %vm113, %v74, 0
  %v244 = vsel %vm113, %v75, 0
  %v247 = vsel %vm113, %v76, 0
  %v250 = vsel %vm113, %v77, 0
  %v253 = vsel %vm113, %v78, 0
  %v256 = vsel %vm113, %v79, 0
  %v259 = vsel %vm113, %v80, 0
  %v262 = vsel %vm113, %v81, 0
  %v265 = vsel %vm113, %v82, 0
  %v268 = vsel %vm113, %v83, 0
  %v271 = vsel %vm113, %v84, 0
  %v274 = vsel %vm113, %v85, 0
  %v277 = vsel %vm113, %v86, 0
  %v280 = vsel %vm113, %v87, 0
  %v283 = vsel %vm113, %v88, 0
  %v286 = vsel %vm113, %v89, 0
  %v289 = vsel %vm113, %v90, 0
  %v292 = vsel %vm113, %v91, 0
  %v295 = vsel %vm113, %v92, 0
  %v298 = vsel %vm113, %v93, 0
  %v301 = vsel %vm113, %v94, 0
  %v304 = vsel %vm113, %v95, 0
  %306 = vmatprep.subr.mxu0 0.0
  %307 = vmatpush1.msra.mxu0 %v100
  %308 = vmatprep.subr.mxu0 0.0
  %309 = vmatpush1.msra.mxu0 %v101
  %310 = vmatprep.subr.mxu0 0.0
  %311 = vmatpush1.msra.mxu0 %v102
  %312 = vmatprep.subr.mxu0 0.0
  %313 = vmatpush1.msra.mxu0 %v103
  %314 = vmatprep.subr.mxu0 0.0
  %315 = vmatpush1.msra.mxu0 0.0
  %316 = vmatprep.subr.mxu0 0.0
  %317 = vmatpush1.msra.mxu0 0.0
  %318 = vmatprep.subr.mxu0 0.0
  %319 = vmatpush1.msra.mxu0 0.0
  %320 = vmatprep.subr.mxu0 0.0
  %321 = vmatpush1.msra.mxu0 0.0
  %322 = vmatprep.subr.mxu0 0.0
  %323 = vmatpush1.msra.mxu0 0.0
  %324 = vmatprep.subr.mxu0 0.0
  %325 = vmatpush1.msra.mxu0 0.0
  %326 = vmatprep.subr.mxu0 0.0
  %327 = vmatpush1.msra.mxu0 0.0
  %328 = vmatprep.subr.mxu0 0.0
  %329 = vmatpush1.msra.mxu0 0.0
  %330 = vmatprep.subr.mxu0 0.0
  %331 = vmatpush1.msra.mxu0 0.0
  %332 = vmatprep.subr.mxu0 0.0
  %333 = vmatpush1.msra.mxu0 0.0
  %334 = vmatprep.subr.mxu0 0.0
  %335 = vmatpush1.msra.mxu0 0.0
  %336 = vmatprep.subr.mxu0 0.0
  %337 = vmatpush1.msra.mxu0 0.0
  %338 = vmatprep.subr.mxu0 0.0
  %339 = vmatpush1.msra.mxu0 0.0
  %340 = vmatprep.subr.mxu0 0.0
  %341 = vmatpush1.msra.mxu0 0.0
  %342 = vmatprep.subr.mxu0 0.0
  %343 = vmatpush1.msra.mxu0 0.0
  %344 = vmatprep.subr.mxu0 0.0
  %345 = vmatpush1.msra.mxu0 0.0
  %346 = vmatprep.subr.mxu0 0.0
  %347 = vmatpush1.msra.mxu0 0.0
  %348 = vmatprep.subr.mxu0 0.0
  %349 = vmatpush1.msra.mxu0 0.0
  %350 = vmatprep.subr.mxu0 0.0
  %351 = vmatpush1.msra.mxu0 0.0
  %352 = vmatprep.subr.mxu0 0.0
  %353 = vmatpush1.msra.mxu0 0.0
  %354 = vmatprep.subr.mxu0 0.0
  %355 = vmatpush1.msra.mxu0 0.0
  %356 = vmatprep.subr.mxu0 0.0
  %357 = vmatpush1.msra.mxu0 0.0
  %358 = vmatprep.subr.mxu0 0.0
  %359 = vmatpush1.msra.mxu0 0.0
  %360 = vmatprep.subr.mxu0 0.0
  %361 = vmatpush1.msra.mxu0 0.0
  %362 = vmatprep.subr.mxu0 0.0
  %363 = vmatpush1.msra.mxu0 0.0
  %364 = vmatprep.subr.mxu0 0.0
  %365 = vmatpush1.msra.mxu0 0.0
  %366 = vmatprep.subr.mxu0 0.0
  %367 = vmatpush1.msra.mxu0 0.0
  %368 = vmatprep.subr.mxu0 0.0
  %369 = vmatpush1.msra.mxu0 0.0
  %370 = vmatprep.mubr.f32.mxu0 0.0
  %371 = vmatmul.mubr.f32.gmra.mrb[0].mxu0 %v115
  %v372 = vpop.f32.mrb[0].mxu0
  %v373 = vadd.f32 %v111, %v372
  %v374 = vpop.f32.mrb[0].mxu0
  %375 = vmatprep.mubr.f32.mxu0 0.0
  %376 = vmatmul.mubr.f32.gmra.mrb[0].mxu0 %v118
  %v377 = vpop.f32.mrb[0].mxu0
  %v378 = vadd.f32 %v111, %v377
  %v379 = vpop.f32.mrb[0].mxu0
  %380 = vmatprep.mubr.f32.mxu0 0.0
  %381 = vmatmul.mubr.f32.gmra.mrb[0].mxu0 %v121
  %v382 = vpop.f32.mrb[0].mxu0
  %v383 = vadd.f32 %v111, %v382
  %v384 = vpop.f32.mrb[0].mxu0
  %385 = vmatprep.mubr.f32.mxu0 0.0
  %386 = vmatmul.mubr.f32.gmra.mrb[0].mxu0 %v124
  %v387 = vpop.f32.mrb[0].mxu0
  %v388 = vadd.f32 %v111, %v387
  %v389 = vpop.f32.mrb[0].mxu0
  %390 = vmatprep.mubr.f32.mxu0 0.0
  %391 = vmatmul.mubr.f32.gmra.mrb[0].mxu0 %v127
  %v392 = vpop.f32.mrb[0].mxu0
  %v393 = vadd.f32 %v111, %v392
  %v394 = vpop.f32.mrb[0].mxu0
  %395 = vmatprep.mubr.f32.mxu0 0.0
  %396 = vmatmul.mubr.f32.gmra.mrb[0].mxu0 %v130
  %v397 = vpop.f32.mrb[0].mxu0
  %v398 = vadd.f32 %v111, %v397
  %v399 = vpop.f32.mrb[0].mxu0
  %400 = vmatprep.mubr.f32.mxu0 0.0
  %401 = vmatmul.mubr.f32.gmra.mrb[0].mxu0 %v133
  %v402 = vpop.f32.mrb[0].mxu0
  %v403 = vadd.f32 %v111, %v402
  %v404 = vpop.f32.mrb[0].mxu0
  %405 = vmatprep.mubr.f32.mxu0 0.0
  %406 = vmatmul.mubr.f32.gmra.mrb[0].mxu0 %v136
  %v407 = vpop.f32.mrb[0].mxu0
  %v408 = vadd.f32 %v111, %v407
  %v409 = vpop.f32.mrb[0].mxu0
  %410 = vmatprep.mubr.f32.mxu0 0.0
  %411 = vmatmul.mubr.f32.gmra.mrb[0].mxu0 %v139
  %v412 = vpop.f32.mrb[0].mxu0
  %v413 = vadd.f32 %v111, %v412
  %v414 = vpop.f32.mrb[0].mxu0
  %415 = vmatprep.mubr.f32.mxu0 0.0
  %416 = vmatmul.mubr.f32.gmra.mrb[0].mxu0 %v142
  %v417 = vpop.f32.mrb[0].mxu0
  %v418 = vadd.f32 %v111, %v417
  %v419 = vpop.f32.mrb[0].mxu0
  %420 = vmatprep.mubr.f32.mxu0 0.0
  %421 = vmatmul.mubr.f32.gmra.mrb[0].mxu0 %v145
  %v422 = vpop.f32.mrb[0].mxu0
  %v423 = vadd.f32 %v111, %v422
  %v424 = vpop.f32.mrb[0].mxu0
  %425 = vmatprep.mubr.f32.mxu0 0.0
  %426 = vmatmul.mubr.f32.gmra.mrb[0].mxu0 %v148
  %v427 = vpop.f32.mrb[0].mxu0
  %v428 = vadd.f32 %v111, %v427
  %v429 = vpop.f32.mrb[0].mxu0
  %430 = vmatprep.mubr.f32.mxu0 0.0
  %431 = vmatmul.mubr.f32.gmra.mrb[0].mxu0 %v151
  %v432 = vpop.f32.mrb[0].mxu0
  %v433 = vadd.f32 %v111, %v432
  %v434 = vpop.f32.mrb[0].mxu0
  %435 = vmatprep.mubr.f32.mxu0 0.0
  %436 = vmatmul.mubr.f32.gmra.mrb[0].mxu0 %v154
  %v437 = vpop.f32.mrb[0].mxu0
  %v438 = vadd.f32 %v111, %v437
  %v439 = vpop.f32.mrb[0].mxu0
  %440 = vmatprep.mubr.f32.mxu0 0.0
  %441 = vmatmul.mubr.f32.gmra.mrb[0].mxu0 %v157
  %v442 = vpop.f32.mrb[0].mxu0
  %v443 = vadd.f32 %v111, %v442
  %v444 = vpop.f32.mrb[0].mxu0
  %445 = vmatprep.mubr.f32.mxu0 0.0
  %446 = vmatmul.mubr.f32.gmra.mrb[0].mxu0 %v160
  %v447 = vpop.f32.mrb[0].mxu0
  %v448 = vadd.f32 %v111, %v447
  %v449 = vpop.f32.mrb[0].mxu0
  %450 = vmatprep.mubr.f32.mxu0 0.0
  %451 = vmatmul.mubr.f32.gmra.mrb[0].mxu0 %v163
  %v452 = vpop.f32.mrb[0].mxu0
  %v453 = vadd.f32 %v111, %v452
  %v454 = vpop.f32.mrb[0].mxu0
  %455 = vmatprep.mubr.f32.mxu0 0.0
  %456 = vmatmul.mubr.f32.gmra.mrb[0].mxu0 %v166
  %v457 = vpop.f32.mrb[0].mxu0
  %v458 = vadd.f32 %v111, %v457
  %v459 = vpop.f32.mrb[0].mxu0
  %460 = vmatprep.mubr.f32.mxu0 0.0
  %461 = vmatmul.mubr.f32.gmra.mrb[0].mxu0 %v169
  %v462 = vpop.f32.mrb[0].mxu0
  %v463 = vadd.f32 %v111, %v462
  %v464 = vpop.f32.mrb[0].mxu0
  %465 = vmatprep.mubr.f32.mxu0 0.0
  %466 = vmatmul.mubr.f32.gmra.mrb[0].mxu0 %v172
  %v467 = vpop.f32.mrb[0].mxu0
  %v468 = vadd.f32 %v111, %v467
  %v469 = vpop.f32.mrb[0].mxu0
  %470 = vmatprep.mubr.f32.mxu0 0.0
  %471 = vmatmul.mubr.f32.gmra.mrb[0].mxu0 %v175
  %v472 = vpop.f32.mrb[0].mxu0
  %v473 = vadd.f32 %v111, %v472
  %v474 = vpop.f32.mrb[0].mxu0
  %475 = vmatprep.mubr.f32.mxu0 0.0
  %476 = vmatmul.mubr.f32.gmra.mrb[0].mxu0 %v178
  %v477 = vpop.f32.mrb[0].mxu0
  %v478 = vadd.f32 %v111, %v477
  %v479 = vpop.f32.mrb[0].mxu0
  %480 = vmatprep.mubr.f32.mxu0 0.0
  %481 = vmatmul.mubr.f32.gmra.mrb[0].mxu0 %v181
  %v482 = vpop.f32.mrb[0].mxu0
  %v483 = vadd.f32 %v111, %v482
  %v484 = vpop.f32.mrb[0].mxu0
  %485 = vmatprep.mubr.f32.mxu0 0.0
  %486 = vmatmul.mubr.f32.gmra.mrb[0].mxu0 %v184
  %v487 = vpop.f32.mrb[0].mxu0
  %v488 = vadd.f32 %v111, %v487
  %v489 = vpop.f32.mrb[0].mxu0
  %490 = vmatprep.mubr.f32.mxu0 0.0
  %491 = vmatmul.mubr.f32.gmra.mrb[0].mxu0 %v187
  %v492 = vpop.f32.mrb[0].mxu0
  %v493 = vadd.f32 %v111, %v492
  %v494 = vpop.f32.mrb[0].mxu0
  %495 = vmatprep.mubr.f32.mxu0 0.0
  %496 = vmatmul.mubr.f32.gmra.mrb[0].mxu0 %v190
  %v497 = vpop.f32.mrb[0].mxu0
  %v498 = vadd.f32 %v111, %v497
  %v499 = vpop.f32.mrb[0].mxu0
  %500 = vmatprep.mubr.f32.mxu0 0.0
  %501 = vmatmul.mubr.f32.gmra.mrb[0].mxu0 %v193
  %v502 = vpop.f32.mrb[0].mxu0
  %v503 = vadd.f32 %v111, %v502
  %v504 = vpop.f32.mrb[0].mxu0
  %505 = vmatprep.mubr.f32.mxu0 0.0
  %506 = vmatmul.mubr.f32.gmra.mrb[0].mxu0 %v196
  %v507 = vpop.f32.mrb[0].mxu0
  %v508 = vadd.f32 %v111, %v507
  %v509 = vpop.f32.mrb[0].mxu0
  %510 = vmatprep.mubr.f32.mxu0 0.0
  %511 = vmatmul.mubr.f32.gmra.mrb[0].mxu0 %v199
  %v512 = vpop.f32.mrb[0].mxu0
  %v513 = vadd.f32 %v111, %v512
  %v514 = vpop.f32.mrb[0].mxu0
  %515 = vmatprep.mubr.f32.mxu0 0.0
  %516 = vmatmul.mubr.f32.gmra.mrb[0].mxu0 %v202
  %v517 = vpop.f32.mrb[0].mxu0
  %v518 = vadd.f32 %v111, %v517
  %v519 = vpop.f32.mrb[0].mxu0
  %520 = vmatprep.mubr.f32.mxu0 0.0
  %521 = vmatmul.mubr.f32.gmra.mrb[0].mxu0 %v205
  %v522 = vpop.f32.mrb[0].mxu0
  %v523 = vadd.f32 %v111, %v522
  %v524 = vpop.f32.mrb[0].mxu0
  %525 = vmatprep.mubr.f32.mxu0 0.0
  %526 = vmatmul.mubr.f32.gmra.mrb[0].mxu0 %v208
  %v527 = vpop.f32.mrb[0].mxu0
  %v528 = vadd.f32 %v111, %v527
  %v529 = vpop.f32.mrb[0].mxu0
  %530 = vmatprep.mubr.f32.mxu0 0.0
  %531 = vmatmul.mubr.f32.gmra.mrb[0].mxu0 %v211
  %v532 = vpop.f32.mrb[0].mxu0
  %v533 = vadd.f32 %v111, %v532
  %v534 = vpop.f32.mrb[0].mxu0
  %535 = vmatprep.mubr.f32.mxu0 0.0
  %536 = vmatmul.mubr.f32.gmra.mrb[0].mxu0 %v214
  %v537 = vpop.f32.mrb[0].mxu0
  %v538 = vadd.f32 %v111, %v537
  %v539 = vpop.f32.mrb[0].mxu0
  %540 = vmatprep.mubr.f32.mxu0 0.0
  %541 = vmatmul.mubr.f32.gmra.mrb[0].mxu0 %v217
  %v542 = vpop.f32.mrb[0].mxu0
  %v543 = vadd.f32 %v111, %v542
  %v544 = vpop.f32.mrb[0].mxu0
  %545 = vmatprep.mubr.f32.mxu0 0.0
  %546 = vmatmul.mubr.f32.gmra.mrb[0].mxu0 %v220
  %v547 = vpop.f32.mrb[0].mxu0
  %v548 = vadd.f32 %v111, %v547
  %v549 = vpop.f32.mrb[0].mxu0
  %550 = vmatprep.mubr.f32.mxu0 0.0
  %551 = vmatmul.mubr.f32.gmra.mrb[0].mxu0 %v223
  %v552 = vpop.f32.mrb[0].mxu0
  %v553 = vadd.f32 %v111, %v552
  %v554 = vpop.f32.mrb[0].mxu0
  %555 = vmatprep.mubr.f32.mxu0 0.0
  %556 = vmatmul.mubr.f32.gmra.mrb[0].mxu0 %v226
  %v557 = vpop.f32.mrb[0].mxu0
  %v558 = vadd.f32 %v111, %v557
  %v559 = vpop.f32.mrb[0].mxu0
  %560 = vmatprep.mubr.f32.mxu0 0.0
  %561 = vmatmul.mubr.f32.gmra.mrb[0].mxu0 %v229
  %v562 = vpop.f32.mrb[0].mxu0
  %v563 = vadd.f32 %v111, %v562
  %v564 = vpop.f32.mrb[0].mxu0
  %565 = vmatprep.mubr.f32.mxu0 0.0
  %566 = vmatmul.mubr.f32.gmra.mrb[0].mxu0 %v232
  %v567 = vpop.f32.mrb[0].mxu0
  %v568 = vadd.f32 %v111, %v567
  %v569 = vpop.f32.mrb[0].mxu0
  %570 = vmatprep.mubr.f32.mxu0 0.0
  %571 = vmatmul.mubr.f32.gmra.mrb[0].mxu0 %v235
  %v572 = vpop.f32.mrb[0].mxu0
  %v573 = vadd.f32 %v111, %v572
  %v574 = vpop.f32.mrb[0].mxu0
  %575 = vmatprep.mubr.f32.mxu0 0.0
  %576 = vmatmul.mubr.f32.gmra.mrb[0].mxu0 %v238
  %v577 = vpop.f32.mrb[0].mxu0
  %v578 = vadd.f32 %v111, %v577
  %v579 = vpop.f32.mrb[0].mxu0
  %580 = vmatprep.mubr.f32.mxu0 0.0
  %581 = vmatmul.mubr.f32.gmra.mrb[0].mxu0 %v241
  %v582 = vpop.f32.mrb[0].mxu0
  %v583 = vadd.f32 %v111, %v582
  %v584 = vpop.f32.mrb[0].mxu0
  %585 = vmatprep.mubr.f32.mxu0 0.0
  %586 = vmatmul.mubr.f32.gmra.mrb[0].mxu0 %v244
  %v587 = vpop.f32.mrb[0].mxu0
  %v588 = vadd.f32 %v111, %v587
  %v589 = vpop.f32.mrb[0].mxu0
  %590 = vmatprep.mubr.f32.mxu0 0.0
  %591 = vmatmul.mubr.f32.gmra.mrb[0].mxu0 %v247
  %v592 = vpop.f32.mrb[0].mxu0
  %v593 = vadd.f32 %v111, %v592
  %v594 = vpop.f32.mrb[0].mxu0
  %595 = vmatprep.mubr.f32.mxu0 0.0
  %596 = vmatmul.mubr.f32.gmra.mrb[0].mxu0 %v250
  %v597 = vpop.f32.mrb[0].mxu0
  %v598 = vadd.f32 %v111, %v597
  %v599 = vpop.f32.mrb[0].mxu0
  %600 = vmatprep.mubr.f32.mxu0 0.0
  %601 = vmatmul.mubr.f32.gmra.mrb[0].mxu0 %v253
  %v602 = vpop.f32.mrb[0].mxu0
  %v603 = vadd.f32 %v111, %v602
  %v604 = vpop.f32.mrb[0].mxu0
  %605 = vmatprep.mubr.f32.mxu0 0.0
  %606 = vmatmul.mubr.f32.gmra.mrb[0].mxu0 %v256
  %v607 = vpop.f32.mrb[0].mxu0
  %v608 = vadd.f32 %v111, %v607
  %v609 = vpop.f32.mrb[0].mxu0
  %610 = vmatprep.mubr.f32.mxu0 0.0
  %611 = vmatmul.mubr.f32.gmra.mrb[0].mxu0 %v259
  %v612 = vpop.f32.mrb[0].mxu0
  %v613 = vadd.f32 %v111, %v612
  %v614 = vpop.f32.mrb[0].mxu0
  %615 = vmatprep.mubr.f32.mxu0 0.0
  %616 = vmatmul.mubr.f32.gmra.mrb[0].mxu0 %v262
  %v617 = vpop.f32.mrb[0].mxu0
  %v618 = vadd.f32 %v111, %v617
  %v619 = vpop.f32.mrb[0].mxu0
  %620 = vmatprep.mubr.f32.mxu0 0.0
  %621 = vmatmul.mubr.f32.gmra.mrb[0].mxu0 %v265
  %v622 = vpop.f32.mrb[0].mxu0
  %v623 = vadd.f32 %v111, %v622
  %v624 = vpop.f32.mrb[0].mxu0
  %625 = vmatprep.mubr.f32.mxu0 0.0
  %626 = vmatmul.mubr.f32.gmra.mrb[0].mxu0 %v268
  %v627 = vpop.f32.mrb[0].mxu0
  %v628 = vadd.f32 %v111, %v627
  %v629 = vpop.f32.mrb[0].mxu0
  %630 = vmatprep.mubr.f32.mxu0 0.0
  %631 = vmatmul.mubr.f32.gmra.mrb[0].mxu0 %v271
  %v632 = vpop.f32.mrb[0].mxu0
  %v633 = vadd.f32 %v111, %v632
  %v634 = vpop.f32.mrb[0].mxu0
  %635 = vmatprep.mubr.f32.mxu0 0.0
  %636 = vmatmul.mubr.f32.gmra.mrb[0].mxu0 %v274
  %v637 = vpop.f32.mrb[0].mxu0
  %v638 = vadd.f32 %v111, %v637
  %v639 = vpop.f32.mrb[0].mxu0
  %640 = vmatprep.mubr.f32.mxu0 0.0
  %641 = vmatmul.mubr.f32.gmra.mrb[0].mxu0 %v277
  %v642 = vpop.f32.mrb[0].mxu0
  %v643 = vadd.f32 %v111, %v642
  %v644 = vpop.f32.mrb[0].mxu0
  %645 = vmatprep.mubr.f32.mxu0 0.0
  %646 = vmatmul.mubr.f32.gmra.mrb[0].mxu0 %v280
  %v647 = vpop.f32.mrb[0].mxu0
  %v648 = vadd.f32 %v111, %v647
  %v649 = vpop.f32.mrb[0].mxu0
  %650 = vmatprep.mubr.f32.mxu0 0.0
  %651 = vmatmul.mubr.f32.gmra.mrb[0].mxu0 %v283
  %v652 = vpop.f32.mrb[0].mxu0
  %v653 = vadd.f32 %v111, %v652
  %v654 = vpop.f32.mrb[0].mxu0
  %655 = vmatprep.mubr.f32.mxu0 0.0
  %656 = vmatmul.mubr.f32.gmra.mrb[0].mxu0 %v286
  %v657 = vpop.f32.mrb[0].mxu0
  %v658 = vadd.f32 %v111, %v657
  %v659 = vpop.f32.mrb[0].mxu0
  %660 = vmatprep.mubr.f32.mxu0 0.0
  %661 = vmatmul.mubr.f32.gmra.mrb[0].mxu0 %v289
  %v662 = vpop.f32.mrb[0].mxu0
  %v663 = vadd.f32 %v111, %v662
  %v664 = vpop.f32.mrb[0].mxu0
  %665 = vmatprep.mubr.f32.mxu0 0.0
  %666 = vmatmul.mubr.f32.gmra.mrb[0].mxu0 %v292
  %v667 = vpop.f32.mrb[0].mxu0
  %v668 = vadd.f32 %v111, %v667
  %v669 = vpop.f32.mrb[0].mxu0
  %670 = vmatprep.mubr.f32.mxu0 0.0
  %671 = vmatmul.mubr.f32.gmra.mrb[0].mxu0 %v295
  %v672 = vpop.f32.mrb[0].mxu0
  %v673 = vadd.f32 %v111, %v672
  %v674 = vpop.f32.mrb[0].mxu0
  %675 = vmatprep.mubr.f32.mxu0 0.0
  %676 = vmatmul.mubr.f32.gmra.mrb[0].mxu0 %v298
  %v677 = vpop.f32.mrb[0].mxu0
  %v678 = vadd.f32 %v111, %v677
  %v679 = vpop.f32.mrb[0].mxu0
  %680 = vmatprep.mubr.f32.mxu0 0.0
  %681 = vmatmul.mubr.f32.gmra.mrb[0].mxu0 %v301
  %v682 = vpop.f32.mrb[0].mxu0
  %v683 = vadd.f32 %v111, %v682
  %v684 = vpop.f32.mrb[0].mxu0
  %685 = vmatprep.mubr.f32.mxu0 0.0
  %686 = vmatmul.mubr.f32.gmra.mrb[0].mxu0 %v304
  %v687 = vpop.f32.mrb[0].mxu0
  %v688 = vadd.f32 %v111, %v687
  %v689 = vpop.f32.mrb[0].mxu0
  %690 = vdwg.mxu0
  %v691 = vmax.f32 %v373, 0.0
  %v692 = vmax.f32 %v378, 0.0
  %v693 = vmax.f32 %v383, 0.0
  %v694 = vmax.f32 %v388, 0.0
  %v695 = vmax.f32 %v393, 0.0
  %v696 = vmax.f32 %v398, 0.0
  %v697 = vmax.f32 %v403, 0.0
  %v698 = vmax.f32 %v408, 0.0
  %v699 = vmax.f32 %v413, 0.0
  %v700 = vmax.f32 %v418, 0.0
  %v701 = vmax.f32 %v423, 0.0
  %v702 = vmax.f32 %v428, 0.0
  %v703 = vmax.f32 %v433, 0.0
  %v704 = vmax.f32 %v438, 0.0
  %v705 = vmax.f32 %v443, 0.0
  %v706 = vmax.f32 %v448, 0.0
  %v707 = vmax.f32 %v453, 0.0
  %v708 = vmax.f32 %v458, 0.0
  %v709 = vmax.f32 %v463, 0.0
  %v710 = vmax.f32 %v468, 0.0
  %v711 = vmax.f32 %v473, 0.0
  %v712 = vmax.f32 %v478, 0.0
  %v713 = vmax.f32 %v483, 0.0
  %v714 = vmax.f32 %v488, 0.0
  %v715 = vmax.f32 %v493, 0.0
  %v716 = vmax.f32 %v498, 0.0
  %v717 = vmax.f32 %v503, 0.0
  %v718 = vmax.f32 %v508, 0.0
  %v719 = vmax.f32 %v513, 0.0
  %v720 = vmax.f32 %v518, 0.0
  %v721 = vmax.f32 %v523, 0.0
  %v722 = vmax.f32 %v528, 0.0
  %v723 = vmax.f32 %v533, 0.0
  %v724 = vmax.f32 %v538, 0.0
  %v725 = vmax.f32 %v543, 0.0
  %v726 = vmax.f32 %v548, 0.0
  %v727 = vmax.f32 %v553, 0.0
  %v728 = vmax.f32 %v558, 0.0
  %v729 = vmax.f32 %v563, 0.0
  %v730 = vmax.f32 %v568, 0.0
  %v731 = vmax.f32 %v573, 0.0
  %v732 = vmax.f32 %v578, 0.0
  %v733 = vmax.f32 %v583, 0.0
  %v734 = vmax.f32 %v588, 0.0
  %v735 = vmax.f32 %v593, 0.0
  %v736 = vmax.f32 %v598, 0.0
  %v737 = vmax.f32 %v603, 0.0
  %v738 = vmax.f32 %v608, 0.0
  %v739 = vmax.f32 %v613, 0.0
  %v740 = vmax.f32 %v618, 0.0
  %v741 = vmax.f32 %v623, 0.0
  %v742 = vmax.f32 %v628, 0.0
  %v743 = vmax.f32 %v633, 0.0
  %v744 = vmax.f32 %v638, 0.0
  %v745 = vmax.f32 %v643, 0.0
  %v746 = vmax.f32 %v648, 0.0
  %v747 = vmax.f32 %v653, 0.0
  %v748 = vmax.f32 %v658, 0.0
  %v749 = vmax.f32 %v663, 0.0
  %v750 = vmax.f32 %v668, 0.0
  %v751 = vmax.f32 %v673, 0.0
  %v752 = vmax.f32 %v678, 0.0
  %v753 = vmax.f32 %v683, 0.0
  %v754 = vmax.f32 %v688, 0.0
  %v755 = vsel %vm113, %v691, 0.0
  %v756 = vsel %vm113, %v692, 0.0
  %v757 = vadd.f32 %v755, %v756
  %v758 = vsel %vm113, %v693, 0.0
  %v759 = vadd.f32 %v757, %v758
  %v760 = vsel %vm113, %v694, 0.0
  %v761 = vadd.f32 %v759, %v760
  %v762 = vsel %vm113, %v695, 0.0
  %v763 = vadd.f32 %v761, %v762
  %v764 = vsel %vm113, %v696, 0.0
  %v765 = vadd.f32 %v763, %v764
  %v766 = vsel %vm113, %v697, 0.0
  %v767 = vadd.f32 %v765, %v766
  %v768 = vsel %vm113, %v698, 0.0
  %v769 = vadd.f32 %v767, %v768
  %v770 = vsel %vm113, %v699, 0.0
  %v771 = vadd.f32 %v769, %v770
  %v772 = vsel %vm113, %v700, 0.0
  %v773 = vadd.f32 %v771, %v772
  %v774 = vsel %vm113, %v701, 0.0
  %v775 = vadd.f32 %v773, %v774
  %v776 = vsel %vm113, %v702, 0.0
  %v777 = vadd.f32 %v775, %v776
  %v778 = vsel %vm113, %v703, 0.0
  %v779 = vadd.f32 %v777, %v778
  %v780 = vsel %vm113, %v704, 0.0
  %v781 = vadd.f32 %v779, %v780
  %v782 = vsel %vm113, %v705, 0.0
  %v783 = vadd.f32 %v781, %v782
  %v784 = vsel %vm113, %v706, 0.0
  %v785 = vadd.f32 %v783, %v784
  %v786 = vsel %vm113, %v707, 0.0
  %v787 = vadd.f32 %v785, %v786
  %v788 = vsel %vm113, %v708, 0.0
  %v789 = vadd.f32 %v787, %v788
  %v790 = vsel %vm113, %v709, 0.0
  %v791 = vadd.f32 %v789, %v790
  %v792 = vsel %vm113, %v710, 0.0
  %v793 = vadd.f32 %v791, %v792
  %v794 = vsel %vm113, %v711, 0.0
  %v795 = vadd.f32 %v793, %v794
  %v796 = vsel %vm113, %v712, 0.0
  %v797 = vadd.f32 %v795, %v796
  %v798 = vsel %vm113, %v713, 0.0
  %v799 = vadd.f32 %v797, %v798
  %v800 = vsel %vm113, %v714, 0.0
  %v801 = vadd.f32 %v799, %v800
  %v802 = vsel %vm113, %v715, 0.0
  %v803 = vadd.f32 %v801, %v802
  %v804 = vsel %vm113, %v716, 0.0
  %v805 = vadd.f32 %v803, %v804
  %v806 = vsel %vm113, %v717, 0.0
  %v807 = vadd.f32 %v805, %v806
  %v808 = vsel %vm113, %v718, 0.0
  %v809 = vadd.f32 %v807, %v808
  %v810 = vsel %vm113, %v719, 0.0
  %v811 = vadd.f32 %v809, %v810
  %v812 = vsel %vm113, %v720, 0.0
  %v813 = vadd.f32 %v811, %v812
  %v814 = vsel %vm113, %v721, 0.0
  %v815 = vadd.f32 %v813, %v814
  %v816 = vsel %vm113, %v722, 0.0
  %v817 = vadd.f32 %v815, %v816
  %v818 = vsel %vm113, %v723, 0.0
  %v819 = vadd.f32 %v817, %v818
  %v820 = vsel %vm113, %v724, 0.0
  %v821 = vadd.f32 %v819, %v820
  %v822 = vsel %vm113, %v725, 0.0
  %v823 = vadd.f32 %v821, %v822
  %v824 = vsel %vm113, %v726, 0.0
  %v825 = vadd.f32 %v823, %v824
  %v826 = vsel %vm113, %v727, 0.0
  %v827 = vadd.f32 %v825, %v826
  %v828 = vsel %vm113, %v728, 0.0
  %v829 = vadd.f32 %v827, %v828
  %v830 = vsel %vm113, %v729, 0.0
  %v831 = vadd.f32 %v829, %v830
  %v832 = vsel %vm113, %v730, 0.0
  %v833 = vadd.f32 %v831, %v832
  %v834 = vsel %vm113, %v731, 0.0
  %v835 = vadd.f32 %v833, %v834
  %v836 = vsel %vm113, %v732, 0.0
  %v837 = vadd.f32 %v835, %v836
  %v838 = vsel %vm113, %v733, 0.0
  %v839 = vadd.f32 %v837, %v838
  %v840 = vsel %vm113, %v734, 0.0
  %v841 = vadd.f32 %v839, %v840
  %v842 = vsel %vm113, %v735, 0.0
  %v843 = vadd.f32 %v841, %v842
  %v844 = vsel %vm113, %v736, 0.0
  %v845 = vadd.f32 %v843, %v844
  %v846 = vsel %vm113, %v737, 0.0
  %v847 = vadd.f32 %v845, %v846
  %v848 = vsel %vm113, %v738, 0.0
  %v849 = vadd.f32 %v847, %v848
  %v850 = vsel %vm113, %v739, 0.0
  %v851 = vadd.f32 %v849, %v850
  %v852 = vsel %vm113, %v740, 0.0
  %v853 = vadd.f32 %v851, %v852
  %v854 = vsel %vm113, %v741, 0.0
  %v855 = vadd.f32 %v853, %v854
  %v856 = vsel %vm113, %v742, 0.0
  %v857 = vadd.f32 %v855, %v856
  %v858 = vsel %vm113, %v743, 0.0
  %v859 = vadd.f32 %v857, %v858
  %v860 = vsel %vm113, %v744, 0.0
  %v861 = vadd.f32 %v859, %v860
  %v862 = vsel %vm113, %v745, 0.0
  %v863 = vadd.f32 %v861, %v862
  %v864 = vsel %vm113, %v746, 0.0
  %v865 = vadd.f32 %v863, %v864
  %v866 = vsel %vm113, %v747, 0.0
  %v867 = vadd.f32 %v865, %v866
  %v868 = vsel %vm113, %v748, 0.0
  %v869 = vadd.f32 %v867, %v868
  %v870 = vsel %vm113, %v749, 0.0
  %v871 = vadd.f32 %v869, %v870
  %v872 = vsel %vm113, %v750, 0.0
  %v873 = vadd.f32 %v871, %v872
  %v874 = vsel %vm113, %v751, 0.0
  %v875 = vadd.f32 %v873, %v874
  %v876 = vsel %vm113, %v752, 0.0
  %v877 = vadd.f32 %v875, %v876
  %v878 = vsel %vm113, %v753, 0.0
  %v879 = vadd.f32 %v877, %v878
  %v880 = vsel %vm113, %v754, 0.0
  %v881 = vadd.f32 %v879, %v880
  %v882 = vrot.slane %v881, 4
  %v883 = vadd.f32 %v881, %v882
  %v884 = vrot.slane %v883, 2
  %v885 = vadd.f32 %v883, %v884
  %v886 = vrot.slane %v885, 1
  %v887 = vadd.f32 %v885, %v886
  %v888 = vmul.f32 %v887, 0.001953125
  %v889 = vmul.f32 %v691, %v691
  %v890 = vmul.f32 %v692, %v692
  %v891 = vmul.f32 %v693, %v693
  %v892 = vmul.f32 %v694, %v694
  %v893 = vmul.f32 %v695, %v695
  %v894 = vmul.f32 %v696, %v696
  %v895 = vmul.f32 %v697, %v697
  %v896 = vmul.f32 %v698, %v698
  %v897 = vmul.f32 %v699, %v699
  %v898 = vmul.f32 %v700, %v700
  %v899 = vmul.f32 %v701, %v701
  %v900 = vmul.f32 %v702, %v702
  %v901 = vmul.f32 %v703, %v703
  %v902 = vmul.f32 %v704, %v704
  %v903 = vmul.f32 %v705, %v705
  %v904 = vmul.f32 %v706, %v706
  %v905 = vmul.f32 %v707, %v707
  %v906 = vmul.f32 %v708, %v708
  %v907 = vmul.f32 %v709, %v709
  %v908 = vmul.f32 %v710, %v710
  %v909 = vmul.f32 %v711, %v711
  %v910 = vmul.f32 %v712, %v712
  %v911 = vmul.f32 %v713, %v713
  %v912 = vmul.f32 %v714, %v714
  %v913 = vmul.f32 %v715, %v715
  %v914 = vmul.f32 %v716, %v716
  %v915 = vmul.f32 %v717, %v717
  %v916 = vmul.f32 %v718, %v718
  %v917 = vmul.f32 %v719, %v719
  %v918 = vmul.f32 %v720, %v720
  %v919 = vmul.f32 %v721, %v721
  %v920 = vmul.f32 %v722, %v722
  %v921 = vmul.f32 %v723, %v723
  %v922 = vmul.f32 %v724, %v724
  %v923 = vmul.f32 %v725, %v725
  %v924 = vmul.f32 %v726, %v726
  %v925 = vmul.f32 %v727, %v727
  %v926 = vmul.f32 %v728, %v728
  %v927 = vmul.f32 %v729, %v729
  %v928 = vmul.f32 %v730, %v730
  %v929 = vmul.f32 %v731, %v731
  %v930 = vmul.f32 %v732, %v732
  %v931 = vmul.f32 %v733, %v733
  %v932 = vmul.f32 %v734, %v734
  %v933 = vmul.f32 %v735, %v735
  %v934 = vmul.f32 %v736, %v736
  %v935 = vmul.f32 %v737, %v737
  %v936 = vmul.f32 %v738, %v738
  %v937 = vmul.f32 %v739, %v739
  %v938 = vmul.f32 %v740, %v740
  %v939 = vmul.f32 %v741, %v741
  %v940 = vmul.f32 %v742, %v742
  %v941 = vmul.f32 %v743, %v743
  %v942 = vmul.f32 %v744, %v744
  %v943 = vmul.f32 %v745, %v745
  %v944 = vmul.f32 %v746, %v746
  %v945 = vmul.f32 %v747, %v747
  %v946 = vmul.f32 %v748, %v748
  %v947 = vmul.f32 %v749, %v749
  %v948 = vmul.f32 %v750, %v750
  %v949 = vmul.f32 %v751, %v751
  %v950 = vmul.f32 %v752, %v752
  %v951 = vmul.f32 %v753, %v753
  %v952 = vmul.f32 %v754, %v754
  %v953 = vsel %vm113, %v889, 0.0
  %v954 = vsel %vm113, %v890, 0.0
  %v955 = vadd.f32 %v953, %v954
  %v956 = vsel %vm113, %v891, 0.0
  %v957 = vadd.f32 %v955, %v956
  %v958 = vsel %vm113, %v892, 0.0
  %v959 = vadd.f32 %v957, %v958
  %v960 = vsel %vm113, %v893, 0.0
  %v961 = vadd.f32 %v959, %v960
  %v962 = vsel %vm113, %v894, 0.0
  %v963 = vadd.f32 %v961, %v962
  %v964 = vsel %vm113, %v895, 0.0
  %v965 = vadd.f32 %v963, %v964
  %v966 = vsel %vm113, %v896, 0.0
  %v967 = vadd.f32 %v965, %v966
  %v968 = vsel %vm113, %v897, 0.0
  %v969 = vadd.f32 %v967, %v968
  %v970 = vsel %vm113, %v898, 0.0
  %v971 = vadd.f32 %v969, %v970
  %v972 = vsel %vm113, %v899, 0.0
  %v973 = vadd.f32 %v971, %v972
  %v974 = vsel %vm113, %v900, 0.0
  %v975 = vadd.f32 %v973, %v974
  %v976 = vsel %vm113, %v901, 0.0
  %v977 = vadd.f32 %v975, %v976
  %v978 = vsel %vm113, %v902, 0.0
  %v979 = vadd.f32 %v977, %v978
  %v980 = vsel %vm113, %v903, 0.0
  %v981 = vadd.f32 %v979, %v980
  %v982 = vsel %vm113, %v904, 0.0
  %v983 = vadd.f32 %v981, %v982
  %v984 = vsel %vm113, %v905, 0.0
  %v985 = vadd.f32 %v983, %v984
  %v986 = vsel %vm113, %v906, 0.0
  %v987 = vadd.f32 %v985, %v986
  %v988 = vsel %vm113, %v907, 0.0
  %v989 = vadd.f32 %v987, %v988
  %v990 = vsel %vm113, %v908, 0.0
  %v991 = vadd.f32 %v989, %v990
  %v992 = vsel %vm113, %v909, 0.0
  %v993 = vadd.f32 %v991, %v992
  %v994 = vsel %vm113, %v910, 0.0
  %v995 = vadd.f32 %v993, %v994
  %v996 = vsel %vm113, %v911, 0.0
  %v997 = vadd.f32 %v995, %v996
  %v998 = vsel %vm113, %v912, 0.0
  %v999 = vadd.f32 %v997, %v998
  %v1000 = vsel %vm113, %v913, 0.0
  %v1001 = vadd.f32 %v999, %v1000
  %v1002 = vsel %vm113, %v914, 0.0
  %v1003 = vadd.f32 %v1001, %v1002
  %v1004 = vsel %vm113, %v915, 0.0
  %v1005 = vadd.f32 %v1003, %v1004
  %v1006 = vsel %vm113, %v916, 0.0
  %v1007 = vadd.f32 %v1005, %v1006
  %v1008 = vsel %vm113, %v917, 0.0
  %v1009 = vadd.f32 %v1007, %v1008
  %v1010 = vsel %vm113, %v918, 0.0
  %v1011 = vadd.f32 %v1009, %v1010
  %v1012 = vsel %vm113, %v919, 0.0
  %v1013 = vadd.f32 %v1011, %v1012
  %v1014 = vsel %vm113, %v920, 0.0
  %v1015 = vadd.f32 %v1013, %v1014
  %v1016 = vsel %vm113, %v921, 0.0
  %v1017 = vadd.f32 %v1015, %v1016
  %v1018 = vsel %vm113, %v922, 0.0
  %v1019 = vadd.f32 %v1017, %v1018
  %v1020 = vsel %vm113, %v923, 0.0
  %v1021 = vadd.f32 %v1019, %v1020
  %v1022 = vsel %vm113, %v924, 0.0
  %v1023 = vadd.f32 %v1021, %v1022
  %v1024 = vsel %vm113, %v925, 0.0
  %v1025 = vadd.f32 %v1023, %v1024
  %v1026 = vsel %vm113, %v926, 0.0
  %v1027 = vadd.f32 %v1025, %v1026
  %v1028 = vsel %vm113, %v927, 0.0
  %v1029 = vadd.f32 %v1027, %v1028
  %v1030 = vsel %vm113, %v928, 0.0
  %v1031 = vadd.f32 %v1029, %v1030
  %v1032 = vsel %vm113, %v929, 0.0
  %v1033 = vadd.f32 %v1031, %v1032
  %v1034 = vsel %vm113, %v930, 0.0
  %v1035 = vadd.f32 %v1033, %v1034
  %v1036 = vsel %vm113, %v931, 0.0
  %v1037 = vadd.f32 %v1035, %v1036
  %v1038 = vsel %vm113, %v932, 0.0
  %v1039 = vadd.f32 %v1037, %v1038
  %v1040 = vsel %vm113, %v933, 0.0
  %v1041 = vadd.f32 %v1039, %v1040
  %v1042 = vsel %vm113, %v934, 0.0
  %v1043 = vadd.f32 %v1041, %v1042
  %v1044 = vsel %vm113, %v935, 0.0
  %v1045 = vadd.f32 %v1043, %v1044
  %v1046 = vsel %vm113, %v936, 0.0
  %v1047 = vadd.f32 %v1045, %v1046
  %v1048 = vsel %vm113, %v937, 0.0
  %v1049 = vadd.f32 %v1047, %v1048
  %v1050 = vsel %vm113, %v938, 0.0
  %v1051 = vadd.f32 %v1049, %v1050
  %v1052 = vsel %vm113, %v939, 0.0
  %v1053 = vadd.f32 %v1051, %v1052
  %v1054 = vsel %vm113, %v940, 0.0
  %v1055 = vadd.f32 %v1053, %v1054
  %v1056 = vsel %vm113, %v941, 0.0
  %v1057 = vadd.f32 %v1055, %v1056
  %v1058 = vsel %vm113, %v942, 0.0
  %v1059 = vadd.f32 %v1057, %v1058
  %v1060 = vsel %vm113, %v943, 0.0
  %v1061 = vadd.f32 %v1059, %v1060
  %v1062 = vsel %vm113, %v944, 0.0
  %v1063 = vadd.f32 %v1061, %v1062
  %v1064 = vsel %vm113, %v945, 0.0
  %v1065 = vadd.f32 %v1063, %v1064
  %v1066 = vsel %vm113, %v946, 0.0
  %v1067 = vadd.f32 %v1065, %v1066
  %v1068 = vsel %vm113, %v947, 0.0
  %v1069 = vadd.f32 %v1067, %v1068
  %v1070 = vsel %vm113, %v948, 0.0
  %v1071 = vadd.f32 %v1069, %v1070
  %v1072 = vsel %vm113, %v949, 0.0
  %v1073 = vadd.f32 %v1071, %v1072
  %v1074 = vsel %vm113, %v950, 0.0
  %v1075 = vadd.f32 %v1073, %v1074
  %v1076 = vsel %vm113, %v951, 0.0
  %v1077 = vadd.f32 %v1075, %v1076
  %v1078 = vsel %vm113, %v952, 0.0
  %v1079 = vadd.f32 %v1077, %v1078
  %v1080 = vrot.slane %v1079, 4
  %v1081 = vadd.f32 %v1079, %v1080
  %v1082 = vrot.slane %v1081, 2
  %v1083 = vadd.f32 %v1081, %v1082
  %v1084 = vrot.slane %v1083, 1
  %v1085 = vadd.f32 %v1083, %v1084
  %v1086 = vmul.f32 %v1085, 0.001953125
  %v1087 = vmul.f32 %v888, %v888
  %v1088 = vsub.f32 %v1086, %v1087
  %v1089 = vmax.f32 %v1088, 0.0
  %v1090 = vadd.f32 %v1089, 1e-05
  %v1091 = vrsqrt.pop %v1090
  %v1092 = vmul.f32 %v105, %v1091
  %v1093 = vmul.f32 %v888, %v1092
  %v1094 = vsub.f32 %v106, %v1093
  %v1096 = vlaneseq
  %v1097 = vshrl.u32 %v1096, 7
  %v1098 = vsub.s32 0, %v1097
  %v1099 = vrot.slane %v1092, %v1098
  %v1101 = vmul.f32 %v691, %v1099
  %v1102 = vmul.f32 %v692, %v1099
  %v1103 = vmul.f32 %v693, %v1099
  %v1104 = vmul.f32 %v694, %v1099
  %v1105 = vmul.f32 %v695, %v1099
  %v1106 = vmul.f32 %v696, %v1099
  %v1107 = vmul.f32 %v697, %v1099
  %v1108 = vmul.f32 %v698, %v1099
  %v1109 = vmul.f32 %v699, %v1099
  %v1110 = vmul.f32 %v700, %v1099
  %v1111 = vmul.f32 %v701, %v1099
  %v1112 = vmul.f32 %v702, %v1099
  %v1113 = vmul.f32 %v703, %v1099
  %v1114 = vmul.f32 %v704, %v1099
  %v1115 = vmul.f32 %v705, %v1099
  %v1116 = vmul.f32 %v706, %v1099
  %v1117 = vmul.f32 %v707, %v1099
  %v1118 = vmul.f32 %v708, %v1099
  %v1119 = vmul.f32 %v709, %v1099
  %v1120 = vmul.f32 %v710, %v1099
  %v1121 = vmul.f32 %v711, %v1099
  %v1122 = vmul.f32 %v712, %v1099
  %v1123 = vmul.f32 %v713, %v1099
  %v1124 = vmul.f32 %v714, %v1099
  %v1125 = vmul.f32 %v715, %v1099
  %v1126 = vmul.f32 %v716, %v1099
  %v1127 = vmul.f32 %v717, %v1099
  %v1128 = vmul.f32 %v718, %v1099
  %v1129 = vmul.f32 %v719, %v1099
  %v1130 = vmul.f32 %v720, %v1099
  %v1131 = vmul.f32 %v721, %v1099
  %v1132 = vmul.f32 %v722, %v1099
  %v1133 = vmul.f32 %v723, %v1099
  %v1134 = vmul.f32 %v724, %v1099
  %v1135 = vmul.f32 %v725, %v1099
  %v1136 = vmul.f32 %v726, %v1099
  %v1137 = vmul.f32 %v727, %v1099
  %v1138 = vmul.f32 %v728, %v1099
  %v1139 = vmul.f32 %v729, %v1099
  %v1140 = vmul.f32 %v730, %v1099
  %v1141 = vmul.f32 %v731, %v1099
  %v1142 = vmul.f32 %v732, %v1099
  %v1143 = vmul.f32 %v733, %v1099
  %v1144 = vmul.f32 %v734, %v1099
  %v1145 = vmul.f32 %v735, %v1099
  %v1146 = vmul.f32 %v736, %v1099
  %v1147 = vmul.f32 %v737, %v1099
  %v1148 = vmul.f32 %v738, %v1099
  %v1149 = vmul.f32 %v739, %v1099
  %v1150 = vmul.f32 %v740, %v1099
  %v1151 = vmul.f32 %v741, %v1099
  %v1152 = vmul.f32 %v742, %v1099
  %v1153 = vmul.f32 %v743, %v1099
  %v1154 = vmul.f32 %v744, %v1099
  %v1155 = vmul.f32 %v745, %v1099
  %v1156 = vmul.f32 %v746, %v1099
  %v1157 = vmul.f32 %v747, %v1099
  %v1158 = vmul.f32 %v748, %v1099
  %v1159 = vmul.f32 %v749, %v1099
  %v1160 = vmul.f32 %v750, %v1099
  %v1161 = vmul.f32 %v751, %v1099
  %v1162 = vmul.f32 %v752, %v1099
  %v1163 = vmul.f32 %v753, %v1099
  %v1164 = vmul.f32 %v754, %v1099
  %v1166 = vlaneseq
  %v1167 = vshrl.u32 %v1166, 7
  %v1168 = vsub.s32 0, %v1167
  %v1169 = vrot.slane %v1094, %v1168
  %v1171 = vadd.f32 %v1101, %v1169
  %v1172 = vadd.f32 %v1102, %v1169
  %v1173 = vadd.f32 %v1103, %v1169
  %v1174 = vadd.f32 %v1104, %v1169
  %v1175 = vadd.f32 %v1105, %v1169
  %v1176 = vadd.f32 %v1106, %v1169
  %v1177 = vadd.f32 %v1107, %v1169
  %v1178 = vadd.f32 %v1108, %v1169
  %v1179 = vadd.f32 %v1109, %v1169
  %v1180 = vadd.f32 %v1110, %v1169
  %v1181 = vadd.f32 %v1111, %v1169
  %v1182 = vadd.f32 %v1112, %v1169
  %v1183 = vadd.f32 %v1113, %v1169
  %v1184 = vadd.f32 %v1114, %v1169
  %v1185 = vadd.f32 %v1115, %v1169
  %v1186 = vadd.f32 %v1116, %v1169
  %v1187 = vadd.f32 %v1117, %v1169
  %v1188 = vadd.f32 %v1118, %v1169
  %v1189 = vadd.f32 %v1119, %v1169
  %v1190 = vadd.f32 %v1120, %v1169
  %v1191 = vadd.f32 %v1121, %v1169
  %v1192 = vadd.f32 %v1122, %v1169
  %v1193 = vadd.f32 %v1123, %v1169
  %v1194 = vadd.f32 %v1124, %v1169
  %v1195 = vadd.f32 %v1125, %v1169
  %v1196 = vadd.f32 %v1126, %v1169
  %v1197 = vadd.f32 %v1127, %v1169
  %v1198 = vadd.f32 %v1128, %v1169
  %v1199 = vadd.f32 %v1129, %v1169
  %v1200 = vadd.f32 %v1130, %v1169
  %v1201 = vadd.f32 %v1131, %v1169
  %v1202 = vadd.f32 %v1132, %v1169
  %v1203 = vadd.f32 %v1133, %v1169
  %v1204 = vadd.f32 %v1134, %v1169
  %v1205 = vadd.f32 %v1135, %v1169
  %v1206 = vadd.f32 %v1136, %v1169
  %v1207 = vadd.f32 %v1137, %v1169
  %v1208 = vadd.f32 %v1138, %v1169
  %v1209 = vadd.f32 %v1139, %v1169
  %v1210 = vadd.f32 %v1140, %v1169
  %v1211 = vadd.f32 %v1141, %v1169
  %v1212 = vadd.f32 %v1142, %v1169
  %v1213 = vadd.f32 %v1143, %v1169
  %v1214 = vadd.f32 %v1144, %v1169
  %v1215 = vadd.f32 %v1145, %v1169
  %v1216 = vadd.f32 %v1146, %v1169
  %v1217 = vadd.f32 %v1147, %v1169
  %v1218 = vadd.f32 %v1148, %v1169
  %v1219 = vadd.f32 %v1149, %v1169
  %v1220 = vadd.f32 %v1150, %v1169
  %v1221 = vadd.f32 %v1151, %v1169
  %v1222 = vadd.f32 %v1152, %v1169
  %v1223 = vadd.f32 %v1153, %v1169
  %v1224 = vadd.f32 %v1154, %v1169
  %v1225 = vadd.f32 %v1155, %v1169
  %v1226 = vadd.f32 %v1156, %v1169
  %v1227 = vadd.f32 %v1157, %v1169
  %v1228 = vadd.f32 %v1158, %v1169
  %v1229 = vadd.f32 %v1159, %v1169
  %v1230 = vadd.f32 %v1160, %v1169
  %v1231 = vadd.f32 %v1161, %v1169
  %v1232 = vadd.f32 %v1162, %v1169
  %v1233 = vadd.f32 %v1163, %v1169
  %v1234 = vadd.f32 %v1164, %v1169
  %v1235 = vld [vmem:[%s1] sm:$0xff]
  %v1236 = vld [vmem:[%s1 + $0x8] sm:$0xff]
  %v1237 = vld [vmem:[%s1 + $0x10] sm:$0xff]
  %v1238 = vld [vmem:[%s1 + $0x18] sm:$0xff]
  %v1239 = vld [vmem:[%s1 + $0x20] sm:$0xff]
  %v1240 = vld [vmem:[%s1 + $0x28] sm:$0xff]
  %v1241 = vld [vmem:[%s1 + $0x30] sm:$0xff]
  %v1242 = vld [vmem:[%s1 + $0x38] sm:$0xff]
  %v1243 = vld [vmem:[%s1 + $0x40] sm:$0xff]
  %v1244 = vld [vmem:[%s1 + $0x48] sm:$0xff]
  %v1245 = vld [vmem:[%s1 + $0x50] sm:$0xff]
  %v1246 = vld [vmem:[%s1 + $0x58] sm:$0xff]
  %v1247 = vld [vmem:[%s1 + $0x60] sm:$0xff]
  %v1248 = vld [vmem:[%s1 + $0x68] sm:$0xff]
  %v1249 = vld [vmem:[%s1 + $0x70] sm:$0xff]
  %v1250 = vld [vmem:[%s1 + $0x78] sm:$0xff]
  %v1251 = vld [vmem:[%s1 + $0x80] sm:$0xff]
  %v1252 = vld [vmem:[%s1 + $0x88] sm:$0xff]
  %v1253 = vld [vmem:[%s1 + $0x90] sm:$0xff]
  %v1254 = vld [vmem:[%s1 + $0x98] sm:$0xff]
  %v1255 = vld [vmem:[%s1 + $0xa0] sm:$0xff]
  %v1256 = vld [vmem:[%s1 + $0xa8] sm:$0xff]
  %v1257 = vld [vmem:[%s1 + $0xb0] sm:$0xff]
  %v1258 = vld [vmem:[%s1 + $0xb8] sm:$0xff]
  %v1259 = vld [vmem:[%s1 + $0xc0] sm:$0xff]
  %v1260 = vld [vmem:[%s1 + $0xc8] sm:$0xff]
  %v1261 = vld [vmem:[%s1 + $0xd0] sm:$0xff]
  %v1262 = vld [vmem:[%s1 + $0xd8] sm:$0xff]
  %v1263 = vld [vmem:[%s1 + $0xe0] sm:$0xff]
  %v1264 = vld [vmem:[%s1 + $0xe8] sm:$0xff]
  %v1265 = vld [vmem:[%s1 + $0xf0] sm:$0xff]
  %v1266 = vld [vmem:[%s1 + $0xf8] sm:$0xff]
  %v1267 = vld [vmem:[%s1 + $0x100] sm:$0xff]
  %v1268 = vld [vmem:[%s1 + $0x108] sm:$0xff]
  %v1269 = vld [vmem:[%s1 + $0x110] sm:$0xff]
  %v1270 = vld [vmem:[%s1 + $0x118] sm:$0xff]
  %v1271 = vld [vmem:[%s1 + $0x120] sm:$0xff]
  %v1272 = vld [vmem:[%s1 + $0x128] sm:$0xff]
  %v1273 = vld [vmem:[%s1 + $0x130] sm:$0xff]
  %v1274 = vld [vmem:[%s1 + $0x138] sm:$0xff]
  %v1275 = vld [vmem:[%s1 + $0x140] sm:$0xff]
  %v1276 = vld [vmem:[%s1 + $0x148] sm:$0xff]
  %v1277 = vld [vmem:[%s1 + $0x150] sm:$0xff]
  %v1278 = vld [vmem:[%s1 + $0x158] sm:$0xff]
  %v1279 = vld [vmem:[%s1 + $0x160] sm:$0xff]
  %v1280 = vld [vmem:[%s1 + $0x168] sm:$0xff]
  %v1281 = vld [vmem:[%s1 + $0x170] sm:$0xff]
  %v1282 = vld [vmem:[%s1 + $0x178] sm:$0xff]
  %v1283 = vld [vmem:[%s1 + $0x180] sm:$0xff]
  %v1284 = vld [vmem:[%s1 + $0x188] sm:$0xff]
  %v1285 = vld [vmem:[%s1 + $0x190] sm:$0xff]
  %v1286 = vld [vmem:[%s1 + $0x198] sm:$0xff]
  %v1287 = vld [vmem:[%s1 + $0x1a0] sm:$0xff]
  %v1288 = vld [vmem:[%s1 + $0x1a8] sm:$0xff]
  %v1289 = vld [vmem:[%s1 + $0x1b0] sm:$0xff]
  %v1290 = vld [vmem:[%s1 + $0x1b8] sm:$0xff]
  %v1291 = vld [vmem:[%s1 + $0x1c0] sm:$0xff]
  %v1292 = vld [vmem:[%s1 + $0x1c8] sm:$0xff]
  %v1293 = vld [vmem:[%s1 + $0x1d0] sm:$0xff]
  %v1294 = vld [vmem:[%s1 + $0x1d8] sm:$0xff]
  %v1295 = vld [vmem:[%s1 + $0x1e0] sm:$0xff]
  %v1296 = vld [vmem:[%s1 + $0x1e8] sm:$0xff]
  %v1297 = vld [vmem:[%s1 + $0x1f0] sm:$0xff]
  %v1298 = vld [vmem:[%s1 + $0x1f8] sm:$0xff]
  %v1299 = vld [vmem:[%s1 + $0x200] sm:$0xff]
  %v1300 = vld [vmem:[%s1 + $0x208] sm:$0xff]
  %v1301 = vld [vmem:[%s1 + $0x210] sm:$0xff]
  %v1302 = vld [vmem:[%s1 + $0x218] sm:$0xff]
  %v1303 = vld [vmem:[%s1 + $0x220] sm:$0xff]
  %v1304 = vld [vmem:[%s1 + $0x228] sm:$0xff]
  %v1305 = vld [vmem:[%s1 + $0x230] sm:$0xff]
  %v1306 = vld [vmem:[%s1 + $0x238] sm:$0xff]
  %v1307 = vunpack.c.l.bf16 %v1235
  %v1308 = vunpack.c.h.bf16 %v1235
  %v1309 = vunpack.c.l.bf16 %v1236
  %v1310 = vunpack.c.h.bf16 %v1236
  %v1311 = vunpack.c.l.bf16 %v1237
  %v1312 = vunpack.c.h.bf16 %v1237
  %v1313 = vunpack.c.l.bf16 %v1238
  %v1314 = vunpack.c.h.bf16 %v1238
  %v1315 = vunpack.c.l.bf16 %v1239
  %v1316 = vunpack.c.h.bf16 %v1239
  %v1317 = vunpack.c.l.bf16 %v1240
  %v1318 = vunpack.c.h.bf16 %v1240
  %v1319 = vunpack.c.l.bf16 %v1241
  %v1320 = vunpack.c.h.bf16 %v1241
  %v1321 = vunpack.c.l.bf16 %v1242
  %v1322 = vunpack.c.h.bf16 %v1242
  %v1323 = vunpack.c.l.bf16 %v1243
  %v1324 = vunpack.c.h.bf16 %v1243
  %v1325 = vunpack.c.l.bf16 %v1244
  %v1326 = vunpack.c.h.bf16 %v1244
  %v1327 = vunpack.c.l.bf16 %v1245
  %v1328 = vunpack.c.h.bf16 %v1245
  %v1329 = vunpack.c.l.bf16 %v1246
  %v1330 = vunpack.c.h.bf16 %v1246
  %v1331 = vunpack.c.l.bf16 %v1247
  %v1332 = vunpack.c.h.bf16 %v1247
  %v1333 = vunpack.c.l.bf16 %v1248
  %v1334 = vunpack.c.h.bf16 %v1248
  %v1335 = vunpack.c.l.bf16 %v1249
  %v1336 = vunpack.c.h.bf16 %v1249
  %v1337 = vunpack.c.l.bf16 %v1250
  %v1338 = vunpack.c.h.bf16 %v1250
  %v1339 = vunpack.c.l.bf16 %v1251
  %v1340 = vunpack.c.h.bf16 %v1251
  %v1341 = vunpack.c.l.bf16 %v1252
  %v1342 = vunpack.c.h.bf16 %v1252
  %v1343 = vunpack.c.l.bf16 %v1253
  %v1344 = vunpack.c.h.bf16 %v1253
  %v1345 = vunpack.c.l.bf16 %v1254
  %v1346 = vunpack.c.h.bf16 %v1254
  %v1347 = vunpack.c.l.bf16 %v1255
  %v1348 = vunpack.c.h.bf16 %v1255
  %v1349 = vunpack.c.l.bf16 %v1256
  %v1350 = vunpack.c.h.bf16 %v1256
  %v1351 = vunpack.c.l.bf16 %v1257
  %v1352 = vunpack.c.h.bf16 %v1257
  %v1353 = vunpack.c.l.bf16 %v1258
  %v1354 = vunpack.c.h.bf16 %v1258
  %v1355 = vunpack.c.l.bf16 %v1259
  %v1356 = vunpack.c.h.bf16 %v1259
  %v1357 = vunpack.c.l.bf16 %v1260
  %v1358 = vunpack.c.h.bf16 %v1260
  %v1359 = vunpack.c.l.bf16 %v1261
  %v1360 = vunpack.c.h.bf16 %v1261
  %v1361 = vunpack.c.l.bf16 %v1262
  %v1362 = vunpack.c.h.bf16 %v1262
  %v1363 = vunpack.c.l.bf16 %v1263
  %v1364 = vunpack.c.h.bf16 %v1263
  %v1365 = vunpack.c.l.bf16 %v1264
  %v1366 = vunpack.c.h.bf16 %v1264
  %v1367 = vunpack.c.l.bf16 %v1265
  %v1368 = vunpack.c.h.bf16 %v1265
  %v1369 = vunpack.c.l.bf16 %v1266
  %v1370 = vunpack.c.h.bf16 %v1266
  %v1371 = vunpack.c.l.bf16 %v1267
  %v1372 = vunpack.c.h.bf16 %v1267
  %v1373 = vunpack.c.l.bf16 %v1268
  %v1374 = vunpack.c.h.bf16 %v1268
  %v1375 = vunpack.c.l.bf16 %v1269
  %v1376 = vunpack.c.h.bf16 %v1269
  %v1377 = vunpack.c.l.bf16 %v1270
  %v1378 = vunpack.c.h.bf16 %v1270
  %v1379 = vunpack.c.l.bf16 %v1271
  %v1380 = vunpack.c.h.bf16 %v1271
  %v1381 = vunpack.c.l.bf16 %v1272
  %v1382 = vunpack.c.h.bf16 %v1272
  %v1383 = vunpack.c.l.bf16 %v1273
  %v1384 = vunpack.c.h.bf16 %v1273
  %v1385 = vunpack.c.l.bf16 %v1274
  %v1386 = vunpack.c.h.bf16 %v1274
  %v1387 = vunpack.c.l.bf16 %v1275
  %v1388 = vunpack.c.h.bf16 %v1275
  %v1389 = vunpack.c.l.bf16 %v1276
  %v1390 = vunpack.c.h.bf16 %v1276
  %v1391 = vunpack.c.l.bf16 %v1277
  %v1392 = vunpack.c.h.bf16 %v1277
  %v1393 = vunpack.c.l.bf16 %v1278
  %v1394 = vunpack.c.h.bf16 %v1278
  %v1395 = vunpack.c.l.bf16 %v1279
  %v1396 = vunpack.c.h.bf16 %v1279
  %v1397 = vunpack.c.l.bf16 %v1280
  %v1398 = vunpack.c.h.bf16 %v1280
  %v1399 = vunpack.c.l.bf16 %v1281
  %v1400 = vunpack.c.h.bf16 %v1281
  %v1401 = vunpack.c.l.bf16 %v1282
  %v1402 = vunpack.c.h.bf16 %v1282
  %v1403 = vunpack.c.l.bf16 %v1283
  %v1404 = vunpack.c.h.bf16 %v1283
  %v1405 = vunpack.c.l.bf16 %v1284
  %v1406 = vunpack.c.h.bf16 %v1284
  %v1407 = vunpack.c.l.bf16 %v1285
  %v1408 = vunpack.c.h.bf16 %v1285
  %v1409 = vunpack.c.l.bf16 %v1286
  %v1410 = vunpack.c.h.bf16 %v1286
  %v1411 = vunpack.c.l.bf16 %v1287
  %v1412 = vunpack.c.h.bf16 %v1287
  %v1413 = vunpack.c.l.bf16 %v1288
  %v1414 = vunpack.c.h.bf16 %v1288
  %v1415 = vunpack.c.l.bf16 %v1289
  %v1416 = vunpack.c.h.bf16 %v1289
  %v1417 = vunpack.c.l.bf16 %v1290
  %v1418 = vunpack.c.h.bf16 %v1290
  %v1419 = vunpack.c.l.bf16 %v1291
  %v1420 = vunpack.c.h.bf16 %v1291
  %v1421 = vunpack.c.l.bf16 %v1292
  %v1422 = vunpack.c.h.bf16 %v1292
  %v1423 = vunpack.c.l.bf16 %v1293
  %v1424 = vunpack.c.h.bf16 %v1293
  %v1425 = vunpack.c.l.bf16 %v1294
  %v1426 = vunpack.c.h.bf16 %v1294
  %v1427 = vunpack.c.l.bf16 %v1295
  %v1428 = vunpack.c.h.bf16 %v1295
  %v1429 = vunpack.c.l.bf16 %v1296
  %v1430 = vunpack.c.h.bf16 %v1296
  %v1431 = vunpack.c.l.bf16 %v1297
  %v1432 = vunpack.c.h.bf16 %v1297
  %v1433 = vunpack.c.l.bf16 %v1298
  %v1434 = vunpack.c.h.bf16 %v1298
  %v1435 = vunpack.c.l.bf16 %v1299
  %v1436 = vunpack.c.h.bf16 %v1299
  %v1437 = vunpack.c.l.bf16 %v1300
  %v1438 = vunpack.c.h.bf16 %v1300
  %v1439 = vunpack.c.l.bf16 %v1301
  %v1440 = vunpack.c.h.bf16 %v1301
  %v1441 = vunpack.c.l.bf16 %v1302
  %v1442 = vunpack.c.h.bf16 %v1302
  %v1443 = vunpack.c.l.bf16 %v1303
  %v1444 = vunpack.c.h.bf16 %v1303
  %v1445 = vunpack.c.l.bf16 %v1304
  %v1446 = vunpack.c.h.bf16 %v1304
  %v1447 = vunpack.c.l.bf16 %v1305
  %v1448 = vunpack.c.h.bf16 %v1305
  %v1449 = vunpack.c.l.bf16 %v1306
  %v1450 = vunpack.c.h.bf16 %v1306
  %v1451 = vld [vmem:[%s5] sm:$0xf]
  %v1452 = vld [vmem:[%s5 + $0x4] sm:$0xf]
  %v1453 = vld [vmem:[%s5 + $0x8] sm:$0xf]
  %v1454 = vld [vmem:[%s5 + $0xc] sm:$0xf]
  %v1455 = vld [vmem:[%s5 + $0x10] sm:$0xf]
  %v1456 = vld [vmem:[%s5 + $0x14] sm:$0xf]
  %v1457 = vld [vmem:[%s5 + $0x18] sm:$0xf]
  %v1458 = vld [vmem:[%s5 + $0x1c] sm:$0xf]
  %v1459 = vld [vmem:[%s5 + $0x20] sm:$0xf]
  %v1460 = vld [vmem:[%s5 + $0x24] sm:$0xf]
  %v1461 = vld [vmem:[%s5 + $0x28] sm:$0xf]
  %v1462 = vld [vmem:[%s5 + $0x2c] sm:$0xf]
  %v1463 = vld [vmem:[%s5 + $0x30] sm:$0xf]
  %v1464 = vld [vmem:[%s5 + $0x34] sm:$0xf]
  %v1465 = vld [vmem:[%s5 + $0x38] sm:$0xf]
  %v1466 = vld [vmem:[%s5 + $0x3c] sm:$0xf]
  %v1467 = vld [vmem:[%s5 + $0x40] sm:$0xf]
  %v1468 = vld [vmem:[%s5 + $0x44] sm:$0xf]
  %v1469 = vld [vmem:[%s5 + $0x48] sm:$0xf]
  %v1470 = vld [vmem:[%s5 + $0x4c] sm:$0xf]
  %v1471 = vld [vmem:[%s5 + $0x50] sm:$0xf]
  %v1472 = vld [vmem:[%s5 + $0x54] sm:$0xf]
  %v1473 = vld [vmem:[%s5 + $0x58] sm:$0xf]
  %v1474 = vld [vmem:[%s5 + $0x5c] sm:$0xf]
  %v1475 = vld [vmem:[%s5 + $0x60] sm:$0xf]
  %v1476 = vld [vmem:[%s5 + $0x64] sm:$0xf]
  %v1477 = vld [vmem:[%s5 + $0x68] sm:$0xf]
  %v1478 = vld [vmem:[%s5 + $0x6c] sm:$0xf]
  %v1479 = vld [vmem:[%s5 + $0x70] sm:$0xf]
  %v1480 = vld [vmem:[%s5 + $0x74] sm:$0xf]
  %v1481 = vld [vmem:[%s5 + $0x78] sm:$0xf]
  %v1482 = vld [vmem:[%s5 + $0x7c] sm:$0xf]
  %v1483 = vld [vmem:[%s5 + $0x80] sm:$0xf]
  %v1484 = vld [vmem:[%s5 + $0x84] sm:$0xf]
  %v1485 = vld [vmem:[%s5 + $0x88] sm:$0xf]
  %v1486 = vld [vmem:[%s5 + $0x8c] sm:$0xf]
  %v1487 = vunpack.c.l.bf16 %v1451
  %v1488 = vunpack.c.l.bf16 %v1452
  %v1489 = vunpack.c.l.bf16 %v1453
  %v1490 = vunpack.c.l.bf16 %v1454
  %v1491 = vunpack.c.l.bf16 %v1455
  %v1492 = vunpack.c.l.bf16 %v1456
  %v1493 = vunpack.c.l.bf16 %v1457
  %v1494 = vunpack.c.l.bf16 %v1458
  %v1495 = vunpack.c.l.bf16 %v1459
  %v1496 = vunpack.c.l.bf16 %v1460
  %v1497 = vunpack.c.l.bf16 %v1461
  %v1498 = vunpack.c.l.bf16 %v1462
  %v1499 = vunpack.c.l.bf16 %v1463
  %v1500 = vunpack.c.l.bf16 %v1464
  %v1501 = vunpack.c.l.bf16 %v1465
  %v1502 = vunpack.c.l.bf16 %v1466
  %v1503 = vunpack.c.l.bf16 %v1467
  %v1504 = vunpack.c.l.bf16 %v1468
  %v1505 = vunpack.c.l.bf16 %v1469
  %v1506 = vunpack.c.l.bf16 %v1470
  %v1507 = vunpack.c.l.bf16 %v1471
  %v1508 = vunpack.c.l.bf16 %v1472
  %v1509 = vunpack.c.l.bf16 %v1473
  %v1510 = vunpack.c.l.bf16 %v1474
  %v1511 = vunpack.c.l.bf16 %v1475
  %v1512 = vunpack.c.l.bf16 %v1476
  %v1513 = vunpack.c.l.bf16 %v1477
  %v1514 = vunpack.c.l.bf16 %v1478
  %v1515 = vunpack.c.l.bf16 %v1479
  %v1516 = vunpack.c.l.bf16 %v1480
  %v1517 = vunpack.c.l.bf16 %v1481
  %v1518 = vunpack.c.l.bf16 %v1482
  %v1519 = vunpack.c.l.bf16 %v1483
  %v1520 = vunpack.c.l.bf16 %v1484
  %v1521 = vunpack.c.l.bf16 %v1485
  %v1522 = vunpack.c.l.bf16 %v1486
  %1523 = vmatprep.subr.mxu0 0.0
  %1524 = vmatpush1.msra.mxu0 %v1171
  %1525 = vmatprep.subr.mxu0 0.0
  %1526 = vmatpush1.msra.mxu0 %v1172
  %1527 = vmatprep.subr.mxu0 0.0
  %1528 = vmatpush1.msra.mxu0 %v1173
  %1529 = vmatprep.subr.mxu0 0.0
  %1530 = vmatpush1.msra.mxu0 %v1174
  %1531 = vmatprep.subr.mxu0 0.0
  %1532 = vmatpush1.msra.mxu0 %v1175
  %1533 = vmatprep.subr.mxu0 0.0
  %1534 = vmatpush1.msra.mxu0 %v1176
  %1535 = vmatprep.subr.mxu0 0.0
  %1536 = vmatpush1.msra.mxu0 %v1177
  %1537 = vmatprep.subr.mxu0 0.0
  %1538 = vmatpush1.msra.mxu0 %v1178
  %1539 = vmatprep.subr.mxu0 0.0
  %1540 = vmatpush1.msra.mxu0 %v1179
  %1541 = vmatprep.subr.mxu0 0.0
  %1542 = vmatpush1.msra.mxu0 %v1180
  %1543 = vmatprep.subr.mxu0 0.0
  %1544 = vmatpush1.msra.mxu0 %v1181
  %1545 = vmatprep.subr.mxu0 0.0
  %1546 = vmatpush1.msra.mxu0 %v1182
  %1547 = vmatprep.subr.mxu0 0.0
  %1548 = vmatpush1.msra.mxu0 %v1183
  %1549 = vmatprep.subr.mxu0 0.0
  %1550 = vmatpush1.msra.mxu0 %v1184
  %1551 = vmatprep.subr.mxu0 0.0
  %1552 = vmatpush1.msra.mxu0 %v1185
  %1553 = vmatprep.subr.mxu0 0.0
  %1554 = vmatpush1.msra.mxu0 %v1186
  %1555 = vmatprep.subr.mxu0 0.0
  %1556 = vmatpush1.msra.mxu0 %v1187
  %1557 = vmatprep.subr.mxu0 0.0
  %1558 = vmatpush1.msra.mxu0 %v1188
  %1559 = vmatprep.subr.mxu0 0.0
  %1560 = vmatpush1.msra.mxu0 %v1189
  %1561 = vmatprep.subr.mxu0 0.0
  %1562 = vmatpush1.msra.mxu0 %v1190
  %1563 = vmatprep.subr.mxu0 0.0
  %1564 = vmatpush1.msra.mxu0 %v1191
  %1565 = vmatprep.subr.mxu0 0.0
  %1566 = vmatpush1.msra.mxu0 %v1192
  %1567 = vmatprep.subr.mxu0 0.0
  %1568 = vmatpush1.msra.mxu0 %v1193
  %1569 = vmatprep.subr.mxu0 0.0
  %1570 = vmatpush1.msra.mxu0 %v1194
  %1571 = vmatprep.subr.mxu0 0.0
  %1572 = vmatpush1.msra.mxu0 %v1195
  %1573 = vmatprep.subr.mxu0 0.0
  %1574 = vmatpush1.msra.mxu0 %v1196
  %1575 = vmatprep.subr.mxu0 0.0
  %1576 = vmatpush1.msra.mxu0 %v1197
  %1577 = vmatprep.subr.mxu0 0.0
  %1578 = vmatpush1.msra.mxu0 %v1198
  %1579 = vmatprep.subr.mxu0 0.0
  %1580 = vmatpush1.msra.mxu0 %v1199
  %1581 = vmatprep.subr.mxu0 0.0
  %1582 = vmatpush1.msra.mxu0 %v1200
  %1583 = vmatprep.subr.mxu0 0.0
  %1584 = vmatpush1.msra.mxu0 %v1201
  %1585 = vmatprep.subr.mxu0 0.0
  %1586 = vmatpush1.msra.mxu0 %v1202
  %1587 = vmatprep.mubr.f32.mxu0 %v1308
  %1588 = vmatmul.mubr.f32.gmra.mrb[0].mxu0 %v1307
  %v1589 = vpop.f32.mrb[0].mxu0
  %v1590 = vadd.f32 0.0, %v1589
  %v1591 = vpop.f32.mrb[0].mxu0
  %1592 = vmatprep.mubr.f32.mxu0 %v1310
  %1593 = vmatmul.mubr.f32.gmra.mrb[0].mxu0 %v1309
  %v1594 = vpop.f32.mrb[0].mxu0
  %v1595 = vadd.f32 0.0, %v1594
  %v1596 = vpop.f32.mrb[0].mxu0
  %1597 = vmatprep.mubr.f32.mxu0 %v1312
  %1598 = vmatmul.mubr.f32.gmra.mrb[0].mxu0 %v1311
  %v1599 = vpop.f32.mrb[0].mxu0
  %v1600 = vadd.f32 0.0, %v1599
  %v1601 = vpop.f32.mrb[0].mxu0
  %1602 = vmatprep.mubr.f32.mxu0 %v1314
  %1603 = vmatmul.mubr.f32.gmra.mrb[0].mxu0 %v1313
  %v1604 = vpop.f32.mrb[0].mxu0
  %v1605 = vadd.f32 0.0, %v1604
  %v1606 = vpop.f32.mrb[0].mxu0
  %1607 = vmatprep.mubr.f32.mxu0 %v1316
  %1608 = vmatmul.mubr.f32.gmra.mrb[0].mxu0 %v1315
  %v1609 = vpop.f32.mrb[0].mxu0
  %v1610 = vadd.f32 0.0, %v1609
  %v1611 = vpop.f32.mrb[0].mxu0
  %1612 = vmatprep.mubr.f32.mxu0 %v1318
  %1613 = vmatmul.mubr.f32.gmra.mrb[0].mxu0 %v1317
  %v1614 = vpop.f32.mrb[0].mxu0
  %v1615 = vadd.f32 0.0, %v1614
  %v1616 = vpop.f32.mrb[0].mxu0
  %1617 = vmatprep.mubr.f32.mxu0 %v1320
  %1618 = vmatmul.mubr.f32.gmra.mrb[0].mxu0 %v1319
  %v1619 = vpop.f32.mrb[0].mxu0
  %v1620 = vadd.f32 0.0, %v1619
  %v1621 = vpop.f32.mrb[0].mxu0
  %1622 = vmatprep.mubr.f32.mxu0 %v1322
  %1623 = vmatmul.mubr.f32.gmra.mrb[0].mxu0 %v1321
  %v1624 = vpop.f32.mrb[0].mxu0
  %v1625 = vadd.f32 0.0, %v1624
  %v1626 = vpop.f32.mrb[0].mxu0
  %1627 = vdwg.mxu0
  %1628 = vmatprep.subr.mxu0 0.0
  %1629 = vmatpush1.msra.mxu0 %v1203
  %1630 = vmatprep.subr.mxu0 0.0
  %1631 = vmatpush1.msra.mxu0 %v1204
  %1632 = vmatprep.subr.mxu0 0.0
  %1633 = vmatpush1.msra.mxu0 %v1205
  %1634 = vmatprep.subr.mxu0 0.0
  %1635 = vmatpush1.msra.mxu0 %v1206
  %1636 = vmatprep.subr.mxu0 0.0
  %1637 = vmatpush1.msra.mxu0 %v1207
  %1638 = vmatprep.subr.mxu0 0.0
  %1639 = vmatpush1.msra.mxu0 %v1208
  %1640 = vmatprep.subr.mxu0 0.0
  %1641 = vmatpush1.msra.mxu0 %v1209
  %1642 = vmatprep.subr.mxu0 0.0
  %1643 = vmatpush1.msra.mxu0 %v1210
  %1644 = vmatprep.subr.mxu0 0.0
  %1645 = vmatpush1.msra.mxu0 %v1211
  %1646 = vmatprep.subr.mxu0 0.0
  %1647 = vmatpush1.msra.mxu0 %v1212
  %1648 = vmatprep.subr.mxu0 0.0
  %1649 = vmatpush1.msra.mxu0 %v1213
  %1650 = vmatprep.subr.mxu0 0.0
  %1651 = vmatpush1.msra.mxu0 %v1214
  %1652 = vmatprep.subr.mxu0 0.0
  %1653 = vmatpush1.msra.mxu0 %v1215
  %1654 = vmatprep.subr.mxu0 0.0
  %1655 = vmatpush1.msra.mxu0 %v1216
  %1656 = vmatprep.subr.mxu0 0.0
  %1657 = vmatpush1.msra.mxu0 %v1217
  %1658 = vmatprep.subr.mxu0 0.0
  %1659 = vmatpush1.msra.mxu0 %v1218
  %1660 = vmatprep.subr.mxu0 0.0
  %1661 = vmatpush1.msra.mxu0 %v1219
  %1662 = vmatprep.subr.mxu0 0.0
  %1663 = vmatpush1.msra.mxu0 %v1220
  %1664 = vmatprep.subr.mxu0 0.0
  %1665 = vmatpush1.msra.mxu0 %v1221
  %1666 = vmatprep.subr.mxu0 0.0
  %1667 = vmatpush1.msra.mxu0 %v1222
  %1668 = vmatprep.subr.mxu0 0.0
  %1669 = vmatpush1.msra.mxu0 %v1223
  %1670 = vmatprep.subr.mxu0 0.0
  %1671 = vmatpush1.msra.mxu0 %v1224
  %1672 = vmatprep.subr.mxu0 0.0
  %1673 = vmatpush1.msra.mxu0 %v1225
  %1674 = vmatprep.subr.mxu0 0.0
  %1675 = vmatpush1.msra.mxu0 %v1226
  %1676 = vmatprep.subr.mxu0 0.0
  %1677 = vmatpush1.msra.mxu0 %v1227
  %1678 = vmatprep.subr.mxu0 0.0
  %1679 = vmatpush1.msra.mxu0 %v1228
  %1680 = vmatprep.subr.mxu0 0.0
  %1681 = vmatpush1.msra.mxu0 %v1229
  %1682 = vmatprep.subr.mxu0 0.0
  %1683 = vmatpush1.msra.mxu0 %v1230
  %1684 = vmatprep.subr.mxu0 0.0
  %1685 = vmatpush1.msra.mxu0 %v1231
  %1686 = vmatprep.subr.mxu0 0.0
  %1687 = vmatpush1.msra.mxu0 %v1232
  %1688 = vmatprep.subr.mxu0 0.0
  %1689 = vmatpush1.msra.mxu0 %v1233
  %1690 = vmatprep.subr.mxu0 0.0
  %1691 = vmatpush1.msra.mxu0 %v1234
  %1692 = vmatprep.mubr.f32.mxu0 %v1308
  %1693 = vmatmul.mubr.f32.gmra.mrb[0].mxu0 %v1307
  %v1694 = vpop.f32.mrb[0].mxu0
  %v1695 = vadd.f32 0.0, %v1694
  %v1696 = vpop.f32.mrb[0].mxu0
  %1697 = vmatprep.mubr.f32.mxu0 %v1310
  %1698 = vmatmul.mubr.f32.gmra.mrb[0].mxu0 %v1309
  %v1699 = vpop.f32.mrb[0].mxu0
  %v1700 = vadd.f32 0.0, %v1699
  %v1701 = vpop.f32.mrb[0].mxu0
  %1702 = vmatprep.mubr.f32.mxu0 %v1312
  %1703 = vmatmul.mubr.f32.gmra.mrb[0].mxu0 %v1311
  %v1704 = vpop.f32.mrb[0].mxu0
  %v1705 = vadd.f32 0.0, %v1704
  %v1706 = vpop.f32.mrb[0].mxu0
  %1707 = vmatprep.mubr.f32.mxu0 %v1314
  %1708 = vmatmul.mubr.f32.gmra.mrb[0].mxu0 %v1313
  %v1709 = vpop.f32.mrb[0].mxu0
  %v1710 = vadd.f32 0.0, %v1709
  %v1711 = vpop.f32.mrb[0].mxu0
  %1712 = vmatprep.mubr.f32.mxu0 %v1316
  %1713 = vmatmul.mubr.f32.gmra.mrb[0].mxu0 %v1315
  %v1714 = vpop.f32.mrb[0].mxu0
  %v1715 = vadd.f32 0.0, %v1714
  %v1716 = vpop.f32.mrb[0].mxu0
  %1717 = vmatprep.mubr.f32.mxu0 %v1318
  %1718 = vmatmul.mubr.f32.gmra.mrb[0].mxu0 %v1317
  %v1719 = vpop.f32.mrb[0].mxu0
  %v1720 = vadd.f32 0.0, %v1719
  %v1721 = vpop.f32.mrb[0].mxu0
  %1722 = vmatprep.mubr.f32.mxu0 %v1320
  %1723 = vmatmul.mubr.f32.gmra.mrb[0].mxu0 %v1319
  %v1724 = vpop.f32.mrb[0].mxu0
  %v1725 = vadd.f32 0.0, %v1724
  %v1726 = vpop.f32.mrb[0].mxu0
  %1727 = vmatprep.mubr.f32.mxu0 %v1322
  %1728 = vmatmul.mubr.f32.gmra.mrb[0].mxu0 %v1321
  %v1729 = vpop.f32.mrb[0].mxu0
  %v1730 = vadd.f32 0.0, %v1729
  %v1731 = vpop.f32.mrb[0].mxu0
  %1732 = vdwg.mxu0
  %1733 = vmatprep.subr.mxu0 0.0
  %1734 = vmatpush1.msra.mxu0 %v1171
  %1735 = vmatprep.subr.mxu0 0.0
  %1736 = vmatpush1.msra.mxu0 %v1172
  %1737 = vmatprep.subr.mxu0 0.0
  %1738 = vmatpush1.msra.mxu0 %v1173
  %1739 = vmatprep.subr.mxu0 0.0
  %1740 = vmatpush1.msra.mxu0 %v1174
  %1741 = vmatprep.subr.mxu0 0.0
  %1742 = vmatpush1.msra.mxu0 %v1175
  %1743 = vmatprep.subr.mxu0 0.0
  %1744 = vmatpush1.msra.mxu0 %v1176
  %1745 = vmatprep.subr.mxu0 0.0
  %1746 = vmatpush1.msra.mxu0 %v1177
  %1747 = vmatprep.subr.mxu0 0.0
  %1748 = vmatpush1.msra.mxu0 %v1178
  %1749 = vmatprep.subr.mxu0 0.0
  %1750 = vmatpush1.msra.mxu0 %v1179
  %1751 = vmatprep.subr.mxu0 0.0
  %1752 = vmatpush1.msra.mxu0 %v1180
  %1753 = vmatprep.subr.mxu0 0.0
  %1754 = vmatpush1.msra.mxu0 %v1181
  %1755 = vmatprep.subr.mxu0 0.0
  %1756 = vmatpush1.msra.mxu0 %v1182
  %1757 = vmatprep.subr.mxu0 0.0
  %1758 = vmatpush1.msra.mxu0 %v1183
  %1759 = vmatprep.subr.mxu0 0.0
  %1760 = vmatpush1.msra.mxu0 %v1184
  %1761 = vmatprep.subr.mxu0 0.0
  %1762 = vmatpush1.msra.mxu0 %v1185
  %1763 = vmatprep.subr.mxu0 0.0
  %1764 = vmatpush1.msra.mxu0 %v1186
  %1765 = vmatprep.subr.mxu0 0.0
  %1766 = vmatpush1.msra.mxu0 %v1187
  %1767 = vmatprep.subr.mxu0 0.0
  %1768 = vmatpush1.msra.mxu0 %v1188
  %1769 = vmatprep.subr.mxu0 0.0
  %1770 = vmatpush1.msra.mxu0 %v1189
  %1771 = vmatprep.subr.mxu0 0.0
  %1772 = vmatpush1.msra.mxu0 %v1190
  %1773 = vmatprep.subr.mxu0 0.0
  %1774 = vmatpush1.msra.mxu0 %v1191
  %1775 = vmatprep.subr.mxu0 0.0
  %1776 = vmatpush1.msra.mxu0 %v1192
  %1777 = vmatprep.subr.mxu0 0.0
  %1778 = vmatpush1.msra.mxu0 %v1193
  %1779 = vmatprep.subr.mxu0 0.0
  %1780 = vmatpush1.msra.mxu0 %v1194
  %1781 = vmatprep.subr.mxu0 0.0
  %1782 = vmatpush1.msra.mxu0 %v1195
  %1783 = vmatprep.subr.mxu0 0.0
  %1784 = vmatpush1.msra.mxu0 %v1196
  %1785 = vmatprep.subr.mxu0 0.0
  %1786 = vmatpush1.msra.mxu0 %v1197
  %1787 = vmatprep.subr.mxu0 0.0
  %1788 = vmatpush1.msra.mxu0 %v1198
  %1789 = vmatprep.subr.mxu0 0.0
  %1790 = vmatpush1.msra.mxu0 %v1199
  %1791 = vmatprep.subr.mxu0 0.0
  %1792 = vmatpush1.msra.mxu0 %v1200
  %1793 = vmatprep.subr.mxu0 0.0
  %1794 = vmatpush1.msra.mxu0 %v1201
  %1795 = vmatprep.subr.mxu0 0.0
  %1796 = vmatpush1.msra.mxu0 %v1202
  %1797 = vmatprep.mubr.f32.mxu0 %v1324
  %1798 = vmatmul.mubr.f32.gmra.mrb[0].mxu0 %v1323
  %v1799 = vpop.f32.mrb[0].mxu0
  %v1800 = vadd.f32 0.0, %v1799
  %v1801 = vpop.f32.mrb[0].mxu0
  %1802 = vmatprep.mubr.f32.mxu0 %v1326
  %1803 = vmatmul.mubr.f32.gmra.mrb[0].mxu0 %v1325
  %v1804 = vpop.f32.mrb[0].mxu0
  %v1805 = vadd.f32 0.0, %v1804
  %v1806 = vpop.f32.mrb[0].mxu0
  %1807 = vmatprep.mubr.f32.mxu0 %v1328
  %1808 = vmatmul.mubr.f32.gmra.mrb[0].mxu0 %v1327
  %v1809 = vpop.f32.mrb[0].mxu0
  %v1810 = vadd.f32 0.0, %v1809
  %v1811 = vpop.f32.mrb[0].mxu0
  %1812 = vmatprep.mubr.f32.mxu0 %v1330
  %1813 = vmatmul.mubr.f32.gmra.mrb[0].mxu0 %v1329
  %v1814 = vpop.f32.mrb[0].mxu0
  %v1815 = vadd.f32 0.0, %v1814
  %v1816 = vpop.f32.mrb[0].mxu0
  %1817 = vmatprep.mubr.f32.mxu0 %v1332
  %1818 = vmatmul.mubr.f32.gmra.mrb[0].mxu0 %v1331
  %v1819 = vpop.f32.mrb[0].mxu0
  %v1820 = vadd.f32 0.0, %v1819
  %v1821 = vpop.f32.mrb[0].mxu0
  %1822 = vmatprep.mubr.f32.mxu0 %v1334
  %1823 = vmatmul.mubr.f32.gmra.mrb[0].mxu0 %v1333
  %v1824 = vpop.f32.mrb[0].mxu0
  %v1825 = vadd.f32 0.0, %v1824
  %v1826 = vpop.f32.mrb[0].mxu0
  %1827 = vmatprep.mubr.f32.mxu0 %v1336
  %1828 = vmatmul.mubr.f32.gmra.mrb[0].mxu0 %v1335
  %v1829 = vpop.f32.mrb[0].mxu0
  %v1830 = vadd.f32 0.0, %v1829
  %v1831 = vpop.f32.mrb[0].mxu0
  %1832 = vmatprep.mubr.f32.mxu0 %v1338
  %1833 = vmatmul.mubr.f32.gmra.mrb[0].mxu0 %v1337
  %v1834 = vpop.f32.mrb[0].mxu0
  %v1835 = vadd.f32 0.0, %v1834
  %v1836 = vpop.f32.mrb[0].mxu0
  %1837 = vdwg.mxu0
  %1838 = vmatprep.subr.mxu0 0.0
  %1839 = vmatpush1.msra.mxu0 %v1203
  %1840 = vmatprep.subr.mxu0 0.0
  %1841 = vmatpush1.msra.mxu0 %v1204
  %1842 = vmatprep.subr.mxu0 0.0
  %1843 = vmatpush1.msra.mxu0 %v1205
  %1844 = vmatprep.subr.mxu0 0.0
  %1845 = vmatpush1.msra.mxu0 %v1206
  %1846 = vmatprep.subr.mxu0 0.0
  %1847 = vmatpush1.msra.mxu0 %v1207
  %1848 = vmatprep.subr.mxu0 0.0
  %1849 = vmatpush1.msra.mxu0 %v1208
  %1850 = vmatprep.subr.mxu0 0.0
  %1851 = vmatpush1.msra.mxu0 %v1209
  %1852 = vmatprep.subr.mxu0 0.0
  %1853 = vmatpush1.msra.mxu0 %v1210
  %1854 = vmatprep.subr.mxu0 0.0
  %1855 = vmatpush1.msra.mxu0 %v1211
  %1856 = vmatprep.subr.mxu0 0.0
  %1857 = vmatpush1.msra.mxu0 %v1212
  %1858 = vmatprep.subr.mxu0 0.0
  %1859 = vmatpush1.msra.mxu0 %v1213
  %1860 = vmatprep.subr.mxu0 0.0
  %1861 = vmatpush1.msra.mxu0 %v1214
  %1862 = vmatprep.subr.mxu0 0.0
  %1863 = vmatpush1.msra.mxu0 %v1215
  %1864 = vmatprep.subr.mxu0 0.0
  %1865 = vmatpush1.msra.mxu0 %v1216
  %1866 = vmatprep.subr.mxu0 0.0
  %1867 = vmatpush1.msra.mxu0 %v1217
  %1868 = vmatprep.subr.mxu0 0.0
  %1869 = vmatpush1.msra.mxu0 %v1218
  %1870 = vmatprep.subr.mxu0 0.0
  %1871 = vmatpush1.msra.mxu0 %v1219
  %1872 = vmatprep.subr.mxu0 0.0
  %1873 = vmatpush1.msra.mxu0 %v1220
  %1874 = vmatprep.subr.mxu0 0.0
  %1875 = vmatpush1.msra.mxu0 %v1221
  %1876 = vmatprep.subr.mxu0 0.0
  %1877 = vmatpush1.msra.mxu0 %v1222
  %1878 = vmatprep.subr.mxu0 0.0
  %1879 = vmatpush1.msra.mxu0 %v1223
  %1880 = vmatprep.subr.mxu0 0.0
  %1881 = vmatpush1.msra.mxu0 %v1224
  %1882 = vmatprep.subr.mxu0 0.0
  %1883 = vmatpush1.msra.mxu0 %v1225
  %1884 = vmatprep.subr.mxu0 0.0
  %1885 = vmatpush1.msra.mxu0 %v1226
  %1886 = vmatprep.subr.mxu0 0.0
  %1887 = vmatpush1.msra.mxu0 %v1227
  %1888 = vmatprep.subr.mxu0 0.0
  %1889 = vmatpush1.msra.mxu0 %v1228
  %1890 = vmatprep.subr.mxu0 0.0
  %1891 = vmatpush1.msra.mxu0 %v1229
  %1892 = vmatprep.subr.mxu0 0.0
  %1893 = vmatpush1.msra.mxu0 %v1230
  %1894 = vmatprep.subr.mxu0 0.0
  %1895 = vmatpush1.msra.mxu0 %v1231
  %1896 = vmatprep.subr.mxu0 0.0
  %1897 = vmatpush1.msra.mxu0 %v1232
  %1898 = vmatprep.subr.mxu0 0.0
  %1899 = vmatpush1.msra.mxu0 %v1233
  %1900 = vmatprep.subr.mxu0 0.0
  %1901 = vmatpush1.msra.mxu0 %v1234
  %1902 = vmatprep.mubr.f32.mxu0 %v1324
  %1903 = vmatmul.mubr.f32.gmra.mrb[0].mxu0 %v1323
  %v1904 = vpop.f32.mrb[0].mxu0
  %v1905 = vadd.f32 0.0, %v1904
  %v1906 = vpop.f32.mrb[0].mxu0
  %1907 = vmatprep.mubr.f32.mxu0 %v1326
  %1908 = vmatmul.mubr.f32.gmra.mrb[0].mxu0 %v1325
  %v1909 = vpop.f32.mrb[0].mxu0
  %v1910 = vadd.f32 0.0, %v1909
  %v1911 = vpop.f32.mrb[0].mxu0
  %1912 = vmatprep.mubr.f32.mxu0 %v1328
  %1913 = vmatmul.mubr.f32.gmra.mrb[0].mxu0 %v1327
  %v1914 = vpop.f32.mrb[0].mxu0
  %v1915 = vadd.f32 0.0, %v1914
  %v1916 = vpop.f32.mrb[0].mxu0
  %1917 = vmatprep.mubr.f32.mxu0 %v1330
  %1918 = vmatmul.mubr.f32.gmra.mrb[0].mxu0 %v1329
  %v1919 = vpop.f32.mrb[0].mxu0
  %v1920 = vadd.f32 0.0, %v1919
  %v1921 = vpop.f32.mrb[0].mxu0
  %1922 = vmatprep.mubr.f32.mxu0 %v1332
  %1923 = vmatmul.mubr.f32.gmra.mrb[0].mxu0 %v1331
  %v1924 = vpop.f32.mrb[0].mxu0
  %v1925 = vadd.f32 0.0, %v1924
  %v1926 = vpop.f32.mrb[0].mxu0
  %1927 = vmatprep.mubr.f32.mxu0 %v1334
  %1928 = vmatmul.mubr.f32.gmra.mrb[0].mxu0 %v1333
  %v1929 = vpop.f32.mrb[0].mxu0
  %v1930 = vadd.f32 0.0, %v1929
  %v1931 = vpop.f32.mrb[0].mxu0
  %1932 = vmatprep.mubr.f32.mxu0 %v1336
  %1933 = vmatmul.mubr.f32.gmra.mrb[0].mxu0 %v1335
  %v1934 = vpop.f32.mrb[0].mxu0
  %v1935 = vadd.f32 0.0, %v1934
  %v1936 = vpop.f32.mrb[0].mxu0
  %1937 = vmatprep.mubr.f32.mxu0 %v1338
  %1938 = vmatmul.mubr.f32.gmra.mrb[0].mxu0 %v1337
  %v1939 = vpop.f32.mrb[0].mxu0
  %v1940 = vadd.f32 0.0, %v1939
  %v1941 = vpop.f32.mrb[0].mxu0
  %1942 = vdwg.mxu0
  %1943 = vmatprep.subr.mxu0 0.0
  %1944 = vmatpush1.msra.mxu0 %v1171
  %1945 = vmatprep.subr.mxu0 0.0
  %1946 = vmatpush1.msra.mxu0 %v1172
  %1947 = vmatprep.subr.mxu0 0.0
  %1948 = vmatpush1.msra.mxu0 %v1173
  %1949 = vmatprep.subr.mxu0 0.0
  %1950 = vmatpush1.msra.mxu0 %v1174
  %1951 = vmatprep.subr.mxu0 0.0
  %1952 = vmatpush1.msra.mxu0 %v1175
  %1953 = vmatprep.subr.mxu0 0.0
  %1954 = vmatpush1.msra.mxu0 %v1176
  %1955 = vmatprep.subr.mxu0 0.0
  %1956 = vmatpush1.msra.mxu0 %v1177
  %1957 = vmatprep.subr.mxu0 0.0
  %1958 = vmatpush1.msra.mxu0 %v1178
  %1959 = vmatprep.subr.mxu0 0.0
  %1960 = vmatpush1.msra.mxu0 %v1179
  %1961 = vmatprep.subr.mxu0 0.0
  %1962 = vmatpush1.msra.mxu0 %v1180
  %1963 = vmatprep.subr.mxu0 0.0
  %1964 = vmatpush1.msra.mxu0 %v1181
  %1965 = vmatprep.subr.mxu0 0.0
  %1966 = vmatpush1.msra.mxu0 %v1182
  %1967 = vmatprep.subr.mxu0 0.0
  %1968 = vmatpush1.msra.mxu0 %v1183
  %1969 = vmatprep.subr.mxu0 0.0
  %1970 = vmatpush1.msra.mxu0 %v1184
  %1971 = vmatprep.subr.mxu0 0.0
  %1972 = vmatpush1.msra.mxu0 %v1185
  %1973 = vmatprep.subr.mxu0 0.0
  %1974 = vmatpush1.msra.mxu0 %v1186
  %1975 = vmatprep.subr.mxu0 0.0
  %1976 = vmatpush1.msra.mxu0 %v1187
  %1977 = vmatprep.subr.mxu0 0.0
  %1978 = vmatpush1.msra.mxu0 %v1188
  %1979 = vmatprep.subr.mxu0 0.0
  %1980 = vmatpush1.msra.mxu0 %v1189
  %1981 = vmatprep.subr.mxu0 0.0
  %1982 = vmatpush1.msra.mxu0 %v1190
  %1983 = vmatprep.subr.mxu0 0.0
  %1984 = vmatpush1.msra.mxu0 %v1191
  %1985 = vmatprep.subr.mxu0 0.0
  %1986 = vmatpush1.msra.mxu0 %v1192
  %1987 = vmatprep.subr.mxu0 0.0
  %1988 = vmatpush1.msra.mxu0 %v1193
  %1989 = vmatprep.subr.mxu0 0.0
  %1990 = vmatpush1.msra.mxu0 %v1194
  %1991 = vmatprep.subr.mxu0 0.0
  %1992 = vmatpush1.msra.mxu0 %v1195
  %1993 = vmatprep.subr.mxu0 0.0
  %1994 = vmatpush1.msra.mxu0 %v1196
  %1995 = vmatprep.subr.mxu0 0.0
  %1996 = vmatpush1.msra.mxu0 %v1197
  %1997 = vmatprep.subr.mxu0 0.0
  %1998 = vmatpush1.msra.mxu0 %v1198
  %1999 = vmatprep.subr.mxu0 0.0
  %2000 = vmatpush1.msra.mxu0 %v1199
  %2001 = vmatprep.subr.mxu0 0.0
  %2002 = vmatpush1.msra.mxu0 %v1200
  %2003 = vmatprep.subr.mxu0 0.0
  %2004 = vmatpush1.msra.mxu0 %v1201
  %2005 = vmatprep.subr.mxu0 0.0
  %2006 = vmatpush1.msra.mxu0 %v1202
  %2007 = vmatprep.mubr.f32.mxu0 %v1340
  %2008 = vmatmul.mubr.f32.gmra.mrb[0].mxu0 %v1339
  %v2009 = vpop.f32.mrb[0].mxu0
  %v2010 = vadd.f32 0.0, %v2009
  %v2011 = vpop.f32.mrb[0].mxu0
  %2012 = vmatprep.mubr.f32.mxu0 %v1342
  %2013 = vmatmul.mubr.f32.gmra.mrb[0].mxu0 %v1341
  %v2014 = vpop.f32.mrb[0].mxu0
  %v2015 = vadd.f32 0.0, %v2014
  %v2016 = vpop.f32.mrb[0].mxu0
  %2017 = vmatprep.mubr.f32.mxu0 %v1344
  %2018 = vmatmul.mubr.f32.gmra.mrb[0].mxu0 %v1343
  %v2019 = vpop.f32.mrb[0].mxu0
  %v2020 = vadd.f32 0.0, %v2019
  %v2021 = vpop.f32.mrb[0].mxu0
  %2022 = vmatprep.mubr.f32.mxu0 %v1346
  %2023 = vmatmul.mubr.f32.gmra.mrb[0].mxu0 %v1345
  %v2024 = vpop.f32.mrb[0].mxu0
  %v2025 = vadd.f32 0.0, %v2024
  %v2026 = vpop.f32.mrb[0].mxu0
  %2027 = vmatprep.mubr.f32.mxu0 %v1348
  %2028 = vmatmul.mubr.f32.gmra.mrb[0].mxu0 %v1347
  %v2029 = vpop.f32.mrb[0].mxu0
  %v2030 = vadd.f32 0.0, %v2029
  %v2031 = vpop.f32.mrb[0].mxu0
  %2032 = vmatprep.mubr.f32.mxu0 %v1350
  %2033 = vmatmul.mubr.f32.gmra.mrb[0].mxu0 %v1349
  %v2034 = vpop.f32.mrb[0].mxu0
  %v2035 = vadd.f32 0.0, %v2034
  %v2036 = vpop.f32.mrb[0].mxu0
  %2037 = vmatprep.mubr.f32.mxu0 %v1352
  %2038 = vmatmul.mubr.f32.gmra.mrb[0].mxu0 %v1351
  %v2039 = vpop.f32.mrb[0].mxu0
  %v2040 = vadd.f32 0.0, %v2039
  %v2041 = vpop.f32.mrb[0].mxu0
  %2042 = vmatprep.mubr.f32.mxu0 %v1354
  %2043 = vmatmul.mubr.f32.gmra.mrb[0].mxu0 %v1353
  %v2044 = vpop.f32.mrb[0].mxu0
  %v2045 = vadd.f32 0.0, %v2044
  %v2046 = vpop.f32.mrb[0].mxu0
  %2047 = vdwg.mxu0
  %2048 = vmatprep.subr.mxu0 0.0
  %2049 = vmatpush1.msra.mxu0 %v1203
  %2050 = vmatprep.subr.mxu0 0.0
  %2051 = vmatpush1.msra.mxu0 %v1204
  %2052 = vmatprep.subr.mxu0 0.0
  %2053 = vmatpush1.msra.mxu0 %v1205
  %2054 = vmatprep.subr.mxu0 0.0
  %2055 = vmatpush1.msra.mxu0 %v1206
  %2056 = vmatprep.subr.mxu0 0.0
  %2057 = vmatpush1.msra.mxu0 %v1207
  %2058 = vmatprep.subr.mxu0 0.0
  %2059 = vmatpush1.msra.mxu0 %v1208
  %2060 = vmatprep.subr.mxu0 0.0
  %2061 = vmatpush1.msra.mxu0 %v1209
  %2062 = vmatprep.subr.mxu0 0.0
  %2063 = vmatpush1.msra.mxu0 %v1210
  %2064 = vmatprep.subr.mxu0 0.0
  %2065 = vmatpush1.msra.mxu0 %v1211
  %2066 = vmatprep.subr.mxu0 0.0
  %2067 = vmatpush1.msra.mxu0 %v1212
  %2068 = vmatprep.subr.mxu0 0.0
  %2069 = vmatpush1.msra.mxu0 %v1213
  %2070 = vmatprep.subr.mxu0 0.0
  %2071 = vmatpush1.msra.mxu0 %v1214
  %2072 = vmatprep.subr.mxu0 0.0
  %2073 = vmatpush1.msra.mxu0 %v1215
  %2074 = vmatprep.subr.mxu0 0.0
  %2075 = vmatpush1.msra.mxu0 %v1216
  %2076 = vmatprep.subr.mxu0 0.0
  %2077 = vmatpush1.msra.mxu0 %v1217
  %2078 = vmatprep.subr.mxu0 0.0
  %2079 = vmatpush1.msra.mxu0 %v1218
  %2080 = vmatprep.subr.mxu0 0.0
  %2081 = vmatpush1.msra.mxu0 %v1219
  %2082 = vmatprep.subr.mxu0 0.0
  %2083 = vmatpush1.msra.mxu0 %v1220
  %2084 = vmatprep.subr.mxu0 0.0
  %2085 = vmatpush1.msra.mxu0 %v1221
  %2086 = vmatprep.subr.mxu0 0.0
  %2087 = vmatpush1.msra.mxu0 %v1222
  %2088 = vmatprep.subr.mxu0 0.0
  %2089 = vmatpush1.msra.mxu0 %v1223
  %2090 = vmatprep.subr.mxu0 0.0
  %2091 = vmatpush1.msra.mxu0 %v1224
  %2092 = vmatprep.subr.mxu0 0.0
  %2093 = vmatpush1.msra.mxu0 %v1225
  %2094 = vmatprep.subr.mxu0 0.0
  %2095 = vmatpush1.msra.mxu0 %v1226
  %2096 = vmatprep.subr.mxu0 0.0
  %2097 = vmatpush1.msra.mxu0 %v1227
  %2098 = vmatprep.subr.mxu0 0.0
  %2099 = vmatpush1.msra.mxu0 %v1228
  %2100 = vmatprep.subr.mxu0 0.0
  %2101 = vmatpush1.msra.mxu0 %v1229
  %2102 = vmatprep.subr.mxu0 0.0
  %2103 = vmatpush1.msra.mxu0 %v1230
  %2104 = vmatprep.subr.mxu0 0.0
  %2105 = vmatpush1.msra.mxu0 %v1231
  %2106 = vmatprep.subr.mxu0 0.0
  %2107 = vmatpush1.msra.mxu0 %v1232
  %2108 = vmatprep.subr.mxu0 0.0
  %2109 = vmatpush1.msra.mxu0 %v1233
  %2110 = vmatprep.subr.mxu0 0.0
  %2111 = vmatpush1.msra.mxu0 %v1234
  %2112 = vmatprep.mubr.f32.mxu0 %v1340
  %2113 = vmatmul.mubr.f32.gmra.mrb[0].mxu0 %v1339
  %v2114 = vpop.f32.mrb[0].mxu0
  %v2115 = vadd.f32 0.0, %v2114
  %v2116 = vpop.f32.mrb[0].mxu0
  %2117 = vmatprep.mubr.f32.mxu0 %v1342
  %2118 = vmatmul.mubr.f32.gmra.mrb[0].mxu0 %v1341
  %v2119 = vpop.f32.mrb[0].mxu0
  %v2120 = vadd.f32 0.0, %v2119
  %v2121 = vpop.f32.mrb[0].mxu0
  %2122 = vmatprep.mubr.f32.mxu0 %v1344
  %2123 = vmatmul.mubr.f32.gmra.mrb[0].mxu0 %v1343
  %v2124 = vpop.f32.mrb[0].mxu0
  %v2125 = vadd.f32 0.0, %v2124
  %v2126 = vpop.f32.mrb[0].mxu0
  %2127 = vmatprep.mubr.f32.mxu0 %v1346
  %2128 = vmatmul.mubr.f32.gmra.mrb[0].mxu0 %v1345
  %v2129 = vpop.f32.mrb[0].mxu0
  %v2130 = vadd.f32 0.0, %v2129
  %v2131 = vpop.f32.mrb[0].mxu0
  %2132 = vmatprep.mubr.f32.mxu0 %v1348
  %2133 = vmatmul.mubr.f32.gmra.mrb[0].mxu0 %v1347
  %v2134 = vpop.f32.mrb[0].mxu0
  %v2135 = vadd.f32 0.0, %v2134
  %v2136 = vpop.f32.mrb[0].mxu0
  %2137 = vmatprep.mubr.f32.mxu0 %v1350
  %2138 = vmatmul.mubr.f32.gmra.mrb[0].mxu0 %v1349
  %v2139 = vpop.f32.mrb[0].mxu0
  %v2140 = vadd.f32 0.0, %v2139
  %v2141 = vpop.f32.mrb[0].mxu0
  %2142 = vmatprep.mubr.f32.mxu0 %v1352
  %2143 = vmatmul.mubr.f32.gmra.mrb[0].mxu0 %v1351
  %v2144 = vpop.f32.mrb[0].mxu0
  %v2145 = vadd.f32 0.0, %v2144
  %v2146 = vpop.f32.mrb[0].mxu0
  %2147 = vmatprep.mubr.f32.mxu0 %v1354
  %2148 = vmatmul.mubr.f32.gmra.mrb[0].mxu0 %v1353
  %v2149 = vpop.f32.mrb[0].mxu0
  %v2150 = vadd.f32 0.0, %v2149
  %v2151 = vpop.f32.mrb[0].mxu0
  %2152 = vdwg.mxu0
  %2153 = vmatprep.subr.mxu0 0.0
  %2154 = vmatpush1.msra.mxu0 %v1171
  %2155 = vmatprep.subr.mxu0 0.0
  %2156 = vmatpush1.msra.mxu0 %v1172
  %2157 = vmatprep.subr.mxu0 0.0
  %2158 = vmatpush1.msra.mxu0 %v1173
  %2159 = vmatprep.subr.mxu0 0.0
  %2160 = vmatpush1.msra.mxu0 %v1174
  %2161 = vmatprep.subr.mxu0 0.0
  %2162 = vmatpush1.msra.mxu0 %v1175
  %2163 = vmatprep.subr.mxu0 0.0
  %2164 = vmatpush1.msra.mxu0 %v1176
  %2165 = vmatprep.subr.mxu0 0.0
  %2166 = vmatpush1.msra.mxu0 %v1177
  %2167 = vmatprep.subr.mxu0 0.0
  %2168 = vmatpush1.msra.mxu0 %v1178
  %2169 = vmatprep.subr.mxu0 0.0
  %2170 = vmatpush1.msra.mxu0 %v1179
  %2171 = vmatprep.subr.mxu0 0.0
  %2172 = vmatpush1.msra.mxu0 %v1180
  %2173 = vmatprep.subr.mxu0 0.0
  %2174 = vmatpush1.msra.mxu0 %v1181
  %2175 = vmatprep.subr.mxu0 0.0
  %2176 = vmatpush1.msra.mxu0 %v1182
  %2177 = vmatprep.subr.mxu0 0.0
  %2178 = vmatpush1.msra.mxu0 %v1183
  %2179 = vmatprep.subr.mxu0 0.0
  %2180 = vmatpush1.msra.mxu0 %v1184
  %2181 = vmatprep.subr.mxu0 0.0
  %2182 = vmatpush1.msra.mxu0 %v1185
  %2183 = vmatprep.subr.mxu0 0.0
  %2184 = vmatpush1.msra.mxu0 %v1186
  %2185 = vmatprep.subr.mxu0 0.0
  %2186 = vmatpush1.msra.mxu0 %v1187
  %2187 = vmatprep.subr.mxu0 0.0
  %2188 = vmatpush1.msra.mxu0 %v1188
  %2189 = vmatprep.subr.mxu0 0.0
  %2190 = vmatpush1.msra.mxu0 %v1189
  %2191 = vmatprep.subr.mxu0 0.0
  %2192 = vmatpush1.msra.mxu0 %v1190
  %2193 = vmatprep.subr.mxu0 0.0
  %2194 = vmatpush1.msra.mxu0 %v1191
  %2195 = vmatprep.subr.mxu0 0.0
  %2196 = vmatpush1.msra.mxu0 %v1192
  %2197 = vmatprep.subr.mxu0 0.0
  %2198 = vmatpush1.msra.mxu0 %v1193
  %2199 = vmatprep.subr.mxu0 0.0
  %2200 = vmatpush1.msra.mxu0 %v1194
  %2201 = vmatprep.subr.mxu0 0.0
  %2202 = vmatpush1.msra.mxu0 %v1195
  %2203 = vmatprep.subr.mxu0 0.0
  %2204 = vmatpush1.msra.mxu0 %v1196
  %2205 = vmatprep.subr.mxu0 0.0
  %2206 = vmatpush1.msra.mxu0 %v1197
  %2207 = vmatprep.subr.mxu0 0.0
  %2208 = vmatpush1.msra.mxu0 %v1198
  %2209 = vmatprep.subr.mxu0 0.0
  %2210 = vmatpush1.msra.mxu0 %v1199
  %2211 = vmatprep.subr.mxu0 0.0
  %2212 = vmatpush1.msra.mxu0 %v1200
  %2213 = vmatprep.subr.mxu0 0.0
  %2214 = vmatpush1.msra.mxu0 %v1201
  %2215 = vmatprep.subr.mxu0 0.0
  %2216 = vmatpush1.msra.mxu0 %v1202
  %2217 = vmatprep.mubr.f32.mxu0 %v1356
  %2218 = vmatmul.mubr.f32.gmra.mrb[0].mxu0 %v1355
  %v2219 = vpop.f32.mrb[0].mxu0
  %v2220 = vadd.f32 0.0, %v2219
  %v2221 = vpop.f32.mrb[0].mxu0
  %2222 = vmatprep.mubr.f32.mxu0 %v1358
  %2223 = vmatmul.mubr.f32.gmra.mrb[0].mxu0 %v1357
  %v2224 = vpop.f32.mrb[0].mxu0
  %v2225 = vadd.f32 0.0, %v2224
  %v2226 = vpop.f32.mrb[0].mxu0
  %2227 = vmatprep.mubr.f32.mxu0 %v1360
  %2228 = vmatmul.mubr.f32.gmra.mrb[0].mxu0 %v1359
  %v2229 = vpop.f32.mrb[0].mxu0
  %v2230 = vadd.f32 0.0, %v2229
  %v2231 = vpop.f32.mrb[0].mxu0
  %2232 = vmatprep.mubr.f32.mxu0 %v1362
  %2233 = vmatmul.mubr.f32.gmra.mrb[0].mxu0 %v1361
  %v2234 = vpop.f32.mrb[0].mxu0
  %v2235 = vadd.f32 0.0, %v2234
  %v2236 = vpop.f32.mrb[0].mxu0
  %2237 = vmatprep.mubr.f32.mxu0 %v1364
  %2238 = vmatmul.mubr.f32.gmra.mrb[0].mxu0 %v1363
  %v2239 = vpop.f32.mrb[0].mxu0
  %v2240 = vadd.f32 0.0, %v2239
  %v2241 = vpop.f32.mrb[0].mxu0
  %2242 = vmatprep.mubr.f32.mxu0 %v1366
  %2243 = vmatmul.mubr.f32.gmra.mrb[0].mxu0 %v1365
  %v2244 = vpop.f32.mrb[0].mxu0
  %v2245 = vadd.f32 0.0, %v2244
  %v2246 = vpop.f32.mrb[0].mxu0
  %2247 = vmatprep.mubr.f32.mxu0 %v1368
  %2248 = vmatmul.mubr.f32.gmra.mrb[0].mxu0 %v1367
  %v2249 = vpop.f32.mrb[0].mxu0
  %v2250 = vadd.f32 0.0, %v2249
  %v2251 = vpop.f32.mrb[0].mxu0
  %2252 = vmatprep.mubr.f32.mxu0 %v1370
  %2253 = vmatmul.mubr.f32.gmra.mrb[0].mxu0 %v1369
  %v2254 = vpop.f32.mrb[0].mxu0
  %v2255 = vadd.f32 0.0, %v2254
  %v2256 = vpop.f32.mrb[0].mxu0
  %2257 = vdwg.mxu0
  %2258 = vmatprep.subr.mxu0 0.0
  %2259 = vmatpush1.msra.mxu0 %v1203
  %2260 = vmatprep.subr.mxu0 0.0
  %2261 = vmatpush1.msra.mxu0 %v1204
  %2262 = vmatprep.subr.mxu0 0.0
  %2263 = vmatpush1.msra.mxu0 %v1205
  %2264 = vmatprep.subr.mxu0 0.0
  %2265 = vmatpush1.msra.mxu0 %v1206
  %2266 = vmatprep.subr.mxu0 0.0
  %2267 = vmatpush1.msra.mxu0 %v1207
  %2268 = vmatprep.subr.mxu0 0.0
  %2269 = vmatpush1.msra.mxu0 %v1208
  %2270 = vmatprep.subr.mxu0 0.0
  %2271 = vmatpush1.msra.mxu0 %v1209
  %2272 = vmatprep.subr.mxu0 0.0
  %2273 = vmatpush1.msra.mxu0 %v1210
  %2274 = vmatprep.subr.mxu0 0.0
  %2275 = vmatpush1.msra.mxu0 %v1211
  %2276 = vmatprep.subr.mxu0 0.0
  %2277 = vmatpush1.msra.mxu0 %v1212
  %2278 = vmatprep.subr.mxu0 0.0
  %2279 = vmatpush1.msra.mxu0 %v1213
  %2280 = vmatprep.subr.mxu0 0.0
  %2281 = vmatpush1.msra.mxu0 %v1214
  %2282 = vmatprep.subr.mxu0 0.0
  %2283 = vmatpush1.msra.mxu0 %v1215
  %2284 = vmatprep.subr.mxu0 0.0
  %2285 = vmatpush1.msra.mxu0 %v1216
  %2286 = vmatprep.subr.mxu0 0.0
  %2287 = vmatpush1.msra.mxu0 %v1217
  %2288 = vmatprep.subr.mxu0 0.0
  %2289 = vmatpush1.msra.mxu0 %v1218
  %2290 = vmatprep.subr.mxu0 0.0
  %2291 = vmatpush1.msra.mxu0 %v1219
  %2292 = vmatprep.subr.mxu0 0.0
  %2293 = vmatpush1.msra.mxu0 %v1220
  %2294 = vmatprep.subr.mxu0 0.0
  %2295 = vmatpush1.msra.mxu0 %v1221
  %2296 = vmatprep.subr.mxu0 0.0
  %2297 = vmatpush1.msra.mxu0 %v1222
  %2298 = vmatprep.subr.mxu0 0.0
  %2299 = vmatpush1.msra.mxu0 %v1223
  %2300 = vmatprep.subr.mxu0 0.0
  %2301 = vmatpush1.msra.mxu0 %v1224
  %2302 = vmatprep.subr.mxu0 0.0
  %2303 = vmatpush1.msra.mxu0 %v1225
  %2304 = vmatprep.subr.mxu0 0.0
  %2305 = vmatpush1.msra.mxu0 %v1226
  %2306 = vmatprep.subr.mxu0 0.0
  %2307 = vmatpush1.msra.mxu0 %v1227
  %2308 = vmatprep.subr.mxu0 0.0
  %2309 = vmatpush1.msra.mxu0 %v1228
  %2310 = vmatprep.subr.mxu0 0.0
  %2311 = vmatpush1.msra.mxu0 %v1229
  %2312 = vmatprep.subr.mxu0 0.0
  %2313 = vmatpush1.msra.mxu0 %v1230
  %2314 = vmatprep.subr.mxu0 0.0
  %2315 = vmatpush1.msra.mxu0 %v1231
  %2316 = vmatprep.subr.mxu0 0.0
  %2317 = vmatpush1.msra.mxu0 %v1232
  %2318 = vmatprep.subr.mxu0 0.0
  %2319 = vmatpush1.msra.mxu0 %v1233
  %2320 = vmatprep.subr.mxu0 0.0
  %2321 = vmatpush1.msra.mxu0 %v1234
  %2322 = vmatprep.mubr.f32.mxu0 %v1356
  %2323 = vmatmul.mubr.f32.gmra.mrb[0].mxu0 %v1355
  %v2324 = vpop.f32.mrb[0].mxu0
  %v2325 = vadd.f32 0.0, %v2324
  %v2326 = vpop.f32.mrb[0].mxu0
  %2327 = vmatprep.mubr.f32.mxu0 %v1358
  %2328 = vmatmul.mubr.f32.gmra.mrb[0].mxu0 %v1357
  %v2329 = vpop.f32.mrb[0].mxu0
  %v2330 = vadd.f32 0.0, %v2329
  %v2331 = vpop.f32.mrb[0].mxu0
  %2332 = vmatprep.mubr.f32.mxu0 %v1360
  %2333 = vmatmul.mubr.f32.gmra.mrb[0].mxu0 %v1359
  %v2334 = vpop.f32.mrb[0].mxu0
  %v2335 = vadd.f32 0.0, %v2334
  %v2336 = vpop.f32.mrb[0].mxu0
  %2337 = vmatprep.mubr.f32.mxu0 %v1362
  %2338 = vmatmul.mubr.f32.gmra.mrb[0].mxu0 %v1361
  %v2339 = vpop.f32.mrb[0].mxu0
  %v2340 = vadd.f32 0.0, %v2339
  %v2341 = vpop.f32.mrb[0].mxu0
  %2342 = vmatprep.mubr.f32.mxu0 %v1364
  %2343 = vmatmul.mubr.f32.gmra.mrb[0].mxu0 %v1363
  %v2344 = vpop.f32.mrb[0].mxu0
  %v2345 = vadd.f32 0.0, %v2344
  %v2346 = vpop.f32.mrb[0].mxu0
  %2347 = vmatprep.mubr.f32.mxu0 %v1366
  %2348 = vmatmul.mubr.f32.gmra.mrb[0].mxu0 %v1365
  %v2349 = vpop.f32.mrb[0].mxu0
  %v2350 = vadd.f32 0.0, %v2349
  %v2351 = vpop.f32.mrb[0].mxu0
  %2352 = vmatprep.mubr.f32.mxu0 %v1368
  %2353 = vmatmul.mubr.f32.gmra.mrb[0].mxu0 %v1367
  %v2354 = vpop.f32.mrb[0].mxu0
  %v2355 = vadd.f32 0.0, %v2354
  %v2356 = vpop.f32.mrb[0].mxu0
  %2357 = vmatprep.mubr.f32.mxu0 %v1370
  %2358 = vmatmul.mubr.f32.gmra.mrb[0].mxu0 %v1369
  %v2359 = vpop.f32.mrb[0].mxu0
  %v2360 = vadd.f32 0.0, %v2359
  %v2361 = vpop.f32.mrb[0].mxu0
  %2362 = vdwg.mxu0
  %2363 = vmatprep.subr.mxu0 0.0
  %2364 = vmatpush1.msra.mxu0 %v1171
  %2365 = vmatprep.subr.mxu0 0.0
  %2366 = vmatpush1.msra.mxu0 %v1172
  %2367 = vmatprep.subr.mxu0 0.0
  %2368 = vmatpush1.msra.mxu0 %v1173
  %2369 = vmatprep.subr.mxu0 0.0
  %2370 = vmatpush1.msra.mxu0 %v1174
  %2371 = vmatprep.subr.mxu0 0.0
  %2372 = vmatpush1.msra.mxu0 %v1175
  %2373 = vmatprep.subr.mxu0 0.0
  %2374 = vmatpush1.msra.mxu0 %v1176
  %2375 = vmatprep.subr.mxu0 0.0
  %2376 = vmatpush1.msra.mxu0 %v1177
  %2377 = vmatprep.subr.mxu0 0.0
  %2378 = vmatpush1.msra.mxu0 %v1178
  %2379 = vmatprep.subr.mxu0 0.0
  %2380 = vmatpush1.msra.mxu0 %v1179
  %2381 = vmatprep.subr.mxu0 0.0
  %2382 = vmatpush1.msra.mxu0 %v1180
  %2383 = vmatprep.subr.mxu0 0.0
  %2384 = vmatpush1.msra.mxu0 %v1181
  %2385 = vmatprep.subr.mxu0 0.0
  %2386 = vmatpush1.msra.mxu0 %v1182
  %2387 = vmatprep.subr.mxu0 0.0
  %2388 = vmatpush1.msra.mxu0 %v1183
  %2389 = vmatprep.subr.mxu0 0.0
  %2390 = vmatpush1.msra.mxu0 %v1184
  %2391 = vmatprep.subr.mxu0 0.0
  %2392 = vmatpush1.msra.mxu0 %v1185
  %2393 = vmatprep.subr.mxu0 0.0
  %2394 = vmatpush1.msra.mxu0 %v1186
  %2395 = vmatprep.subr.mxu0 0.0
  %2396 = vmatpush1.msra.mxu0 %v1187
  %2397 = vmatprep.subr.mxu0 0.0
  %2398 = vmatpush1.msra.mxu0 %v1188
  %2399 = vmatprep.subr.mxu0 0.0
  %2400 = vmatpush1.msra.mxu0 %v1189
  %2401 = vmatprep.subr.mxu0 0.0
  %2402 = vmatpush1.msra.mxu0 %v1190
  %2403 = vmatprep.subr.mxu0 0.0
  %2404 = vmatpush1.msra.mxu0 %v1191
  %2405 = vmatprep.subr.mxu0 0.0
  %2406 = vmatpush1.msra.mxu0 %v1192
  %2407 = vmatprep.subr.mxu0 0.0
  %2408 = vmatpush1.msra.mxu0 %v1193
  %2409 = vmatprep.subr.mxu0 0.0
  %2410 = vmatpush1.msra.mxu0 %v1194
  %2411 = vmatprep.subr.mxu0 0.0
  %2412 = vmatpush1.msra.mxu0 %v1195
  %2413 = vmatprep.subr.mxu0 0.0
  %2414 = vmatpush1.msra.mxu0 %v1196
  %2415 = vmatprep.subr.mxu0 0.0
  %2416 = vmatpush1.msra.mxu0 %v1197
  %2417 = vmatprep.subr.mxu0 0.0
  %2418 = vmatpush1.msra.mxu0 %v1198
  %2419 = vmatprep.subr.mxu0 0.0
  %2420 = vmatpush1.msra.mxu0 %v1199
  %2421 = vmatprep.subr.mxu0 0.0
  %2422 = vmatpush1.msra.mxu0 %v1200
  %2423 = vmatprep.subr.mxu0 0.0
  %2424 = vmatpush1.msra.mxu0 %v1201
  %2425 = vmatprep.subr.mxu0 0.0
  %2426 = vmatpush1.msra.mxu0 %v1202
  %2427 = vmatprep.mubr.f32.mxu0 %v1372
  %2428 = vmatmul.mubr.f32.gmra.mrb[0].mxu0 %v1371
  %v2429 = vpop.f32.mrb[0].mxu0
  %v2430 = vadd.f32 0.0, %v2429
  %v2431 = vpop.f32.mrb[0].mxu0
  %2432 = vmatprep.mubr.f32.mxu0 %v1374
  %2433 = vmatmul.mubr.f32.gmra.mrb[0].mxu0 %v1373
  %v2434 = vpop.f32.mrb[0].mxu0
  %v2435 = vadd.f32 0.0, %v2434
  %v2436 = vpop.f32.mrb[0].mxu0
  %2437 = vmatprep.mubr.f32.mxu0 %v1376
  %2438 = vmatmul.mubr.f32.gmra.mrb[0].mxu0 %v1375
  %v2439 = vpop.f32.mrb[0].mxu0
  %v2440 = vadd.f32 0.0, %v2439
  %v2441 = vpop.f32.mrb[0].mxu0
  %2442 = vmatprep.mubr.f32.mxu0 %v1378
  %2443 = vmatmul.mubr.f32.gmra.mrb[0].mxu0 %v1377
  %v2444 = vpop.f32.mrb[0].mxu0
  %v2445 = vadd.f32 0.0, %v2444
  %v2446 = vpop.f32.mrb[0].mxu0
  %2447 = vmatprep.mubr.f32.mxu0 %v1380
  %2448 = vmatmul.mubr.f32.gmra.mrb[0].mxu0 %v1379
  %v2449 = vpop.f32.mrb[0].mxu0
  %v2450 = vadd.f32 0.0, %v2449
  %v2451 = vpop.f32.mrb[0].mxu0
  %2452 = vmatprep.mubr.f32.mxu0 %v1382
  %2453 = vmatmul.mubr.f32.gmra.mrb[0].mxu0 %v1381
  %v2454 = vpop.f32.mrb[0].mxu0
  %v2455 = vadd.f32 0.0, %v2454
  %v2456 = vpop.f32.mrb[0].mxu0
  %2457 = vmatprep.mubr.f32.mxu0 %v1384
  %2458 = vmatmul.mubr.f32.gmra.mrb[0].mxu0 %v1383
  %v2459 = vpop.f32.mrb[0].mxu0
  %v2460 = vadd.f32 0.0, %v2459
  %v2461 = vpop.f32.mrb[0].mxu0
  %2462 = vmatprep.mubr.f32.mxu0 %v1386
  %2463 = vmatmul.mubr.f32.gmra.mrb[0].mxu0 %v1385
  %v2464 = vpop.f32.mrb[0].mxu0
  %v2465 = vadd.f32 0.0, %v2464
  %v2466 = vpop.f32.mrb[0].mxu0
  %2467 = vdwg.mxu0
  %2468 = vmatprep.subr.mxu0 0.0
  %2469 = vmatpush1.msra.mxu0 %v1203
  %2470 = vmatprep.subr.mxu0 0.0
  %2471 = vmatpush1.msra.mxu0 %v1204
  %2472 = vmatprep.subr.mxu0 0.0
  %2473 = vmatpush1.msra.mxu0 %v1205
  %2474 = vmatprep.subr.mxu0 0.0
  %2475 = vmatpush1.msra.mxu0 %v1206
  %2476 = vmatprep.subr.mxu0 0.0
  %2477 = vmatpush1.msra.mxu0 %v1207
  %2478 = vmatprep.subr.mxu0 0.0
  %2479 = vmatpush1.msra.mxu0 %v1208
  %2480 = vmatprep.subr.mxu0 0.0
  %2481 = vmatpush1.msra.mxu0 %v1209
  %2482 = vmatprep.subr.mxu0 0.0
  %2483 = vmatpush1.msra.mxu0 %v1210
  %2484 = vmatprep.subr.mxu0 0.0
  %2485 = vmatpush1.msra.mxu0 %v1211
  %2486 = vmatprep.subr.mxu0 0.0
  %2487 = vmatpush1.msra.mxu0 %v1212
  %2488 = vmatprep.subr.mxu0 0.0
  %2489 = vmatpush1.msra.mxu0 %v1213
  %2490 = vmatprep.subr.mxu0 0.0
  %2491 = vmatpush1.msra.mxu0 %v1214
  %2492 = vmatprep.subr.mxu0 0.0
  %2493 = vmatpush1.msra.mxu0 %v1215
  %2494 = vmatprep.subr.mxu0 0.0
  %2495 = vmatpush1.msra.mxu0 %v1216
  %2496 = vmatprep.subr.mxu0 0.0
  %2497 = vmatpush1.msra.mxu0 %v1217
  %2498 = vmatprep.subr.mxu0 0.0
  %2499 = vmatpush1.msra.mxu0 %v1218
  %2500 = vmatprep.subr.mxu0 0.0
  %2501 = vmatpush1.msra.mxu0 %v1219
  %2502 = vmatprep.subr.mxu0 0.0
  %2503 = vmatpush1.msra.mxu0 %v1220
  %2504 = vmatprep.subr.mxu0 0.0
  %2505 = vmatpush1.msra.mxu0 %v1221
  %2506 = vmatprep.subr.mxu0 0.0
  %2507 = vmatpush1.msra.mxu0 %v1222
  %2508 = vmatprep.subr.mxu0 0.0
  %2509 = vmatpush1.msra.mxu0 %v1223
  %2510 = vmatprep.subr.mxu0 0.0
  %2511 = vmatpush1.msra.mxu0 %v1224
  %2512 = vmatprep.subr.mxu0 0.0
  %2513 = vmatpush1.msra.mxu0 %v1225
  %2514 = vmatprep.subr.mxu0 0.0
  %2515 = vmatpush1.msra.mxu0 %v1226
  %2516 = vmatprep.subr.mxu0 0.0
  %2517 = vmatpush1.msra.mxu0 %v1227
  %2518 = vmatprep.subr.mxu0 0.0
  %2519 = vmatpush1.msra.mxu0 %v1228
  %2520 = vmatprep.subr.mxu0 0.0
  %2521 = vmatpush1.msra.mxu0 %v1229
  %2522 = vmatprep.subr.mxu0 0.0
  %2523 = vmatpush1.msra.mxu0 %v1230
  %2524 = vmatprep.subr.mxu0 0.0
  %2525 = vmatpush1.msra.mxu0 %v1231
  %2526 = vmatprep.subr.mxu0 0.0
  %2527 = vmatpush1.msra.mxu0 %v1232
  %2528 = vmatprep.subr.mxu0 0.0
  %2529 = vmatpush1.msra.mxu0 %v1233
  %2530 = vmatprep.subr.mxu0 0.0
  %2531 = vmatpush1.msra.mxu0 %v1234
  %2532 = vmatprep.mubr.f32.mxu0 %v1372
  %2533 = vmatmul.mubr.f32.gmra.mrb[0].mxu0 %v1371
  %v2534 = vpop.f32.mrb[0].mxu0
  %v2535 = vadd.f32 0.0, %v2534
  %v2536 = vpop.f32.mrb[0].mxu0
  %2537 = vmatprep.mubr.f32.mxu0 %v1374
  %2538 = vmatmul.mubr.f32.gmra.mrb[0].mxu0 %v1373
  %v2539 = vpop.f32.mrb[0].mxu0
  %v2540 = vadd.f32 0.0, %v2539
  %v2541 = vpop.f32.mrb[0].mxu0
  %2542 = vmatprep.mubr.f32.mxu0 %v1376
  %2543 = vmatmul.mubr.f32.gmra.mrb[0].mxu0 %v1375
  %v2544 = vpop.f32.mrb[0].mxu0
  %v2545 = vadd.f32 0.0, %v2544
  %v2546 = vpop.f32.mrb[0].mxu0
  %2547 = vmatprep.mubr.f32.mxu0 %v1378
  %2548 = vmatmul.mubr.f32.gmra.mrb[0].mxu0 %v1377
  %v2549 = vpop.f32.mrb[0].mxu0
  %v2550 = vadd.f32 0.0, %v2549
  %v2551 = vpop.f32.mrb[0].mxu0
  %2552 = vmatprep.mubr.f32.mxu0 %v1380
  %2553 = vmatmul.mubr.f32.gmra.mrb[0].mxu0 %v1379
  %v2554 = vpop.f32.mrb[0].mxu0
  %v2555 = vadd.f32 0.0, %v2554
  %v2556 = vpop.f32.mrb[0].mxu0
  %2557 = vmatprep.mubr.f32.mxu0 %v1382
  %2558 = vmatmul.mubr.f32.gmra.mrb[0].mxu0 %v1381
  %v2559 = vpop.f32.mrb[0].mxu0
  %v2560 = vadd.f32 0.0, %v2559
  %v2561 = vpop.f32.mrb[0].mxu0
  %2562 = vmatprep.mubr.f32.mxu0 %v1384
  %2563 = vmatmul.mubr.f32.gmra.mrb[0].mxu0 %v1383
  %v2564 = vpop.f32.mrb[0].mxu0
  %v2565 = vadd.f32 0.0, %v2564
  %v2566 = vpop.f32.mrb[0].mxu0
  %2567 = vmatprep.mubr.f32.mxu0 %v1386
  %2568 = vmatmul.mubr.f32.gmra.mrb[0].mxu0 %v1385
  %v2569 = vpop.f32.mrb[0].mxu0
  %v2570 = vadd.f32 0.0, %v2569
  %v2571 = vpop.f32.mrb[0].mxu0
  %2572 = vdwg.mxu0
  %2573 = vmatprep.subr.mxu0 0.0
  %2574 = vmatpush1.msra.mxu0 %v1171
  %2575 = vmatprep.subr.mxu0 0.0
  %2576 = vmatpush1.msra.mxu0 %v1172
  %2577 = vmatprep.subr.mxu0 0.0
  %2578 = vmatpush1.msra.mxu0 %v1173
  %2579 = vmatprep.subr.mxu0 0.0
  %2580 = vmatpush1.msra.mxu0 %v1174
  %2581 = vmatprep.subr.mxu0 0.0
  %2582 = vmatpush1.msra.mxu0 %v1175
  %2583 = vmatprep.subr.mxu0 0.0
  %2584 = vmatpush1.msra.mxu0 %v1176
  %2585 = vmatprep.subr.mxu0 0.0
  %2586 = vmatpush1.msra.mxu0 %v1177
  %2587 = vmatprep.subr.mxu0 0.0
  %2588 = vmatpush1.msra.mxu0 %v1178
  %2589 = vmatprep.subr.mxu0 0.0
  %2590 = vmatpush1.msra.mxu0 %v1179
  %2591 = vmatprep.subr.mxu0 0.0
  %2592 = vmatpush1.msra.mxu0 %v1180
  %2593 = vmatprep.subr.mxu0 0.0
  %2594 = vmatpush1.msra.mxu0 %v1181
  %2595 = vmatprep.subr.mxu0 0.0
  %2596 = vmatpush1.msra.mxu0 %v1182
  %2597 = vmatprep.subr.mxu0 0.0
  %2598 = vmatpush1.msra.mxu0 %v1183
  %2599 = vmatprep.subr.mxu0 0.0
  %2600 = vmatpush1.msra.mxu0 %v1184
  %2601 = vmatprep.subr.mxu0 0.0
  %2602 = vmatpush1.msra.mxu0 %v1185
  %2603 = vmatprep.subr.mxu0 0.0
  %2604 = vmatpush1.msra.mxu0 %v1186
  %2605 = vmatprep.subr.mxu0 0.0
  %2606 = vmatpush1.msra.mxu0 %v1187
  %2607 = vmatprep.subr.mxu0 0.0
  %2608 = vmatpush1.msra.mxu0 %v1188
  %2609 = vmatprep.subr.mxu0 0.0
  %2610 = vmatpush1.msra.mxu0 %v1189
  %2611 = vmatprep.subr.mxu0 0.0
  %2612 = vmatpush1.msra.mxu0 %v1190
  %2613 = vmatprep.subr.mxu0 0.0
  %2614 = vmatpush1.msra.mxu0 %v1191
  %2615 = vmatprep.subr.mxu0 0.0
  %2616 = vmatpush1.msra.mxu0 %v1192
  %2617 = vmatprep.subr.mxu0 0.0
  %2618 = vmatpush1.msra.mxu0 %v1193
  %2619 = vmatprep.subr.mxu0 0.0
  %2620 = vmatpush1.msra.mxu0 %v1194
  %2621 = vmatprep.subr.mxu0 0.0
  %2622 = vmatpush1.msra.mxu0 %v1195
  %2623 = vmatprep.subr.mxu0 0.0
  %2624 = vmatpush1.msra.mxu0 %v1196
  %2625 = vmatprep.subr.mxu0 0.0
  %2626 = vmatpush1.msra.mxu0 %v1197
  %2627 = vmatprep.subr.mxu0 0.0
  %2628 = vmatpush1.msra.mxu0 %v1198
  %2629 = vmatprep.subr.mxu0 0.0
  %2630 = vmatpush1.msra.mxu0 %v1199
  %2631 = vmatprep.subr.mxu0 0.0
  %2632 = vmatpush1.msra.mxu0 %v1200
  %2633 = vmatprep.subr.mxu0 0.0
  %2634 = vmatpush1.msra.mxu0 %v1201
  %2635 = vmatprep.subr.mxu0 0.0
  %2636 = vmatpush1.msra.mxu0 %v1202
  %2637 = vmatprep.mubr.f32.mxu0 %v1388
  %2638 = vmatmul.mubr.f32.gmra.mrb[0].mxu0 %v1387
  %v2639 = vpop.f32.mrb[0].mxu0
  %v2640 = vadd.f32 0.0, %v2639
  %v2641 = vpop.f32.mrb[0].mxu0
  %2642 = vmatprep.mubr.f32.mxu0 %v1390
  %2643 = vmatmul.mubr.f32.gmra.mrb[0].mxu0 %v1389
  %v2644 = vpop.f32.mrb[0].mxu0
  %v2645 = vadd.f32 0.0, %v2644
  %v2646 = vpop.f32.mrb[0].mxu0
  %2647 = vmatprep.mubr.f32.mxu0 %v1392
  %2648 = vmatmul.mubr.f32.gmra.mrb[0].mxu0 %v1391
  %v2649 = vpop.f32.mrb[0].mxu0
  %v2650 = vadd.f32 0.0, %v2649
  %v2651 = vpop.f32.mrb[0].mxu0
  %2652 = vmatprep.mubr.f32.mxu0 %v1394
  %2653 = vmatmul.mubr.f32.gmra.mrb[0].mxu0 %v1393
  %v2654 = vpop.f32.mrb[0].mxu0
  %v2655 = vadd.f32 0.0, %v2654
  %v2656 = vpop.f32.mrb[0].mxu0
  %2657 = vmatprep.mubr.f32.mxu0 %v1396
  %2658 = vmatmul.mubr.f32.gmra.mrb[0].mxu0 %v1395
  %v2659 = vpop.f32.mrb[0].mxu0
  %v2660 = vadd.f32 0.0, %v2659
  %v2661 = vpop.f32.mrb[0].mxu0
  %2662 = vmatprep.mubr.f32.mxu0 %v1398
  %2663 = vmatmul.mubr.f32.gmra.mrb[0].mxu0 %v1397
  %v2664 = vpop.f32.mrb[0].mxu0
  %v2665 = vadd.f32 0.0, %v2664
  %v2666 = vpop.f32.mrb[0].mxu0
  %2667 = vmatprep.mubr.f32.mxu0 %v1400
  %2668 = vmatmul.mubr.f32.gmra.mrb[0].mxu0 %v1399
  %v2669 = vpop.f32.mrb[0].mxu0
  %v2670 = vadd.f32 0.0, %v2669
  %v2671 = vpop.f32.mrb[0].mxu0
  %2672 = vmatprep.mubr.f32.mxu0 %v1402
  %2673 = vmatmul.mubr.f32.gmra.mrb[0].mxu0 %v1401
  %v2674 = vpop.f32.mrb[0].mxu0
  %v2675 = vadd.f32 0.0, %v2674
  %v2676 = vpop.f32.mrb[0].mxu0
  %2677 = vdwg.mxu0
  %2678 = vmatprep.subr.mxu0 0.0
  %2679 = vmatpush1.msra.mxu0 %v1203
  %2680 = vmatprep.subr.mxu0 0.0
  %2681 = vmatpush1.msra.mxu0 %v1204
  %2682 = vmatprep.subr.mxu0 0.0
  %2683 = vmatpush1.msra.mxu0 %v1205
  %2684 = vmatprep.subr.mxu0 0.0
  %2685 = vmatpush1.msra.mxu0 %v1206
  %2686 = vmatprep.subr.mxu0 0.0
  %2687 = vmatpush1.msra.mxu0 %v1207
  %2688 = vmatprep.subr.mxu0 0.0
  %2689 = vmatpush1.msra.mxu0 %v1208
  %2690 = vmatprep.subr.mxu0 0.0
  %2691 = vmatpush1.msra.mxu0 %v1209
  %2692 = vmatprep.subr.mxu0 0.0
  %2693 = vmatpush1.msra.mxu0 %v1210
  %2694 = vmatprep.subr.mxu0 0.0
  %2695 = vmatpush1.msra.mxu0 %v1211
  %2696 = vmatprep.subr.mxu0 0.0
  %2697 = vmatpush1.msra.mxu0 %v1212
  %2698 = vmatprep.subr.mxu0 0.0
  %2699 = vmatpush1.msra.mxu0 %v1213
  %2700 = vmatprep.subr.mxu0 0.0
  %2701 = vmatpush1.msra.mxu0 %v1214
  %2702 = vmatprep.subr.mxu0 0.0
  %2703 = vmatpush1.msra.mxu0 %v1215
  %2704 = vmatprep.subr.mxu0 0.0
  %2705 = vmatpush1.msra.mxu0 %v1216
  %2706 = vmatprep.subr.mxu0 0.0
  %2707 = vmatpush1.msra.mxu0 %v1217
  %2708 = vmatprep.subr.mxu0 0.0
  %2709 = vmatpush1.msra.mxu0 %v1218
  %2710 = vmatprep.subr.mxu0 0.0
  %2711 = vmatpush1.msra.mxu0 %v1219
  %2712 = vmatprep.subr.mxu0 0.0
  %2713 = vmatpush1.msra.mxu0 %v1220
  %2714 = vmatprep.subr.mxu0 0.0
  %2715 = vmatpush1.msra.mxu0 %v1221
  %2716 = vmatprep.subr.mxu0 0.0
  %2717 = vmatpush1.msra.mxu0 %v1222
  %2718 = vmatprep.subr.mxu0 0.0
  %2719 = vmatpush1.msra.mxu0 %v1223
  %2720 = vmatprep.subr.mxu0 0.0
  %2721 = vmatpush1.msra.mxu0 %v1224
  %2722 = vmatprep.subr.mxu0 0.0
  %2723 = vmatpush1.msra.mxu0 %v1225
  %2724 = vmatprep.subr.mxu0 0.0
  %2725 = vmatpush1.msra.mxu0 %v1226
  %2726 = vmatprep.subr.mxu0 0.0
  %2727 = vmatpush1.msra.mxu0 %v1227
  %2728 = vmatprep.subr.mxu0 0.0
  %2729 = vmatpush1.msra.mxu0 %v1228
  %2730 = vmatprep.subr.mxu0 0.0
  %2731 = vmatpush1.msra.mxu0 %v1229
  %2732 = vmatprep.subr.mxu0 0.0
  %2733 = vmatpush1.msra.mxu0 %v1230
  %2734 = vmatprep.subr.mxu0 0.0
  %2735 = vmatpush1.msra.mxu0 %v1231
  %2736 = vmatprep.subr.mxu0 0.0
  %2737 = vmatpush1.msra.mxu0 %v1232
  %2738 = vmatprep.subr.mxu0 0.0
  %2739 = vmatpush1.msra.mxu0 %v1233
  %2740 = vmatprep.subr.mxu0 0.0
  %2741 = vmatpush1.msra.mxu0 %v1234
  %2742 = vmatprep.mubr.f32.mxu0 %v1388
  %2743 = vmatmul.mubr.f32.gmra.mrb[0].mxu0 %v1387
  %v2744 = vpop.f32.mrb[0].mxu0
  %v2745 = vadd.f32 0.0, %v2744
  %v2746 = vpop.f32.mrb[0].mxu0
  %2747 = vmatprep.mubr.f32.mxu0 %v1390
  %2748 = vmatmul.mubr.f32.gmra.mrb[0].mxu0 %v1389
  %v2749 = vpop.f32.mrb[0].mxu0
  %v2750 = vadd.f32 0.0, %v2749
  %v2751 = vpop.f32.mrb[0].mxu0
  %2752 = vmatprep.mubr.f32.mxu0 %v1392
  %2753 = vmatmul.mubr.f32.gmra.mrb[0].mxu0 %v1391
  %v2754 = vpop.f32.mrb[0].mxu0
  %v2755 = vadd.f32 0.0, %v2754
  %v2756 = vpop.f32.mrb[0].mxu0
  %2757 = vmatprep.mubr.f32.mxu0 %v1394
  %2758 = vmatmul.mubr.f32.gmra.mrb[0].mxu0 %v1393
  %v2759 = vpop.f32.mrb[0].mxu0
  %v2760 = vadd.f32 0.0, %v2759
  %v2761 = vpop.f32.mrb[0].mxu0
  %2762 = vmatprep.mubr.f32.mxu0 %v1396
  %2763 = vmatmul.mubr.f32.gmra.mrb[0].mxu0 %v1395
  %v2764 = vpop.f32.mrb[0].mxu0
  %v2765 = vadd.f32 0.0, %v2764
  %v2766 = vpop.f32.mrb[0].mxu0
  %2767 = vmatprep.mubr.f32.mxu0 %v1398
  %2768 = vmatmul.mubr.f32.gmra.mrb[0].mxu0 %v1397
  %v2769 = vpop.f32.mrb[0].mxu0
  %v2770 = vadd.f32 0.0, %v2769
  %v2771 = vpop.f32.mrb[0].mxu0
  %2772 = vmatprep.mubr.f32.mxu0 %v1400
  %2773 = vmatmul.mubr.f32.gmra.mrb[0].mxu0 %v1399
  %v2774 = vpop.f32.mrb[0].mxu0
  %v2775 = vadd.f32 0.0, %v2774
  %v2776 = vpop.f32.mrb[0].mxu0
  %2777 = vmatprep.mubr.f32.mxu0 %v1402
  %2778 = vmatmul.mubr.f32.gmra.mrb[0].mxu0 %v1401
  %v2779 = vpop.f32.mrb[0].mxu0
  %v2780 = vadd.f32 0.0, %v2779
  %v2781 = vpop.f32.mrb[0].mxu0
  %2782 = vdwg.mxu0
  %2783 = vmatprep.subr.mxu0 0.0
  %2784 = vmatpush1.msra.mxu0 %v1171
  %2785 = vmatprep.subr.mxu0 0.0
  %2786 = vmatpush1.msra.mxu0 %v1172
  %2787 = vmatprep.subr.mxu0 0.0
  %2788 = vmatpush1.msra.mxu0 %v1173
  %2789 = vmatprep.subr.mxu0 0.0
  %2790 = vmatpush1.msra.mxu0 %v1174
  %2791 = vmatprep.subr.mxu0 0.0
  %2792 = vmatpush1.msra.mxu0 %v1175
  %2793 = vmatprep.subr.mxu0 0.0
  %2794 = vmatpush1.msra.mxu0 %v1176
  %2795 = vmatprep.subr.mxu0 0.0
  %2796 = vmatpush1.msra.mxu0 %v1177
  %2797 = vmatprep.subr.mxu0 0.0
  %2798 = vmatpush1.msra.mxu0 %v1178
  %2799 = vmatprep.subr.mxu0 0.0
  %2800 = vmatpush1.msra.mxu0 %v1179
  %2801 = vmatprep.subr.mxu0 0.0
  %2802 = vmatpush1.msra.mxu0 %v1180
  %2803 = vmatprep.subr.mxu0 0.0
  %2804 = vmatpush1.msra.mxu0 %v1181
  %2805 = vmatprep.subr.mxu0 0.0
  %2806 = vmatpush1.msra.mxu0 %v1182
  %2807 = vmatprep.subr.mxu0 0.0
  %2808 = vmatpush1.msra.mxu0 %v1183
  %2809 = vmatprep.subr.mxu0 0.0
  %2810 = vmatpush1.msra.mxu0 %v1184
  %2811 = vmatprep.subr.mxu0 0.0
  %2812 = vmatpush1.msra.mxu0 %v1185
  %2813 = vmatprep.subr.mxu0 0.0
  %2814 = vmatpush1.msra.mxu0 %v1186
  %2815 = vmatprep.subr.mxu0 0.0
  %2816 = vmatpush1.msra.mxu0 %v1187
  %2817 = vmatprep.subr.mxu0 0.0
  %2818 = vmatpush1.msra.mxu0 %v1188
  %2819 = vmatprep.subr.mxu0 0.0
  %2820 = vmatpush1.msra.mxu0 %v1189
  %2821 = vmatprep.subr.mxu0 0.0
  %2822 = vmatpush1.msra.mxu0 %v1190
  %2823 = vmatprep.subr.mxu0 0.0
  %2824 = vmatpush1.msra.mxu0 %v1191
  %2825 = vmatprep.subr.mxu0 0.0
  %2826 = vmatpush1.msra.mxu0 %v1192
  %2827 = vmatprep.subr.mxu0 0.0
  %2828 = vmatpush1.msra.mxu0 %v1193
  %2829 = vmatprep.subr.mxu0 0.0
  %2830 = vmatpush1.msra.mxu0 %v1194
  %2831 = vmatprep.subr.mxu0 0.0
  %2832 = vmatpush1.msra.mxu0 %v1195
  %2833 = vmatprep.subr.mxu0 0.0
  %2834 = vmatpush1.msra.mxu0 %v1196
  %2835 = vmatprep.subr.mxu0 0.0
  %2836 = vmatpush1.msra.mxu0 %v1197
  %2837 = vmatprep.subr.mxu0 0.0
  %2838 = vmatpush1.msra.mxu0 %v1198
  %2839 = vmatprep.subr.mxu0 0.0
  %2840 = vmatpush1.msra.mxu0 %v1199
  %2841 = vmatprep.subr.mxu0 0.0
  %2842 = vmatpush1.msra.mxu0 %v1200
  %2843 = vmatprep.subr.mxu0 0.0
  %2844 = vmatpush1.msra.mxu0 %v1201
  %2845 = vmatprep.subr.mxu0 0.0
  %2846 = vmatpush1.msra.mxu0 %v1202
  %2847 = vmatprep.mubr.f32.mxu0 %v1404
  %2848 = vmatmul.mubr.f32.gmra.mrb[0].mxu0 %v1403
  %v2849 = vpop.f32.mrb[0].mxu0
  %v2850 = vadd.f32 0.0, %v2849
  %v2851 = vpop.f32.mrb[0].mxu0
  %2852 = vmatprep.mubr.f32.mxu0 %v1406
  %2853 = vmatmul.mubr.f32.gmra.mrb[0].mxu0 %v1405
  %v2854 = vpop.f32.mrb[0].mxu0
  %v2855 = vadd.f32 0.0, %v2854
  %v2856 = vpop.f32.mrb[0].mxu0
  %2857 = vmatprep.mubr.f32.mxu0 %v1408
  %2858 = vmatmul.mubr.f32.gmra.mrb[0].mxu0 %v1407
  %v2859 = vpop.f32.mrb[0].mxu0
  %v2860 = vadd.f32 0.0, %v2859
  %v2861 = vpop.f32.mrb[0].mxu0
  %2862 = vmatprep.mubr.f32.mxu0 %v1410
  %2863 = vmatmul.mubr.f32.gmra.mrb[0].mxu0 %v1409
  %v2864 = vpop.f32.mrb[0].mxu0
  %v2865 = vadd.f32 0.0, %v2864
  %v2866 = vpop.f32.mrb[0].mxu0
  %2867 = vmatprep.mubr.f32.mxu0 %v1412
  %2868 = vmatmul.mubr.f32.gmra.mrb[0].mxu0 %v1411
  %v2869 = vpop.f32.mrb[0].mxu0
  %v2870 = vadd.f32 0.0, %v2869
  %v2871 = vpop.f32.mrb[0].mxu0
  %2872 = vmatprep.mubr.f32.mxu0 %v1414
  %2873 = vmatmul.mubr.f32.gmra.mrb[0].mxu0 %v1413
  %v2874 = vpop.f32.mrb[0].mxu0
  %v2875 = vadd.f32 0.0, %v2874
  %v2876 = vpop.f32.mrb[0].mxu0
  %2877 = vmatprep.mubr.f32.mxu0 %v1416
  %2878 = vmatmul.mubr.f32.gmra.mrb[0].mxu0 %v1415
  %v2879 = vpop.f32.mrb[0].mxu0
  %v2880 = vadd.f32 0.0, %v2879
  %v2881 = vpop.f32.mrb[0].mxu0
  %2882 = vmatprep.mubr.f32.mxu0 %v1418
  %2883 = vmatmul.mubr.f32.gmra.mrb[0].mxu0 %v1417
  %v2884 = vpop.f32.mrb[0].mxu0
  %v2885 = vadd.f32 0.0, %v2884
  %v2886 = vpop.f32.mrb[0].mxu0
  %2887 = vdwg.mxu0
  %2888 = vmatprep.subr.mxu0 0.0
  %2889 = vmatpush1.msra.mxu0 %v1203
  %2890 = vmatprep.subr.mxu0 0.0
  %2891 = vmatpush1.msra.mxu0 %v1204
  %2892 = vmatprep.subr.mxu0 0.0
  %2893 = vmatpush1.msra.mxu0 %v1205
  %2894 = vmatprep.subr.mxu0 0.0
  %2895 = vmatpush1.msra.mxu0 %v1206
  %2896 = vmatprep.subr.mxu0 0.0
  %2897 = vmatpush1.msra.mxu0 %v1207
  %2898 = vmatprep.subr.mxu0 0.0
  %2899 = vmatpush1.msra.mxu0 %v1208
  %2900 = vmatprep.subr.mxu0 0.0
  %2901 = vmatpush1.msra.mxu0 %v1209
  %2902 = vmatprep.subr.mxu0 0.0
  %2903 = vmatpush1.msra.mxu0 %v1210
  %2904 = vmatprep.subr.mxu0 0.0
  %2905 = vmatpush1.msra.mxu0 %v1211
  %2906 = vmatprep.subr.mxu0 0.0
  %2907 = vmatpush1.msra.mxu0 %v1212
  %2908 = vmatprep.subr.mxu0 0.0
  %2909 = vmatpush1.msra.mxu0 %v1213
  %2910 = vmatprep.subr.mxu0 0.0
  %2911 = vmatpush1.msra.mxu0 %v1214
  %2912 = vmatprep.subr.mxu0 0.0
  %2913 = vmatpush1.msra.mxu0 %v1215
  %2914 = vmatprep.subr.mxu0 0.0
  %2915 = vmatpush1.msra.mxu0 %v1216
  %2916 = vmatprep.subr.mxu0 0.0
  %2917 = vmatpush1.msra.mxu0 %v1217
  %2918 = vmatprep.subr.mxu0 0.0
  %2919 = vmatpush1.msra.mxu0 %v1218
  %2920 = vmatprep.subr.mxu0 0.0
  %2921 = vmatpush1.msra.mxu0 %v1219
  %2922 = vmatprep.subr.mxu0 0.0
  %2923 = vmatpush1.msra.mxu0 %v1220
  %2924 = vmatprep.subr.mxu0 0.0
  %2925 = vmatpush1.msra.mxu0 %v1221
  %2926 = vmatprep.subr.mxu0 0.0
  %2927 = vmatpush1.msra.mxu0 %v1222
  %2928 = vmatprep.subr.mxu0 0.0
  %2929 = vmatpush1.msra.mxu0 %v1223
  %2930 = vmatprep.subr.mxu0 0.0
  %2931 = vmatpush1.msra.mxu0 %v1224
  %2932 = vmatprep.subr.mxu0 0.0
  %2933 = vmatpush1.msra.mxu0 %v1225
  %2934 = vmatprep.subr.mxu0 0.0
  %2935 = vmatpush1.msra.mxu0 %v1226
  %2936 = vmatprep.subr.mxu0 0.0
  %2937 = vmatpush1.msra.mxu0 %v1227
  %2938 = vmatprep.subr.mxu0 0.0
  %2939 = vmatpush1.msra.mxu0 %v1228
  %2940 = vmatprep.subr.mxu0 0.0
  %2941 = vmatpush1.msra.mxu0 %v1229
  %2942 = vmatprep.subr.mxu0 0.0
  %2943 = vmatpush1.msra.mxu0 %v1230
  %2944 = vmatprep.subr.mxu0 0.0
  %2945 = vmatpush1.msra.mxu0 %v1231
  %2946 = vmatprep.subr.mxu0 0.0
  %2947 = vmatpush1.msra.mxu0 %v1232
  %2948 = vmatprep.subr.mxu0 0.0
  %2949 = vmatpush1.msra.mxu0 %v1233
  %2950 = vmatprep.subr.mxu0 0.0
  %2951 = vmatpush1.msra.mxu0 %v1234
  %2952 = vmatprep.mubr.f32.mxu0 %v1404
  %2953 = vmatmul.mubr.f32.gmra.mrb[0].mxu0 %v1403
  %v2954 = vpop.f32.mrb[0].mxu0
  %v2955 = vadd.f32 0.0, %v2954
  %v2956 = vpop.f32.mrb[0].mxu0
  %2957 = vmatprep.mubr.f32.mxu0 %v1406
  %2958 = vmatmul.mubr.f32.gmra.mrb[0].mxu0 %v1405
  %v2959 = vpop.f32.mrb[0].mxu0
  %v2960 = vadd.f32 0.0, %v2959
  %v2961 = vpop.f32.mrb[0].mxu0
  %2962 = vmatprep.mubr.f32.mxu0 %v1408
  %2963 = vmatmul.mubr.f32.gmra.mrb[0].mxu0 %v1407
  %v2964 = vpop.f32.mrb[0].mxu0
  %v2965 = vadd.f32 0.0, %v2964
  %v2966 = vpop.f32.mrb[0].mxu0
  %2967 = vmatprep.mubr.f32.mxu0 %v1410
  %2968 = vmatmul.mubr.f32.gmra.mrb[0].mxu0 %v1409
  %v2969 = vpop.f32.mrb[0].mxu0
  %v2970 = vadd.f32 0.0, %v2969
  %v2971 = vpop.f32.mrb[0].mxu0
  %2972 = vmatprep.mubr.f32.mxu0 %v1412
  %2973 = vmatmul.mubr.f32.gmra.mrb[0].mxu0 %v1411
  %v2974 = vpop.f32.mrb[0].mxu0
  %v2975 = vadd.f32 0.0, %v2974
  %v2976 = vpop.f32.mrb[0].mxu0
  %2977 = vmatprep.mubr.f32.mxu0 %v1414
  %2978 = vmatmul.mubr.f32.gmra.mrb[0].mxu0 %v1413
  %v2979 = vpop.f32.mrb[0].mxu0
  %v2980 = vadd.f32 0.0, %v2979
  %v2981 = vpop.f32.mrb[0].mxu0
  %2982 = vmatprep.mubr.f32.mxu0 %v1416
  %2983 = vmatmul.mubr.f32.gmra.mrb[0].mxu0 %v1415
  %v2984 = vpop.f32.mrb[0].mxu0
  %v2985 = vadd.f32 0.0, %v2984
  %v2986 = vpop.f32.mrb[0].mxu0
  %2987 = vmatprep.mubr.f32.mxu0 %v1418
  %2988 = vmatmul.mubr.f32.gmra.mrb[0].mxu0 %v1417
  %v2989 = vpop.f32.mrb[0].mxu0
  %v2990 = vadd.f32 0.0, %v2989
  %v2991 = vpop.f32.mrb[0].mxu0
  %2992 = vdwg.mxu0
  %2993 = vmatprep.subr.mxu0 0.0
  %2994 = vmatpush1.msra.mxu0 %v1171
  %2995 = vmatprep.subr.mxu0 0.0
  %2996 = vmatpush1.msra.mxu0 %v1172
  %2997 = vmatprep.subr.mxu0 0.0
  %2998 = vmatpush1.msra.mxu0 %v1173
  %2999 = vmatprep.subr.mxu0 0.0
  %3000 = vmatpush1.msra.mxu0 %v1174
  %3001 = vmatprep.subr.mxu0 0.0
  %3002 = vmatpush1.msra.mxu0 %v1175
  %3003 = vmatprep.subr.mxu0 0.0
  %3004 = vmatpush1.msra.mxu0 %v1176
  %3005 = vmatprep.subr.mxu0 0.0
  %3006 = vmatpush1.msra.mxu0 %v1177
  %3007 = vmatprep.subr.mxu0 0.0
  %3008 = vmatpush1.msra.mxu0 %v1178
  %3009 = vmatprep.subr.mxu0 0.0
  %3010 = vmatpush1.msra.mxu0 %v1179
  %3011 = vmatprep.subr.mxu0 0.0
  %3012 = vmatpush1.msra.mxu0 %v1180
  %3013 = vmatprep.subr.mxu0 0.0
  %3014 = vmatpush1.msra.mxu0 %v1181
  %3015 = vmatprep.subr.mxu0 0.0
  %3016 = vmatpush1.msra.mxu0 %v1182
  %3017 = vmatprep.subr.mxu0 0.0
  %3018 = vmatpush1.msra.mxu0 %v1183
  %3019 = vmatprep.subr.mxu0 0.0
  %3020 = vmatpush1.msra.mxu0 %v1184
  %3021 = vmatprep.subr.mxu0 0.0
  %3022 = vmatpush1.msra.mxu0 %v1185
  %3023 = vmatprep.subr.mxu0 0.0
  %3024 = vmatpush1.msra.mxu0 %v1186
  %3025 = vmatprep.subr.mxu0 0.0
  %3026 = vmatpush1.msra.mxu0 %v1187
  %3027 = vmatprep.subr.mxu0 0.0
  %3028 = vmatpush1.msra.mxu0 %v1188
  %3029 = vmatprep.subr.mxu0 0.0
  %3030 = vmatpush1.msra.mxu0 %v1189
  %3031 = vmatprep.subr.mxu0 0.0
  %3032 = vmatpush1.msra.mxu0 %v1190
  %3033 = vmatprep.subr.mxu0 0.0
  %3034 = vmatpush1.msra.mxu0 %v1191
  %3035 = vmatprep.subr.mxu0 0.0
  %3036 = vmatpush1.msra.mxu0 %v1192
  %3037 = vmatprep.subr.mxu0 0.0
  %3038 = vmatpush1.msra.mxu0 %v1193
  %3039 = vmatprep.subr.mxu0 0.0
  %3040 = vmatpush1.msra.mxu0 %v1194
  %3041 = vmatprep.subr.mxu0 0.0
  %3042 = vmatpush1.msra.mxu0 %v1195
  %3043 = vmatprep.subr.mxu0 0.0
  %3044 = vmatpush1.msra.mxu0 %v1196
  %3045 = vmatprep.subr.mxu0 0.0
  %3046 = vmatpush1.msra.mxu0 %v1197
  %3047 = vmatprep.subr.mxu0 0.0
  %3048 = vmatpush1.msra.mxu0 %v1198
  %3049 = vmatprep.subr.mxu0 0.0
  %3050 = vmatpush1.msra.mxu0 %v1199
  %3051 = vmatprep.subr.mxu0 0.0
  %3052 = vmatpush1.msra.mxu0 %v1200
  %3053 = vmatprep.subr.mxu0 0.0
  %3054 = vmatpush1.msra.mxu0 %v1201
  %3055 = vmatprep.subr.mxu0 0.0
  %3056 = vmatpush1.msra.mxu0 %v1202
  %3057 = vmatprep.mubr.f32.mxu0 %v1420
  %3058 = vmatmul.mubr.f32.gmra.mrb[0].mxu0 %v1419
  %v3059 = vpop.f32.mrb[0].mxu0
  %v3060 = vadd.f32 0.0, %v3059
  %v3061 = vpop.f32.mrb[0].mxu0
  %3062 = vmatprep.mubr.f32.mxu0 %v1422
  %3063 = vmatmul.mubr.f32.gmra.mrb[0].mxu0 %v1421
  %v3064 = vpop.f32.mrb[0].mxu0
  %v3065 = vadd.f32 0.0, %v3064
  %v3066 = vpop.f32.mrb[0].mxu0
  %3067 = vmatprep.mubr.f32.mxu0 %v1424
  %3068 = vmatmul.mubr.f32.gmra.mrb[0].mxu0 %v1423
  %v3069 = vpop.f32.mrb[0].mxu0
  %v3070 = vadd.f32 0.0, %v3069
  %v3071 = vpop.f32.mrb[0].mxu0
  %3072 = vmatprep.mubr.f32.mxu0 %v1426
  %3073 = vmatmul.mubr.f32.gmra.mrb[0].mxu0 %v1425
  %v3074 = vpop.f32.mrb[0].mxu0
  %v3075 = vadd.f32 0.0, %v3074
  %v3076 = vpop.f32.mrb[0].mxu0
  %3077 = vmatprep.mubr.f32.mxu0 %v1428
  %3078 = vmatmul.mubr.f32.gmra.mrb[0].mxu0 %v1427
  %v3079 = vpop.f32.mrb[0].mxu0
  %v3080 = vadd.f32 0.0, %v3079
  %v3081 = vpop.f32.mrb[0].mxu0
  %3082 = vmatprep.mubr.f32.mxu0 %v1430
  %3083 = vmatmul.mubr.f32.gmra.mrb[0].mxu0 %v1429
  %v3084 = vpop.f32.mrb[0].mxu0
  %v3085 = vadd.f32 0.0, %v3084
  %v3086 = vpop.f32.mrb[0].mxu0
  %3087 = vmatprep.mubr.f32.mxu0 %v1432
  %3088 = vmatmul.mubr.f32.gmra.mrb[0].mxu0 %v1431
  %v3089 = vpop.f32.mrb[0].mxu0
  %v3090 = vadd.f32 0.0, %v3089
  %v3091 = vpop.f32.mrb[0].mxu0
  %3092 = vmatprep.mubr.f32.mxu0 %v1434
  %3093 = vmatmul.mubr.f32.gmra.mrb[0].mxu0 %v1433
  %v3094 = vpop.f32.mrb[0].mxu0
  %v3095 = vadd.f32 0.0, %v3094
  %v3096 = vpop.f32.mrb[0].mxu0
  %3097 = vdwg.mxu0
  %3098 = vmatprep.subr.mxu0 0.0
  %3099 = vmatpush1.msra.mxu0 %v1203
  %3100 = vmatprep.subr.mxu0 0.0
  %3101 = vmatpush1.msra.mxu0 %v1204
  %3102 = vmatprep.subr.mxu0 0.0
  %3103 = vmatpush1.msra.mxu0 %v1205
  %3104 = vmatprep.subr.mxu0 0.0
  %3105 = vmatpush1.msra.mxu0 %v1206
  %3106 = vmatprep.subr.mxu0 0.0
  %3107 = vmatpush1.msra.mxu0 %v1207
  %3108 = vmatprep.subr.mxu0 0.0
  %3109 = vmatpush1.msra.mxu0 %v1208
  %3110 = vmatprep.subr.mxu0 0.0
  %3111 = vmatpush1.msra.mxu0 %v1209
  %3112 = vmatprep.subr.mxu0 0.0
  %3113 = vmatpush1.msra.mxu0 %v1210
  %3114 = vmatprep.subr.mxu0 0.0
  %3115 = vmatpush1.msra.mxu0 %v1211
  %3116 = vmatprep.subr.mxu0 0.0
  %3117 = vmatpush1.msra.mxu0 %v1212
  %3118 = vmatprep.subr.mxu0 0.0
  %3119 = vmatpush1.msra.mxu0 %v1213
  %3120 = vmatprep.subr.mxu0 0.0
  %3121 = vmatpush1.msra.mxu0 %v1214
  %3122 = vmatprep.subr.mxu0 0.0
  %3123 = vmatpush1.msra.mxu0 %v1215
  %3124 = vmatprep.subr.mxu0 0.0
  %3125 = vmatpush1.msra.mxu0 %v1216
  %3126 = vmatprep.subr.mxu0 0.0
  %3127 = vmatpush1.msra.mxu0 %v1217
  %3128 = vmatprep.subr.mxu0 0.0
  %3129 = vmatpush1.msra.mxu0 %v1218
  %3130 = vmatprep.subr.mxu0 0.0
  %3131 = vmatpush1.msra.mxu0 %v1219
  %3132 = vmatprep.subr.mxu0 0.0
  %3133 = vmatpush1.msra.mxu0 %v1220
  %3134 = vmatprep.subr.mxu0 0.0
  %3135 = vmatpush1.msra.mxu0 %v1221
  %3136 = vmatprep.subr.mxu0 0.0
  %3137 = vmatpush1.msra.mxu0 %v1222
  %3138 = vmatprep.subr.mxu0 0.0
  %3139 = vmatpush1.msra.mxu0 %v1223
  %3140 = vmatprep.subr.mxu0 0.0
  %3141 = vmatpush1.msra.mxu0 %v1224
  %3142 = vmatprep.subr.mxu0 0.0
  %3143 = vmatpush1.msra.mxu0 %v1225
  %3144 = vmatprep.subr.mxu0 0.0
  %3145 = vmatpush1.msra.mxu0 %v1226
  %3146 = vmatprep.subr.mxu0 0.0
  %3147 = vmatpush1.msra.mxu0 %v1227
  %3148 = vmatprep.subr.mxu0 0.0
  %3149 = vmatpush1.msra.mxu0 %v1228
  %3150 = vmatprep.subr.mxu0 0.0
  %3151 = vmatpush1.msra.mxu0 %v1229
  %3152 = vmatprep.subr.mxu0 0.0
  %3153 = vmatpush1.msra.mxu0 %v1230
  %3154 = vmatprep.subr.mxu0 0.0
  %3155 = vmatpush1.msra.mxu0 %v1231
  %3156 = vmatprep.subr.mxu0 0.0
  %3157 = vmatpush1.msra.mxu0 %v1232
  %3158 = vmatprep.subr.mxu0 0.0
  %3159 = vmatpush1.msra.mxu0 %v1233
  %3160 = vmatprep.subr.mxu0 0.0
  %3161 = vmatpush1.msra.mxu0 %v1234
  %3162 = vmatprep.mubr.f32.mxu0 %v1420
  %3163 = vmatmul.mubr.f32.gmra.mrb[0].mxu0 %v1419
  %v3164 = vpop.f32.mrb[0].mxu0
  %v3165 = vadd.f32 0.0, %v3164
  %v3166 = vpop.f32.mrb[0].mxu0
  %3167 = vmatprep.mubr.f32.mxu0 %v1422
  %3168 = vmatmul.mubr.f32.gmra.mrb[0].mxu0 %v1421
  %v3169 = vpop.f32.mrb[0].mxu0
  %v3170 = vadd.f32 0.0, %v3169
  %v3171 = vpop.f32.mrb[0].mxu0
  %3172 = vmatprep.mubr.f32.mxu0 %v1424
  %3173 = vmatmul.mubr.f32.gmra.mrb[0].mxu0 %v1423
  %v3174 = vpop.f32.mrb[0].mxu0
  %v3175 = vadd.f32 0.0, %v3174
  %v3176 = vpop.f32.mrb[0].mxu0
  %3177 = vmatprep.mubr.f32.mxu0 %v1426
  %3178 = vmatmul.mubr.f32.gmra.mrb[0].mxu0 %v1425
  %v3179 = vpop.f32.mrb[0].mxu0
  %v3180 = vadd.f32 0.0, %v3179
  %v3181 = vpop.f32.mrb[0].mxu0
  %3182 = vmatprep.mubr.f32.mxu0 %v1428
  %3183 = vmatmul.mubr.f32.gmra.mrb[0].mxu0 %v1427
  %v3184 = vpop.f32.mrb[0].mxu0
  %v3185 = vadd.f32 0.0, %v3184
  %v3186 = vpop.f32.mrb[0].mxu0
  %3187 = vmatprep.mubr.f32.mxu0 %v1430
  %3188 = vmatmul.mubr.f32.gmra.mrb[0].mxu0 %v1429
  %v3189 = vpop.f32.mrb[0].mxu0
  %v3190 = vadd.f32 0.0, %v3189
  %v3191 = vpop.f32.mrb[0].mxu0
  %3192 = vmatprep.mubr.f32.mxu0 %v1432
  %3193 = vmatmul.mubr.f32.gmra.mrb[0].mxu0 %v1431
  %v3194 = vpop.f32.mrb[0].mxu0
  %v3195 = vadd.f32 0.0, %v3194
  %v3196 = vpop.f32.mrb[0].mxu0
  %3197 = vmatprep.mubr.f32.mxu0 %v1434
  %3198 = vmatmul.mubr.f32.gmra.mrb[0].mxu0 %v1433
  %v3199 = vpop.f32.mrb[0].mxu0
  %v3200 = vadd.f32 0.0, %v3199
  %v3201 = vpop.f32.mrb[0].mxu0
  %3202 = vdwg.mxu0
  %3203 = vmatprep.subr.mxu0 0.0
  %3204 = vmatpush1.msra.mxu0 %v1171
  %3205 = vmatprep.subr.mxu0 0.0
  %3206 = vmatpush1.msra.mxu0 %v1172
  %3207 = vmatprep.subr.mxu0 0.0
  %3208 = vmatpush1.msra.mxu0 %v1173
  %3209 = vmatprep.subr.mxu0 0.0
  %3210 = vmatpush1.msra.mxu0 %v1174
  %3211 = vmatprep.subr.mxu0 0.0
  %3212 = vmatpush1.msra.mxu0 %v1175
  %3213 = vmatprep.subr.mxu0 0.0
  %3214 = vmatpush1.msra.mxu0 %v1176
  %3215 = vmatprep.subr.mxu0 0.0
  %3216 = vmatpush1.msra.mxu0 %v1177
  %3217 = vmatprep.subr.mxu0 0.0
  %3218 = vmatpush1.msra.mxu0 %v1178
  %3219 = vmatprep.subr.mxu0 0.0
  %3220 = vmatpush1.msra.mxu0 %v1179
  %3221 = vmatprep.subr.mxu0 0.0
  %3222 = vmatpush1.msra.mxu0 %v1180
  %3223 = vmatprep.subr.mxu0 0.0
  %3224 = vmatpush1.msra.mxu0 %v1181
  %3225 = vmatprep.subr.mxu0 0.0
  %3226 = vmatpush1.msra.mxu0 %v1182
  %3227 = vmatprep.subr.mxu0 0.0
  %3228 = vmatpush1.msra.mxu0 %v1183
  %3229 = vmatprep.subr.mxu0 0.0
  %3230 = vmatpush1.msra.mxu0 %v1184
  %3231 = vmatprep.subr.mxu0 0.0
  %3232 = vmatpush1.msra.mxu0 %v1185
  %3233 = vmatprep.subr.mxu0 0.0
  %3234 = vmatpush1.msra.mxu0 %v1186
  %3235 = vmatprep.subr.mxu0 0.0
  %3236 = vmatpush1.msra.mxu0 %v1187
  %3237 = vmatprep.subr.mxu0 0.0
  %3238 = vmatpush1.msra.mxu0 %v1188
  %3239 = vmatprep.subr.mxu0 0.0
  %3240 = vmatpush1.msra.mxu0 %v1189
  %3241 = vmatprep.subr.mxu0 0.0
  %3242 = vmatpush1.msra.mxu0 %v1190
  %3243 = vmatprep.subr.mxu0 0.0
  %3244 = vmatpush1.msra.mxu0 %v1191
  %3245 = vmatprep.subr.mxu0 0.0
  %3246 = vmatpush1.msra.mxu0 %v1192
  %3247 = vmatprep.subr.mxu0 0.0
  %3248 = vmatpush1.msra.mxu0 %v1193
  %3249 = vmatprep.subr.mxu0 0.0
  %3250 = vmatpush1.msra.mxu0 %v1194
  %3251 = vmatprep.subr.mxu0 0.0
  %3252 = vmatpush1.msra.mxu0 %v1195
  %3253 = vmatprep.subr.mxu0 0.0
  %3254 = vmatpush1.msra.mxu0 %v1196
  %3255 = vmatprep.subr.mxu0 0.0
  %3256 = vmatpush1.msra.mxu0 %v1197
  %3257 = vmatprep.subr.mxu0 0.0
  %3258 = vmatpush1.msra.mxu0 %v1198
  %3259 = vmatprep.subr.mxu0 0.0
  %3260 = vmatpush1.msra.mxu0 %v1199
  %3261 = vmatprep.subr.mxu0 0.0
  %3262 = vmatpush1.msra.mxu0 %v1200
  %3263 = vmatprep.subr.mxu0 0.0
  %3264 = vmatpush1.msra.mxu0 %v1201
  %3265 = vmatprep.subr.mxu0 0.0
  %3266 = vmatpush1.msra.mxu0 %v1202
  %3267 = vmatprep.mubr.f32.mxu0 %v1436
  %3268 = vmatmul.mubr.f32.gmra.mrb[0].mxu0 %v1435
  %v3269 = vpop.f32.mrb[0].mxu0
  %v3270 = vadd.f32 0.0, %v3269
  %v3271 = vpop.f32.mrb[0].mxu0
  %3272 = vmatprep.mubr.f32.mxu0 %v1438
  %3273 = vmatmul.mubr.f32.gmra.mrb[0].mxu0 %v1437
  %v3274 = vpop.f32.mrb[0].mxu0
  %v3275 = vadd.f32 0.0, %v3274
  %v3276 = vpop.f32.mrb[0].mxu0
  %3277 = vmatprep.mubr.f32.mxu0 %v1440
  %3278 = vmatmul.mubr.f32.gmra.mrb[0].mxu0 %v1439
  %v3279 = vpop.f32.mrb[0].mxu0
  %v3280 = vadd.f32 0.0, %v3279
  %v3281 = vpop.f32.mrb[0].mxu0
  %3282 = vmatprep.mubr.f32.mxu0 %v1442
  %3283 = vmatmul.mubr.f32.gmra.mrb[0].mxu0 %v1441
  %v3284 = vpop.f32.mrb[0].mxu0
  %v3285 = vadd.f32 0.0, %v3284
  %v3286 = vpop.f32.mrb[0].mxu0
  %3287 = vmatprep.mubr.f32.mxu0 %v1444
  %3288 = vmatmul.mubr.f32.gmra.mrb[0].mxu0 %v1443
  %v3289 = vpop.f32.mrb[0].mxu0
  %v3290 = vadd.f32 0.0, %v3289
  %v3291 = vpop.f32.mrb[0].mxu0
  %3292 = vmatprep.mubr.f32.mxu0 %v1446
  %3293 = vmatmul.mubr.f32.gmra.mrb[0].mxu0 %v1445
  %v3294 = vpop.f32.mrb[0].mxu0
  %v3295 = vadd.f32 0.0, %v3294
  %v3296 = vpop.f32.mrb[0].mxu0
  %3297 = vmatprep.mubr.f32.mxu0 %v1448
  %3298 = vmatmul.mubr.f32.gmra.mrb[0].mxu0 %v1447
  %v3299 = vpop.f32.mrb[0].mxu0
  %v3300 = vadd.f32 0.0, %v3299
  %v3301 = vpop.f32.mrb[0].mxu0
  %3302 = vmatprep.mubr.f32.mxu0 %v1450
  %3303 = vmatmul.mubr.f32.gmra.mrb[0].mxu0 %v1449
  %v3304 = vpop.f32.mrb[0].mxu0
  %v3305 = vadd.f32 0.0, %v3304
  %v3306 = vpop.f32.mrb[0].mxu0
  %3307 = vdwg.mxu0
  %3308 = vmatprep.subr.mxu0 0.0
  %3309 = vmatpush1.msra.mxu0 %v1203
  %3310 = vmatprep.subr.mxu0 0.0
  %3311 = vmatpush1.msra.mxu0 %v1204
  %3312 = vmatprep.subr.mxu0 0.0
  %3313 = vmatpush1.msra.mxu0 %v1205
  %3314 = vmatprep.subr.mxu0 0.0
  %3315 = vmatpush1.msra.mxu0 %v1206
  %3316 = vmatprep.subr.mxu0 0.0
  %3317 = vmatpush1.msra.mxu0 %v1207
  %3318 = vmatprep.subr.mxu0 0.0
  %3319 = vmatpush1.msra.mxu0 %v1208
  %3320 = vmatprep.subr.mxu0 0.0
  %3321 = vmatpush1.msra.mxu0 %v1209
  %3322 = vmatprep.subr.mxu0 0.0
  %3323 = vmatpush1.msra.mxu0 %v1210
  %3324 = vmatprep.subr.mxu0 0.0
  %3325 = vmatpush1.msra.mxu0 %v1211
  %3326 = vmatprep.subr.mxu0 0.0
  %3327 = vmatpush1.msra.mxu0 %v1212
  %3328 = vmatprep.subr.mxu0 0.0
  %3329 = vmatpush1.msra.mxu0 %v1213
  %3330 = vmatprep.subr.mxu0 0.0
  %3331 = vmatpush1.msra.mxu0 %v1214
  %3332 = vmatprep.subr.mxu0 0.0
  %3333 = vmatpush1.msra.mxu0 %v1215
  %3334 = vmatprep.subr.mxu0 0.0
  %3335 = vmatpush1.msra.mxu0 %v1216
  %3336 = vmatprep.subr.mxu0 0.0
  %3337 = vmatpush1.msra.mxu0 %v1217
  %3338 = vmatprep.subr.mxu0 0.0
  %3339 = vmatpush1.msra.mxu0 %v1218
  %3340 = vmatprep.subr.mxu0 0.0
  %3341 = vmatpush1.msra.mxu0 %v1219
  %3342 = vmatprep.subr.mxu0 0.0
  %3343 = vmatpush1.msra.mxu0 %v1220
  %3344 = vmatprep.subr.mxu0 0.0
  %3345 = vmatpush1.msra.mxu0 %v1221
  %3346 = vmatprep.subr.mxu0 0.0
  %3347 = vmatpush1.msra.mxu0 %v1222
  %3348 = vmatprep.subr.mxu0 0.0
  %3349 = vmatpush1.msra.mxu0 %v1223
  %3350 = vmatprep.subr.mxu0 0.0
  %3351 = vmatpush1.msra.mxu0 %v1224
  %3352 = vmatprep.subr.mxu0 0.0
  %3353 = vmatpush1.msra.mxu0 %v1225
  %3354 = vmatprep.subr.mxu0 0.0
  %3355 = vmatpush1.msra.mxu0 %v1226
  %3356 = vmatprep.subr.mxu0 0.0
  %3357 = vmatpush1.msra.mxu0 %v1227
  %3358 = vmatprep.subr.mxu0 0.0
  %3359 = vmatpush1.msra.mxu0 %v1228
  %3360 = vmatprep.subr.mxu0 0.0
  %3361 = vmatpush1.msra.mxu0 %v1229
  %3362 = vmatprep.subr.mxu0 0.0
  %3363 = vmatpush1.msra.mxu0 %v1230
  %3364 = vmatprep.subr.mxu0 0.0
  %3365 = vmatpush1.msra.mxu0 %v1231
  %3366 = vmatprep.subr.mxu0 0.0
  %3367 = vmatpush1.msra.mxu0 %v1232
  %3368 = vmatprep.subr.mxu0 0.0
  %3369 = vmatpush1.msra.mxu0 %v1233
  %3370 = vmatprep.subr.mxu0 0.0
  %3371 = vmatpush1.msra.mxu0 %v1234
  %3372 = vmatprep.mubr.f32.mxu0 %v1436
  %3373 = vmatmul.mubr.f32.gmra.mrb[0].mxu0 %v1435
  %v3374 = vpop.f32.mrb[0].mxu0
  %v3375 = vadd.f32 0.0, %v3374
  %v3376 = vpop.f32.mrb[0].mxu0
  %3377 = vmatprep.mubr.f32.mxu0 %v1438
  %3378 = vmatmul.mubr.f32.gmra.mrb[0].mxu0 %v1437
  %v3379 = vpop.f32.mrb[0].mxu0
  %v3380 = vadd.f32 0.0, %v3379
  %v3381 = vpop.f32.mrb[0].mxu0
  %3382 = vmatprep.mubr.f32.mxu0 %v1440
  %3383 = vmatmul.mubr.f32.gmra.mrb[0].mxu0 %v1439
  %v3384 = vpop.f32.mrb[0].mxu0
  %v3385 = vadd.f32 0.0, %v3384
  %v3386 = vpop.f32.mrb[0].mxu0
  %3387 = vmatprep.mubr.f32.mxu0 %v1442
  %3388 = vmatmul.mubr.f32.gmra.mrb[0].mxu0 %v1441
  %v3389 = vpop.f32.mrb[0].mxu0
  %v3390 = vadd.f32 0.0, %v3389
  %v3391 = vpop.f32.mrb[0].mxu0
  %3392 = vmatprep.mubr.f32.mxu0 %v1444
  %3393 = vmatmul.mubr.f32.gmra.mrb[0].mxu0 %v1443
  %v3394 = vpop.f32.mrb[0].mxu0
  %v3395 = vadd.f32 0.0, %v3394
  %v3396 = vpop.f32.mrb[0].mxu0
  %3397 = vmatprep.mubr.f32.mxu0 %v1446
  %3398 = vmatmul.mubr.f32.gmra.mrb[0].mxu0 %v1445
  %v3399 = vpop.f32.mrb[0].mxu0
  %v3400 = vadd.f32 0.0, %v3399
  %v3401 = vpop.f32.mrb[0].mxu0
  %3402 = vmatprep.mubr.f32.mxu0 %v1448
  %3403 = vmatmul.mubr.f32.gmra.mrb[0].mxu0 %v1447
  %v3404 = vpop.f32.mrb[0].mxu0
  %v3405 = vadd.f32 0.0, %v3404
  %v3406 = vpop.f32.mrb[0].mxu0
  %3407 = vmatprep.mubr.f32.mxu0 %v1450
  %3408 = vmatmul.mubr.f32.gmra.mrb[0].mxu0 %v1449
  %v3409 = vpop.f32.mrb[0].mxu0
  %v3410 = vadd.f32 0.0, %v3409
  %v3411 = vpop.f32.mrb[0].mxu0
  %3412 = vdwg.mxu0
  %3429 = vrot.lane.b32.xlu0 %v1800, 32
  %v3430 = vpop.permute.xlu0 %3429
  %3431 = vrot.lane.b32.xlu0 %v1805, 32
  %v3432 = vpop.permute.xlu0 %3431
  %3433 = vrot.lane.b32.xlu0 %v1810, 32
  %v3434 = vpop.permute.xlu0 %3433
  %3435 = vrot.lane.b32.xlu0 %v1815, 32
  %v3436 = vpop.permute.xlu0 %3435
  %3437 = vrot.lane.b32.xlu0 %v1820, 32
  %v3438 = vpop.permute.xlu0 %3437
  %3439 = vrot.lane.b32.xlu0 %v1825, 32
  %v3440 = vpop.permute.xlu0 %3439
  %3441 = vrot.lane.b32.xlu0 %v1830, 32
  %v3442 = vpop.permute.xlu0 %3441
  %3443 = vrot.lane.b32.xlu0 %v1835, 32
  %v3444 = vpop.permute.xlu0 %3443
  %3445 = vrot.lane.b32.xlu0 %v1905, 32
  %v3446 = vpop.permute.xlu0 %3445
  %3447 = vrot.lane.b32.xlu0 %v1910, 32
  %v3448 = vpop.permute.xlu0 %3447
  %3449 = vrot.lane.b32.xlu0 %v1915, 32
  %v3450 = vpop.permute.xlu0 %3449
  %3451 = vrot.lane.b32.xlu0 %v1920, 32
  %v3452 = vpop.permute.xlu0 %3451
  %3453 = vrot.lane.b32.xlu0 %v1925, 32
  %v3454 = vpop.permute.xlu0 %3453
  %3455 = vrot.lane.b32.xlu0 %v1930, 32
  %v3456 = vpop.permute.xlu0 %3455
  %3457 = vrot.lane.b32.xlu0 %v1935, 32
  %v3458 = vpop.permute.xlu0 %3457
  %3459 = vrot.lane.b32.xlu0 %v1940, 32
  %v3460 = vpop.permute.xlu0 %3459
  %3493 = vrot.lane.b32.xlu0 %v2010, 64
  %v3494 = vpop.permute.xlu0 %3493
  %3495 = vrot.lane.b32.xlu0 %v2015, 64
  %v3496 = vpop.permute.xlu0 %3495
  %3497 = vrot.lane.b32.xlu0 %v2020, 64
  %v3498 = vpop.permute.xlu0 %3497
  %3499 = vrot.lane.b32.xlu0 %v2025, 64
  %v3500 = vpop.permute.xlu0 %3499
  %3501 = vrot.lane.b32.xlu0 %v2030, 64
  %v3502 = vpop.permute.xlu0 %3501
  %3503 = vrot.lane.b32.xlu0 %v2035, 64
  %v3504 = vpop.permute.xlu0 %3503
  %3505 = vrot.lane.b32.xlu0 %v2040, 64
  %v3506 = vpop.permute.xlu0 %3505
  %3507 = vrot.lane.b32.xlu0 %v2045, 64
  %v3508 = vpop.permute.xlu0 %3507
  %3509 = vrot.lane.b32.xlu0 %v2115, 64
  %v3510 = vpop.permute.xlu0 %3509
  %3511 = vrot.lane.b32.xlu0 %v2120, 64
  %v3512 = vpop.permute.xlu0 %3511
  %3513 = vrot.lane.b32.xlu0 %v2125, 64
  %v3514 = vpop.permute.xlu0 %3513
  %3515 = vrot.lane.b32.xlu0 %v2130, 64
  %v3516 = vpop.permute.xlu0 %3515
  %3517 = vrot.lane.b32.xlu0 %v2135, 64
  %v3518 = vpop.permute.xlu0 %3517
  %3519 = vrot.lane.b32.xlu0 %v2140, 64
  %v3520 = vpop.permute.xlu0 %3519
  %3521 = vrot.lane.b32.xlu0 %v2145, 64
  %v3522 = vpop.permute.xlu0 %3521
  %3523 = vrot.lane.b32.xlu0 %v2150, 64
  %v3524 = vpop.permute.xlu0 %3523
  %3557 = vrot.lane.b32.xlu0 %v2220, 96
  %v3558 = vpop.permute.xlu0 %3557
  %3559 = vrot.lane.b32.xlu0 %v2225, 96
  %v3560 = vpop.permute.xlu0 %3559
  %3561 = vrot.lane.b32.xlu0 %v2230, 96
  %v3562 = vpop.permute.xlu0 %3561
  %3563 = vrot.lane.b32.xlu0 %v2235, 96
  %v3564 = vpop.permute.xlu0 %3563
  %3565 = vrot.lane.b32.xlu0 %v2240, 96
  %v3566 = vpop.permute.xlu0 %3565
  %3567 = vrot.lane.b32.xlu0 %v2245, 96
  %v3568 = vpop.permute.xlu0 %3567
  %3569 = vrot.lane.b32.xlu0 %v2250, 96
  %v3570 = vpop.permute.xlu0 %3569
  %3571 = vrot.lane.b32.xlu0 %v2255, 96
  %v3572 = vpop.permute.xlu0 %3571
  %3573 = vrot.lane.b32.xlu0 %v2325, 96
  %v3574 = vpop.permute.xlu0 %3573
  %3575 = vrot.lane.b32.xlu0 %v2330, 96
  %v3576 = vpop.permute.xlu0 %3575
  %3577 = vrot.lane.b32.xlu0 %v2335, 96
  %v3578 = vpop.permute.xlu0 %3577
  %3579 = vrot.lane.b32.xlu0 %v2340, 96
  %v3580 = vpop.permute.xlu0 %3579
  %3581 = vrot.lane.b32.xlu0 %v2345, 96
  %v3582 = vpop.permute.xlu0 %3581
  %3583 = vrot.lane.b32.xlu0 %v2350, 96
  %v3584 = vpop.permute.xlu0 %3583
  %3585 = vrot.lane.b32.xlu0 %v2355, 96
  %v3586 = vpop.permute.xlu0 %3585
  %3587 = vrot.lane.b32.xlu0 %v2360, 96
  %v3588 = vpop.permute.xlu0 %3587
  %3621 = vrot.lane.b32.xlu0 %v2640, 32
  %v3622 = vpop.permute.xlu0 %3621
  %3623 = vrot.lane.b32.xlu0 %v2645, 32
  %v3624 = vpop.permute.xlu0 %3623
  %3625 = vrot.lane.b32.xlu0 %v2650, 32
  %v3626 = vpop.permute.xlu0 %3625
  %3627 = vrot.lane.b32.xlu0 %v2655, 32
  %v3628 = vpop.permute.xlu0 %3627
  %3629 = vrot.lane.b32.xlu0 %v2660, 32
  %v3630 = vpop.permute.xlu0 %3629
  %3631 = vrot.lane.b32.xlu0 %v2665, 32
  %v3632 = vpop.permute.xlu0 %3631
  %3633 = vrot.lane.b32.xlu0 %v2670, 32
  %v3634 = vpop.permute.xlu0 %3633
  %3635 = vrot.lane.b32.xlu0 %v2675, 32
  %v3636 = vpop.permute.xlu0 %3635
  %3637 = vrot.lane.b32.xlu0 %v2745, 32
  %v3638 = vpop.permute.xlu0 %3637
  %3639 = vrot.lane.b32.xlu0 %v2750, 32
  %v3640 = vpop.permute.xlu0 %3639
  %3641 = vrot.lane.b32.xlu0 %v2755, 32
  %v3642 = vpop.permute.xlu0 %3641
  %3643 = vrot.lane.b32.xlu0 %v2760, 32
  %v3644 = vpop.permute.xlu0 %3643
  %3645 = vrot.lane.b32.xlu0 %v2765, 32
  %v3646 = vpop.permute.xlu0 %3645
  %3647 = vrot.lane.b32.xlu0 %v2770, 32
  %v3648 = vpop.permute.xlu0 %3647
  %3649 = vrot.lane.b32.xlu0 %v2775, 32
  %v3650 = vpop.permute.xlu0 %3649
  %3651 = vrot.lane.b32.xlu0 %v2780, 32
  %v3652 = vpop.permute.xlu0 %3651
  %3685 = vrot.lane.b32.xlu0 %v2850, 64
  %v3686 = vpop.permute.xlu0 %3685
  %3687 = vrot.lane.b32.xlu0 %v2855, 64
  %v3688 = vpop.permute.xlu0 %3687
  %3689 = vrot.lane.b32.xlu0 %v2860, 64
  %v3690 = vpop.permute.xlu0 %3689
  %3691 = vrot.lane.b32.xlu0 %v2865, 64
  %v3692 = vpop.permute.xlu0 %3691
  %3693 = vrot.lane.b32.xlu0 %v2870, 64
  %v3694 = vpop.permute.xlu0 %3693
  %3695 = vrot.lane.b32.xlu0 %v2875, 64
  %v3696 = vpop.permute.xlu0 %3695
  %3697 = vrot.lane.b32.xlu0 %v2880, 64
  %v3698 = vpop.permute.xlu0 %3697
  %3699 = vrot.lane.b32.xlu0 %v2885, 64
  %v3700 = vpop.permute.xlu0 %3699
  %3701 = vrot.lane.b32.xlu0 %v2955, 64
  %v3702 = vpop.permute.xlu0 %3701
  %3703 = vrot.lane.b32.xlu0 %v2960, 64
  %v3704 = vpop.permute.xlu0 %3703
  %3705 = vrot.lane.b32.xlu0 %v2965, 64
  %v3706 = vpop.permute.xlu0 %3705
  %3707 = vrot.lane.b32.xlu0 %v2970, 64
  %v3708 = vpop.permute.xlu0 %3707
  %3709 = vrot.lane.b32.xlu0 %v2975, 64
  %v3710 = vpop.permute.xlu0 %3709
  %3711 = vrot.lane.b32.xlu0 %v2980, 64
  %v3712 = vpop.permute.xlu0 %3711
  %3713 = vrot.lane.b32.xlu0 %v2985, 64
  %v3714 = vpop.permute.xlu0 %3713
  %3715 = vrot.lane.b32.xlu0 %v2990, 64
  %v3716 = vpop.permute.xlu0 %3715
  %3749 = vrot.lane.b32.xlu0 %v3060, 96
  %v3750 = vpop.permute.xlu0 %3749
  %3751 = vrot.lane.b32.xlu0 %v3065, 96
  %v3752 = vpop.permute.xlu0 %3751
  %3753 = vrot.lane.b32.xlu0 %v3070, 96
  %v3754 = vpop.permute.xlu0 %3753
  %3755 = vrot.lane.b32.xlu0 %v3075, 96
  %v3756 = vpop.permute.xlu0 %3755
  %3757 = vrot.lane.b32.xlu0 %v3080, 96
  %v3758 = vpop.permute.xlu0 %3757
  %3759 = vrot.lane.b32.xlu0 %v3085, 96
  %v3760 = vpop.permute.xlu0 %3759
  %3761 = vrot.lane.b32.xlu0 %v3090, 96
  %v3762 = vpop.permute.xlu0 %3761
  %3763 = vrot.lane.b32.xlu0 %v3095, 96
  %v3764 = vpop.permute.xlu0 %3763
  %3765 = vrot.lane.b32.xlu0 %v3165, 96
  %v3766 = vpop.permute.xlu0 %3765
  %3767 = vrot.lane.b32.xlu0 %v3170, 96
  %v3768 = vpop.permute.xlu0 %3767
  %3769 = vrot.lane.b32.xlu0 %v3175, 96
  %v3770 = vpop.permute.xlu0 %3769
  %3771 = vrot.lane.b32.xlu0 %v3180, 96
  %v3772 = vpop.permute.xlu0 %3771
  %3773 = vrot.lane.b32.xlu0 %v3185, 96
  %v3774 = vpop.permute.xlu0 %3773
  %3775 = vrot.lane.b32.xlu0 %v3190, 96
  %v3776 = vpop.permute.xlu0 %3775
  %3777 = vrot.lane.b32.xlu0 %v3195, 96
  %v3778 = vpop.permute.xlu0 %3777
  %3779 = vrot.lane.b32.xlu0 %v3200, 96
  %v3780 = vpop.permute.xlu0 %3779
  %v3797 = vsel %vm113, %v1590, %v3430
  %v3798 = vsel %vm113, %v1595, %v3432
  %v3799 = vsel %vm113, %v1600, %v3434
  %v3800 = vsel %vm113, %v1605, %v3436
  %v3801 = vsel %vm113, %v1610, %v3438
  %v3802 = vsel %vm113, %v1615, %v3440
  %v3803 = vsel %vm113, %v1620, %v3442
  %v3804 = vsel %vm113, %v1625, %v3444
  %v3805 = vsel %vm113, %v1695, %v3446
  %v3806 = vsel %vm113, %v1700, %v3448
  %v3807 = vsel %vm113, %v1705, %v3450
  %v3808 = vsel %vm113, %v1710, %v3452
  %v3809 = vsel %vm113, %v1715, %v3454
  %v3810 = vsel %vm113, %v1720, %v3456
  %v3811 = vsel %vm113, %v1725, %v3458
  %v3812 = vsel %vm113, %v1730, %v3460
  %vm3813 = vcmask 523264
  %v3814 = vsel %vm3813, %v3797, %v3494
  %v3815 = vsel %vm3813, %v3798, %v3496
  %v3816 = vsel %vm3813, %v3799, %v3498
  %v3817 = vsel %vm3813, %v3800, %v3500
  %v3818 = vsel %vm3813, %v3801, %v3502
  %v3819 = vsel %vm3813, %v3802, %v3504
  %v3820 = vsel %vm3813, %v3803, %v3506
  %v3821 = vsel %vm3813, %v3804, %v3508
  %v3822 = vsel %vm3813, %v3805, %v3510
  %v3823 = vsel %vm3813, %v3806, %v3512
  %v3824 = vsel %vm3813, %v3807, %v3514
  %v3825 = vsel %vm3813, %v3808, %v3516
  %v3826 = vsel %vm3813, %v3809, %v3518
  %v3827 = vsel %vm3813, %v3810, %v3520
  %v3828 = vsel %vm3813, %v3811, %v3522
  %v3829 = vsel %vm3813, %v3812, %v3524
  %vm3830 = vcmask 785408
  %v3831 = vsel %vm3830, %v3814, %v3558
  %v3832 = vsel %vm3830, %v3815, %v3560
  %v3833 = vsel %vm3830, %v3816, %v3562
  %v3834 = vsel %vm3830, %v3817, %v3564
  %v3835 = vsel %vm3830, %v3818, %v3566
  %v3836 = vsel %vm3830, %v3819, %v3568
  %v3837 = vsel %vm3830, %v3820, %v3570
  %v3838 = vsel %vm3830, %v3821, %v3572
  %v3839 = vsel %vm3830, %v3822, %v3574
  %v3840 = vsel %vm3830, %v3823, %v3576
  %v3841 = vsel %vm3830, %v3824, %v3578
  %v3842 = vsel %vm3830, %v3825, %v3580
  %v3843 = vsel %vm3830, %v3826, %v3582
  %v3844 = vsel %vm3830, %v3827, %v3584
  %v3845 = vsel %vm3830, %v3828, %v3586
  %v3846 = vsel %vm3830, %v3829, %v3588
  %v3847 = vsel %vm113, %v2430, %v3622
  %v3848 = vsel %vm113, %v2435, %v3624
  %v3849 = vsel %vm113, %v2440, %v3626
  %v3850 = vsel %vm113, %v2445, %v3628
  %v3851 = vsel %vm113, %v2450, %v3630
  %v3852 = vsel %vm113, %v2455, %v3632
  %v3853 = vsel %vm113, %v2460, %v3634
  %v3854 = vsel %vm113, %v2465, %v3636
  %v3855 = vsel %vm113, %v2535, %v3638
  %v3856 = vsel %vm113, %v2540, %v3640
  %v3857 = vsel %vm113, %v2545, %v3642
  %v3858 = vsel %vm113, %v2550, %v3644
  %v3859 = vsel %vm113, %v2555, %v3646
  %v3860 = vsel %vm113, %v2560, %v3648
  %v3861 = vsel %vm113, %v2565, %v3650
  %v3862 = vsel %vm113, %v2570, %v3652
  %v3863 = vsel %vm3813, %v3847, %v3686
  %v3864 = vsel %vm3813, %v3848, %v3688
  %v3865 = vsel %vm3813, %v3849, %v3690
  %v3866 = vsel %vm3813, %v3850, %v3692
  %v3867 = vsel %vm3813, %v3851, %v3694
  %v3868 = vsel %vm3813, %v3852, %v3696
  %v3869 = vsel %vm3813, %v3853, %v3698
  %v3870 = vsel %vm3813, %v3854, %v3700
  %v3871 = vsel %vm3813, %v3855, %v3702
  %v3872 = vsel %vm3813, %v3856, %v3704
  %v3873 = vsel %vm3813, %v3857, %v3706
  %v3874 = vsel %vm3813, %v3858, %v3708
  %v3875 = vsel %vm3813, %v3859, %v3710
  %v3876 = vsel %vm3813, %v3860, %v3712
  %v3877 = vsel %vm3813, %v3861, %v3714
  %v3878 = vsel %vm3813, %v3862, %v3716
  %v3879 = vsel %vm3830, %v3863, %v3750
  %v3880 = vsel %vm3830, %v3864, %v3752
  %v3881 = vsel %vm3830, %v3865, %v3754
  %v3882 = vsel %vm3830, %v3866, %v3756
  %v3883 = vsel %vm3830, %v3867, %v3758
  %v3884 = vsel %vm3830, %v3868, %v3760
  %v3885 = vsel %vm3830, %v3869, %v3762
  %v3886 = vsel %vm3830, %v3870, %v3764
  %v3887 = vsel %vm3830, %v3871, %v3766
  %v3888 = vsel %vm3830, %v3872, %v3768
  %v3889 = vsel %vm3830, %v3873, %v3770
  %v3890 = vsel %vm3830, %v3874, %v3772
  %v3891 = vsel %vm3830, %v3875, %v3774
  %v3892 = vsel %vm3830, %v3876, %v3776
  %v3893 = vsel %vm3830, %v3877, %v3778
  %v3894 = vsel %vm3830, %v3878, %v3780
  %s3895 = scalar_lea.vmem %s6, 1
  %v3896 = vld [vmem:[%s3895] sm:$0x1]
  %s3897 = scalar_lea.vmem %s7, 1
  %v3898 = vld [vmem:[%s3897] sm:$0x1]
  %s3899 = scalar_lea.vmem %s8, 1
  %v3900 = vld [vmem:[%s3899] sm:$0x1]
  %v3902 = vlaneseq
  %v3903 = vshrl.u32 %v3902, 7
  %v3904 = vsub.s32 0, %v3903
  %v3905 = vrot.slane %v3896, %v3904
  %v3908 = vsel %vm113, %v3270, 0
  %v3911 = vsel %vm113, %v3275, 0
  %v3914 = vsel %vm113, %v3280, 0
  %v3917 = vsel %vm113, %v3285, 0
  %v3920 = vsel %vm113, %v3290, 0
  %v3923 = vsel %vm113, %v3295, 0
  %v3926 = vsel %vm113, %v3300, 0
  %v3929 = vsel %vm113, %v3305, 0
  %v3932 = vsel %vm113, %v3375, 0
  %v3935 = vsel %vm113, %v3380, 0
  %v3938 = vsel %vm113, %v3385, 0
  %v3941 = vsel %vm113, %v3390, 0
  %v3944 = vsel %vm113, %v3395, 0
  %v3947 = vsel %vm113, %v3400, 0
  %v3950 = vsel %vm113, %v3405, 0
  %v3953 = vsel %vm113, %v3410, 0
  %3955 = vmatprep.subr.mxu0 0.0
  %3956 = vmatpush1.msra.mxu0 %v1487
  %3957 = vmatprep.subr.mxu0 0.0
  %3958 = vmatpush1.msra.mxu0 %v1488
  %3959 = vmatprep.subr.mxu0 0.0
  %3960 = vmatpush1.msra.mxu0 %v1489
  %3961 = vmatprep.subr.mxu0 0.0
  %3962 = vmatpush1.msra.mxu0 %v1490
  %3963 = vmatprep.subr.mxu0 0.0
  %3964 = vmatpush1.msra.mxu0 %v1491
  %3965 = vmatprep.subr.mxu0 0.0
  %3966 = vmatpush1.msra.mxu0 %v1492
  %3967 = vmatprep.subr.mxu0 0.0
  %3968 = vmatpush1.msra.mxu0 %v1493
  %3969 = vmatprep.subr.mxu0 0.0
  %3970 = vmatpush1.msra.mxu0 %v1494
  %3971 = vmatprep.subr.mxu0 0.0
  %3972 = vmatpush1.msra.mxu0 %v1495
  %3973 = vmatprep.subr.mxu0 0.0
  %3974 = vmatpush1.msra.mxu0 %v1496
  %3975 = vmatprep.subr.mxu0 0.0
  %3976 = vmatpush1.msra.mxu0 %v1497
  %3977 = vmatprep.subr.mxu0 0.0
  %3978 = vmatpush1.msra.mxu0 %v1498
  %3979 = vmatprep.subr.mxu0 0.0
  %3980 = vmatpush1.msra.mxu0 %v1499
  %3981 = vmatprep.subr.mxu0 0.0
  %3982 = vmatpush1.msra.mxu0 %v1500
  %3983 = vmatprep.subr.mxu0 0.0
  %3984 = vmatpush1.msra.mxu0 %v1501
  %3985 = vmatprep.subr.mxu0 0.0
  %3986 = vmatpush1.msra.mxu0 %v1502
  %3987 = vmatprep.subr.mxu0 0.0
  %3988 = vmatpush1.msra.mxu0 %v1503
  %3989 = vmatprep.subr.mxu0 0.0
  %3990 = vmatpush1.msra.mxu0 %v1504
  %3991 = vmatprep.subr.mxu0 0.0
  %3992 = vmatpush1.msra.mxu0 %v1505
  %3993 = vmatprep.subr.mxu0 0.0
  %3994 = vmatpush1.msra.mxu0 %v1506
  %3995 = vmatprep.subr.mxu0 0.0
  %3996 = vmatpush1.msra.mxu0 %v1507
  %3997 = vmatprep.subr.mxu0 0.0
  %3998 = vmatpush1.msra.mxu0 %v1508
  %3999 = vmatprep.subr.mxu0 0.0
  %4000 = vmatpush1.msra.mxu0 %v1509
  %4001 = vmatprep.subr.mxu0 0.0
  %4002 = vmatpush1.msra.mxu0 %v1510
  %4003 = vmatprep.subr.mxu0 0.0
  %4004 = vmatpush1.msra.mxu0 %v1511
  %4005 = vmatprep.subr.mxu0 0.0
  %4006 = vmatpush1.msra.mxu0 %v1512
  %4007 = vmatprep.subr.mxu0 0.0
  %4008 = vmatpush1.msra.mxu0 %v1513
  %4009 = vmatprep.subr.mxu0 0.0
  %4010 = vmatpush1.msra.mxu0 %v1514
  %4011 = vmatprep.subr.mxu0 0.0
  %4012 = vmatpush1.msra.mxu0 %v1515
  %4013 = vmatprep.subr.mxu0 0.0
  %4014 = vmatpush1.msra.mxu0 %v1516
  %4015 = vmatprep.subr.mxu0 0.0
  %4016 = vmatpush1.msra.mxu0 %v1517
  %4017 = vmatprep.subr.mxu0 0.0
  %4018 = vmatpush1.msra.mxu0 %v1518
  %4019 = vmatprep.mubr.f32.mxu0 %v3879
  %4020 = vmatmul.mubr.f32.gmra.mrb[0].mxu0 %v3831
  %v4021 = vpop.f32.mrb[0].mxu0
  %v4022 = vadd.f32 %v3905, %v4021
  %v4023 = vpop.f32.mrb[0].mxu0
  %4024 = vmatprep.mubr.f32.mxu0 %v3880
  %4025 = vmatmul.mubr.f32.gmra.mrb[0].mxu0 %v3832
  %v4026 = vpop.f32.mrb[0].mxu0
  %v4027 = vadd.f32 %v3905, %v4026
  %v4028 = vpop.f32.mrb[0].mxu0
  %4029 = vmatprep.mubr.f32.mxu0 %v3881
  %4030 = vmatmul.mubr.f32.gmra.mrb[0].mxu0 %v3833
  %v4031 = vpop.f32.mrb[0].mxu0
  %v4032 = vadd.f32 %v3905, %v4031
  %v4033 = vpop.f32.mrb[0].mxu0
  %4034 = vmatprep.mubr.f32.mxu0 %v3882
  %4035 = vmatmul.mubr.f32.gmra.mrb[0].mxu0 %v3834
  %v4036 = vpop.f32.mrb[0].mxu0
  %v4037 = vadd.f32 %v3905, %v4036
  %v4038 = vpop.f32.mrb[0].mxu0
  %4039 = vmatprep.mubr.f32.mxu0 %v3883
  %4040 = vmatmul.mubr.f32.gmra.mrb[0].mxu0 %v3835
  %v4041 = vpop.f32.mrb[0].mxu0
  %v4042 = vadd.f32 %v3905, %v4041
  %v4043 = vpop.f32.mrb[0].mxu0
  %4044 = vmatprep.mubr.f32.mxu0 %v3884
  %4045 = vmatmul.mubr.f32.gmra.mrb[0].mxu0 %v3836
  %v4046 = vpop.f32.mrb[0].mxu0
  %v4047 = vadd.f32 %v3905, %v4046
  %v4048 = vpop.f32.mrb[0].mxu0
  %4049 = vmatprep.mubr.f32.mxu0 %v3885
  %4050 = vmatmul.mubr.f32.gmra.mrb[0].mxu0 %v3837
  %v4051 = vpop.f32.mrb[0].mxu0
  %v4052 = vadd.f32 %v3905, %v4051
  %v4053 = vpop.f32.mrb[0].mxu0
  %4054 = vmatprep.mubr.f32.mxu0 %v3886
  %4055 = vmatmul.mubr.f32.gmra.mrb[0].mxu0 %v3838
  %v4056 = vpop.f32.mrb[0].mxu0
  %v4057 = vadd.f32 %v3905, %v4056
  %v4058 = vpop.f32.mrb[0].mxu0
  %4059 = vmatprep.mubr.f32.mxu0 %v3887
  %4060 = vmatmul.mubr.f32.gmra.mrb[0].mxu0 %v3839
  %v4061 = vpop.f32.mrb[0].mxu0
  %v4062 = vadd.f32 %v3905, %v4061
  %v4063 = vpop.f32.mrb[0].mxu0
  %4064 = vmatprep.mubr.f32.mxu0 %v3888
  %4065 = vmatmul.mubr.f32.gmra.mrb[0].mxu0 %v3840
  %v4066 = vpop.f32.mrb[0].mxu0
  %v4067 = vadd.f32 %v3905, %v4066
  %v4068 = vpop.f32.mrb[0].mxu0
  %4069 = vmatprep.mubr.f32.mxu0 %v3889
  %4070 = vmatmul.mubr.f32.gmra.mrb[0].mxu0 %v3841
  %v4071 = vpop.f32.mrb[0].mxu0
  %v4072 = vadd.f32 %v3905, %v4071
  %v4073 = vpop.f32.mrb[0].mxu0
  %4074 = vmatprep.mubr.f32.mxu0 %v3890
  %4075 = vmatmul.mubr.f32.gmra.mrb[0].mxu0 %v3842
  %v4076 = vpop.f32.mrb[0].mxu0
  %v4077 = vadd.f32 %v3905, %v4076
  %v4078 = vpop.f32.mrb[0].mxu0
  %4079 = vmatprep.mubr.f32.mxu0 %v3891
  %4080 = vmatmul.mubr.f32.gmra.mrb[0].mxu0 %v3843
  %v4081 = vpop.f32.mrb[0].mxu0
  %v4082 = vadd.f32 %v3905, %v4081
  %v4083 = vpop.f32.mrb[0].mxu0
  %4084 = vmatprep.mubr.f32.mxu0 %v3892
  %4085 = vmatmul.mubr.f32.gmra.mrb[0].mxu0 %v3844
  %v4086 = vpop.f32.mrb[0].mxu0
  %v4087 = vadd.f32 %v3905, %v4086
  %v4088 = vpop.f32.mrb[0].mxu0
  %4089 = vmatprep.mubr.f32.mxu0 %v3893
  %4090 = vmatmul.mubr.f32.gmra.mrb[0].mxu0 %v3845
  %v4091 = vpop.f32.mrb[0].mxu0
  %v4092 = vadd.f32 %v3905, %v4091
  %v4093 = vpop.f32.mrb[0].mxu0
  %4094 = vmatprep.mubr.f32.mxu0 %v3894
  %4095 = vmatmul.mubr.f32.gmra.mrb[0].mxu0 %v3846
  %v4096 = vpop.f32.mrb[0].mxu0
  %v4097 = vadd.f32 %v3905, %v4096
  %v4098 = vpop.f32.mrb[0].mxu0
  %4099 = vdwg.mxu0
  %4100 = vmatprep.subr.mxu0 0.0
  %4101 = vmatpush1.msra.mxu0 %v1519
  %4102 = vmatprep.subr.mxu0 0.0
  %4103 = vmatpush1.msra.mxu0 %v1520
  %4104 = vmatprep.subr.mxu0 0.0
  %4105 = vmatpush1.msra.mxu0 %v1521
  %4106 = vmatprep.subr.mxu0 0.0
  %4107 = vmatpush1.msra.mxu0 %v1522
  %4108 = vmatprep.subr.mxu0 0.0
  %4109 = vmatpush1.msra.mxu0 0.0
  %4110 = vmatprep.subr.mxu0 0.0
  %4111 = vmatpush1.msra.mxu0 0.0
  %4112 = vmatprep.subr.mxu0 0.0
  %4113 = vmatpush1.msra.mxu0 0.0
  %4114 = vmatprep.subr.mxu0 0.0
  %4115 = vmatpush1.msra.mxu0 0.0
  %4116 = vmatprep.subr.mxu0 0.0
  %4117 = vmatpush1.msra.mxu0 0.0
  %4118 = vmatprep.subr.mxu0 0.0
  %4119 = vmatpush1.msra.mxu0 0.0
  %4120 = vmatprep.subr.mxu0 0.0
  %4121 = vmatpush1.msra.mxu0 0.0
  %4122 = vmatprep.subr.mxu0 0.0
  %4123 = vmatpush1.msra.mxu0 0.0
  %4124 = vmatprep.subr.mxu0 0.0
  %4125 = vmatpush1.msra.mxu0 0.0
  %4126 = vmatprep.subr.mxu0 0.0
  %4127 = vmatpush1.msra.mxu0 0.0
  %4128 = vmatprep.subr.mxu0 0.0
  %4129 = vmatpush1.msra.mxu0 0.0
  %4130 = vmatprep.subr.mxu0 0.0
  %4131 = vmatpush1.msra.mxu0 0.0
  %4132 = vmatprep.subr.mxu0 0.0
  %4133 = vmatpush1.msra.mxu0 0.0
  %4134 = vmatprep.subr.mxu0 0.0
  %4135 = vmatpush1.msra.mxu0 0.0
  %4136 = vmatprep.subr.mxu0 0.0
  %4137 = vmatpush1.msra.mxu0 0.0
  %4138 = vmatprep.subr.mxu0 0.0
  %4139 = vmatpush1.msra.mxu0 0.0
  %4140 = vmatprep.subr.mxu0 0.0
  %4141 = vmatpush1.msra.mxu0 0.0
  %4142 = vmatprep.subr.mxu0 0.0
  %4143 = vmatpush1.msra.mxu0 0.0
  %4144 = vmatprep.subr.mxu0 0.0
  %4145 = vmatpush1.msra.mxu0 0.0
  %4146 = vmatprep.subr.mxu0 0.0
  %4147 = vmatpush1.msra.mxu0 0.0
  %4148 = vmatprep.subr.mxu0 0.0
  %4149 = vmatpush1.msra.mxu0 0.0
  %4150 = vmatprep.subr.mxu0 0.0
  %4151 = vmatpush1.msra.mxu0 0.0
  %4152 = vmatprep.subr.mxu0 0.0
  %4153 = vmatpush1.msra.mxu0 0.0
  %4154 = vmatprep.subr.mxu0 0.0
  %4155 = vmatpush1.msra.mxu0 0.0
  %4156 = vmatprep.subr.mxu0 0.0
  %4157 = vmatpush1.msra.mxu0 0.0
  %4158 = vmatprep.subr.mxu0 0.0
  %4159 = vmatpush1.msra.mxu0 0.0
  %4160 = vmatprep.subr.mxu0 0.0
  %4161 = vmatpush1.msra.mxu0 0.0
  %4162 = vmatprep.subr.mxu0 0.0
  %4163 = vmatpush1.msra.mxu0 0.0
  %4164 = vmatprep.mubr.f32.mxu0 0.0
  %4165 = vmatmul.mubr.f32.gmra.mrb[0].mxu0 %v3908
  %v4166 = vpop.f32.mrb[0].mxu0
  %v4167 = vadd.f32 %v4022, %v4166
  %v4168 = vpop.f32.mrb[0].mxu0
  %4169 = vmatprep.mubr.f32.mxu0 0.0
  %4170 = vmatmul.mubr.f32.gmra.mrb[0].mxu0 %v3911
  %v4171 = vpop.f32.mrb[0].mxu0
  %v4172 = vadd.f32 %v4027, %v4171
  %v4173 = vpop.f32.mrb[0].mxu0
  %4174 = vmatprep.mubr.f32.mxu0 0.0
  %4175 = vmatmul.mubr.f32.gmra.mrb[0].mxu0 %v3914
  %v4176 = vpop.f32.mrb[0].mxu0
  %v4177 = vadd.f32 %v4032, %v4176
  %v4178 = vpop.f32.mrb[0].mxu0
  %4179 = vmatprep.mubr.f32.mxu0 0.0
  %4180 = vmatmul.mubr.f32.gmra.mrb[0].mxu0 %v3917
  %v4181 = vpop.f32.mrb[0].mxu0
  %v4182 = vadd.f32 %v4037, %v4181
  %v4183 = vpop.f32.mrb[0].mxu0
  %4184 = vmatprep.mubr.f32.mxu0 0.0
  %4185 = vmatmul.mubr.f32.gmra.mrb[0].mxu0 %v3920
  %v4186 = vpop.f32.mrb[0].mxu0
  %v4187 = vadd.f32 %v4042, %v4186
  %v4188 = vpop.f32.mrb[0].mxu0
  %4189 = vmatprep.mubr.f32.mxu0 0.0
  %4190 = vmatmul.mubr.f32.gmra.mrb[0].mxu0 %v3923
  %v4191 = vpop.f32.mrb[0].mxu0
  %v4192 = vadd.f32 %v4047, %v4191
  %v4193 = vpop.f32.mrb[0].mxu0
  %4194 = vmatprep.mubr.f32.mxu0 0.0
  %4195 = vmatmul.mubr.f32.gmra.mrb[0].mxu0 %v3926
  %v4196 = vpop.f32.mrb[0].mxu0
  %v4197 = vadd.f32 %v4052, %v4196
  %v4198 = vpop.f32.mrb[0].mxu0
  %4199 = vmatprep.mubr.f32.mxu0 0.0
  %4200 = vmatmul.mubr.f32.gmra.mrb[0].mxu0 %v3929
  %v4201 = vpop.f32.mrb[0].mxu0
  %v4202 = vadd.f32 %v4057, %v4201
  %v4203 = vpop.f32.mrb[0].mxu0
  %4204 = vmatprep.mubr.f32.mxu0 0.0
  %4205 = vmatmul.mubr.f32.gmra.mrb[0].mxu0 %v3932
  %v4206 = vpop.f32.mrb[0].mxu0
  %v4207 = vadd.f32 %v4062, %v4206
  %v4208 = vpop.f32.mrb[0].mxu0
  %4209 = vmatprep.mubr.f32.mxu0 0.0
  %4210 = vmatmul.mubr.f32.gmra.mrb[0].mxu0 %v3935
  %v4211 = vpop.f32.mrb[0].mxu0
  %v4212 = vadd.f32 %v4067, %v4211
  %v4213 = vpop.f32.mrb[0].mxu0
  %4214 = vmatprep.mubr.f32.mxu0 0.0
  %4215 = vmatmul.mubr.f32.gmra.mrb[0].mxu0 %v3938
  %v4216 = vpop.f32.mrb[0].mxu0
  %v4217 = vadd.f32 %v4072, %v4216
  %v4218 = vpop.f32.mrb[0].mxu0
  %4219 = vmatprep.mubr.f32.mxu0 0.0
  %4220 = vmatmul.mubr.f32.gmra.mrb[0].mxu0 %v3941
  %v4221 = vpop.f32.mrb[0].mxu0
  %v4222 = vadd.f32 %v4077, %v4221
  %v4223 = vpop.f32.mrb[0].mxu0
  %4224 = vmatprep.mubr.f32.mxu0 0.0
  %4225 = vmatmul.mubr.f32.gmra.mrb[0].mxu0 %v3944
  %v4226 = vpop.f32.mrb[0].mxu0
  %v4227 = vadd.f32 %v4082, %v4226
  %v4228 = vpop.f32.mrb[0].mxu0
  %4229 = vmatprep.mubr.f32.mxu0 0.0
  %4230 = vmatmul.mubr.f32.gmra.mrb[0].mxu0 %v3947
  %v4231 = vpop.f32.mrb[0].mxu0
  %v4232 = vadd.f32 %v4087, %v4231
  %v4233 = vpop.f32.mrb[0].mxu0
  %4234 = vmatprep.mubr.f32.mxu0 0.0
  %4235 = vmatmul.mubr.f32.gmra.mrb[0].mxu0 %v3950
  %v4236 = vpop.f32.mrb[0].mxu0
  %v4237 = vadd.f32 %v4092, %v4236
  %v4238 = vpop.f32.mrb[0].mxu0
  %4239 = vmatprep.mubr.f32.mxu0 0.0
  %4240 = vmatmul.mubr.f32.gmra.mrb[0].mxu0 %v3953
  %v4241 = vpop.f32.mrb[0].mxu0
  %v4242 = vadd.f32 %v4097, %v4241
  %v4243 = vpop.f32.mrb[0].mxu0
  %4244 = vdwg.mxu0
  %v4245 = vmax.f32 %v4167, 0.0
  %v4246 = vmax.f32 %v4172, 0.0
  %v4247 = vmax.f32 %v4177, 0.0
  %v4248 = vmax.f32 %v4182, 0.0
  %v4249 = vmax.f32 %v4187, 0.0
  %v4250 = vmax.f32 %v4192, 0.0
  %v4251 = vmax.f32 %v4197, 0.0
  %v4252 = vmax.f32 %v4202, 0.0
  %v4253 = vmax.f32 %v4207, 0.0
  %v4254 = vmax.f32 %v4212, 0.0
  %v4255 = vmax.f32 %v4217, 0.0
  %v4256 = vmax.f32 %v4222, 0.0
  %v4257 = vmax.f32 %v4227, 0.0
  %v4258 = vmax.f32 %v4232, 0.0
  %v4259 = vmax.f32 %v4237, 0.0
  %v4260 = vmax.f32 %v4242, 0.0
  %v4261 = vsel %vm113, %v4245, 0.0
  %v4262 = vsel %vm113, %v4246, 0.0
  %v4263 = vadd.f32 %v4261, %v4262
  %v4264 = vsel %vm113, %v4247, 0.0
  %v4265 = vadd.f32 %v4263, %v4264
  %v4266 = vsel %vm113, %v4248, 0.0
  %v4267 = vadd.f32 %v4265, %v4266
  %v4268 = vsel %vm113, %v4249, 0.0
  %v4269 = vadd.f32 %v4267, %v4268
  %v4270 = vsel %vm113, %v4250, 0.0
  %v4271 = vadd.f32 %v4269, %v4270
  %v4272 = vsel %vm113, %v4251, 0.0
  %v4273 = vadd.f32 %v4271, %v4272
  %v4274 = vsel %vm113, %v4252, 0.0
  %v4275 = vadd.f32 %v4273, %v4274
  %v4276 = vsel %vm113, %v4253, 0.0
  %v4277 = vadd.f32 %v4275, %v4276
  %v4278 = vsel %vm113, %v4254, 0.0
  %v4279 = vadd.f32 %v4277, %v4278
  %v4280 = vsel %vm113, %v4255, 0.0
  %v4281 = vadd.f32 %v4279, %v4280
  %v4282 = vsel %vm113, %v4256, 0.0
  %v4283 = vadd.f32 %v4281, %v4282
  %v4284 = vsel %vm113, %v4257, 0.0
  %v4285 = vadd.f32 %v4283, %v4284
  %v4286 = vsel %vm113, %v4258, 0.0
  %v4287 = vadd.f32 %v4285, %v4286
  %v4288 = vsel %vm113, %v4259, 0.0
  %v4289 = vadd.f32 %v4287, %v4288
  %v4290 = vsel %vm113, %v4260, 0.0
  %v4291 = vadd.f32 %v4289, %v4290
  %v4292 = vrot.slane %v4291, 4
  %v4293 = vadd.f32 %v4291, %v4292
  %v4294 = vrot.slane %v4293, 2
  %v4295 = vadd.f32 %v4293, %v4294
  %v4296 = vrot.slane %v4295, 1
  %v4297 = vadd.f32 %v4295, %v4296
  %v4298 = vmul.f32 %v4297, 0.0078125
  %v4299 = vmul.f32 %v4245, %v4245
  %v4300 = vmul.f32 %v4246, %v4246
  %v4301 = vmul.f32 %v4247, %v4247
  %v4302 = vmul.f32 %v4248, %v4248
  %v4303 = vmul.f32 %v4249, %v4249
  %v4304 = vmul.f32 %v4250, %v4250
  %v4305 = vmul.f32 %v4251, %v4251
  %v4306 = vmul.f32 %v4252, %v4252
  %v4307 = vmul.f32 %v4253, %v4253
  %v4308 = vmul.f32 %v4254, %v4254
  %v4309 = vmul.f32 %v4255, %v4255
  %v4310 = vmul.f32 %v4256, %v4256
  %v4311 = vmul.f32 %v4257, %v4257
  %v4312 = vmul.f32 %v4258, %v4258
  %v4313 = vmul.f32 %v4259, %v4259
  %v4314 = vmul.f32 %v4260, %v4260
  %v4315 = vsel %vm113, %v4299, 0.0
  %v4316 = vsel %vm113, %v4300, 0.0
  %v4317 = vadd.f32 %v4315, %v4316
  %v4318 = vsel %vm113, %v4301, 0.0
  %v4319 = vadd.f32 %v4317, %v4318
  %v4320 = vsel %vm113, %v4302, 0.0
  %v4321 = vadd.f32 %v4319, %v4320
  %v4322 = vsel %vm113, %v4303, 0.0
  %v4323 = vadd.f32 %v4321, %v4322
  %v4324 = vsel %vm113, %v4304, 0.0
  %v4325 = vadd.f32 %v4323, %v4324
  %v4326 = vsel %vm113, %v4305, 0.0
  %v4327 = vadd.f32 %v4325, %v4326
  %v4328 = vsel %vm113, %v4306, 0.0
  %v4329 = vadd.f32 %v4327, %v4328
  %v4330 = vsel %vm113, %v4307, 0.0
  %v4331 = vadd.f32 %v4329, %v4330
  %v4332 = vsel %vm113, %v4308, 0.0
  %v4333 = vadd.f32 %v4331, %v4332
  %v4334 = vsel %vm113, %v4309, 0.0
  %v4335 = vadd.f32 %v4333, %v4334
  %v4336 = vsel %vm113, %v4310, 0.0
  %v4337 = vadd.f32 %v4335, %v4336
  %v4338 = vsel %vm113, %v4311, 0.0
  %v4339 = vadd.f32 %v4337, %v4338
  %v4340 = vsel %vm113, %v4312, 0.0
  %v4341 = vadd.f32 %v4339, %v4340
  %v4342 = vsel %vm113, %v4313, 0.0
  %v4343 = vadd.f32 %v4341, %v4342
  %v4344 = vsel %vm113, %v4314, 0.0
  %v4345 = vadd.f32 %v4343, %v4344
  %v4346 = vrot.slane %v4345, 4
  %v4347 = vadd.f32 %v4345, %v4346
  %v4348 = vrot.slane %v4347, 2
  %v4349 = vadd.f32 %v4347, %v4348
  %v4350 = vrot.slane %v4349, 1
  %v4351 = vadd.f32 %v4349, %v4350
  %v4352 = vmul.f32 %v4351, 0.0078125
  %v4353 = vmul.f32 %v4298, %v4298
  %v4354 = vsub.f32 %v4352, %v4353
  %v4355 = vmax.f32 %v4354, 0.0
  %v4356 = vadd.f32 %v4355, 1e-05
  %v4357 = vrsqrt.pop %v4356
  %v4358 = vmul.f32 %v3898, %v4357
  %v4359 = vmul.f32 %v4298, %v4358
  %v4360 = vsub.f32 %v3900, %v4359
  %v4362 = vlaneseq
  %v4363 = vshrl.u32 %v4362, 7
  %v4364 = vsub.s32 0, %v4363
  %v4365 = vrot.slane %v4358, %v4364
  %v4367 = vmul.f32 %v4245, %v4365
  %v4368 = vmul.f32 %v4246, %v4365
  %v4369 = vmul.f32 %v4247, %v4365
  %v4370 = vmul.f32 %v4248, %v4365
  %v4371 = vmul.f32 %v4249, %v4365
  %v4372 = vmul.f32 %v4250, %v4365
  %v4373 = vmul.f32 %v4251, %v4365
  %v4374 = vmul.f32 %v4252, %v4365
  %v4375 = vmul.f32 %v4253, %v4365
  %v4376 = vmul.f32 %v4254, %v4365
  %v4377 = vmul.f32 %v4255, %v4365
  %v4378 = vmul.f32 %v4256, %v4365
  %v4379 = vmul.f32 %v4257, %v4365
  %v4380 = vmul.f32 %v4258, %v4365
  %v4381 = vmul.f32 %v4259, %v4365
  %v4382 = vmul.f32 %v4260, %v4365
  %v4384 = vlaneseq
  %v4385 = vshrl.u32 %v4384, 7
  %v4386 = vsub.s32 0, %v4385
  %v4387 = vrot.slane %v4360, %v4386
  %v4389 = vadd.f32 %v4367, %v4387
  %v4390 = vadd.f32 %v4368, %v4387
  %v4391 = vadd.f32 %v4369, %v4387
  %v4392 = vadd.f32 %v4370, %v4387
  %v4393 = vadd.f32 %v4371, %v4387
  %v4394 = vadd.f32 %v4372, %v4387
  %v4395 = vadd.f32 %v4373, %v4387
  %v4396 = vadd.f32 %v4374, %v4387
  %v4397 = vadd.f32 %v4375, %v4387
  %v4398 = vadd.f32 %v4376, %v4387
  %v4399 = vadd.f32 %v4377, %v4387
  %v4400 = vadd.f32 %v4378, %v4387
  %v4401 = vadd.f32 %v4379, %v4387
  %v4402 = vadd.f32 %v4380, %v4387
  %v4403 = vadd.f32 %v4381, %v4387
  %v4404 = vadd.f32 %v4382, %v4387
  %v4405 = vld [vmem:[%s2] sm:$0xf]
  %v4406 = vld [vmem:[%s2 + $0x4] sm:$0xf]
  %v4407 = vld [vmem:[%s2 + $0x8] sm:$0xf]
  %v4408 = vld [vmem:[%s2 + $0xc] sm:$0xf]
  %v4409 = vld [vmem:[%s2 + $0x10] sm:$0xf]
  %v4410 = vld [vmem:[%s2 + $0x14] sm:$0xf]
  %v4411 = vld [vmem:[%s2 + $0x18] sm:$0xf]
  %v4412 = vld [vmem:[%s2 + $0x1c] sm:$0xf]
  %v4413 = vld [vmem:[%s2 + $0x20] sm:$0xf]
  %v4414 = vld [vmem:[%s2 + $0x24] sm:$0xf]
  %v4415 = vld [vmem:[%s2 + $0x28] sm:$0xf]
  %v4416 = vld [vmem:[%s2 + $0x2c] sm:$0xf]
  %v4417 = vld [vmem:[%s2 + $0x30] sm:$0xf]
  %v4418 = vld [vmem:[%s2 + $0x34] sm:$0xf]
  %v4419 = vld [vmem:[%s2 + $0x38] sm:$0xf]
  %v4420 = vld [vmem:[%s2 + $0x3c] sm:$0xf]
  %v4421 = vld [vmem:[%s2 + $0x40] sm:$0xf]
  %v4422 = vld [vmem:[%s2 + $0x44] sm:$0xf]
  %v4423 = vunpack.c.l.bf16 %v4405
  %v4424 = vunpack.c.l.bf16 %v4406
  %v4425 = vunpack.c.l.bf16 %v4407
  %v4426 = vunpack.c.l.bf16 %v4408
  %v4427 = vunpack.c.l.bf16 %v4409
  %v4428 = vunpack.c.l.bf16 %v4410
  %v4429 = vunpack.c.l.bf16 %v4411
  %v4430 = vunpack.c.l.bf16 %v4412
  %v4431 = vunpack.c.l.bf16 %v4413
  %v4432 = vunpack.c.l.bf16 %v4414
  %v4433 = vunpack.c.l.bf16 %v4415
  %v4434 = vunpack.c.l.bf16 %v4416
  %v4435 = vunpack.c.l.bf16 %v4417
  %v4436 = vunpack.c.l.bf16 %v4418
  %v4437 = vunpack.c.l.bf16 %v4419
  %v4438 = vunpack.c.l.bf16 %v4420
  %v4439 = vunpack.c.l.bf16 %v4421
  %v4440 = vunpack.c.l.bf16 %v4422
  %s4441 = scalar_lea.vmem %s5, 144
  %v4442 = vld [vmem:[%s4441] sm:$0xf]
  %v4443 = vld [vmem:[%s4441 + $0x4] sm:$0xf]
  %v4444 = vld [vmem:[%s4441 + $0x8] sm:$0xf]
  %v4445 = vld [vmem:[%s4441 + $0xc] sm:$0xf]
  %v4446 = vld [vmem:[%s4441 + $0x10] sm:$0xf]
  %v4447 = vld [vmem:[%s4441 + $0x14] sm:$0xf]
  %v4448 = vld [vmem:[%s4441 + $0x18] sm:$0xf]
  %v4449 = vld [vmem:[%s4441 + $0x1c] sm:$0xf]
  %v4450 = vld [vmem:[%s4441 + $0x20] sm:$0xf]
  %v4451 = vld [vmem:[%s4441 + $0x24] sm:$0xf]
  %v4452 = vld [vmem:[%s4441 + $0x28] sm:$0xf]
  %v4453 = vld [vmem:[%s4441 + $0x2c] sm:$0xf]
  %v4454 = vld [vmem:[%s4441 + $0x30] sm:$0xf]
  %v4455 = vld [vmem:[%s4441 + $0x34] sm:$0xf]
  %v4456 = vld [vmem:[%s4441 + $0x38] sm:$0xf]
  %v4457 = vld [vmem:[%s4441 + $0x3c] sm:$0xf]
  %v4458 = vld [vmem:[%s4441 + $0x40] sm:$0xf]
  %v4459 = vld [vmem:[%s4441 + $0x44] sm:$0xf]
  %v4460 = vld [vmem:[%s4441 + $0x48] sm:$0xf]
  %v4461 = vld [vmem:[%s4441 + $0x4c] sm:$0xf]
  %v4462 = vld [vmem:[%s4441 + $0x50] sm:$0xf]
  %v4463 = vld [vmem:[%s4441 + $0x54] sm:$0xf]
  %v4464 = vld [vmem:[%s4441 + $0x58] sm:$0xf]
  %v4465 = vld [vmem:[%s4441 + $0x5c] sm:$0xf]
  %v4466 = vld [vmem:[%s4441 + $0x60] sm:$0xf]
  %v4467 = vld [vmem:[%s4441 + $0x64] sm:$0xf]
  %v4468 = vld [vmem:[%s4441 + $0x68] sm:$0xf]
  %v4469 = vld [vmem:[%s4441 + $0x6c] sm:$0xf]
  %v4470 = vld [vmem:[%s4441 + $0x70] sm:$0xf]
  %v4471 = vld [vmem:[%s4441 + $0x74] sm:$0xf]
  %v4472 = vld [vmem:[%s4441 + $0x78] sm:$0xf]
  %v4473 = vld [vmem:[%s4441 + $0x7c] sm:$0xf]
  %v4474 = vld [vmem:[%s4441 + $0x80] sm:$0xf]
  %v4475 = vld [vmem:[%s4441 + $0x84] sm:$0xf]
  %v4476 = vld [vmem:[%s4441 + $0x88] sm:$0xf]
  %v4477 = vld [vmem:[%s4441 + $0x8c] sm:$0xf]
  %v4478 = vunpack.c.l.bf16 %v4442
  %v4479 = vunpack.c.l.bf16 %v4443
  %v4480 = vunpack.c.l.bf16 %v4444
  %v4481 = vunpack.c.l.bf16 %v4445
  %v4482 = vunpack.c.l.bf16 %v4446
  %v4483 = vunpack.c.l.bf16 %v4447
  %v4484 = vunpack.c.l.bf16 %v4448
  %v4485 = vunpack.c.l.bf16 %v4449
  %v4486 = vunpack.c.l.bf16 %v4450
  %v4487 = vunpack.c.l.bf16 %v4451
  %v4488 = vunpack.c.l.bf16 %v4452
  %v4489 = vunpack.c.l.bf16 %v4453
  %v4490 = vunpack.c.l.bf16 %v4454
  %v4491 = vunpack.c.l.bf16 %v4455
  %v4492 = vunpack.c.l.bf16 %v4456
  %v4493 = vunpack.c.l.bf16 %v4457
  %v4494 = vunpack.c.l.bf16 %v4458
  %v4495 = vunpack.c.l.bf16 %v4459
  %v4496 = vunpack.c.l.bf16 %v4460
  %v4497 = vunpack.c.l.bf16 %v4461
  %v4498 = vunpack.c.l.bf16 %v4462
  %v4499 = vunpack.c.l.bf16 %v4463
  %v4500 = vunpack.c.l.bf16 %v4464
  %v4501 = vunpack.c.l.bf16 %v4465
  %v4502 = vunpack.c.l.bf16 %v4466
  %v4503 = vunpack.c.l.bf16 %v4467
  %v4504 = vunpack.c.l.bf16 %v4468
  %v4505 = vunpack.c.l.bf16 %v4469
  %v4506 = vunpack.c.l.bf16 %v4470
  %v4507 = vunpack.c.l.bf16 %v4471
  %v4508 = vunpack.c.l.bf16 %v4472
  %v4509 = vunpack.c.l.bf16 %v4473
  %v4510 = vunpack.c.l.bf16 %v4474
  %v4511 = vunpack.c.l.bf16 %v4475
  %v4512 = vunpack.c.l.bf16 %v4476
  %v4513 = vunpack.c.l.bf16 %v4477
  %v4515 = vsel %vm3813, %v4423, 0
  %v4518 = vsel %vm3813, %v4424, 0
  %4520 = vmatprep.subr.mxu0 0.0
  %4521 = vmatpush1.msra.mxu0 %v4389
  %4522 = vmatprep.subr.mxu0 0.0
  %4523 = vmatpush1.msra.mxu0 %v4390
  %4524 = vmatprep.subr.mxu0 0.0
  %4525 = vmatpush1.msra.mxu0 %v4391
  %4526 = vmatprep.subr.mxu0 0.0
  %4527 = vmatpush1.msra.mxu0 %v4392
  %4528 = vmatprep.subr.mxu0 0.0
  %4529 = vmatpush1.msra.mxu0 %v4393
  %4530 = vmatprep.subr.mxu0 0.0
  %4531 = vmatpush1.msra.mxu0 %v4394
  %4532 = vmatprep.subr.mxu0 0.0
  %4533 = vmatpush1.msra.mxu0 %v4395
  %4534 = vmatprep.subr.mxu0 0.0
  %4535 = vmatpush1.msra.mxu0 %v4396
  %4536 = vmatprep.subr.mxu0 0.0
  %4537 = vmatpush1.msra.mxu0 0.0
  %4538 = vmatprep.subr.mxu0 0.0
  %4539 = vmatpush1.msra.mxu0 0.0
  %4540 = vmatprep.subr.mxu0 0.0
  %4541 = vmatpush1.msra.mxu0 0.0
  %4542 = vmatprep.subr.mxu0 0.0
  %4543 = vmatpush1.msra.mxu0 0.0
  %4544 = vmatprep.subr.mxu0 0.0
  %4545 = vmatpush1.msra.mxu0 0.0
  %4546 = vmatprep.subr.mxu0 0.0
  %4547 = vmatpush1.msra.mxu0 0.0
  %4548 = vmatprep.subr.mxu0 0.0
  %4549 = vmatpush1.msra.mxu0 0.0
  %4550 = vmatprep.subr.mxu0 0.0
  %4551 = vmatpush1.msra.mxu0 0.0
  %4552 = vmatprep.subr.mxu0 0.0
  %4553 = vmatpush1.msra.mxu0 0.0
  %4554 = vmatprep.subr.mxu0 0.0
  %4555 = vmatpush1.msra.mxu0 0.0
  %4556 = vmatprep.subr.mxu0 0.0
  %4557 = vmatpush1.msra.mxu0 0.0
  %4558 = vmatprep.subr.mxu0 0.0
  %4559 = vmatpush1.msra.mxu0 0.0
  %4560 = vmatprep.subr.mxu0 0.0
  %4561 = vmatpush1.msra.mxu0 0.0
  %4562 = vmatprep.subr.mxu0 0.0
  %4563 = vmatpush1.msra.mxu0 0.0
  %4564 = vmatprep.subr.mxu0 0.0
  %4565 = vmatpush1.msra.mxu0 0.0
  %4566 = vmatprep.subr.mxu0 0.0
  %4567 = vmatpush1.msra.mxu0 0.0
  %4568 = vmatprep.subr.mxu0 0.0
  %4569 = vmatpush1.msra.mxu0 0.0
  %4570 = vmatprep.subr.mxu0 0.0
  %4571 = vmatpush1.msra.mxu0 0.0
  %4572 = vmatprep.subr.mxu0 0.0
  %4573 = vmatpush1.msra.mxu0 0.0
  %4574 = vmatprep.subr.mxu0 0.0
  %4575 = vmatpush1.msra.mxu0 0.0
  %4576 = vmatprep.subr.mxu0 0.0
  %4577 = vmatpush1.msra.mxu0 0.0
  %4578 = vmatprep.subr.mxu0 0.0
  %4579 = vmatpush1.msra.mxu0 0.0
  %4580 = vmatprep.subr.mxu0 0.0
  %4581 = vmatpush1.msra.mxu0 0.0
  %4582 = vmatprep.subr.mxu0 0.0
  %4583 = vmatpush1.msra.mxu0 0.0
  %4584 = vmatprep.mubr.f32.mxu0 0.0
  %4585 = vmatmul.mubr.f32.gmra.mrb[0].mxu0 %v4515
  %v4586 = vpop.f32.mrb[0].mxu0
  %v4587 = vadd.f32 0.0, %v4586
  %v4588 = vpop.f32.mrb[0].mxu0
  %4589 = vmatprep.mubr.f32.mxu0 0.0
  %4590 = vmatmul.mubr.f32.gmra.mrb[0].mxu0 %v4518
  %v4591 = vpop.f32.mrb[0].mxu0
  %v4592 = vadd.f32 0.0, %v4591
  %v4593 = vpop.f32.mrb[0].mxu0
  %4594 = vdwg.mxu0
  %4595 = vmatprep.subr.mxu0 0.0
  %4596 = vmatpush1.msra.mxu0 %v4397
  %4597 = vmatprep.subr.mxu0 0.0
  %4598 = vmatpush1.msra.mxu0 %v4398
  %4599 = vmatprep.subr.mxu0 0.0
  %4600 = vmatpush1.msra.mxu0 %v4399
  %4601 = vmatprep.subr.mxu0 0.0
  %4602 = vmatpush1.msra.mxu0 %v4400
  %4603 = vmatprep.subr.mxu0 0.0
  %4604 = vmatpush1.msra.mxu0 %v4401
  %4605 = vmatprep.subr.mxu0 0.0
  %4606 = vmatpush1.msra.mxu0 %v4402
  %4607 = vmatprep.subr.mxu0 0.0
  %4608 = vmatpush1.msra.mxu0 %v4403
  %4609 = vmatprep.subr.mxu0 0.0
  %4610 = vmatpush1.msra.mxu0 %v4404
  %4611 = vmatprep.subr.mxu0 0.0
  %4612 = vmatpush1.msra.mxu0 0.0
  %4613 = vmatprep.subr.mxu0 0.0
  %4614 = vmatpush1.msra.mxu0 0.0
  %4615 = vmatprep.subr.mxu0 0.0
  %4616 = vmatpush1.msra.mxu0 0.0
  %4617 = vmatprep.subr.mxu0 0.0
  %4618 = vmatpush1.msra.mxu0 0.0
  %4619 = vmatprep.subr.mxu0 0.0
  %4620 = vmatpush1.msra.mxu0 0.0
  %4621 = vmatprep.subr.mxu0 0.0
  %4622 = vmatpush1.msra.mxu0 0.0
  %4623 = vmatprep.subr.mxu0 0.0
  %4624 = vmatpush1.msra.mxu0 0.0
  %4625 = vmatprep.subr.mxu0 0.0
  %4626 = vmatpush1.msra.mxu0 0.0
  %4627 = vmatprep.subr.mxu0 0.0
  %4628 = vmatpush1.msra.mxu0 0.0
  %4629 = vmatprep.subr.mxu0 0.0
  %4630 = vmatpush1.msra.mxu0 0.0
  %4631 = vmatprep.subr.mxu0 0.0
  %4632 = vmatpush1.msra.mxu0 0.0
  %4633 = vmatprep.subr.mxu0 0.0
  %4634 = vmatpush1.msra.mxu0 0.0
  %4635 = vmatprep.subr.mxu0 0.0
  %4636 = vmatpush1.msra.mxu0 0.0
  %4637 = vmatprep.subr.mxu0 0.0
  %4638 = vmatpush1.msra.mxu0 0.0
  %4639 = vmatprep.subr.mxu0 0.0
  %4640 = vmatpush1.msra.mxu0 0.0
  %4641 = vmatprep.subr.mxu0 0.0
  %4642 = vmatpush1.msra.mxu0 0.0
  %4643 = vmatprep.subr.mxu0 0.0
  %4644 = vmatpush1.msra.mxu0 0.0
  %4645 = vmatprep.subr.mxu0 0.0
  %4646 = vmatpush1.msra.mxu0 0.0
  %4647 = vmatprep.subr.mxu0 0.0
  %4648 = vmatpush1.msra.mxu0 0.0
  %4649 = vmatprep.subr.mxu0 0.0
  %4650 = vmatpush1.msra.mxu0 0.0
  %4651 = vmatprep.subr.mxu0 0.0
  %4652 = vmatpush1.msra.mxu0 0.0
  %4653 = vmatprep.subr.mxu0 0.0
  %4654 = vmatpush1.msra.mxu0 0.0
  %4655 = vmatprep.subr.mxu0 0.0
  %4656 = vmatpush1.msra.mxu0 0.0
  %4657 = vmatprep.subr.mxu0 0.0
  %4658 = vmatpush1.msra.mxu0 0.0
  %4659 = vmatprep.mubr.f32.mxu0 0.0
  %4660 = vmatmul.mubr.f32.gmra.mrb[0].mxu0 %v4515
  %v4661 = vpop.f32.mrb[0].mxu0
  %v4662 = vadd.f32 0.0, %v4661
  %v4663 = vpop.f32.mrb[0].mxu0
  %4664 = vmatprep.mubr.f32.mxu0 0.0
  %4665 = vmatmul.mubr.f32.gmra.mrb[0].mxu0 %v4518
  %v4666 = vpop.f32.mrb[0].mxu0
  %v4667 = vadd.f32 0.0, %v4666
  %v4668 = vpop.f32.mrb[0].mxu0
  %4669 = vdwg.mxu0
  %v4671 = vsel %vm3813, %v4425, 0
  %v4674 = vsel %vm3813, %v4426, 0
  %4676 = vmatprep.subr.mxu0 0.0
  %4677 = vmatpush1.msra.mxu0 %v4389
  %4678 = vmatprep.subr.mxu0 0.0
  %4679 = vmatpush1.msra.mxu0 %v4390
  %4680 = vmatprep.subr.mxu0 0.0
  %4681 = vmatpush1.msra.mxu0 %v4391
  %4682 = vmatprep.subr.mxu0 0.0
  %4683 = vmatpush1.msra.mxu0 %v4392
  %4684 = vmatprep.subr.mxu0 0.0
  %4685 = vmatpush1.msra.mxu0 %v4393
  %4686 = vmatprep.subr.mxu0 0.0
  %4687 = vmatpush1.msra.mxu0 %v4394
  %4688 = vmatprep.subr.mxu0 0.0
  %4689 = vmatpush1.msra.mxu0 %v4395
  %4690 = vmatprep.subr.mxu0 0.0
  %4691 = vmatpush1.msra.mxu0 %v4396
  %4692 = vmatprep.subr.mxu0 0.0
  %4693 = vmatpush1.msra.mxu0 0.0
  %4694 = vmatprep.subr.mxu0 0.0
  %4695 = vmatpush1.msra.mxu0 0.0
  %4696 = vmatprep.subr.mxu0 0.0
  %4697 = vmatpush1.msra.mxu0 0.0
  %4698 = vmatprep.subr.mxu0 0.0
  %4699 = vmatpush1.msra.mxu0 0.0
  %4700 = vmatprep.subr.mxu0 0.0
  %4701 = vmatpush1.msra.mxu0 0.0
  %4702 = vmatprep.subr.mxu0 0.0
  %4703 = vmatpush1.msra.mxu0 0.0
  %4704 = vmatprep.subr.mxu0 0.0
  %4705 = vmatpush1.msra.mxu0 0.0
  %4706 = vmatprep.subr.mxu0 0.0
  %4707 = vmatpush1.msra.mxu0 0.0
  %4708 = vmatprep.subr.mxu0 0.0
  %4709 = vmatpush1.msra.mxu0 0.0
  %4710 = vmatprep.subr.mxu0 0.0
  %4711 = vmatpush1.msra.mxu0 0.0
  %4712 = vmatprep.subr.mxu0 0.0
  %4713 = vmatpush1.msra.mxu0 0.0
  %4714 = vmatprep.subr.mxu0 0.0
  %4715 = vmatpush1.msra.mxu0 0.0
  %4716 = vmatprep.subr.mxu0 0.0
  %4717 = vmatpush1.msra.mxu0 0.0
  %4718 = vmatprep.subr.mxu0 0.0
  %4719 = vmatpush1.msra.mxu0 0.0
  %4720 = vmatprep.subr.mxu0 0.0
  %4721 = vmatpush1.msra.mxu0 0.0
  %4722 = vmatprep.subr.mxu0 0.0
  %4723 = vmatpush1.msra.mxu0 0.0
  %4724 = vmatprep.subr.mxu0 0.0
  %4725 = vmatpush1.msra.mxu0 0.0
  %4726 = vmatprep.subr.mxu0 0.0
  %4727 = vmatpush1.msra.mxu0 0.0
  %4728 = vmatprep.subr.mxu0 0.0
  %4729 = vmatpush1.msra.mxu0 0.0
  %4730 = vmatprep.subr.mxu0 0.0
  %4731 = vmatpush1.msra.mxu0 0.0
  %4732 = vmatprep.subr.mxu0 0.0
  %4733 = vmatpush1.msra.mxu0 0.0
  %4734 = vmatprep.subr.mxu0 0.0
  %4735 = vmatpush1.msra.mxu0 0.0
  %4736 = vmatprep.subr.mxu0 0.0
  %4737 = vmatpush1.msra.mxu0 0.0
  %4738 = vmatprep.subr.mxu0 0.0
  %4739 = vmatpush1.msra.mxu0 0.0
  %4740 = vmatprep.mubr.f32.mxu0 0.0
  %4741 = vmatmul.mubr.f32.gmra.mrb[0].mxu0 %v4671
  %v4742 = vpop.f32.mrb[0].mxu0
  %v4743 = vadd.f32 0.0, %v4742
  %v4744 = vpop.f32.mrb[0].mxu0
  %4745 = vmatprep.mubr.f32.mxu0 0.0
  %4746 = vmatmul.mubr.f32.gmra.mrb[0].mxu0 %v4674
  %v4747 = vpop.f32.mrb[0].mxu0
  %v4748 = vadd.f32 0.0, %v4747
  %v4749 = vpop.f32.mrb[0].mxu0
  %4750 = vdwg.mxu0
  %4751 = vmatprep.subr.mxu0 0.0
  %4752 = vmatpush1.msra.mxu0 %v4397
  %4753 = vmatprep.subr.mxu0 0.0
  %4754 = vmatpush1.msra.mxu0 %v4398
  %4755 = vmatprep.subr.mxu0 0.0
  %4756 = vmatpush1.msra.mxu0 %v4399
  %4757 = vmatprep.subr.mxu0 0.0
  %4758 = vmatpush1.msra.mxu0 %v4400
  %4759 = vmatprep.subr.mxu0 0.0
  %4760 = vmatpush1.msra.mxu0 %v4401
  %4761 = vmatprep.subr.mxu0 0.0
  %4762 = vmatpush1.msra.mxu0 %v4402
  %4763 = vmatprep.subr.mxu0 0.0
  %4764 = vmatpush1.msra.mxu0 %v4403
  %4765 = vmatprep.subr.mxu0 0.0
  %4766 = vmatpush1.msra.mxu0 %v4404
  %4767 = vmatprep.subr.mxu0 0.0
  %4768 = vmatpush1.msra.mxu0 0.0
  %4769 = vmatprep.subr.mxu0 0.0
  %4770 = vmatpush1.msra.mxu0 0.0
  %4771 = vmatprep.subr.mxu0 0.0
  %4772 = vmatpush1.msra.mxu0 0.0
  %4773 = vmatprep.subr.mxu0 0.0
  %4774 = vmatpush1.msra.mxu0 0.0
  %4775 = vmatprep.subr.mxu0 0.0
  %4776 = vmatpush1.msra.mxu0 0.0
  %4777 = vmatprep.subr.mxu0 0.0
  %4778 = vmatpush1.msra.mxu0 0.0
  %4779 = vmatprep.subr.mxu0 0.0
  %4780 = vmatpush1.msra.mxu0 0.0
  %4781 = vmatprep.subr.mxu0 0.0
  %4782 = vmatpush1.msra.mxu0 0.0
  %4783 = vmatprep.subr.mxu0 0.0
  %4784 = vmatpush1.msra.mxu0 0.0
  %4785 = vmatprep.subr.mxu0 0.0
  %4786 = vmatpush1.msra.mxu0 0.0
  %4787 = vmatprep.subr.mxu0 0.0
  %4788 = vmatpush1.msra.mxu0 0.0
  %4789 = vmatprep.subr.mxu0 0.0
  %4790 = vmatpush1.msra.mxu0 0.0
  %4791 = vmatprep.subr.mxu0 0.0
  %4792 = vmatpush1.msra.mxu0 0.0
  %4793 = vmatprep.subr.mxu0 0.0
  %4794 = vmatpush1.msra.mxu0 0.0
  %4795 = vmatprep.subr.mxu0 0.0
  %4796 = vmatpush1.msra.mxu0 0.0
  %4797 = vmatprep.subr.mxu0 0.0
  %4798 = vmatpush1.msra.mxu0 0.0
  %4799 = vmatprep.subr.mxu0 0.0
  %4800 = vmatpush1.msra.mxu0 0.0
  %4801 = vmatprep.subr.mxu0 0.0
  %4802 = vmatpush1.msra.mxu0 0.0
  %4803 = vmatprep.subr.mxu0 0.0
  %4804 = vmatpush1.msra.mxu0 0.0
  %4805 = vmatprep.subr.mxu0 0.0
  %4806 = vmatpush1.msra.mxu0 0.0
  %4807 = vmatprep.subr.mxu0 0.0
  %4808 = vmatpush1.msra.mxu0 0.0
  %4809 = vmatprep.subr.mxu0 0.0
  %4810 = vmatpush1.msra.mxu0 0.0
  %4811 = vmatprep.subr.mxu0 0.0
  %4812 = vmatpush1.msra.mxu0 0.0
  %4813 = vmatprep.subr.mxu0 0.0
  %4814 = vmatpush1.msra.mxu0 0.0
  %4815 = vmatprep.mubr.f32.mxu0 0.0
  %4816 = vmatmul.mubr.f32.gmra.mrb[0].mxu0 %v4671
  %v4817 = vpop.f32.mrb[0].mxu0
  %v4818 = vadd.f32 0.0, %v4817
  %v4819 = vpop.f32.mrb[0].mxu0
  %4820 = vmatprep.mubr.f32.mxu0 0.0
  %4821 = vmatmul.mubr.f32.gmra.mrb[0].mxu0 %v4674
  %v4822 = vpop.f32.mrb[0].mxu0
  %v4823 = vadd.f32 0.0, %v4822
  %v4824 = vpop.f32.mrb[0].mxu0
  %4825 = vdwg.mxu0
  %v4827 = vsel %vm3813, %v4427, 0
  %v4830 = vsel %vm3813, %v4428, 0
  %4832 = vmatprep.subr.mxu0 0.0
  %4833 = vmatpush1.msra.mxu0 %v4389
  %4834 = vmatprep.subr.mxu0 0.0
  %4835 = vmatpush1.msra.mxu0 %v4390
  %4836 = vmatprep.subr.mxu0 0.0
  %4837 = vmatpush1.msra.mxu0 %v4391
  %4838 = vmatprep.subr.mxu0 0.0
  %4839 = vmatpush1.msra.mxu0 %v4392
  %4840 = vmatprep.subr.mxu0 0.0
  %4841 = vmatpush1.msra.mxu0 %v4393
  %4842 = vmatprep.subr.mxu0 0.0
  %4843 = vmatpush1.msra.mxu0 %v4394
  %4844 = vmatprep.subr.mxu0 0.0
  %4845 = vmatpush1.msra.mxu0 %v4395
  %4846 = vmatprep.subr.mxu0 0.0
  %4847 = vmatpush1.msra.mxu0 %v4396
  %4848 = vmatprep.subr.mxu0 0.0
  %4849 = vmatpush1.msra.mxu0 0.0
  %4850 = vmatprep.subr.mxu0 0.0
  %4851 = vmatpush1.msra.mxu0 0.0
  %4852 = vmatprep.subr.mxu0 0.0
  %4853 = vmatpush1.msra.mxu0 0.0
  %4854 = vmatprep.subr.mxu0 0.0
  %4855 = vmatpush1.msra.mxu0 0.0
  %4856 = vmatprep.subr.mxu0 0.0
  %4857 = vmatpush1.msra.mxu0 0.0
  %4858 = vmatprep.subr.mxu0 0.0
  %4859 = vmatpush1.msra.mxu0 0.0
  %4860 = vmatprep.subr.mxu0 0.0
  %4861 = vmatpush1.msra.mxu0 0.0
  %4862 = vmatprep.subr.mxu0 0.0
  %4863 = vmatpush1.msra.mxu0 0.0
  %4864 = vmatprep.subr.mxu0 0.0
  %4865 = vmatpush1.msra.mxu0 0.0
  %4866 = vmatprep.subr.mxu0 0.0
  %4867 = vmatpush1.msra.mxu0 0.0
  %4868 = vmatprep.subr.mxu0 0.0
  %4869 = vmatpush1.msra.mxu0 0.0
  %4870 = vmatprep.subr.mxu0 0.0
  %4871 = vmatpush1.msra.mxu0 0.0
  %4872 = vmatprep.subr.mxu0 0.0
  %4873 = vmatpush1.msra.mxu0 0.0
  %4874 = vmatprep.subr.mxu0 0.0
  %4875 = vmatpush1.msra.mxu0 0.0
  %4876 = vmatprep.subr.mxu0 0.0
  %4877 = vmatpush1.msra.mxu0 0.0
  %4878 = vmatprep.subr.mxu0 0.0
  %4879 = vmatpush1.msra.mxu0 0.0
  %4880 = vmatprep.subr.mxu0 0.0
  %4881 = vmatpush1.msra.mxu0 0.0
  %4882 = vmatprep.subr.mxu0 0.0
  %4883 = vmatpush1.msra.mxu0 0.0
  %4884 = vmatprep.subr.mxu0 0.0
  %4885 = vmatpush1.msra.mxu0 0.0
  %4886 = vmatprep.subr.mxu0 0.0
  %4887 = vmatpush1.msra.mxu0 0.0
  %4888 = vmatprep.subr.mxu0 0.0
  %4889 = vmatpush1.msra.mxu0 0.0
  %4890 = vmatprep.subr.mxu0 0.0
  %4891 = vmatpush1.msra.mxu0 0.0
  %4892 = vmatprep.subr.mxu0 0.0
  %4893 = vmatpush1.msra.mxu0 0.0
  %4894 = vmatprep.subr.mxu0 0.0
  %4895 = vmatpush1.msra.mxu0 0.0
  %4896 = vmatprep.mubr.f32.mxu0 0.0
  %4897 = vmatmul.mubr.f32.gmra.mrb[0].mxu0 %v4827
  %v4898 = vpop.f32.mrb[0].mxu0
  %v4899 = vadd.f32 0.0, %v4898
  %v4900 = vpop.f32.mrb[0].mxu0
  %4901 = vmatprep.mubr.f32.mxu0 0.0
  %4902 = vmatmul.mubr.f32.gmra.mrb[0].mxu0 %v4830
  %v4903 = vpop.f32.mrb[0].mxu0
  %v4904 = vadd.f32 0.0, %v4903
  %v4905 = vpop.f32.mrb[0].mxu0
  %4906 = vdwg.mxu0
  %4907 = vmatprep.subr.mxu0 0.0
  %4908 = vmatpush1.msra.mxu0 %v4397
  %4909 = vmatprep.subr.mxu0 0.0
  %4910 = vmatpush1.msra.mxu0 %v4398
  %4911 = vmatprep.subr.mxu0 0.0
  %4912 = vmatpush1.msra.mxu0 %v4399
  %4913 = vmatprep.subr.mxu0 0.0
  %4914 = vmatpush1.msra.mxu0 %v4400
  %4915 = vmatprep.subr.mxu0 0.0
  %4916 = vmatpush1.msra.mxu0 %v4401
  %4917 = vmatprep.subr.mxu0 0.0
  %4918 = vmatpush1.msra.mxu0 %v4402
  %4919 = vmatprep.subr.mxu0 0.0
  %4920 = vmatpush1.msra.mxu0 %v4403
  %4921 = vmatprep.subr.mxu0 0.0
  %4922 = vmatpush1.msra.mxu0 %v4404
  %4923 = vmatprep.subr.mxu0 0.0
  %4924 = vmatpush1.msra.mxu0 0.0
  %4925 = vmatprep.subr.mxu0 0.0
  %4926 = vmatpush1.msra.mxu0 0.0
  %4927 = vmatprep.subr.mxu0 0.0
  %4928 = vmatpush1.msra.mxu0 0.0
  %4929 = vmatprep.subr.mxu0 0.0
  %4930 = vmatpush1.msra.mxu0 0.0
  %4931 = vmatprep.subr.mxu0 0.0
  %4932 = vmatpush1.msra.mxu0 0.0
  %4933 = vmatprep.subr.mxu0 0.0
  %4934 = vmatpush1.msra.mxu0 0.0
  %4935 = vmatprep.subr.mxu0 0.0
  %4936 = vmatpush1.msra.mxu0 0.0
  %4937 = vmatprep.subr.mxu0 0.0
  %4938 = vmatpush1.msra.mxu0 0.0
  %4939 = vmatprep.subr.mxu0 0.0
  %4940 = vmatpush1.msra.mxu0 0.0
  %4941 = vmatprep.subr.mxu0 0.0
  %4942 = vmatpush1.msra.mxu0 0.0
  %4943 = vmatprep.subr.mxu0 0.0
  %4944 = vmatpush1.msra.mxu0 0.0
  %4945 = vmatprep.subr.mxu0 0.0
  %4946 = vmatpush1.msra.mxu0 0.0
  %4947 = vmatprep.subr.mxu0 0.0
  %4948 = vmatpush1.msra.mxu0 0.0
  %4949 = vmatprep.subr.mxu0 0.0
  %4950 = vmatpush1.msra.mxu0 0.0
  %4951 = vmatprep.subr.mxu0 0.0
  %4952 = vmatpush1.msra.mxu0 0.0
  %4953 = vmatprep.subr.mxu0 0.0
  %4954 = vmatpush1.msra.mxu0 0.0
  %4955 = vmatprep.subr.mxu0 0.0
  %4956 = vmatpush1.msra.mxu0 0.0
  %4957 = vmatprep.subr.mxu0 0.0
  %4958 = vmatpush1.msra.mxu0 0.0
  %4959 = vmatprep.subr.mxu0 0.0
  %4960 = vmatpush1.msra.mxu0 0.0
  %4961 = vmatprep.subr.mxu0 0.0
  %4962 = vmatpush1.msra.mxu0 0.0
  %4963 = vmatprep.subr.mxu0 0.0
  %4964 = vmatpush1.msra.mxu0 0.0
  %4965 = vmatprep.subr.mxu0 0.0
  %4966 = vmatpush1.msra.mxu0 0.0
  %4967 = vmatprep.subr.mxu0 0.0
  %4968 = vmatpush1.msra.mxu0 0.0
  %4969 = vmatprep.subr.mxu0 0.0
  %4970 = vmatpush1.msra.mxu0 0.0
  %4971 = vmatprep.mubr.f32.mxu0 0.0
  %4972 = vmatmul.mubr.f32.gmra.mrb[0].mxu0 %v4827
  %v4973 = vpop.f32.mrb[0].mxu0
  %v4974 = vadd.f32 0.0, %v4973
  %v4975 = vpop.f32.mrb[0].mxu0
  %4976 = vmatprep.mubr.f32.mxu0 0.0
  %4977 = vmatmul.mubr.f32.gmra.mrb[0].mxu0 %v4830
  %v4978 = vpop.f32.mrb[0].mxu0
  %v4979 = vadd.f32 0.0, %v4978
  %v4980 = vpop.f32.mrb[0].mxu0
  %4981 = vdwg.mxu0
  %v4983 = vsel %vm3813, %v4429, 0
  %v4986 = vsel %vm3813, %v4430, 0
  %4988 = vmatprep.subr.mxu0 0.0
  %4989 = vmatpush1.msra.mxu0 %v4389
  %4990 = vmatprep.subr.mxu0 0.0
  %4991 = vmatpush1.msra.mxu0 %v4390
  %4992 = vmatprep.subr.mxu0 0.0
  %4993 = vmatpush1.msra.mxu0 %v4391
  %4994 = vmatprep.subr.mxu0 0.0
  %4995 = vmatpush1.msra.mxu0 %v4392
  %4996 = vmatprep.subr.mxu0 0.0
  %4997 = vmatpush1.msra.mxu0 %v4393
  %4998 = vmatprep.subr.mxu0 0.0
  %4999 = vmatpush1.msra.mxu0 %v4394
  %5000 = vmatprep.subr.mxu0 0.0
  %5001 = vmatpush1.msra.mxu0 %v4395
  %5002 = vmatprep.subr.mxu0 0.0
  %5003 = vmatpush1.msra.mxu0 %v4396
  %5004 = vmatprep.subr.mxu0 0.0
  %5005 = vmatpush1.msra.mxu0 0.0
  %5006 = vmatprep.subr.mxu0 0.0
  %5007 = vmatpush1.msra.mxu0 0.0
  %5008 = vmatprep.subr.mxu0 0.0
  %5009 = vmatpush1.msra.mxu0 0.0
  %5010 = vmatprep.subr.mxu0 0.0
  %5011 = vmatpush1.msra.mxu0 0.0
  %5012 = vmatprep.subr.mxu0 0.0
  %5013 = vmatpush1.msra.mxu0 0.0
  %5014 = vmatprep.subr.mxu0 0.0
  %5015 = vmatpush1.msra.mxu0 0.0
  %5016 = vmatprep.subr.mxu0 0.0
  %5017 = vmatpush1.msra.mxu0 0.0
  %5018 = vmatprep.subr.mxu0 0.0
  %5019 = vmatpush1.msra.mxu0 0.0
  %5020 = vmatprep.subr.mxu0 0.0
  %5021 = vmatpush1.msra.mxu0 0.0
  %5022 = vmatprep.subr.mxu0 0.0
  %5023 = vmatpush1.msra.mxu0 0.0
  %5024 = vmatprep.subr.mxu0 0.0
  %5025 = vmatpush1.msra.mxu0 0.0
  %5026 = vmatprep.subr.mxu0 0.0
  %5027 = vmatpush1.msra.mxu0 0.0
  %5028 = vmatprep.subr.mxu0 0.0
  %5029 = vmatpush1.msra.mxu0 0.0
  %5030 = vmatprep.subr.mxu0 0.0
  %5031 = vmatpush1.msra.mxu0 0.0
  %5032 = vmatprep.subr.mxu0 0.0
  %5033 = vmatpush1.msra.mxu0 0.0
  %5034 = vmatprep.subr.mxu0 0.0
  %5035 = vmatpush1.msra.mxu0 0.0
  %5036 = vmatprep.subr.mxu0 0.0
  %5037 = vmatpush1.msra.mxu0 0.0
  %5038 = vmatprep.subr.mxu0 0.0
  %5039 = vmatpush1.msra.mxu0 0.0
  %5040 = vmatprep.subr.mxu0 0.0
  %5041 = vmatpush1.msra.mxu0 0.0
  %5042 = vmatprep.subr.mxu0 0.0
  %5043 = vmatpush1.msra.mxu0 0.0
  %5044 = vmatprep.subr.mxu0 0.0
  %5045 = vmatpush1.msra.mxu0 0.0
  %5046 = vmatprep.subr.mxu0 0.0
  %5047 = vmatpush1.msra.mxu0 0.0
  %5048 = vmatprep.subr.mxu0 0.0
  %5049 = vmatpush1.msra.mxu0 0.0
  %5050 = vmatprep.subr.mxu0 0.0
  %5051 = vmatpush1.msra.mxu0 0.0
  %5052 = vmatprep.mubr.f32.mxu0 0.0
  %5053 = vmatmul.mubr.f32.gmra.mrb[0].mxu0 %v4983
  %v5054 = vpop.f32.mrb[0].mxu0
  %v5055 = vadd.f32 0.0, %v5054
  %v5056 = vpop.f32.mrb[0].mxu0
  %5057 = vmatprep.mubr.f32.mxu0 0.0
  %5058 = vmatmul.mubr.f32.gmra.mrb[0].mxu0 %v4986
  %v5059 = vpop.f32.mrb[0].mxu0
  %v5060 = vadd.f32 0.0, %v5059
  %v5061 = vpop.f32.mrb[0].mxu0
  %5062 = vdwg.mxu0
  %5063 = vmatprep.subr.mxu0 0.0
  %5064 = vmatpush1.msra.mxu0 %v4397
  %5065 = vmatprep.subr.mxu0 0.0
  %5066 = vmatpush1.msra.mxu0 %v4398
  %5067 = vmatprep.subr.mxu0 0.0
  %5068 = vmatpush1.msra.mxu0 %v4399
  %5069 = vmatprep.subr.mxu0 0.0
  %5070 = vmatpush1.msra.mxu0 %v4400
  %5071 = vmatprep.subr.mxu0 0.0
  %5072 = vmatpush1.msra.mxu0 %v4401
  %5073 = vmatprep.subr.mxu0 0.0
  %5074 = vmatpush1.msra.mxu0 %v4402
  %5075 = vmatprep.subr.mxu0 0.0
  %5076 = vmatpush1.msra.mxu0 %v4403
  %5077 = vmatprep.subr.mxu0 0.0
  %5078 = vmatpush1.msra.mxu0 %v4404
  %5079 = vmatprep.subr.mxu0 0.0
  %5080 = vmatpush1.msra.mxu0 0.0
  %5081 = vmatprep.subr.mxu0 0.0
  %5082 = vmatpush1.msra.mxu0 0.0
  %5083 = vmatprep.subr.mxu0 0.0
  %5084 = vmatpush1.msra.mxu0 0.0
  %5085 = vmatprep.subr.mxu0 0.0
  %5086 = vmatpush1.msra.mxu0 0.0
  %5087 = vmatprep.subr.mxu0 0.0
  %5088 = vmatpush1.msra.mxu0 0.0
  %5089 = vmatprep.subr.mxu0 0.0
  %5090 = vmatpush1.msra.mxu0 0.0
  %5091 = vmatprep.subr.mxu0 0.0
  %5092 = vmatpush1.msra.mxu0 0.0
  %5093 = vmatprep.subr.mxu0 0.0
  %5094 = vmatpush1.msra.mxu0 0.0
  %5095 = vmatprep.subr.mxu0 0.0
  %5096 = vmatpush1.msra.mxu0 0.0
  %5097 = vmatprep.subr.mxu0 0.0
  %5098 = vmatpush1.msra.mxu0 0.0
  %5099 = vmatprep.subr.mxu0 0.0
  %5100 = vmatpush1.msra.mxu0 0.0
  %5101 = vmatprep.subr.mxu0 0.0
  %5102 = vmatpush1.msra.mxu0 0.0
  %5103 = vmatprep.subr.mxu0 0.0
  %5104 = vmatpush1.msra.mxu0 0.0
  %5105 = vmatprep.subr.mxu0 0.0
  %5106 = vmatpush1.msra.mxu0 0.0
  %5107 = vmatprep.subr.mxu0 0.0
  %5108 = vmatpush1.msra.mxu0 0.0
  %5109 = vmatprep.subr.mxu0 0.0
  %5110 = vmatpush1.msra.mxu0 0.0
  %5111 = vmatprep.subr.mxu0 0.0
  %5112 = vmatpush1.msra.mxu0 0.0
  %5113 = vmatprep.subr.mxu0 0.0
  %5114 = vmatpush1.msra.mxu0 0.0
  %5115 = vmatprep.subr.mxu0 0.0
  %5116 = vmatpush1.msra.mxu0 0.0
  %5117 = vmatprep.subr.mxu0 0.0
  %5118 = vmatpush1.msra.mxu0 0.0
  %5119 = vmatprep.subr.mxu0 0.0
  %5120 = vmatpush1.msra.mxu0 0.0
  %5121 = vmatprep.subr.mxu0 0.0
  %5122 = vmatpush1.msra.mxu0 0.0
  %5123 = vmatprep.subr.mxu0 0.0
  %5124 = vmatpush1.msra.mxu0 0.0
  %5125 = vmatprep.subr.mxu0 0.0
  %5126 = vmatpush1.msra.mxu0 0.0
  %5127 = vmatprep.mubr.f32.mxu0 0.0
  %5128 = vmatmul.mubr.f32.gmra.mrb[0].mxu0 %v4983
  %v5129 = vpop.f32.mrb[0].mxu0
  %v5130 = vadd.f32 0.0, %v5129
  %v5131 = vpop.f32.mrb[0].mxu0
  %5132 = vmatprep.mubr.f32.mxu0 0.0
  %5133 = vmatmul.mubr.f32.gmra.mrb[0].mxu0 %v4986
  %v5134 = vpop.f32.mrb[0].mxu0
  %v5135 = vadd.f32 0.0, %v5134
  %v5136 = vpop.f32.mrb[0].mxu0
  %5137 = vdwg.mxu0
  %v5139 = vsel %vm3813, %v4431, 0
  %v5142 = vsel %vm3813, %v4432, 0
  %5144 = vmatprep.subr.mxu0 0.0
  %5145 = vmatpush1.msra.mxu0 %v4389
  %5146 = vmatprep.subr.mxu0 0.0
  %5147 = vmatpush1.msra.mxu0 %v4390
  %5148 = vmatprep.subr.mxu0 0.0
  %5149 = vmatpush1.msra.mxu0 %v4391
  %5150 = vmatprep.subr.mxu0 0.0
  %5151 = vmatpush1.msra.mxu0 %v4392
  %5152 = vmatprep.subr.mxu0 0.0
  %5153 = vmatpush1.msra.mxu0 %v4393
  %5154 = vmatprep.subr.mxu0 0.0
  %5155 = vmatpush1.msra.mxu0 %v4394
  %5156 = vmatprep.subr.mxu0 0.0
  %5157 = vmatpush1.msra.mxu0 %v4395
  %5158 = vmatprep.subr.mxu0 0.0
  %5159 = vmatpush1.msra.mxu0 %v4396
  %5160 = vmatprep.subr.mxu0 0.0
  %5161 = vmatpush1.msra.mxu0 0.0
  %5162 = vmatprep.subr.mxu0 0.0
  %5163 = vmatpush1.msra.mxu0 0.0
  %5164 = vmatprep.subr.mxu0 0.0
  %5165 = vmatpush1.msra.mxu0 0.0
  %5166 = vmatprep.subr.mxu0 0.0
  %5167 = vmatpush1.msra.mxu0 0.0
  %5168 = vmatprep.subr.mxu0 0.0
  %5169 = vmatpush1.msra.mxu0 0.0
  %5170 = vmatprep.subr.mxu0 0.0
  %5171 = vmatpush1.msra.mxu0 0.0
  %5172 = vmatprep.subr.mxu0 0.0
  %5173 = vmatpush1.msra.mxu0 0.0
  %5174 = vmatprep.subr.mxu0 0.0
  %5175 = vmatpush1.msra.mxu0 0.0
  %5176 = vmatprep.subr.mxu0 0.0
  %5177 = vmatpush1.msra.mxu0 0.0
  %5178 = vmatprep.subr.mxu0 0.0
  %5179 = vmatpush1.msra.mxu0 0.0
  %5180 = vmatprep.subr.mxu0 0.0
  %5181 = vmatpush1.msra.mxu0 0.0
  %5182 = vmatprep.subr.mxu0 0.0
  %5183 = vmatpush1.msra.mxu0 0.0
  %5184 = vmatprep.subr.mxu0 0.0
  %5185 = vmatpush1.msra.mxu0 0.0
  %5186 = vmatprep.subr.mxu0 0.0
  %5187 = vmatpush1.msra.mxu0 0.0
  %5188 = vmatprep.subr.mxu0 0.0
  %5189 = vmatpush1.msra.mxu0 0.0
  %5190 = vmatprep.subr.mxu0 0.0
  %5191 = vmatpush1.msra.mxu0 0.0
  %5192 = vmatprep.subr.mxu0 0.0
  %5193 = vmatpush1.msra.mxu0 0.0
  %5194 = vmatprep.subr.mxu0 0.0
  %5195 = vmatpush1.msra.mxu0 0.0
  %5196 = vmatprep.subr.mxu0 0.0
  %5197 = vmatpush1.msra.mxu0 0.0
  %5198 = vmatprep.subr.mxu0 0.0
  %5199 = vmatpush1.msra.mxu0 0.0
  %5200 = vmatprep.subr.mxu0 0.0
  %5201 = vmatpush1.msra.mxu0 0.0
  %5202 = vmatprep.subr.mxu0 0.0
  %5203 = vmatpush1.msra.mxu0 0.0
  %5204 = vmatprep.subr.mxu0 0.0
  %5205 = vmatpush1.msra.mxu0 0.0
  %5206 = vmatprep.subr.mxu0 0.0
  %5207 = vmatpush1.msra.mxu0 0.0
  %5208 = vmatprep.mubr.f32.mxu0 0.0
  %5209 = vmatmul.mubr.f32.gmra.mrb[0].mxu0 %v5139
  %v5210 = vpop.f32.mrb[0].mxu0
  %v5211 = vadd.f32 0.0, %v5210
  %v5212 = vpop.f32.mrb[0].mxu0
  %5213 = vmatprep.mubr.f32.mxu0 0.0
  %5214 = vmatmul.mubr.f32.gmra.mrb[0].mxu0 %v5142
  %v5215 = vpop.f32.mrb[0].mxu0
  %v5216 = vadd.f32 0.0, %v5215
  %v5217 = vpop.f32.mrb[0].mxu0
  %5218 = vdwg.mxu0
  %5219 = vmatprep.subr.mxu0 0.0
  %5220 = vmatpush1.msra.mxu0 %v4397
  %5221 = vmatprep.subr.mxu0 0.0
  %5222 = vmatpush1.msra.mxu0 %v4398
  %5223 = vmatprep.subr.mxu0 0.0
  %5224 = vmatpush1.msra.mxu0 %v4399
  %5225 = vmatprep.subr.mxu0 0.0
  %5226 = vmatpush1.msra.mxu0 %v4400
  %5227 = vmatprep.subr.mxu0 0.0
  %5228 = vmatpush1.msra.mxu0 %v4401
  %5229 = vmatprep.subr.mxu0 0.0
  %5230 = vmatpush1.msra.mxu0 %v4402
  %5231 = vmatprep.subr.mxu0 0.0
  %5232 = vmatpush1.msra.mxu0 %v4403
  %5233 = vmatprep.subr.mxu0 0.0
  %5234 = vmatpush1.msra.mxu0 %v4404
  %5235 = vmatprep.subr.mxu0 0.0
  %5236 = vmatpush1.msra.mxu0 0.0
  %5237 = vmatprep.subr.mxu0 0.0
  %5238 = vmatpush1.msra.mxu0 0.0
  %5239 = vmatprep.subr.mxu0 0.0
  %5240 = vmatpush1.msra.mxu0 0.0
  %5241 = vmatprep.subr.mxu0 0.0
  %5242 = vmatpush1.msra.mxu0 0.0
  %5243 = vmatprep.subr.mxu0 0.0
  %5244 = vmatpush1.msra.mxu0 0.0
  %5245 = vmatprep.subr.mxu0 0.0
  %5246 = vmatpush1.msra.mxu0 0.0
  %5247 = vmatprep.subr.mxu0 0.0
  %5248 = vmatpush1.msra.mxu0 0.0
  %5249 = vmatprep.subr.mxu0 0.0
  %5250 = vmatpush1.msra.mxu0 0.0
  %5251 = vmatprep.subr.mxu0 0.0
  %5252 = vmatpush1.msra.mxu0 0.0
  %5253 = vmatprep.subr.mxu0 0.0
  %5254 = vmatpush1.msra.mxu0 0.0
  %5255 = vmatprep.subr.mxu0 0.0
  %5256 = vmatpush1.msra.mxu0 0.0
  %5257 = vmatprep.subr.mxu0 0.0
  %5258 = vmatpush1.msra.mxu0 0.0
  %5259 = vmatprep.subr.mxu0 0.0
  %5260 = vmatpush1.msra.mxu0 0.0
  %5261 = vmatprep.subr.mxu0 0.0
  %5262 = vmatpush1.msra.mxu0 0.0
  %5263 = vmatprep.subr.mxu0 0.0
  %5264 = vmatpush1.msra.mxu0 0.0
  %5265 = vmatprep.subr.mxu0 0.0
  %5266 = vmatpush1.msra.mxu0 0.0
  %5267 = vmatprep.subr.mxu0 0.0
  %5268 = vmatpush1.msra.mxu0 0.0
  %5269 = vmatprep.subr.mxu0 0.0
  %5270 = vmatpush1.msra.mxu0 0.0
  %5271 = vmatprep.subr.mxu0 0.0
  %5272 = vmatpush1.msra.mxu0 0.0
  %5273 = vmatprep.subr.mxu0 0.0
  %5274 = vmatpush1.msra.mxu0 0.0
  %5275 = vmatprep.subr.mxu0 0.0
  %5276 = vmatpush1.msra.mxu0 0.0
  %5277 = vmatprep.subr.mxu0 0.0
  %5278 = vmatpush1.msra.mxu0 0.0
  %5279 = vmatprep.subr.mxu0 0.0
  %5280 = vmatpush1.msra.mxu0 0.0
  %5281 = vmatprep.subr.mxu0 0.0
  %5282 = vmatpush1.msra.mxu0 0.0
  %5283 = vmatprep.mubr.f32.mxu0 0.0
  %5284 = vmatmul.mubr.f32.gmra.mrb[0].mxu0 %v5139
  %v5285 = vpop.f32.mrb[0].mxu0
  %v5286 = vadd.f32 0.0, %v5285
  %v5287 = vpop.f32.mrb[0].mxu0
  %5288 = vmatprep.mubr.f32.mxu0 0.0
  %5289 = vmatmul.mubr.f32.gmra.mrb[0].mxu0 %v5142
  %v5290 = vpop.f32.mrb[0].mxu0
  %v5291 = vadd.f32 0.0, %v5290
  %v5292 = vpop.f32.mrb[0].mxu0
  %5293 = vdwg.mxu0
  %v5295 = vsel %vm3813, %v4433, 0
  %v5298 = vsel %vm3813, %v4434, 0
  %5300 = vmatprep.subr.mxu0 0.0
  %5301 = vmatpush1.msra.mxu0 %v4389
  %5302 = vmatprep.subr.mxu0 0.0
  %5303 = vmatpush1.msra.mxu0 %v4390
  %5304 = vmatprep.subr.mxu0 0.0
  %5305 = vmatpush1.msra.mxu0 %v4391
  %5306 = vmatprep.subr.mxu0 0.0
  %5307 = vmatpush1.msra.mxu0 %v4392
  %5308 = vmatprep.subr.mxu0 0.0
  %5309 = vmatpush1.msra.mxu0 %v4393
  %5310 = vmatprep.subr.mxu0 0.0
  %5311 = vmatpush1.msra.mxu0 %v4394
  %5312 = vmatprep.subr.mxu0 0.0
  %5313 = vmatpush1.msra.mxu0 %v4395
  %5314 = vmatprep.subr.mxu0 0.0
  %5315 = vmatpush1.msra.mxu0 %v4396
  %5316 = vmatprep.subr.mxu0 0.0
  %5317 = vmatpush1.msra.mxu0 0.0
  %5318 = vmatprep.subr.mxu0 0.0
  %5319 = vmatpush1.msra.mxu0 0.0
  %5320 = vmatprep.subr.mxu0 0.0
  %5321 = vmatpush1.msra.mxu0 0.0
  %5322 = vmatprep.subr.mxu0 0.0
  %5323 = vmatpush1.msra.mxu0 0.0
  %5324 = vmatprep.subr.mxu0 0.0
  %5325 = vmatpush1.msra.mxu0 0.0
  %5326 = vmatprep.subr.mxu0 0.0
  %5327 = vmatpush1.msra.mxu0 0.0
  %5328 = vmatprep.subr.mxu0 0.0
  %5329 = vmatpush1.msra.mxu0 0.0
  %5330 = vmatprep.subr.mxu0 0.0
  %5331 = vmatpush1.msra.mxu0 0.0
  %5332 = vmatprep.subr.mxu0 0.0
  %5333 = vmatpush1.msra.mxu0 0.0
  %5334 = vmatprep.subr.mxu0 0.0
  %5335 = vmatpush1.msra.mxu0 0.0
  %5336 = vmatprep.subr.mxu0 0.0
  %5337 = vmatpush1.msra.mxu0 0.0
  %5338 = vmatprep.subr.mxu0 0.0
  %5339 = vmatpush1.msra.mxu0 0.0
  %5340 = vmatprep.subr.mxu0 0.0
  %5341 = vmatpush1.msra.mxu0 0.0
  %5342 = vmatprep.subr.mxu0 0.0
  %5343 = vmatpush1.msra.mxu0 0.0
  %5344 = vmatprep.subr.mxu0 0.0
  %5345 = vmatpush1.msra.mxu0 0.0
  %5346 = vmatprep.subr.mxu0 0.0
  %5347 = vmatpush1.msra.mxu0 0.0
  %5348 = vmatprep.subr.mxu0 0.0
  %5349 = vmatpush1.msra.mxu0 0.0
  %5350 = vmatprep.subr.mxu0 0.0
  %5351 = vmatpush1.msra.mxu0 0.0
  %5352 = vmatprep.subr.mxu0 0.0
  %5353 = vmatpush1.msra.mxu0 0.0
  %5354 = vmatprep.subr.mxu0 0.0
  %5355 = vmatpush1.msra.mxu0 0.0
  %5356 = vmatprep.subr.mxu0 0.0
  %5357 = vmatpush1.msra.mxu0 0.0
  %5358 = vmatprep.subr.mxu0 0.0
  %5359 = vmatpush1.msra.mxu0 0.0
  %5360 = vmatprep.subr.mxu0 0.0
  %5361 = vmatpush1.msra.mxu0 0.0
  %5362 = vmatprep.subr.mxu0 0.0
  %5363 = vmatpush1.msra.mxu0 0.0
  %5364 = vmatprep.mubr.f32.mxu0 0.0
  %5365 = vmatmul.mubr.f32.gmra.mrb[0].mxu0 %v5295
  %v5366 = vpop.f32.mrb[0].mxu0
  %v5367 = vadd.f32 0.0, %v5366
  %v5368 = vpop.f32.mrb[0].mxu0
  %5369 = vmatprep.mubr.f32.mxu0 0.0
  %5370 = vmatmul.mubr.f32.gmra.mrb[0].mxu0 %v5298
  %v5371 = vpop.f32.mrb[0].mxu0
  %v5372 = vadd.f32 0.0, %v5371
  %v5373 = vpop.f32.mrb[0].mxu0
  %5374 = vdwg.mxu0
  %5375 = vmatprep.subr.mxu0 0.0
  %5376 = vmatpush1.msra.mxu0 %v4397
  %5377 = vmatprep.subr.mxu0 0.0
  %5378 = vmatpush1.msra.mxu0 %v4398
  %5379 = vmatprep.subr.mxu0 0.0
  %5380 = vmatpush1.msra.mxu0 %v4399
  %5381 = vmatprep.subr.mxu0 0.0
  %5382 = vmatpush1.msra.mxu0 %v4400
  %5383 = vmatprep.subr.mxu0 0.0
  %5384 = vmatpush1.msra.mxu0 %v4401
  %5385 = vmatprep.subr.mxu0 0.0
  %5386 = vmatpush1.msra.mxu0 %v4402
  %5387 = vmatprep.subr.mxu0 0.0
  %5388 = vmatpush1.msra.mxu0 %v4403
  %5389 = vmatprep.subr.mxu0 0.0
  %5390 = vmatpush1.msra.mxu0 %v4404
  %5391 = vmatprep.subr.mxu0 0.0
  %5392 = vmatpush1.msra.mxu0 0.0
  %5393 = vmatprep.subr.mxu0 0.0
  %5394 = vmatpush1.msra.mxu0 0.0
  %5395 = vmatprep.subr.mxu0 0.0
  %5396 = vmatpush1.msra.mxu0 0.0
  %5397 = vmatprep.subr.mxu0 0.0
  %5398 = vmatpush1.msra.mxu0 0.0
  %5399 = vmatprep.subr.mxu0 0.0
  %5400 = vmatpush1.msra.mxu0 0.0
  %5401 = vmatprep.subr.mxu0 0.0
  %5402 = vmatpush1.msra.mxu0 0.0
  %5403 = vmatprep.subr.mxu0 0.0
  %5404 = vmatpush1.msra.mxu0 0.0
  %5405 = vmatprep.subr.mxu0 0.0
  %5406 = vmatpush1.msra.mxu0 0.0
  %5407 = vmatprep.subr.mxu0 0.0
  %5408 = vmatpush1.msra.mxu0 0.0
  %5409 = vmatprep.subr.mxu0 0.0
  %5410 = vmatpush1.msra.mxu0 0.0
  %5411 = vmatprep.subr.mxu0 0.0
  %5412 = vmatpush1.msra.mxu0 0.0
  %5413 = vmatprep.subr.mxu0 0.0
  %5414 = vmatpush1.msra.mxu0 0.0
  %5415 = vmatprep.subr.mxu0 0.0
  %5416 = vmatpush1.msra.mxu0 0.0
  %5417 = vmatprep.subr.mxu0 0.0
  %5418 = vmatpush1.msra.mxu0 0.0
  %5419 = vmatprep.subr.mxu0 0.0
  %5420 = vmatpush1.msra.mxu0 0.0
  %5421 = vmatprep.subr.mxu0 0.0
  %5422 = vmatpush1.msra.mxu0 0.0
  %5423 = vmatprep.subr.mxu0 0.0
  %5424 = vmatpush1.msra.mxu0 0.0
  %5425 = vmatprep.subr.mxu0 0.0
  %5426 = vmatpush1.msra.mxu0 0.0
  %5427 = vmatprep.subr.mxu0 0.0
  %5428 = vmatpush1.msra.mxu0 0.0
  %5429 = vmatprep.subr.mxu0 0.0
  %5430 = vmatpush1.msra.mxu0 0.0
  %5431 = vmatprep.subr.mxu0 0.0
  %5432 = vmatpush1.msra.mxu0 0.0
  %5433 = vmatprep.subr.mxu0 0.0
  %5434 = vmatpush1.msra.mxu0 0.0
  %5435 = vmatprep.subr.mxu0 0.0
  %5436 = vmatpush1.msra.mxu0 0.0
  %5437 = vmatprep.subr.mxu0 0.0
  %5438 = vmatpush1.msra.mxu0 0.0
  %5439 = vmatprep.mubr.f32.mxu0 0.0
  %5440 = vmatmul.mubr.f32.gmra.mrb[0].mxu0 %v5295
  %v5441 = vpop.f32.mrb[0].mxu0
  %v5442 = vadd.f32 0.0, %v5441
  %v5443 = vpop.f32.mrb[0].mxu0
  %5444 = vmatprep.mubr.f32.mxu0 0.0
  %5445 = vmatmul.mubr.f32.gmra.mrb[0].mxu0 %v5298
  %v5446 = vpop.f32.mrb[0].mxu0
  %v5447 = vadd.f32 0.0, %v5446
  %v5448 = vpop.f32.mrb[0].mxu0
  %5449 = vdwg.mxu0
  %v5451 = vsel %vm3813, %v4435, 0
  %v5454 = vsel %vm3813, %v4436, 0
  %5456 = vmatprep.subr.mxu0 0.0
  %5457 = vmatpush1.msra.mxu0 %v4389
  %5458 = vmatprep.subr.mxu0 0.0
  %5459 = vmatpush1.msra.mxu0 %v4390
  %5460 = vmatprep.subr.mxu0 0.0
  %5461 = vmatpush1.msra.mxu0 %v4391
  %5462 = vmatprep.subr.mxu0 0.0
  %5463 = vmatpush1.msra.mxu0 %v4392
  %5464 = vmatprep.subr.mxu0 0.0
  %5465 = vmatpush1.msra.mxu0 %v4393
  %5466 = vmatprep.subr.mxu0 0.0
  %5467 = vmatpush1.msra.mxu0 %v4394
  %5468 = vmatprep.subr.mxu0 0.0
  %5469 = vmatpush1.msra.mxu0 %v4395
  %5470 = vmatprep.subr.mxu0 0.0
  %5471 = vmatpush1.msra.mxu0 %v4396
  %5472 = vmatprep.subr.mxu0 0.0
  %5473 = vmatpush1.msra.mxu0 0.0
  %5474 = vmatprep.subr.mxu0 0.0
  %5475 = vmatpush1.msra.mxu0 0.0
  %5476 = vmatprep.subr.mxu0 0.0
  %5477 = vmatpush1.msra.mxu0 0.0
  %5478 = vmatprep.subr.mxu0 0.0
  %5479 = vmatpush1.msra.mxu0 0.0
  %5480 = vmatprep.subr.mxu0 0.0
  %5481 = vmatpush1.msra.mxu0 0.0
  %5482 = vmatprep.subr.mxu0 0.0
  %5483 = vmatpush1.msra.mxu0 0.0
  %5484 = vmatprep.subr.mxu0 0.0
  %5485 = vmatpush1.msra.mxu0 0.0
  %5486 = vmatprep.subr.mxu0 0.0
  %5487 = vmatpush1.msra.mxu0 0.0
  %5488 = vmatprep.subr.mxu0 0.0
  %5489 = vmatpush1.msra.mxu0 0.0
  %5490 = vmatprep.subr.mxu0 0.0
  %5491 = vmatpush1.msra.mxu0 0.0
  %5492 = vmatprep.subr.mxu0 0.0
  %5493 = vmatpush1.msra.mxu0 0.0
  %5494 = vmatprep.subr.mxu0 0.0
  %5495 = vmatpush1.msra.mxu0 0.0
  %5496 = vmatprep.subr.mxu0 0.0
  %5497 = vmatpush1.msra.mxu0 0.0
  %5498 = vmatprep.subr.mxu0 0.0
  %5499 = vmatpush1.msra.mxu0 0.0
  %5500 = vmatprep.subr.mxu0 0.0
  %5501 = vmatpush1.msra.mxu0 0.0
  %5502 = vmatprep.subr.mxu0 0.0
  %5503 = vmatpush1.msra.mxu0 0.0
  %5504 = vmatprep.subr.mxu0 0.0
  %5505 = vmatpush1.msra.mxu0 0.0
  %5506 = vmatprep.subr.mxu0 0.0
  %5507 = vmatpush1.msra.mxu0 0.0
  %5508 = vmatprep.subr.mxu0 0.0
  %5509 = vmatpush1.msra.mxu0 0.0
  %5510 = vmatprep.subr.mxu0 0.0
  %5511 = vmatpush1.msra.mxu0 0.0
  %5512 = vmatprep.subr.mxu0 0.0
  %5513 = vmatpush1.msra.mxu0 0.0
  %5514 = vmatprep.subr.mxu0 0.0
  %5515 = vmatpush1.msra.mxu0 0.0
  %5516 = vmatprep.subr.mxu0 0.0
  %5517 = vmatpush1.msra.mxu0 0.0
  %5518 = vmatprep.subr.mxu0 0.0
  %5519 = vmatpush1.msra.mxu0 0.0
  %5520 = vmatprep.mubr.f32.mxu0 0.0
  %5521 = vmatmul.mubr.f32.gmra.mrb[0].mxu0 %v5451
  %v5522 = vpop.f32.mrb[0].mxu0
  %v5523 = vadd.f32 0.0, %v5522
  %v5524 = vpop.f32.mrb[0].mxu0
  %5525 = vmatprep.mubr.f32.mxu0 0.0
  %5526 = vmatmul.mubr.f32.gmra.mrb[0].mxu0 %v5454
  %v5527 = vpop.f32.mrb[0].mxu0
  %v5528 = vadd.f32 0.0, %v5527
  %v5529 = vpop.f32.mrb[0].mxu0
  %5530 = vdwg.mxu0
  %5531 = vmatprep.subr.mxu0 0.0
  %5532 = vmatpush1.msra.mxu0 %v4397
  %5533 = vmatprep.subr.mxu0 0.0
  %5534 = vmatpush1.msra.mxu0 %v4398
  %5535 = vmatprep.subr.mxu0 0.0
  %5536 = vmatpush1.msra.mxu0 %v4399
  %5537 = vmatprep.subr.mxu0 0.0
  %5538 = vmatpush1.msra.mxu0 %v4400
  %5539 = vmatprep.subr.mxu0 0.0
  %5540 = vmatpush1.msra.mxu0 %v4401
  %5541 = vmatprep.subr.mxu0 0.0
  %5542 = vmatpush1.msra.mxu0 %v4402
  %5543 = vmatprep.subr.mxu0 0.0
  %5544 = vmatpush1.msra.mxu0 %v4403
  %5545 = vmatprep.subr.mxu0 0.0
  %5546 = vmatpush1.msra.mxu0 %v4404
  %5547 = vmatprep.subr.mxu0 0.0
  %5548 = vmatpush1.msra.mxu0 0.0
  %5549 = vmatprep.subr.mxu0 0.0
  %5550 = vmatpush1.msra.mxu0 0.0
  %5551 = vmatprep.subr.mxu0 0.0
  %5552 = vmatpush1.msra.mxu0 0.0
  %5553 = vmatprep.subr.mxu0 0.0
  %5554 = vmatpush1.msra.mxu0 0.0
  %5555 = vmatprep.subr.mxu0 0.0
  %5556 = vmatpush1.msra.mxu0 0.0
  %5557 = vmatprep.subr.mxu0 0.0
  %5558 = vmatpush1.msra.mxu0 0.0
  %5559 = vmatprep.subr.mxu0 0.0
  %5560 = vmatpush1.msra.mxu0 0.0
  %5561 = vmatprep.subr.mxu0 0.0
  %5562 = vmatpush1.msra.mxu0 0.0
  %5563 = vmatprep.subr.mxu0 0.0
  %5564 = vmatpush1.msra.mxu0 0.0
  %5565 = vmatprep.subr.mxu0 0.0
  %5566 = vmatpush1.msra.mxu0 0.0
  %5567 = vmatprep.subr.mxu0 0.0
  %5568 = vmatpush1.msra.mxu0 0.0
  %5569 = vmatprep.subr.mxu0 0.0
  %5570 = vmatpush1.msra.mxu0 0.0
  %5571 = vmatprep.subr.mxu0 0.0
  %5572 = vmatpush1.msra.mxu0 0.0
  %5573 = vmatprep.subr.mxu0 0.0
  %5574 = vmatpush1.msra.mxu0 0.0
  %5575 = vmatprep.subr.mxu0 0.0
  %5576 = vmatpush1.msra.mxu0 0.0
  %5577 = vmatprep.subr.mxu0 0.0
  %5578 = vmatpush1.msra.mxu0 0.0
  %5579 = vmatprep.subr.mxu0 0.0
  %5580 = vmatpush1.msra.mxu0 0.0
  %5581 = vmatprep.subr.mxu0 0.0
  %5582 = vmatpush1.msra.mxu0 0.0
  %5583 = vmatprep.subr.mxu0 0.0
  %5584 = vmatpush1.msra.mxu0 0.0
  %5585 = vmatprep.subr.mxu0 0.0
  %5586 = vmatpush1.msra.mxu0 0.0
  %5587 = vmatprep.subr.mxu0 0.0
  %5588 = vmatpush1.msra.mxu0 0.0
  %5589 = vmatprep.subr.mxu0 0.0
  %5590 = vmatpush1.msra.mxu0 0.0
  %5591 = vmatprep.subr.mxu0 0.0
  %5592 = vmatpush1.msra.mxu0 0.0
  %5593 = vmatprep.subr.mxu0 0.0
  %5594 = vmatpush1.msra.mxu0 0.0
  %5595 = vmatprep.mubr.f32.mxu0 0.0
  %5596 = vmatmul.mubr.f32.gmra.mrb[0].mxu0 %v5451
  %v5597 = vpop.f32.mrb[0].mxu0
  %v5598 = vadd.f32 0.0, %v5597
  %v5599 = vpop.f32.mrb[0].mxu0
  %5600 = vmatprep.mubr.f32.mxu0 0.0
  %5601 = vmatmul.mubr.f32.gmra.mrb[0].mxu0 %v5454
  %v5602 = vpop.f32.mrb[0].mxu0
  %v5603 = vadd.f32 0.0, %v5602
  %v5604 = vpop.f32.mrb[0].mxu0
  %5605 = vdwg.mxu0
  %v5607 = vsel %vm3813, %v4437, 0
  %v5610 = vsel %vm3813, %v4438, 0
  %5612 = vmatprep.subr.mxu0 0.0
  %5613 = vmatpush1.msra.mxu0 %v4389
  %5614 = vmatprep.subr.mxu0 0.0
  %5615 = vmatpush1.msra.mxu0 %v4390
  %5616 = vmatprep.subr.mxu0 0.0
  %5617 = vmatpush1.msra.mxu0 %v4391
  %5618 = vmatprep.subr.mxu0 0.0
  %5619 = vmatpush1.msra.mxu0 %v4392
  %5620 = vmatprep.subr.mxu0 0.0
  %5621 = vmatpush1.msra.mxu0 %v4393
  %5622 = vmatprep.subr.mxu0 0.0
  %5623 = vmatpush1.msra.mxu0 %v4394
  %5624 = vmatprep.subr.mxu0 0.0
  %5625 = vmatpush1.msra.mxu0 %v4395
  %5626 = vmatprep.subr.mxu0 0.0
  %5627 = vmatpush1.msra.mxu0 %v4396
  %5628 = vmatprep.subr.mxu0 0.0
  %5629 = vmatpush1.msra.mxu0 0.0
  %5630 = vmatprep.subr.mxu0 0.0
  %5631 = vmatpush1.msra.mxu0 0.0
  %5632 = vmatprep.subr.mxu0 0.0
  %5633 = vmatpush1.msra.mxu0 0.0
  %5634 = vmatprep.subr.mxu0 0.0
  %5635 = vmatpush1.msra.mxu0 0.0
  %5636 = vmatprep.subr.mxu0 0.0
  %5637 = vmatpush1.msra.mxu0 0.0
  %5638 = vmatprep.subr.mxu0 0.0
  %5639 = vmatpush1.msra.mxu0 0.0
  %5640 = vmatprep.subr.mxu0 0.0
  %5641 = vmatpush1.msra.mxu0 0.0
  %5642 = vmatprep.subr.mxu0 0.0
  %5643 = vmatpush1.msra.mxu0 0.0
  %5644 = vmatprep.subr.mxu0 0.0
  %5645 = vmatpush1.msra.mxu0 0.0
  %5646 = vmatprep.subr.mxu0 0.0
  %5647 = vmatpush1.msra.mxu0 0.0
  %5648 = vmatprep.subr.mxu0 0.0
  %5649 = vmatpush1.msra.mxu0 0.0
  %5650 = vmatprep.subr.mxu0 0.0
  %5651 = vmatpush1.msra.mxu0 0.0
  %5652 = vmatprep.subr.mxu0 0.0
  %5653 = vmatpush1.msra.mxu0 0.0
  %5654 = vmatprep.subr.mxu0 0.0
  %5655 = vmatpush1.msra.mxu0 0.0
  %5656 = vmatprep.subr.mxu0 0.0
  %5657 = vmatpush1.msra.mxu0 0.0
  %5658 = vmatprep.subr.mxu0 0.0
  %5659 = vmatpush1.msra.mxu0 0.0
  %5660 = vmatprep.subr.mxu0 0.0
  %5661 = vmatpush1.msra.mxu0 0.0
  %5662 = vmatprep.subr.mxu0 0.0
  %5663 = vmatpush1.msra.mxu0 0.0
  %5664 = vmatprep.subr.mxu0 0.0
  %5665 = vmatpush1.msra.mxu0 0.0
  %5666 = vmatprep.subr.mxu0 0.0
  %5667 = vmatpush1.msra.mxu0 0.0
  %5668 = vmatprep.subr.mxu0 0.0
  %5669 = vmatpush1.msra.mxu0 0.0
  %5670 = vmatprep.subr.mxu0 0.0
  %5671 = vmatpush1.msra.mxu0 0.0
  %5672 = vmatprep.subr.mxu0 0.0
  %5673 = vmatpush1.msra.mxu0 0.0
  %5674 = vmatprep.subr.mxu0 0.0
  %5675 = vmatpush1.msra.mxu0 0.0
  %5676 = vmatprep.mubr.f32.mxu0 0.0
  %5677 = vmatmul.mubr.f32.gmra.mrb[0].mxu0 %v5607
  %v5678 = vpop.f32.mrb[0].mxu0
  %v5679 = vadd.f32 0.0, %v5678
  %v5680 = vpop.f32.mrb[0].mxu0
  %5681 = vmatprep.mubr.f32.mxu0 0.0
  %5682 = vmatmul.mubr.f32.gmra.mrb[0].mxu0 %v5610
  %v5683 = vpop.f32.mrb[0].mxu0
  %v5684 = vadd.f32 0.0, %v5683
  %v5685 = vpop.f32.mrb[0].mxu0
  %5686 = vdwg.mxu0
  %5687 = vmatprep.subr.mxu0 0.0
  %5688 = vmatpush1.msra.mxu0 %v4397
  %5689 = vmatprep.subr.mxu0 0.0
  %5690 = vmatpush1.msra.mxu0 %v4398
  %5691 = vmatprep.subr.mxu0 0.0
  %5692 = vmatpush1.msra.mxu0 %v4399
  %5693 = vmatprep.subr.mxu0 0.0
  %5694 = vmatpush1.msra.mxu0 %v4400
  %5695 = vmatprep.subr.mxu0 0.0
  %5696 = vmatpush1.msra.mxu0 %v4401
  %5697 = vmatprep.subr.mxu0 0.0
  %5698 = vmatpush1.msra.mxu0 %v4402
  %5699 = vmatprep.subr.mxu0 0.0
  %5700 = vmatpush1.msra.mxu0 %v4403
  %5701 = vmatprep.subr.mxu0 0.0
  %5702 = vmatpush1.msra.mxu0 %v4404
  %5703 = vmatprep.subr.mxu0 0.0
  %5704 = vmatpush1.msra.mxu0 0.0
  %5705 = vmatprep.subr.mxu0 0.0
  %5706 = vmatpush1.msra.mxu0 0.0
  %5707 = vmatprep.subr.mxu0 0.0
  %5708 = vmatpush1.msra.mxu0 0.0
  %5709 = vmatprep.subr.mxu0 0.0
  %5710 = vmatpush1.msra.mxu0 0.0
  %5711 = vmatprep.subr.mxu0 0.0
  %5712 = vmatpush1.msra.mxu0 0.0
  %5713 = vmatprep.subr.mxu0 0.0
  %5714 = vmatpush1.msra.mxu0 0.0
  %5715 = vmatprep.subr.mxu0 0.0
  %5716 = vmatpush1.msra.mxu0 0.0
  %5717 = vmatprep.subr.mxu0 0.0
  %5718 = vmatpush1.msra.mxu0 0.0
  %5719 = vmatprep.subr.mxu0 0.0
  %5720 = vmatpush1.msra.mxu0 0.0
  %5721 = vmatprep.subr.mxu0 0.0
  %5722 = vmatpush1.msra.mxu0 0.0
  %5723 = vmatprep.subr.mxu0 0.0
  %5724 = vmatpush1.msra.mxu0 0.0
  %5725 = vmatprep.subr.mxu0 0.0
  %5726 = vmatpush1.msra.mxu0 0.0
  %5727 = vmatprep.subr.mxu0 0.0
  %5728 = vmatpush1.msra.mxu0 0.0
  %5729 = vmatprep.subr.mxu0 0.0
  %5730 = vmatpush1.msra.mxu0 0.0
  %5731 = vmatprep.subr.mxu0 0.0
  %5732 = vmatpush1.msra.mxu0 0.0
  %5733 = vmatprep.subr.mxu0 0.0
  %5734 = vmatpush1.msra.mxu0 0.0
  %5735 = vmatprep.subr.mxu0 0.0
  %5736 = vmatpush1.msra.mxu0 0.0
  %5737 = vmatprep.subr.mxu0 0.0
  %5738 = vmatpush1.msra.mxu0 0.0
  %5739 = vmatprep.subr.mxu0 0.0
  %5740 = vmatpush1.msra.mxu0 0.0
  %5741 = vmatprep.subr.mxu0 0.0
  %5742 = vmatpush1.msra.mxu0 0.0
  %5743 = vmatprep.subr.mxu0 0.0
  %5744 = vmatpush1.msra.mxu0 0.0
  %5745 = vmatprep.subr.mxu0 0.0
  %5746 = vmatpush1.msra.mxu0 0.0
  %5747 = vmatprep.subr.mxu0 0.0
  %5748 = vmatpush1.msra.mxu0 0.0
  %5749 = vmatprep.subr.mxu0 0.0
  %5750 = vmatpush1.msra.mxu0 0.0
  %5751 = vmatprep.mubr.f32.mxu0 0.0
  %5752 = vmatmul.mubr.f32.gmra.mrb[0].mxu0 %v5607
  %v5753 = vpop.f32.mrb[0].mxu0
  %v5754 = vadd.f32 0.0, %v5753
  %v5755 = vpop.f32.mrb[0].mxu0
  %5756 = vmatprep.mubr.f32.mxu0 0.0
  %5757 = vmatmul.mubr.f32.gmra.mrb[0].mxu0 %v5610
  %v5758 = vpop.f32.mrb[0].mxu0
  %v5759 = vadd.f32 0.0, %v5758
  %v5760 = vpop.f32.mrb[0].mxu0
  %5761 = vdwg.mxu0
  %v5763 = vsel %vm3813, %v4439, 0
  %v5766 = vsel %vm3813, %v4440, 0
  %5768 = vmatprep.subr.mxu0 0.0
  %5769 = vmatpush1.msra.mxu0 %v4389
  %5770 = vmatprep.subr.mxu0 0.0
  %5771 = vmatpush1.msra.mxu0 %v4390
  %5772 = vmatprep.subr.mxu0 0.0
  %5773 = vmatpush1.msra.mxu0 %v4391
  %5774 = vmatprep.subr.mxu0 0.0
  %5775 = vmatpush1.msra.mxu0 %v4392
  %5776 = vmatprep.subr.mxu0 0.0
  %5777 = vmatpush1.msra.mxu0 %v4393
  %5778 = vmatprep.subr.mxu0 0.0
  %5779 = vmatpush1.msra.mxu0 %v4394
  %5780 = vmatprep.subr.mxu0 0.0
  %5781 = vmatpush1.msra.mxu0 %v4395
  %5782 = vmatprep.subr.mxu0 0.0
  %5783 = vmatpush1.msra.mxu0 %v4396
  %5784 = vmatprep.subr.mxu0 0.0
  %5785 = vmatpush1.msra.mxu0 0.0
  %5786 = vmatprep.subr.mxu0 0.0
  %5787 = vmatpush1.msra.mxu0 0.0
  %5788 = vmatprep.subr.mxu0 0.0
  %5789 = vmatpush1.msra.mxu0 0.0
  %5790 = vmatprep.subr.mxu0 0.0
  %5791 = vmatpush1.msra.mxu0 0.0
  %5792 = vmatprep.subr.mxu0 0.0
  %5793 = vmatpush1.msra.mxu0 0.0
  %5794 = vmatprep.subr.mxu0 0.0
  %5795 = vmatpush1.msra.mxu0 0.0
  %5796 = vmatprep.subr.mxu0 0.0
  %5797 = vmatpush1.msra.mxu0 0.0
  %5798 = vmatprep.subr.mxu0 0.0
  %5799 = vmatpush1.msra.mxu0 0.0
  %5800 = vmatprep.subr.mxu0 0.0
  %5801 = vmatpush1.msra.mxu0 0.0
  %5802 = vmatprep.subr.mxu0 0.0
  %5803 = vmatpush1.msra.mxu0 0.0
  %5804 = vmatprep.subr.mxu0 0.0
  %5805 = vmatpush1.msra.mxu0 0.0
  %5806 = vmatprep.subr.mxu0 0.0
  %5807 = vmatpush1.msra.mxu0 0.0
  %5808 = vmatprep.subr.mxu0 0.0
  %5809 = vmatpush1.msra.mxu0 0.0
  %5810 = vmatprep.subr.mxu0 0.0
  %5811 = vmatpush1.msra.mxu0 0.0
  %5812 = vmatprep.subr.mxu0 0.0
  %5813 = vmatpush1.msra.mxu0 0.0
  %5814 = vmatprep.subr.mxu0 0.0
  %5815 = vmatpush1.msra.mxu0 0.0
  %5816 = vmatprep.subr.mxu0 0.0
  %5817 = vmatpush1.msra.mxu0 0.0
  %5818 = vmatprep.subr.mxu0 0.0
  %5819 = vmatpush1.msra.mxu0 0.0
  %5820 = vmatprep.subr.mxu0 0.0
  %5821 = vmatpush1.msra.mxu0 0.0
  %5822 = vmatprep.subr.mxu0 0.0
  %5823 = vmatpush1.msra.mxu0 0.0
  %5824 = vmatprep.subr.mxu0 0.0
  %5825 = vmatpush1.msra.mxu0 0.0
  %5826 = vmatprep.subr.mxu0 0.0
  %5827 = vmatpush1.msra.mxu0 0.0
  %5828 = vmatprep.subr.mxu0 0.0
  %5829 = vmatpush1.msra.mxu0 0.0
  %5830 = vmatprep.subr.mxu0 0.0
  %5831 = vmatpush1.msra.mxu0 0.0
  %5832 = vmatprep.mubr.f32.mxu0 0.0
  %5833 = vmatmul.mubr.f32.gmra.mrb[0].mxu0 %v5763
  %v5834 = vpop.f32.mrb[0].mxu0
  %v5835 = vadd.f32 0.0, %v5834
  %v5836 = vpop.f32.mrb[0].mxu0
  %5837 = vmatprep.mubr.f32.mxu0 0.0
  %5838 = vmatmul.mubr.f32.gmra.mrb[0].mxu0 %v5766
  %v5839 = vpop.f32.mrb[0].mxu0
  %v5840 = vadd.f32 0.0, %v5839
  %v5841 = vpop.f32.mrb[0].mxu0
  %5842 = vdwg.mxu0
  %5843 = vmatprep.subr.mxu0 0.0
  %5844 = vmatpush1.msra.mxu0 %v4397
  %5845 = vmatprep.subr.mxu0 0.0
  %5846 = vmatpush1.msra.mxu0 %v4398
  %5847 = vmatprep.subr.mxu0 0.0
  %5848 = vmatpush1.msra.mxu0 %v4399
  %5849 = vmatprep.subr.mxu0 0.0
  %5850 = vmatpush1.msra.mxu0 %v4400
  %5851 = vmatprep.subr.mxu0 0.0
  %5852 = vmatpush1.msra.mxu0 %v4401
  %5853 = vmatprep.subr.mxu0 0.0
  %5854 = vmatpush1.msra.mxu0 %v4402
  %5855 = vmatprep.subr.mxu0 0.0
  %5856 = vmatpush1.msra.mxu0 %v4403
  %5857 = vmatprep.subr.mxu0 0.0
  %5858 = vmatpush1.msra.mxu0 %v4404
  %5859 = vmatprep.subr.mxu0 0.0
  %5860 = vmatpush1.msra.mxu0 0.0
  %5861 = vmatprep.subr.mxu0 0.0
  %5862 = vmatpush1.msra.mxu0 0.0
  %5863 = vmatprep.subr.mxu0 0.0
  %5864 = vmatpush1.msra.mxu0 0.0
  %5865 = vmatprep.subr.mxu0 0.0
  %5866 = vmatpush1.msra.mxu0 0.0
  %5867 = vmatprep.subr.mxu0 0.0
  %5868 = vmatpush1.msra.mxu0 0.0
  %5869 = vmatprep.subr.mxu0 0.0
  %5870 = vmatpush1.msra.mxu0 0.0
  %5871 = vmatprep.subr.mxu0 0.0
  %5872 = vmatpush1.msra.mxu0 0.0
  %5873 = vmatprep.subr.mxu0 0.0
  %5874 = vmatpush1.msra.mxu0 0.0
  %5875 = vmatprep.subr.mxu0 0.0
  %5876 = vmatpush1.msra.mxu0 0.0
  %5877 = vmatprep.subr.mxu0 0.0
  %5878 = vmatpush1.msra.mxu0 0.0
  %5879 = vmatprep.subr.mxu0 0.0
  %5880 = vmatpush1.msra.mxu0 0.0
  %5881 = vmatprep.subr.mxu0 0.0
  %5882 = vmatpush1.msra.mxu0 0.0
  %5883 = vmatprep.subr.mxu0 0.0
  %5884 = vmatpush1.msra.mxu0 0.0
  %5885 = vmatprep.subr.mxu0 0.0
  %5886 = vmatpush1.msra.mxu0 0.0
  %5887 = vmatprep.subr.mxu0 0.0
  %5888 = vmatpush1.msra.mxu0 0.0
  %5889 = vmatprep.subr.mxu0 0.0
  %5890 = vmatpush1.msra.mxu0 0.0
  %5891 = vmatprep.subr.mxu0 0.0
  %5892 = vmatpush1.msra.mxu0 0.0
  %5893 = vmatprep.subr.mxu0 0.0
  %5894 = vmatpush1.msra.mxu0 0.0
  %5895 = vmatprep.subr.mxu0 0.0
  %5896 = vmatpush1.msra.mxu0 0.0
  %5897 = vmatprep.subr.mxu0 0.0
  %5898 = vmatpush1.msra.mxu0 0.0
  %5899 = vmatprep.subr.mxu0 0.0
  %5900 = vmatpush1.msra.mxu0 0.0
  %5901 = vmatprep.subr.mxu0 0.0
  %5902 = vmatpush1.msra.mxu0 0.0
  %5903 = vmatprep.subr.mxu0 0.0
  %5904 = vmatpush1.msra.mxu0 0.0
  %5905 = vmatprep.subr.mxu0 0.0
  %5906 = vmatpush1.msra.mxu0 0.0
  %5907 = vmatprep.mubr.f32.mxu0 0.0
  %5908 = vmatmul.mubr.f32.gmra.mrb[0].mxu0 %v5763
  %v5909 = vpop.f32.mrb[0].mxu0
  %v5910 = vadd.f32 0.0, %v5909
  %v5911 = vpop.f32.mrb[0].mxu0
  %5912 = vmatprep.mubr.f32.mxu0 0.0
  %5913 = vmatmul.mubr.f32.gmra.mrb[0].mxu0 %v5766
  %v5914 = vpop.f32.mrb[0].mxu0
  %v5915 = vadd.f32 0.0, %v5914
  %v5916 = vpop.f32.mrb[0].mxu0
  %5917 = vdwg.mxu0
  %5922 = vrot.lane.b32.xlu0 %v4743, 32
  %v5923 = vpop.permute.xlu0 %5922
  %5924 = vrot.lane.b32.xlu0 %v4748, 32
  %v5925 = vpop.permute.xlu0 %5924
  %5926 = vrot.lane.b32.xlu0 %v4818, 32
  %v5927 = vpop.permute.xlu0 %5926
  %5928 = vrot.lane.b32.xlu0 %v4823, 32
  %v5929 = vpop.permute.xlu0 %5928
  %5938 = vrot.lane.b32.xlu0 %v4899, 64
  %v5939 = vpop.permute.xlu0 %5938
  %5940 = vrot.lane.b32.xlu0 %v4904, 64
  %v5941 = vpop.permute.xlu0 %5940
  %5942 = vrot.lane.b32.xlu0 %v4974, 64
  %v5943 = vpop.permute.xlu0 %5942
  %5944 = vrot.lane.b32.xlu0 %v4979, 64
  %v5945 = vpop.permute.xlu0 %5944
  %5954 = vrot.lane.b32.xlu0 %v5055, 96
  %v5955 = vpop.permute.xlu0 %5954
  %5956 = vrot.lane.b32.xlu0 %v5060, 96
  %v5957 = vpop.permute.xlu0 %5956
  %5958 = vrot.lane.b32.xlu0 %v5130, 96
  %v5959 = vpop.permute.xlu0 %5958
  %5960 = vrot.lane.b32.xlu0 %v5135, 96
  %v5961 = vpop.permute.xlu0 %5960
  %5970 = vrot.lane.b32.xlu0 %v5367, 32
  %v5971 = vpop.permute.xlu0 %5970
  %5972 = vrot.lane.b32.xlu0 %v5372, 32
  %v5973 = vpop.permute.xlu0 %5972
  %5974 = vrot.lane.b32.xlu0 %v5442, 32
  %v5975 = vpop.permute.xlu0 %5974
  %5976 = vrot.lane.b32.xlu0 %v5447, 32
  %v5977 = vpop.permute.xlu0 %5976
  %5986 = vrot.lane.b32.xlu0 %v5523, 64
  %v5987 = vpop.permute.xlu0 %5986
  %5988 = vrot.lane.b32.xlu0 %v5528, 64
  %v5989 = vpop.permute.xlu0 %5988
  %5990 = vrot.lane.b32.xlu0 %v5598, 64
  %v5991 = vpop.permute.xlu0 %5990
  %5992 = vrot.lane.b32.xlu0 %v5603, 64
  %v5993 = vpop.permute.xlu0 %5992
  %6002 = vrot.lane.b32.xlu0 %v5679, 96
  %v6003 = vpop.permute.xlu0 %6002
  %6004 = vrot.lane.b32.xlu0 %v5684, 96
  %v6005 = vpop.permute.xlu0 %6004
  %6006 = vrot.lane.b32.xlu0 %v5754, 96
  %v6007 = vpop.permute.xlu0 %6006
  %6008 = vrot.lane.b32.xlu0 %v5759, 96
  %v6009 = vpop.permute.xlu0 %6008
  %v6014 = vsel %vm113, %v4587, %v5923
  %v6015 = vsel %vm113, %v4592, %v5925
  %v6016 = vsel %vm113, %v4662, %v5927
  %v6017 = vsel %vm113, %v4667, %v5929
  %v6018 = vsel %vm3813, %v6014, %v5939
  %v6019 = vsel %vm3813, %v6015, %v5941
  %v6020 = vsel %vm3813, %v6016, %v5943
  %v6021 = vsel %vm3813, %v6017, %v5945
  %v6022 = vsel %vm3830, %v6018, %v5955
  %v6023 = vsel %vm3830, %v6019, %v5957
  %v6024 = vsel %vm3830, %v6020, %v5959
  %v6025 = vsel %vm3830, %v6021, %v5961
  %v6026 = vsel %vm113, %v5211, %v5971
  %v6027 = vsel %vm113, %v5216, %v5973
  %v6028 = vsel %vm113, %v5286, %v5975
  %v6029 = vsel %vm113, %v5291, %v5977
  %v6030 = vsel %vm3813, %v6026, %v5987
  %v6031 = vsel %vm3813, %v6027, %v5989
  %v6032 = vsel %vm3813, %v6028, %v5991
  %v6033 = vsel %vm3813, %v6029, %v5993
  %v6034 = vsel %vm3830, %v6030, %v6003
  %v6035 = vsel %vm3830, %v6031, %v6005
  %v6036 = vsel %vm3830, %v6032, %v6007
  %v6037 = vsel %vm3830, %v6033, %v6009
  %s6038 = scalar_lea.vmem %s6, 2
  %v6039 = vld [vmem:[%s6038] sm:$0x1]
  %s6040 = scalar_lea.vmem %s7, 2
  %v6041 = vld [vmem:[%s6040] sm:$0x1]
  %s6042 = scalar_lea.vmem %s8, 2
  %v6043 = vld [vmem:[%s6042] sm:$0x1]
  %v6045 = vlaneseq
  %v6046 = vshrl.u32 %v6045, 7
  %v6047 = vsub.s32 0, %v6046
  %v6048 = vrot.slane %v6039, %v6047
  %v6051 = vsel %vm113, %v5835, 0
  %v6054 = vsel %vm113, %v5840, 0
  %v6057 = vsel %vm113, %v5910, 0
  %v6060 = vsel %vm113, %v5915, 0
  %6062 = vmatprep.subr.mxu0 0.0
  %6063 = vmatpush1.msra.mxu0 %v4478
  %6064 = vmatprep.subr.mxu0 0.0
  %6065 = vmatpush1.msra.mxu0 %v4479
  %6066 = vmatprep.subr.mxu0 0.0
  %6067 = vmatpush1.msra.mxu0 %v4480
  %6068 = vmatprep.subr.mxu0 0.0
  %6069 = vmatpush1.msra.mxu0 %v4481
  %6070 = vmatprep.subr.mxu0 0.0
  %6071 = vmatpush1.msra.mxu0 %v4482
  %6072 = vmatprep.subr.mxu0 0.0
  %6073 = vmatpush1.msra.mxu0 %v4483
  %6074 = vmatprep.subr.mxu0 0.0
  %6075 = vmatpush1.msra.mxu0 %v4484
  %6076 = vmatprep.subr.mxu0 0.0
  %6077 = vmatpush1.msra.mxu0 %v4485
  %6078 = vmatprep.subr.mxu0 0.0
  %6079 = vmatpush1.msra.mxu0 %v4486
  %6080 = vmatprep.subr.mxu0 0.0
  %6081 = vmatpush1.msra.mxu0 %v4487
  %6082 = vmatprep.subr.mxu0 0.0
  %6083 = vmatpush1.msra.mxu0 %v4488
  %6084 = vmatprep.subr.mxu0 0.0
  %6085 = vmatpush1.msra.mxu0 %v4489
  %6086 = vmatprep.subr.mxu0 0.0
  %6087 = vmatpush1.msra.mxu0 %v4490
  %6088 = vmatprep.subr.mxu0 0.0
  %6089 = vmatpush1.msra.mxu0 %v4491
  %6090 = vmatprep.subr.mxu0 0.0
  %6091 = vmatpush1.msra.mxu0 %v4492
  %6092 = vmatprep.subr.mxu0 0.0
  %6093 = vmatpush1.msra.mxu0 %v4493
  %6094 = vmatprep.subr.mxu0 0.0
  %6095 = vmatpush1.msra.mxu0 %v4494
  %6096 = vmatprep.subr.mxu0 0.0
  %6097 = vmatpush1.msra.mxu0 %v4495
  %6098 = vmatprep.subr.mxu0 0.0
  %6099 = vmatpush1.msra.mxu0 %v4496
  %6100 = vmatprep.subr.mxu0 0.0
  %6101 = vmatpush1.msra.mxu0 %v4497
  %6102 = vmatprep.subr.mxu0 0.0
  %6103 = vmatpush1.msra.mxu0 %v4498
  %6104 = vmatprep.subr.mxu0 0.0
  %6105 = vmatpush1.msra.mxu0 %v4499
  %6106 = vmatprep.subr.mxu0 0.0
  %6107 = vmatpush1.msra.mxu0 %v4500
  %6108 = vmatprep.subr.mxu0 0.0
  %6109 = vmatpush1.msra.mxu0 %v4501
  %6110 = vmatprep.subr.mxu0 0.0
  %6111 = vmatpush1.msra.mxu0 %v4502
  %6112 = vmatprep.subr.mxu0 0.0
  %6113 = vmatpush1.msra.mxu0 %v4503
  %6114 = vmatprep.subr.mxu0 0.0
  %6115 = vmatpush1.msra.mxu0 %v4504
  %6116 = vmatprep.subr.mxu0 0.0
  %6117 = vmatpush1.msra.mxu0 %v4505
  %6118 = vmatprep.subr.mxu0 0.0
  %6119 = vmatpush1.msra.mxu0 %v4506
  %6120 = vmatprep.subr.mxu0 0.0
  %6121 = vmatpush1.msra.mxu0 %v4507
  %6122 = vmatprep.subr.mxu0 0.0
  %6123 = vmatpush1.msra.mxu0 %v4508
  %6124 = vmatprep.subr.mxu0 0.0
  %6125 = vmatpush1.msra.mxu0 %v4509
  %6126 = vmatprep.mubr.f32.mxu0 %v6034
  %6127 = vmatmul.mubr.f32.gmra.mrb[0].mxu0 %v6022
  %v6128 = vpop.f32.mrb[0].mxu0
  %v6129 = vadd.f32 %v6048, %v6128
  %v6130 = vpop.f32.mrb[0].mxu0
  %6131 = vmatprep.mubr.f32.mxu0 %v6035
  %6132 = vmatmul.mubr.f32.gmra.mrb[0].mxu0 %v6023
  %v6133 = vpop.f32.mrb[0].mxu0
  %v6134 = vadd.f32 %v6048, %v6133
  %v6135 = vpop.f32.mrb[0].mxu0
  %6136 = vmatprep.mubr.f32.mxu0 %v6036
  %6137 = vmatmul.mubr.f32.gmra.mrb[0].mxu0 %v6024
  %v6138 = vpop.f32.mrb[0].mxu0
  %v6139 = vadd.f32 %v6048, %v6138
  %v6140 = vpop.f32.mrb[0].mxu0
  %6141 = vmatprep.mubr.f32.mxu0 %v6037
  %6142 = vmatmul.mubr.f32.gmra.mrb[0].mxu0 %v6025
  %v6143 = vpop.f32.mrb[0].mxu0
  %v6144 = vadd.f32 %v6048, %v6143
  %v6145 = vpop.f32.mrb[0].mxu0
  %6146 = vdwg.mxu0
  %6147 = vmatprep.subr.mxu0 0.0
  %6148 = vmatpush1.msra.mxu0 %v4510
  %6149 = vmatprep.subr.mxu0 0.0
  %6150 = vmatpush1.msra.mxu0 %v4511
  %6151 = vmatprep.subr.mxu0 0.0
  %6152 = vmatpush1.msra.mxu0 %v4512
  %6153 = vmatprep.subr.mxu0 0.0
  %6154 = vmatpush1.msra.mxu0 %v4513
  %6155 = vmatprep.subr.mxu0 0.0
  %6156 = vmatpush1.msra.mxu0 0.0
  %6157 = vmatprep.subr.mxu0 0.0
  %6158 = vmatpush1.msra.mxu0 0.0
  %6159 = vmatprep.subr.mxu0 0.0
  %6160 = vmatpush1.msra.mxu0 0.0
  %6161 = vmatprep.subr.mxu0 0.0
  %6162 = vmatpush1.msra.mxu0 0.0
  %6163 = vmatprep.subr.mxu0 0.0
  %6164 = vmatpush1.msra.mxu0 0.0
  %6165 = vmatprep.subr.mxu0 0.0
  %6166 = vmatpush1.msra.mxu0 0.0
  %6167 = vmatprep.subr.mxu0 0.0
  %6168 = vmatpush1.msra.mxu0 0.0
  %6169 = vmatprep.subr.mxu0 0.0
  %6170 = vmatpush1.msra.mxu0 0.0
  %6171 = vmatprep.subr.mxu0 0.0
  %6172 = vmatpush1.msra.mxu0 0.0
  %6173 = vmatprep.subr.mxu0 0.0
  %6174 = vmatpush1.msra.mxu0 0.0
  %6175 = vmatprep.subr.mxu0 0.0
  %6176 = vmatpush1.msra.mxu0 0.0
  %6177 = vmatprep.subr.mxu0 0.0
  %6178 = vmatpush1.msra.mxu0 0.0
  %6179 = vmatprep.subr.mxu0 0.0
  %6180 = vmatpush1.msra.mxu0 0.0
  %6181 = vmatprep.subr.mxu0 0.0
  %6182 = vmatpush1.msra.mxu0 0.0
  %6183 = vmatprep.subr.mxu0 0.0
  %6184 = vmatpush1.msra.mxu0 0.0
  %6185 = vmatprep.subr.mxu0 0.0
  %6186 = vmatpush1.msra.mxu0 0.0
  %6187 = vmatprep.subr.mxu0 0.0
  %6188 = vmatpush1.msra.mxu0 0.0
  %6189 = vmatprep.subr.mxu0 0.0
  %6190 = vmatpush1.msra.mxu0 0.0
  %6191 = vmatprep.subr.mxu0 0.0
  %6192 = vmatpush1.msra.mxu0 0.0
  %6193 = vmatprep.subr.mxu0 0.0
  %6194 = vmatpush1.msra.mxu0 0.0
  %6195 = vmatprep.subr.mxu0 0.0
  %6196 = vmatpush1.msra.mxu0 0.0
  %6197 = vmatprep.subr.mxu0 0.0
  %6198 = vmatpush1.msra.mxu0 0.0
  %6199 = vmatprep.subr.mxu0 0.0
  %6200 = vmatpush1.msra.mxu0 0.0
  %6201 = vmatprep.subr.mxu0 0.0
  %6202 = vmatpush1.msra.mxu0 0.0
  %6203 = vmatprep.subr.mxu0 0.0
  %6204 = vmatpush1.msra.mxu0 0.0
  %6205 = vmatprep.subr.mxu0 0.0
  %6206 = vmatpush1.msra.mxu0 0.0
  %6207 = vmatprep.subr.mxu0 0.0
  %6208 = vmatpush1.msra.mxu0 0.0
  %6209 = vmatprep.subr.mxu0 0.0
  %6210 = vmatpush1.msra.mxu0 0.0
  %6211 = vmatprep.mubr.f32.mxu0 0.0
  %6212 = vmatmul.mubr.f32.gmra.mrb[0].mxu0 %v6051
  %v6213 = vpop.f32.mrb[0].mxu0
  %v6214 = vadd.f32 %v6129, %v6213
  %v6215 = vpop.f32.mrb[0].mxu0
  %6216 = vmatprep.mubr.f32.mxu0 0.0
  %6217 = vmatmul.mubr.f32.gmra.mrb[0].mxu0 %v6054
  %v6218 = vpop.f32.mrb[0].mxu0
  %v6219 = vadd.f32 %v6134, %v6218
  %v6220 = vpop.f32.mrb[0].mxu0
  %6221 = vmatprep.mubr.f32.mxu0 0.0
  %6222 = vmatmul.mubr.f32.gmra.mrb[0].mxu0 %v6057
  %v6223 = vpop.f32.mrb[0].mxu0
  %v6224 = vadd.f32 %v6139, %v6223
  %v6225 = vpop.f32.mrb[0].mxu0
  %6226 = vmatprep.mubr.f32.mxu0 0.0
  %6227 = vmatmul.mubr.f32.gmra.mrb[0].mxu0 %v6060
  %v6228 = vpop.f32.mrb[0].mxu0
  %v6229 = vadd.f32 %v6144, %v6228
  %v6230 = vpop.f32.mrb[0].mxu0
  %6231 = vdwg.mxu0
  %v6232 = vmax.f32 %v6214, 0.0
  %v6233 = vmax.f32 %v6219, 0.0
  %v6234 = vmax.f32 %v6224, 0.0
  %v6235 = vmax.f32 %v6229, 0.0
  %v6236 = vsel %vm113, %v6232, 0.0
  %v6237 = vsel %vm113, %v6233, 0.0
  %v6238 = vadd.f32 %v6236, %v6237
  %v6239 = vsel %vm113, %v6234, 0.0
  %v6240 = vadd.f32 %v6238, %v6239
  %v6241 = vsel %vm113, %v6235, 0.0
  %v6242 = vadd.f32 %v6240, %v6241
  %v6243 = vrot.slane %v6242, 4
  %v6244 = vadd.f32 %v6242, %v6243
  %v6245 = vrot.slane %v6244, 2
  %v6246 = vadd.f32 %v6244, %v6245
  %v6247 = vrot.slane %v6246, 1
  %v6248 = vadd.f32 %v6246, %v6247
  %v6249 = vmul.f32 %v6248, 0.03125
  %v6250 = vmul.f32 %v6232, %v6232
  %v6251 = vmul.f32 %v6233, %v6233
  %v6252 = vmul.f32 %v6234, %v6234
  %v6253 = vmul.f32 %v6235, %v6235
  %v6254 = vsel %vm113, %v6250, 0.0
  %v6255 = vsel %vm113, %v6251, 0.0
  %v6256 = vadd.f32 %v6254, %v6255
  %v6257 = vsel %vm113, %v6252, 0.0
  %v6258 = vadd.f32 %v6256, %v6257
  %v6259 = vsel %vm113, %v6253, 0.0
  %v6260 = vadd.f32 %v6258, %v6259
  %v6261 = vrot.slane %v6260, 4
  %v6262 = vadd.f32 %v6260, %v6261
  %v6263 = vrot.slane %v6262, 2
  %v6264 = vadd.f32 %v6262, %v6263
  %v6265 = vrot.slane %v6264, 1
  %v6266 = vadd.f32 %v6264, %v6265
  %v6267 = vmul.f32 %v6266, 0.03125
  %v6268 = vmul.f32 %v6249, %v6249
  %v6269 = vsub.f32 %v6267, %v6268
  %v6270 = vmax.f32 %v6269, 0.0
  %v6271 = vadd.f32 %v6270, 1e-05
  %v6272 = vrsqrt.pop %v6271
  %v6273 = vmul.f32 %v6041, %v6272
  %v6274 = vmul.f32 %v6249, %v6273
  %v6275 = vsub.f32 %v6043, %v6274
  %v6277 = vlaneseq
  %v6278 = vshrl.u32 %v6277, 7
  %v6279 = vsub.s32 0, %v6278
  %v6280 = vrot.slane %v6273, %v6279
  %v6282 = vmul.f32 %v6232, %v6280
  %v6283 = vmul.f32 %v6233, %v6280
  %v6284 = vmul.f32 %v6234, %v6280
  %v6285 = vmul.f32 %v6235, %v6280
  %v6287 = vlaneseq
  %v6288 = vshrl.u32 %v6287, 7
  %v6289 = vsub.s32 0, %v6288
  %v6290 = vrot.slane %v6275, %v6289
  %v6292 = vadd.f32 %v6282, %v6290
  %v6293 = vadd.f32 %v6283, %v6290
  %v6294 = vadd.f32 %v6284, %v6290
  %v6295 = vadd.f32 %v6285, %v6290
  %v6296 = vld [vmem:[%s3] sm:$0x3]
  %v6297 = vld [vmem:[%s3 + $0x2] sm:$0x3]
  %v6298 = vld [vmem:[%s3 + $0x4] sm:$0x3]
  %v6299 = vld [vmem:[%s3 + $0x6] sm:$0x3]
  %v6300 = vld [vmem:[%s3 + $0x8] sm:$0x3]
  %v6301 = vld [vmem:[%s3 + $0xa] sm:$0x3]
  %v6302 = vld [vmem:[%s3 + $0xc] sm:$0x3]
  %v6303 = vld [vmem:[%s3 + $0xe] sm:$0x3]
  %v6304 = vld [vmem:[%s3 + $0x10] sm:$0x3]
  %v6305 = vunpack.c.l.bf16 %v6296
  %v6306 = vunpack.c.l.bf16 %v6297
  %v6307 = vunpack.c.l.bf16 %v6298
  %v6308 = vunpack.c.l.bf16 %v6299
  %v6309 = vunpack.c.l.bf16 %v6300
  %v6310 = vunpack.c.l.bf16 %v6301
  %v6311 = vunpack.c.l.bf16 %v6302
  %v6312 = vunpack.c.l.bf16 %v6303
  %v6313 = vunpack.c.l.bf16 %v6304
  %s6314 = scalar_lea.vmem %s5, 288
  %v6315 = vld [vmem:[%s6314] sm:$0xf]
  %v6316 = vld [vmem:[%s6314 + $0x4] sm:$0xf]
  %v6317 = vld [vmem:[%s6314 + $0x8] sm:$0xf]
  %v6318 = vld [vmem:[%s6314 + $0xc] sm:$0xf]
  %v6319 = vld [vmem:[%s6314 + $0x10] sm:$0xf]
  %v6320 = vld [vmem:[%s6314 + $0x14] sm:$0xf]
  %v6321 = vld [vmem:[%s6314 + $0x18] sm:$0xf]
  %v6322 = vld [vmem:[%s6314 + $0x1c] sm:$0xf]
  %v6323 = vld [vmem:[%s6314 + $0x20] sm:$0xf]
  %v6324 = vld [vmem:[%s6314 + $0x24] sm:$0xf]
  %v6325 = vld [vmem:[%s6314 + $0x28] sm:$0xf]
  %v6326 = vld [vmem:[%s6314 + $0x2c] sm:$0xf]
  %v6327 = vld [vmem:[%s6314 + $0x30] sm:$0xf]
  %v6328 = vld [vmem:[%s6314 + $0x34] sm:$0xf]
  %v6329 = vld [vmem:[%s6314 + $0x38] sm:$0xf]
  %v6330 = vld [vmem:[%s6314 + $0x3c] sm:$0xf]
  %v6331 = vld [vmem:[%s6314 + $0x40] sm:$0xf]
  %v6332 = vld [vmem:[%s6314 + $0x44] sm:$0xf]
  %v6333 = vld [vmem:[%s6314 + $0x48] sm:$0xf]
  %v6334 = vld [vmem:[%s6314 + $0x4c] sm:$0xf]
  %v6335 = vld [vmem:[%s6314 + $0x50] sm:$0xf]
  %v6336 = vld [vmem:[%s6314 + $0x54] sm:$0xf]
  %v6337 = vld [vmem:[%s6314 + $0x58] sm:$0xf]
  %v6338 = vld [vmem:[%s6314 + $0x5c] sm:$0xf]
  %v6339 = vld [vmem:[%s6314 + $0x60] sm:$0xf]
  %v6340 = vld [vmem:[%s6314 + $0x64] sm:$0xf]
  %v6341 = vld [vmem:[%s6314 + $0x68] sm:$0xf]
  %v6342 = vld [vmem:[%s6314 + $0x6c] sm:$0xf]
  %v6343 = vld [vmem:[%s6314 + $0x70] sm:$0xf]
  %v6344 = vld [vmem:[%s6314 + $0x74] sm:$0xf]
  %v6345 = vld [vmem:[%s6314 + $0x78] sm:$0xf]
  %v6346 = vld [vmem:[%s6314 + $0x7c] sm:$0xf]
  %v6347 = vld [vmem:[%s6314 + $0x80] sm:$0xf]
  %v6348 = vld [vmem:[%s6314 + $0x84] sm:$0xf]
  %v6349 = vld [vmem:[%s6314 + $0x88] sm:$0xf]
  %v6350 = vld [vmem:[%s6314 + $0x8c] sm:$0xf]
  %v6351 = vunpack.c.l.bf16 %v6315
  %v6352 = vunpack.c.l.bf16 %v6316
  %v6353 = vunpack.c.l.bf16 %v6317
  %v6354 = vunpack.c.l.bf16 %v6318
  %v6355 = vunpack.c.l.bf16 %v6319
  %v6356 = vunpack.c.l.bf16 %v6320
  %v6357 = vunpack.c.l.bf16 %v6321
  %v6358 = vunpack.c.l.bf16 %v6322
  %v6359 = vunpack.c.l.bf16 %v6323
  %v6360 = vunpack.c.l.bf16 %v6324
  %v6361 = vunpack.c.l.bf16 %v6325
  %v6362 = vunpack.c.l.bf16 %v6326
  %v6363 = vunpack.c.l.bf16 %v6327
  %v6364 = vunpack.c.l.bf16 %v6328
  %v6365 = vunpack.c.l.bf16 %v6329
  %v6366 = vunpack.c.l.bf16 %v6330
  %v6367 = vunpack.c.l.bf16 %v6331
  %v6368 = vunpack.c.l.bf16 %v6332
  %v6369 = vunpack.c.l.bf16 %v6333
  %v6370 = vunpack.c.l.bf16 %v6334
  %v6371 = vunpack.c.l.bf16 %v6335
  %v6372 = vunpack.c.l.bf16 %v6336
  %v6373 = vunpack.c.l.bf16 %v6337
  %v6374 = vunpack.c.l.bf16 %v6338
  %v6375 = vunpack.c.l.bf16 %v6339
  %v6376 = vunpack.c.l.bf16 %v6340
  %v6377 = vunpack.c.l.bf16 %v6341
  %v6378 = vunpack.c.l.bf16 %v6342
  %v6379 = vunpack.c.l.bf16 %v6343
  %v6380 = vunpack.c.l.bf16 %v6344
  %v6381 = vunpack.c.l.bf16 %v6345
  %v6382 = vunpack.c.l.bf16 %v6346
  %v6383 = vunpack.c.l.bf16 %v6347
  %v6384 = vunpack.c.l.bf16 %v6348
  %v6385 = vunpack.c.l.bf16 %v6349
  %v6386 = vunpack.c.l.bf16 %v6350
  %vm6387 = vcmask 130048
  %v6389 = vsel %vm6387, %v6305, 0
  %6391 = vmatprep.subr.mxu0 0.0
  %6392 = vmatpush1.msra.mxu0 %v6292
  %6393 = vmatprep.subr.mxu0 0.0
  %6394 = vmatpush1.msra.mxu0 %v6293
  %6395 = vmatprep.subr.mxu0 0.0
  %6396 = vmatpush1.msra.mxu0 0.0
  %6397 = vmatprep.subr.mxu0 0.0
  %6398 = vmatpush1.msra.mxu0 0.0
  %6399 = vmatprep.subr.mxu0 0.0
  %6400 = vmatpush1.msra.mxu0 0.0
  %6401 = vmatprep.subr.mxu0 0.0
  %6402 = vmatpush1.msra.mxu0 0.0
  %6403 = vmatprep.subr.mxu0 0.0
  %6404 = vmatpush1.msra.mxu0 0.0
  %6405 = vmatprep.subr.mxu0 0.0
  %6406 = vmatpush1.msra.mxu0 0.0
  %6407 = vmatprep.subr.mxu0 0.0
  %6408 = vmatpush1.msra.mxu0 0.0
  %6409 = vmatprep.subr.mxu0 0.0
  %6410 = vmatpush1.msra.mxu0 0.0
  %6411 = vmatprep.subr.mxu0 0.0
  %6412 = vmatpush1.msra.mxu0 0.0
  %6413 = vmatprep.subr.mxu0 0.0
  %6414 = vmatpush1.msra.mxu0 0.0
  %6415 = vmatprep.subr.mxu0 0.0
  %6416 = vmatpush1.msra.mxu0 0.0
  %6417 = vmatprep.subr.mxu0 0.0
  %6418 = vmatpush1.msra.mxu0 0.0
  %6419 = vmatprep.subr.mxu0 0.0
  %6420 = vmatpush1.msra.mxu0 0.0
  %6421 = vmatprep.subr.mxu0 0.0
  %6422 = vmatpush1.msra.mxu0 0.0
  %6423 = vmatprep.subr.mxu0 0.0
  %6424 = vmatpush1.msra.mxu0 0.0
  %6425 = vmatprep.subr.mxu0 0.0
  %6426 = vmatpush1.msra.mxu0 0.0
  %6427 = vmatprep.subr.mxu0 0.0
  %6428 = vmatpush1.msra.mxu0 0.0
  %6429 = vmatprep.subr.mxu0 0.0
  %6430 = vmatpush1.msra.mxu0 0.0
  %6431 = vmatprep.subr.mxu0 0.0
  %6432 = vmatpush1.msra.mxu0 0.0
  %6433 = vmatprep.subr.mxu0 0.0
  %6434 = vmatpush1.msra.mxu0 0.0
  %6435 = vmatprep.subr.mxu0 0.0
  %6436 = vmatpush1.msra.mxu0 0.0
  %6437 = vmatprep.subr.mxu0 0.0
  %6438 = vmatpush1.msra.mxu0 0.0
  %6439 = vmatprep.subr.mxu0 0.0
  %6440 = vmatpush1.msra.mxu0 0.0
  %6441 = vmatprep.subr.mxu0 0.0
  %6442 = vmatpush1.msra.mxu0 0.0
  %6443 = vmatprep.subr.mxu0 0.0
  %6444 = vmatpush1.msra.mxu0 0.0
  %6445 = vmatprep.subr.mxu0 0.0
  %6446 = vmatpush1.msra.mxu0 0.0
  %6447 = vmatprep.subr.mxu0 0.0
  %6448 = vmatpush1.msra.mxu0 0.0
  %6449 = vmatprep.subr.mxu0 0.0
  %6450 = vmatpush1.msra.mxu0 0.0
  %6451 = vmatprep.subr.mxu0 0.0
  %6452 = vmatpush1.msra.mxu0 0.0
  %6453 = vmatprep.subr.mxu0 0.0
  %6454 = vmatpush1.msra.mxu0 0.0
  %6455 = vmatprep.mubr.f32.mxu0 0.0
  %6456 = vmatmul.mubr.f32.gmra.mrb[0].mxu0 %v6389
  %v6457 = vpop.f32.mrb[0].mxu0
  %v6458 = vadd.f32 0.0, %v6457
  %v6459 = vpop.f32.mrb[0].mxu0
  %6460 = vdwg.mxu0
  %6461 = vmatprep.subr.mxu0 0.0
  %6462 = vmatpush1.msra.mxu0 %v6294
  %6463 = vmatprep.subr.mxu0 0.0
  %6464 = vmatpush1.msra.mxu0 %v6295
  %6465 = vmatprep.subr.mxu0 0.0
  %6466 = vmatpush1.msra.mxu0 0.0
  %6467 = vmatprep.subr.mxu0 0.0
  %6468 = vmatpush1.msra.mxu0 0.0
  %6469 = vmatprep.subr.mxu0 0.0
  %6470 = vmatpush1.msra.mxu0 0.0
  %6471 = vmatprep.subr.mxu0 0.0
  %6472 = vmatpush1.msra.mxu0 0.0
  %6473 = vmatprep.subr.mxu0 0.0
  %6474 = vmatpush1.msra.mxu0 0.0
  %6475 = vmatprep.subr.mxu0 0.0
  %6476 = vmatpush1.msra.mxu0 0.0
  %6477 = vmatprep.subr.mxu0 0.0
  %6478 = vmatpush1.msra.mxu0 0.0
  %6479 = vmatprep.subr.mxu0 0.0
  %6480 = vmatpush1.msra.mxu0 0.0
  %6481 = vmatprep.subr.mxu0 0.0
  %6482 = vmatpush1.msra.mxu0 0.0
  %6483 = vmatprep.subr.mxu0 0.0
  %6484 = vmatpush1.msra.mxu0 0.0
  %6485 = vmatprep.subr.mxu0 0.0
  %6486 = vmatpush1.msra.mxu0 0.0
  %6487 = vmatprep.subr.mxu0 0.0
  %6488 = vmatpush1.msra.mxu0 0.0
  %6489 = vmatprep.subr.mxu0 0.0
  %6490 = vmatpush1.msra.mxu0 0.0
  %6491 = vmatprep.subr.mxu0 0.0
  %6492 = vmatpush1.msra.mxu0 0.0
  %6493 = vmatprep.subr.mxu0 0.0
  %6494 = vmatpush1.msra.mxu0 0.0
  %6495 = vmatprep.subr.mxu0 0.0
  %6496 = vmatpush1.msra.mxu0 0.0
  %6497 = vmatprep.subr.mxu0 0.0
  %6498 = vmatpush1.msra.mxu0 0.0
  %6499 = vmatprep.subr.mxu0 0.0
  %6500 = vmatpush1.msra.mxu0 0.0
  %6501 = vmatprep.subr.mxu0 0.0
  %6502 = vmatpush1.msra.mxu0 0.0
  %6503 = vmatprep.subr.mxu0 0.0
  %6504 = vmatpush1.msra.mxu0 0.0
  %6505 = vmatprep.subr.mxu0 0.0
  %6506 = vmatpush1.msra.mxu0 0.0
  %6507 = vmatprep.subr.mxu0 0.0
  %6508 = vmatpush1.msra.mxu0 0.0
  %6509 = vmatprep.subr.mxu0 0.0
  %6510 = vmatpush1.msra.mxu0 0.0
  %6511 = vmatprep.subr.mxu0 0.0
  %6512 = vmatpush1.msra.mxu0 0.0
  %6513 = vmatprep.subr.mxu0 0.0
  %6514 = vmatpush1.msra.mxu0 0.0
  %6515 = vmatprep.subr.mxu0 0.0
  %6516 = vmatpush1.msra.mxu0 0.0
  %6517 = vmatprep.subr.mxu0 0.0
  %6518 = vmatpush1.msra.mxu0 0.0
  %6519 = vmatprep.subr.mxu0 0.0
  %6520 = vmatpush1.msra.mxu0 0.0
  %6521 = vmatprep.subr.mxu0 0.0
  %6522 = vmatpush1.msra.mxu0 0.0
  %6523 = vmatprep.subr.mxu0 0.0
  %6524 = vmatpush1.msra.mxu0 0.0
  %6525 = vmatprep.mubr.f32.mxu0 0.0
  %6526 = vmatmul.mubr.f32.gmra.mrb[0].mxu0 %v6389
  %v6527 = vpop.f32.mrb[0].mxu0
  %v6528 = vadd.f32 0.0, %v6527
  %v6529 = vpop.f32.mrb[0].mxu0
  %6530 = vdwg.mxu0
  %v6532 = vrot.slane %v6528, 4
  %vm6534 = vcmask 1043456
  %v6535 = vsel %vm6534, %v6458, %v6532
  %v6537 = vsel %vm6387, %v6306, 0
  %6539 = vmatprep.subr.mxu0 0.0
  %6540 = vmatpush1.msra.mxu0 %v6292
  %6541 = vmatprep.subr.mxu0 0.0
  %6542 = vmatpush1.msra.mxu0 %v6293
  %6543 = vmatprep.subr.mxu0 0.0
  %6544 = vmatpush1.msra.mxu0 0.0
  %6545 = vmatprep.subr.mxu0 0.0
  %6546 = vmatpush1.msra.mxu0 0.0
  %6547 = vmatprep.subr.mxu0 0.0
  %6548 = vmatpush1.msra.mxu0 0.0
  %6549 = vmatprep.subr.mxu0 0.0
  %6550 = vmatpush1.msra.mxu0 0.0
  %6551 = vmatprep.subr.mxu0 0.0
  %6552 = vmatpush1.msra.mxu0 0.0
  %6553 = vmatprep.subr.mxu0 0.0
  %6554 = vmatpush1.msra.mxu0 0.0
  %6555 = vmatprep.subr.mxu0 0.0
  %6556 = vmatpush1.msra.mxu0 0.0
  %6557 = vmatprep.subr.mxu0 0.0
  %6558 = vmatpush1.msra.mxu0 0.0
  %6559 = vmatprep.subr.mxu0 0.0
  %6560 = vmatpush1.msra.mxu0 0.0
  %6561 = vmatprep.subr.mxu0 0.0
  %6562 = vmatpush1.msra.mxu0 0.0
  %6563 = vmatprep.subr.mxu0 0.0
  %6564 = vmatpush1.msra.mxu0 0.0
  %6565 = vmatprep.subr.mxu0 0.0
  %6566 = vmatpush1.msra.mxu0 0.0
  %6567 = vmatprep.subr.mxu0 0.0
  %6568 = vmatpush1.msra.mxu0 0.0
  %6569 = vmatprep.subr.mxu0 0.0
  %6570 = vmatpush1.msra.mxu0 0.0
  %6571 = vmatprep.subr.mxu0 0.0
  %6572 = vmatpush1.msra.mxu0 0.0
  %6573 = vmatprep.subr.mxu0 0.0
  %6574 = vmatpush1.msra.mxu0 0.0
  %6575 = vmatprep.subr.mxu0 0.0
  %6576 = vmatpush1.msra.mxu0 0.0
  %6577 = vmatprep.subr.mxu0 0.0
  %6578 = vmatpush1.msra.mxu0 0.0
  %6579 = vmatprep.subr.mxu0 0.0
  %6580 = vmatpush1.msra.mxu0 0.0
  %6581 = vmatprep.subr.mxu0 0.0
  %6582 = vmatpush1.msra.mxu0 0.0
  %6583 = vmatprep.subr.mxu0 0.0
  %6584 = vmatpush1.msra.mxu0 0.0
  %6585 = vmatprep.subr.mxu0 0.0
  %6586 = vmatpush1.msra.mxu0 0.0
  %6587 = vmatprep.subr.mxu0 0.0
  %6588 = vmatpush1.msra.mxu0 0.0
  %6589 = vmatprep.subr.mxu0 0.0
  %6590 = vmatpush1.msra.mxu0 0.0
  %6591 = vmatprep.subr.mxu0 0.0
  %6592 = vmatpush1.msra.mxu0 0.0
  %6593 = vmatprep.subr.mxu0 0.0
  %6594 = vmatpush1.msra.mxu0 0.0
  %6595 = vmatprep.subr.mxu0 0.0
  %6596 = vmatpush1.msra.mxu0 0.0
  %6597 = vmatprep.subr.mxu0 0.0
  %6598 = vmatpush1.msra.mxu0 0.0
  %6599 = vmatprep.subr.mxu0 0.0
  %6600 = vmatpush1.msra.mxu0 0.0
  %6601 = vmatprep.subr.mxu0 0.0
  %6602 = vmatpush1.msra.mxu0 0.0
  %6603 = vmatprep.mubr.f32.mxu0 0.0
  %6604 = vmatmul.mubr.f32.gmra.mrb[0].mxu0 %v6537
  %v6605 = vpop.f32.mrb[0].mxu0
  %v6606 = vadd.f32 0.0, %v6605
  %v6607 = vpop.f32.mrb[0].mxu0
  %6608 = vdwg.mxu0
  %6609 = vmatprep.subr.mxu0 0.0
  %6610 = vmatpush1.msra.mxu0 %v6294
  %6611 = vmatprep.subr.mxu0 0.0
  %6612 = vmatpush1.msra.mxu0 %v6295
  %6613 = vmatprep.subr.mxu0 0.0
  %6614 = vmatpush1.msra.mxu0 0.0
  %6615 = vmatprep.subr.mxu0 0.0
  %6616 = vmatpush1.msra.mxu0 0.0
  %6617 = vmatprep.subr.mxu0 0.0
  %6618 = vmatpush1.msra.mxu0 0.0
  %6619 = vmatprep.subr.mxu0 0.0
  %6620 = vmatpush1.msra.mxu0 0.0
  %6621 = vmatprep.subr.mxu0 0.0
  %6622 = vmatpush1.msra.mxu0 0.0
  %6623 = vmatprep.subr.mxu0 0.0
  %6624 = vmatpush1.msra.mxu0 0.0
  %6625 = vmatprep.subr.mxu0 0.0
  %6626 = vmatpush1.msra.mxu0 0.0
  %6627 = vmatprep.subr.mxu0 0.0
  %6628 = vmatpush1.msra.mxu0 0.0
  %6629 = vmatprep.subr.mxu0 0.0
  %6630 = vmatpush1.msra.mxu0 0.0
  %6631 = vmatprep.subr.mxu0 0.0
  %6632 = vmatpush1.msra.mxu0 0.0
  %6633 = vmatprep.subr.mxu0 0.0
  %6634 = vmatpush1.msra.mxu0 0.0
  %6635 = vmatprep.subr.mxu0 0.0
  %6636 = vmatpush1.msra.mxu0 0.0
  %6637 = vmatprep.subr.mxu0 0.0
  %6638 = vmatpush1.msra.mxu0 0.0
  %6639 = vmatprep.subr.mxu0 0.0
  %6640 = vmatpush1.msra.mxu0 0.0
  %6641 = vmatprep.subr.mxu0 0.0
  %6642 = vmatpush1.msra.mxu0 0.0
  %6643 = vmatprep.subr.mxu0 0.0
  %6644 = vmatpush1.msra.mxu0 0.0
  %6645 = vmatprep.subr.mxu0 0.0
  %6646 = vmatpush1.msra.mxu0 0.0
  %6647 = vmatprep.subr.mxu0 0.0
  %6648 = vmatpush1.msra.mxu0 0.0
  %6649 = vmatprep.subr.mxu0 0.0
  %6650 = vmatpush1.msra.mxu0 0.0
  %6651 = vmatprep.subr.mxu0 0.0
  %6652 = vmatpush1.msra.mxu0 0.0
  %6653 = vmatprep.subr.mxu0 0.0
  %6654 = vmatpush1.msra.mxu0 0.0
  %6655 = vmatprep.subr.mxu0 0.0
  %6656 = vmatpush1.msra.mxu0 0.0
  %6657 = vmatprep.subr.mxu0 0.0
  %6658 = vmatpush1.msra.mxu0 0.0
  %6659 = vmatprep.subr.mxu0 0.0
  %6660 = vmatpush1.msra.mxu0 0.0
  %6661 = vmatprep.subr.mxu0 0.0
  %6662 = vmatpush1.msra.mxu0 0.0
  %6663 = vmatprep.subr.mxu0 0.0
  %6664 = vmatpush1.msra.mxu0 0.0
  %6665 = vmatprep.subr.mxu0 0.0
  %6666 = vmatpush1.msra.mxu0 0.0
  %6667 = vmatprep.subr.mxu0 0.0
  %6668 = vmatpush1.msra.mxu0 0.0
  %6669 = vmatprep.subr.mxu0 0.0
  %6670 = vmatpush1.msra.mxu0 0.0
  %6671 = vmatprep.subr.mxu0 0.0
  %6672 = vmatpush1.msra.mxu0 0.0
  %6673 = vmatprep.mubr.f32.mxu0 0.0
  %6674 = vmatmul.mubr.f32.gmra.mrb[0].mxu0 %v6537
  %v6675 = vpop.f32.mrb[0].mxu0
  %v6676 = vadd.f32 0.0, %v6675
  %v6677 = vpop.f32.mrb[0].mxu0
  %6678 = vdwg.mxu0
  %v6680 = vrot.slane %v6676, 4
  %v6682 = vsel %vm6534, %v6606, %v6680
  %v6684 = vsel %vm6387, %v6307, 0
  %6686 = vmatprep.subr.mxu0 0.0
  %6687 = vmatpush1.msra.mxu0 %v6292
  %6688 = vmatprep.subr.mxu0 0.0
  %6689 = vmatpush1.msra.mxu0 %v6293
  %6690 = vmatprep.subr.mxu0 0.0
  %6691 = vmatpush1.msra.mxu0 0.0
  %6692 = vmatprep.subr.mxu0 0.0
  %6693 = vmatpush1.msra.mxu0 0.0
  %6694 = vmatprep.subr.mxu0 0.0
  %6695 = vmatpush1.msra.mxu0 0.0
  %6696 = vmatprep.subr.mxu0 0.0
  %6697 = vmatpush1.msra.mxu0 0.0
  %6698 = vmatprep.subr.mxu0 0.0
  %6699 = vmatpush1.msra.mxu0 0.0
  %6700 = vmatprep.subr.mxu0 0.0
  %6701 = vmatpush1.msra.mxu0 0.0
  %6702 = vmatprep.subr.mxu0 0.0
  %6703 = vmatpush1.msra.mxu0 0.0
  %6704 = vmatprep.subr.mxu0 0.0
  %6705 = vmatpush1.msra.mxu0 0.0
  %6706 = vmatprep.subr.mxu0 0.0
  %6707 = vmatpush1.msra.mxu0 0.0
  %6708 = vmatprep.subr.mxu0 0.0
  %6709 = vmatpush1.msra.mxu0 0.0
  %6710 = vmatprep.subr.mxu0 0.0
  %6711 = vmatpush1.msra.mxu0 0.0
  %6712 = vmatprep.subr.mxu0 0.0
  %6713 = vmatpush1.msra.mxu0 0.0
  %6714 = vmatprep.subr.mxu0 0.0
  %6715 = vmatpush1.msra.mxu0 0.0
  %6716 = vmatprep.subr.mxu0 0.0
  %6717 = vmatpush1.msra.mxu0 0.0
  %6718 = vmatprep.subr.mxu0 0.0
  %6719 = vmatpush1.msra.mxu0 0.0
  %6720 = vmatprep.subr.mxu0 0.0
  %6721 = vmatpush1.msra.mxu0 0.0
  %6722 = vmatprep.subr.mxu0 0.0
  %6723 = vmatpush1.msra.mxu0 0.0
  %6724 = vmatprep.subr.mxu0 0.0
  %6725 = vmatpush1.msra.mxu0 0.0
  %6726 = vmatprep.subr.mxu0 0.0
  %6727 = vmatpush1.msra.mxu0 0.0
  %6728 = vmatprep.subr.mxu0 0.0
  %6729 = vmatpush1.msra.mxu0 0.0
  %6730 = vmatprep.subr.mxu0 0.0
  %6731 = vmatpush1.msra.mxu0 0.0
  %6732 = vmatprep.subr.mxu0 0.0
  %6733 = vmatpush1.msra.mxu0 0.0
  %6734 = vmatprep.subr.mxu0 0.0
  %6735 = vmatpush1.msra.mxu0 0.0
  %6736 = vmatprep.subr.mxu0 0.0
  %6737 = vmatpush1.msra.mxu0 0.0
  %6738 = vmatprep.subr.mxu0 0.0
  %6739 = vmatpush1.msra.mxu0 0.0
  %6740 = vmatprep.subr.mxu0 0.0
  %6741 = vmatpush1.msra.mxu0 0.0
  %6742 = vmatprep.subr.mxu0 0.0
  %6743 = vmatpush1.msra.mxu0 0.0
  %6744 = vmatprep.subr.mxu0 0.0
  %6745 = vmatpush1.msra.mxu0 0.0
  %6746 = vmatprep.subr.mxu0 0.0
  %6747 = vmatpush1.msra.mxu0 0.0
  %6748 = vmatprep.subr.mxu0 0.0
  %6749 = vmatpush1.msra.mxu0 0.0
  %6750 = vmatprep.mubr.f32.mxu0 0.0
  %6751 = vmatmul.mubr.f32.gmra.mrb[0].mxu0 %v6684
  %v6752 = vpop.f32.mrb[0].mxu0
  %v6753 = vadd.f32 0.0, %v6752
  %v6754 = vpop.f32.mrb[0].mxu0
  %6755 = vdwg.mxu0
  %6756 = vmatprep.subr.mxu0 0.0
  %6757 = vmatpush1.msra.mxu0 %v6294
  %6758 = vmatprep.subr.mxu0 0.0
  %6759 = vmatpush1.msra.mxu0 %v6295
  %6760 = vmatprep.subr.mxu0 0.0
  %6761 = vmatpush1.msra.mxu0 0.0
  %6762 = vmatprep.subr.mxu0 0.0
  %6763 = vmatpush1.msra.mxu0 0.0
  %6764 = vmatprep.subr.mxu0 0.0
  %6765 = vmatpush1.msra.mxu0 0.0
  %6766 = vmatprep.subr.mxu0 0.0
  %6767 = vmatpush1.msra.mxu0 0.0
  %6768 = vmatprep.subr.mxu0 0.0
  %6769 = vmatpush1.msra.mxu0 0.0
  %6770 = vmatprep.subr.mxu0 0.0
  %6771 = vmatpush1.msra.mxu0 0.0
  %6772 = vmatprep.subr.mxu0 0.0
  %6773 = vmatpush1.msra.mxu0 0.0
  %6774 = vmatprep.subr.mxu0 0.0
  %6775 = vmatpush1.msra.mxu0 0.0
  %6776 = vmatprep.subr.mxu0 0.0
  %6777 = vmatpush1.msra.mxu0 0.0
  %6778 = vmatprep.subr.mxu0 0.0
  %6779 = vmatpush1.msra.mxu0 0.0
  %6780 = vmatprep.subr.mxu0 0.0
  %6781 = vmatpush1.msra.mxu0 0.0
  %6782 = vmatprep.subr.mxu0 0.0
  %6783 = vmatpush1.msra.mxu0 0.0
  %6784 = vmatprep.subr.mxu0 0.0
  %6785 = vmatpush1.msra.mxu0 0.0
  %6786 = vmatprep.subr.mxu0 0.0
  %6787 = vmatpush1.msra.mxu0 0.0
  %6788 = vmatprep.subr.mxu0 0.0
  %6789 = vmatpush1.msra.mxu0 0.0
  %6790 = vmatprep.subr.mxu0 0.0
  %6791 = vmatpush1.msra.mxu0 0.0
  %6792 = vmatprep.subr.mxu0 0.0
  %6793 = vmatpush1.msra.mxu0 0.0
  %6794 = vmatprep.subr.mxu0 0.0
  %6795 = vmatpush1.msra.mxu0 0.0
  %6796 = vmatprep.subr.mxu0 0.0
  %6797 = vmatpush1.msra.mxu0 0.0
  %6798 = vmatprep.subr.mxu0 0.0
  %6799 = vmatpush1.msra.mxu0 0.0
  %6800 = vmatprep.subr.mxu0 0.0
  %6801 = vmatpush1.msra.mxu0 0.0
  %6802 = vmatprep.subr.mxu0 0.0
  %6803 = vmatpush1.msra.mxu0 0.0
  %6804 = vmatprep.subr.mxu0 0.0
  %6805 = vmatpush1.msra.mxu0 0.0
  %6806 = vmatprep.subr.mxu0 0.0
  %6807 = vmatpush1.msra.mxu0 0.0
  %6808 = vmatprep.subr.mxu0 0.0
  %6809 = vmatpush1.msra.mxu0 0.0
  %6810 = vmatprep.subr.mxu0 0.0
  %6811 = vmatpush1.msra.mxu0 0.0
  %6812 = vmatprep.subr.mxu0 0.0
  %6813 = vmatpush1.msra.mxu0 0.0
  %6814 = vmatprep.subr.mxu0 0.0
  %6815 = vmatpush1.msra.mxu0 0.0
  %6816 = vmatprep.subr.mxu0 0.0
  %6817 = vmatpush1.msra.mxu0 0.0
  %6818 = vmatprep.subr.mxu0 0.0
  %6819 = vmatpush1.msra.mxu0 0.0
  %6820 = vmatprep.mubr.f32.mxu0 0.0
  %6821 = vmatmul.mubr.f32.gmra.mrb[0].mxu0 %v6684
  %v6822 = vpop.f32.mrb[0].mxu0
  %v6823 = vadd.f32 0.0, %v6822
  %v6824 = vpop.f32.mrb[0].mxu0
  %6825 = vdwg.mxu0
  %v6827 = vrot.slane %v6823, 4
  %v6829 = vsel %vm6534, %v6753, %v6827
  %v6831 = vsel %vm6387, %v6308, 0
  %6833 = vmatprep.subr.mxu0 0.0
  %6834 = vmatpush1.msra.mxu0 %v6292
  %6835 = vmatprep.subr.mxu0 0.0
  %6836 = vmatpush1.msra.mxu0 %v6293
  %6837 = vmatprep.subr.mxu0 0.0
  %6838 = vmatpush1.msra.mxu0 0.0
  %6839 = vmatprep.subr.mxu0 0.0
  %6840 = vmatpush1.msra.mxu0 0.0
  %6841 = vmatprep.subr.mxu0 0.0
  %6842 = vmatpush1.msra.mxu0 0.0
  %6843 = vmatprep.subr.mxu0 0.0
  %6844 = vmatpush1.msra.mxu0 0.0
  %6845 = vmatprep.subr.mxu0 0.0
  %6846 = vmatpush1.msra.mxu0 0.0
  %6847 = vmatprep.subr.mxu0 0.0
  %6848 = vmatpush1.msra.mxu0 0.0
  %6849 = vmatprep.subr.mxu0 0.0
  %6850 = vmatpush1.msra.mxu0 0.0
  %6851 = vmatprep.subr.mxu0 0.0
  %6852 = vmatpush1.msra.mxu0 0.0
  %6853 = vmatprep.subr.mxu0 0.0
  %6854 = vmatpush1.msra.mxu0 0.0
  %6855 = vmatprep.subr.mxu0 0.0
  %6856 = vmatpush1.msra.mxu0 0.0
  %6857 = vmatprep.subr.mxu0 0.0
  %6858 = vmatpush1.msra.mxu0 0.0
  %6859 = vmatprep.subr.mxu0 0.0
  %6860 = vmatpush1.msra.mxu0 0.0
  %6861 = vmatprep.subr.mxu0 0.0
  %6862 = vmatpush1.msra.mxu0 0.0
  %6863 = vmatprep.subr.mxu0 0.0
  %6864 = vmatpush1.msra.mxu0 0.0
  %6865 = vmatprep.subr.mxu0 0.0
  %6866 = vmatpush1.msra.mxu0 0.0
  %6867 = vmatprep.subr.mxu0 0.0
  %6868 = vmatpush1.msra.mxu0 0.0
  %6869 = vmatprep.subr.mxu0 0.0
  %6870 = vmatpush1.msra.mxu0 0.0
  %6871 = vmatprep.subr.mxu0 0.0
  %6872 = vmatpush1.msra.mxu0 0.0
  %6873 = vmatprep.subr.mxu0 0.0
  %6874 = vmatpush1.msra.mxu0 0.0
  %6875 = vmatprep.subr.mxu0 0.0
  %6876 = vmatpush1.msra.mxu0 0.0
  %6877 = vmatprep.subr.mxu0 0.0
  %6878 = vmatpush1.msra.mxu0 0.0
  %6879 = vmatprep.subr.mxu0 0.0
  %6880 = vmatpush1.msra.mxu0 0.0
  %6881 = vmatprep.subr.mxu0 0.0
  %6882 = vmatpush1.msra.mxu0 0.0
  %6883 = vmatprep.subr.mxu0 0.0
  %6884 = vmatpush1.msra.mxu0 0.0
  %6885 = vmatprep.subr.mxu0 0.0
  %6886 = vmatpush1.msra.mxu0 0.0
  %6887 = vmatprep.subr.mxu0 0.0
  %6888 = vmatpush1.msra.mxu0 0.0
  %6889 = vmatprep.subr.mxu0 0.0
  %6890 = vmatpush1.msra.mxu0 0.0
  %6891 = vmatprep.subr.mxu0 0.0
  %6892 = vmatpush1.msra.mxu0 0.0
  %6893 = vmatprep.subr.mxu0 0.0
  %6894 = vmatpush1.msra.mxu0 0.0
  %6895 = vmatprep.subr.mxu0 0.0
  %6896 = vmatpush1.msra.mxu0 0.0
  %6897 = vmatprep.mubr.f32.mxu0 0.0
  %6898 = vmatmul.mubr.f32.gmra.mrb[0].mxu0 %v6831
  %v6899 = vpop.f32.mrb[0].mxu0
  %v6900 = vadd.f32 0.0, %v6899
  %v6901 = vpop.f32.mrb[0].mxu0
  %6902 = vdwg.mxu0
  %6903 = vmatprep.subr.mxu0 0.0
  %6904 = vmatpush1.msra.mxu0 %v6294
  %6905 = vmatprep.subr.mxu0 0.0
  %6906 = vmatpush1.msra.mxu0 %v6295
  %6907 = vmatprep.subr.mxu0 0.0
  %6908 = vmatpush1.msra.mxu0 0.0
  %6909 = vmatprep.subr.mxu0 0.0
  %6910 = vmatpush1.msra.mxu0 0.0
  %6911 = vmatprep.subr.mxu0 0.0
  %6912 = vmatpush1.msra.mxu0 0.0
  %6913 = vmatprep.subr.mxu0 0.0
  %6914 = vmatpush1.msra.mxu0 0.0
  %6915 = vmatprep.subr.mxu0 0.0
  %6916 = vmatpush1.msra.mxu0 0.0
  %6917 = vmatprep.subr.mxu0 0.0
  %6918 = vmatpush1.msra.mxu0 0.0
  %6919 = vmatprep.subr.mxu0 0.0
  %6920 = vmatpush1.msra.mxu0 0.0
  %6921 = vmatprep.subr.mxu0 0.0
  %6922 = vmatpush1.msra.mxu0 0.0
  %6923 = vmatprep.subr.mxu0 0.0
  %6924 = vmatpush1.msra.mxu0 0.0
  %6925 = vmatprep.subr.mxu0 0.0
  %6926 = vmatpush1.msra.mxu0 0.0
  %6927 = vmatprep.subr.mxu0 0.0
  %6928 = vmatpush1.msra.mxu0 0.0
  %6929 = vmatprep.subr.mxu0 0.0
  %6930 = vmatpush1.msra.mxu0 0.0
  %6931 = vmatprep.subr.mxu0 0.0
  %6932 = vmatpush1.msra.mxu0 0.0
  %6933 = vmatprep.subr.mxu0 0.0
  %6934 = vmatpush1.msra.mxu0 0.0
  %6935 = vmatprep.subr.mxu0 0.0
  %6936 = vmatpush1.msra.mxu0 0.0
  %6937 = vmatprep.subr.mxu0 0.0
  %6938 = vmatpush1.msra.mxu0 0.0
  %6939 = vmatprep.subr.mxu0 0.0
  %6940 = vmatpush1.msra.mxu0 0.0
  %6941 = vmatprep.subr.mxu0 0.0
  %6942 = vmatpush1.msra.mxu0 0.0
  %6943 = vmatprep.subr.mxu0 0.0
  %6944 = vmatpush1.msra.mxu0 0.0
  %6945 = vmatprep.subr.mxu0 0.0
  %6946 = vmatpush1.msra.mxu0 0.0
  %6947 = vmatprep.subr.mxu0 0.0
  %6948 = vmatpush1.msra.mxu0 0.0
  %6949 = vmatprep.subr.mxu0 0.0
  %6950 = vmatpush1.msra.mxu0 0.0
  %6951 = vmatprep.subr.mxu0 0.0
  %6952 = vmatpush1.msra.mxu0 0.0
  %6953 = vmatprep.subr.mxu0 0.0
  %6954 = vmatpush1.msra.mxu0 0.0
  %6955 = vmatprep.subr.mxu0 0.0
  %6956 = vmatpush1.msra.mxu0 0.0
  %6957 = vmatprep.subr.mxu0 0.0
  %6958 = vmatpush1.msra.mxu0 0.0
  %6959 = vmatprep.subr.mxu0 0.0
  %6960 = vmatpush1.msra.mxu0 0.0
  %6961 = vmatprep.subr.mxu0 0.0
  %6962 = vmatpush1.msra.mxu0 0.0
  %6963 = vmatprep.subr.mxu0 0.0
  %6964 = vmatpush1.msra.mxu0 0.0
  %6965 = vmatprep.subr.mxu0 0.0
  %6966 = vmatpush1.msra.mxu0 0.0
  %6967 = vmatprep.mubr.f32.mxu0 0.0
  %6968 = vmatmul.mubr.f32.gmra.mrb[0].mxu0 %v6831
  %v6969 = vpop.f32.mrb[0].mxu0
  %v6970 = vadd.f32 0.0, %v6969
  %v6971 = vpop.f32.mrb[0].mxu0
  %6972 = vdwg.mxu0
  %v6974 = vrot.slane %v6970, 4
  %v6976 = vsel %vm6534, %v6900, %v6974
  %v6978 = vsel %vm6387, %v6309, 0
  %6980 = vmatprep.subr.mxu0 0.0
  %6981 = vmatpush1.msra.mxu0 %v6292
  %6982 = vmatprep.subr.mxu0 0.0
  %6983 = vmatpush1.msra.mxu0 %v6293
  %6984 = vmatprep.subr.mxu0 0.0
  %6985 = vmatpush1.msra.mxu0 0.0
  %6986 = vmatprep.subr.mxu0 0.0
  %6987 = vmatpush1.msra.mxu0 0.0
  %6988 = vmatprep.subr.mxu0 0.0
  %6989 = vmatpush1.msra.mxu0 0.0
  %6990 = vmatprep.subr.mxu0 0.0
  %6991 = vmatpush1.msra.mxu0 0.0
  %6992 = vmatprep.subr.mxu0 0.0
  %6993 = vmatpush1.msra.mxu0 0.0
  %6994 = vmatprep.subr.mxu0 0.0
  %6995 = vmatpush1.msra.mxu0 0.0
  %6996 = vmatprep.subr.mxu0 0.0
  %6997 = vmatpush1.msra.mxu0 0.0
  %6998 = vmatprep.subr.mxu0 0.0
  %6999 = vmatpush1.msra.mxu0 0.0
  %7000 = vmatprep.subr.mxu0 0.0
  %7001 = vmatpush1.msra.mxu0 0.0
  %7002 = vmatprep.subr.mxu0 0.0
  %7003 = vmatpush1.msra.mxu0 0.0
  %7004 = vmatprep.subr.mxu0 0.0
  %7005 = vmatpush1.msra.mxu0 0.0
  %7006 = vmatprep.subr.mxu0 0.0
  %7007 = vmatpush1.msra.mxu0 0.0
  %7008 = vmatprep.subr.mxu0 0.0
  %7009 = vmatpush1.msra.mxu0 0.0
  %7010 = vmatprep.subr.mxu0 0.0
  %7011 = vmatpush1.msra.mxu0 0.0
  %7012 = vmatprep.subr.mxu0 0.0
  %7013 = vmatpush1.msra.mxu0 0.0
  %7014 = vmatprep.subr.mxu0 0.0
  %7015 = vmatpush1.msra.mxu0 0.0
  %7016 = vmatprep.subr.mxu0 0.0
  %7017 = vmatpush1.msra.mxu0 0.0
  %7018 = vmatprep.subr.mxu0 0.0
  %7019 = vmatpush1.msra.mxu0 0.0
  %7020 = vmatprep.subr.mxu0 0.0
  %7021 = vmatpush1.msra.mxu0 0.0
  %7022 = vmatprep.subr.mxu0 0.0
  %7023 = vmatpush1.msra.mxu0 0.0
  %7024 = vmatprep.subr.mxu0 0.0
  %7025 = vmatpush1.msra.mxu0 0.0
  %7026 = vmatprep.subr.mxu0 0.0
  %7027 = vmatpush1.msra.mxu0 0.0
  %7028 = vmatprep.subr.mxu0 0.0
  %7029 = vmatpush1.msra.mxu0 0.0
  %7030 = vmatprep.subr.mxu0 0.0
  %7031 = vmatpush1.msra.mxu0 0.0
  %7032 = vmatprep.subr.mxu0 0.0
  %7033 = vmatpush1.msra.mxu0 0.0
  %7034 = vmatprep.subr.mxu0 0.0
  %7035 = vmatpush1.msra.mxu0 0.0
  %7036 = vmatprep.subr.mxu0 0.0
  %7037 = vmatpush1.msra.mxu0 0.0
  %7038 = vmatprep.subr.mxu0 0.0
  %7039 = vmatpush1.msra.mxu0 0.0
  %7040 = vmatprep.subr.mxu0 0.0
  %7041 = vmatpush1.msra.mxu0 0.0
  %7042 = vmatprep.subr.mxu0 0.0
  %7043 = vmatpush1.msra.mxu0 0.0
  %7044 = vmatprep.mubr.f32.mxu0 0.0
  %7045 = vmatmul.mubr.f32.gmra.mrb[0].mxu0 %v6978
  %v7046 = vpop.f32.mrb[0].mxu0
  %v7047 = vadd.f32 0.0, %v7046
  %v7048 = vpop.f32.mrb[0].mxu0
  %7049 = vdwg.mxu0
  %7050 = vmatprep.subr.mxu0 0.0
  %7051 = vmatpush1.msra.mxu0 %v6294
  %7052 = vmatprep.subr.mxu0 0.0
  %7053 = vmatpush1.msra.mxu0 %v6295
  %7054 = vmatprep.subr.mxu0 0.0
  %7055 = vmatpush1.msra.mxu0 0.0
  %7056 = vmatprep.subr.mxu0 0.0
  %7057 = vmatpush1.msra.mxu0 0.0
  %7058 = vmatprep.subr.mxu0 0.0
  %7059 = vmatpush1.msra.mxu0 0.0
  %7060 = vmatprep.subr.mxu0 0.0
  %7061 = vmatpush1.msra.mxu0 0.0
  %7062 = vmatprep.subr.mxu0 0.0
  %7063 = vmatpush1.msra.mxu0 0.0
  %7064 = vmatprep.subr.mxu0 0.0
  %7065 = vmatpush1.msra.mxu0 0.0
  %7066 = vmatprep.subr.mxu0 0.0
  %7067 = vmatpush1.msra.mxu0 0.0
  %7068 = vmatprep.subr.mxu0 0.0
  %7069 = vmatpush1.msra.mxu0 0.0
  %7070 = vmatprep.subr.mxu0 0.0
  %7071 = vmatpush1.msra.mxu0 0.0
  %7072 = vmatprep.subr.mxu0 0.0
  %7073 = vmatpush1.msra.mxu0 0.0
  %7074 = vmatprep.subr.mxu0 0.0
  %7075 = vmatpush1.msra.mxu0 0.0
  %7076 = vmatprep.subr.mxu0 0.0
  %7077 = vmatpush1.msra.mxu0 0.0
  %7078 = vmatprep.subr.mxu0 0.0
  %7079 = vmatpush1.msra.mxu0 0.0
  %7080 = vmatprep.subr.mxu0 0.0
  %7081 = vmatpush1.msra.mxu0 0.0
  %7082 = vmatprep.subr.mxu0 0.0
  %7083 = vmatpush1.msra.mxu0 0.0
  %7084 = vmatprep.subr.mxu0 0.0
  %7085 = vmatpush1.msra.mxu0 0.0
  %7086 = vmatprep.subr.mxu0 0.0
  %7087 = vmatpush1.msra.mxu0 0.0
  %7088 = vmatprep.subr.mxu0 0.0
  %7089 = vmatpush1.msra.mxu0 0.0
  %7090 = vmatprep.subr.mxu0 0.0
  %7091 = vmatpush1.msra.mxu0 0.0
  %7092 = vmatprep.subr.mxu0 0.0
  %7093 = vmatpush1.msra.mxu0 0.0
  %7094 = vmatprep.subr.mxu0 0.0
  %7095 = vmatpush1.msra.mxu0 0.0
  %7096 = vmatprep.subr.mxu0 0.0
  %7097 = vmatpush1.msra.mxu0 0.0
  %7098 = vmatprep.subr.mxu0 0.0
  %7099 = vmatpush1.msra.mxu0 0.0
  %7100 = vmatprep.subr.mxu0 0.0
  %7101 = vmatpush1.msra.mxu0 0.0
  %7102 = vmatprep.subr.mxu0 0.0
  %7103 = vmatpush1.msra.mxu0 0.0
  %7104 = vmatprep.subr.mxu0 0.0
  %7105 = vmatpush1.msra.mxu0 0.0
  %7106 = vmatprep.subr.mxu0 0.0
  %7107 = vmatpush1.msra.mxu0 0.0
  %7108 = vmatprep.subr.mxu0 0.0
  %7109 = vmatpush1.msra.mxu0 0.0
  %7110 = vmatprep.subr.mxu0 0.0
  %7111 = vmatpush1.msra.mxu0 0.0
  %7112 = vmatprep.subr.mxu0 0.0
  %7113 = vmatpush1.msra.mxu0 0.0
  %7114 = vmatprep.mubr.f32.mxu0 0.0
  %7115 = vmatmul.mubr.f32.gmra.mrb[0].mxu0 %v6978
  %v7116 = vpop.f32.mrb[0].mxu0
  %v7117 = vadd.f32 0.0, %v7116
  %v7118 = vpop.f32.mrb[0].mxu0
  %7119 = vdwg.mxu0
  %v7121 = vrot.slane %v7117, 4
  %v7123 = vsel %vm6534, %v7047, %v7121
  %v7125 = vsel %vm6387, %v6310, 0
  %7127 = vmatprep.subr.mxu0 0.0
  %7128 = vmatpush1.msra.mxu0 %v6292
  %7129 = vmatprep.subr.mxu0 0.0
  %7130 = vmatpush1.msra.mxu0 %v6293
  %7131 = vmatprep.subr.mxu0 0.0
  %7132 = vmatpush1.msra.mxu0 0.0
  %7133 = vmatprep.subr.mxu0 0.0
  %7134 = vmatpush1.msra.mxu0 0.0
  %7135 = vmatprep.subr.mxu0 0.0
  %7136 = vmatpush1.msra.mxu0 0.0
  %7137 = vmatprep.subr.mxu0 0.0
  %7138 = vmatpush1.msra.mxu0 0.0
  %7139 = vmatprep.subr.mxu0 0.0
  %7140 = vmatpush1.msra.mxu0 0.0
  %7141 = vmatprep.subr.mxu0 0.0
  %7142 = vmatpush1.msra.mxu0 0.0
  %7143 = vmatprep.subr.mxu0 0.0
  %7144 = vmatpush1.msra.mxu0 0.0
  %7145 = vmatprep.subr.mxu0 0.0
  %7146 = vmatpush1.msra.mxu0 0.0
  %7147 = vmatprep.subr.mxu0 0.0
  %7148 = vmatpush1.msra.mxu0 0.0
  %7149 = vmatprep.subr.mxu0 0.0
  %7150 = vmatpush1.msra.mxu0 0.0
  %7151 = vmatprep.subr.mxu0 0.0
  %7152 = vmatpush1.msra.mxu0 0.0
  %7153 = vmatprep.subr.mxu0 0.0
  %7154 = vmatpush1.msra.mxu0 0.0
  %7155 = vmatprep.subr.mxu0 0.0
  %7156 = vmatpush1.msra.mxu0 0.0
  %7157 = vmatprep.subr.mxu0 0.0
  %7158 = vmatpush1.msra.mxu0 0.0
  %7159 = vmatprep.subr.mxu0 0.0
  %7160 = vmatpush1.msra.mxu0 0.0
  %7161 = vmatprep.subr.mxu0 0.0
  %7162 = vmatpush1.msra.mxu0 0.0
  %7163 = vmatprep.subr.mxu0 0.0
  %7164 = vmatpush1.msra.mxu0 0.0
  %7165 = vmatprep.subr.mxu0 0.0
  %7166 = vmatpush1.msra.mxu0 0.0
  %7167 = vmatprep.subr.mxu0 0.0
  %7168 = vmatpush1.msra.mxu0 0.0
  %7169 = vmatprep.subr.mxu0 0.0
  %7170 = vmatpush1.msra.mxu0 0.0
  %7171 = vmatprep.subr.mxu0 0.0
  %7172 = vmatpush1.msra.mxu0 0.0
  %7173 = vmatprep.subr.mxu0 0.0
  %7174 = vmatpush1.msra.mxu0 0.0
  %7175 = vmatprep.subr.mxu0 0.0
  %7176 = vmatpush1.msra.mxu0 0.0
  %7177 = vmatprep.subr.mxu0 0.0
  %7178 = vmatpush1.msra.mxu0 0.0
  %7179 = vmatprep.subr.mxu0 0.0
  %7180 = vmatpush1.msra.mxu0 0.0
  %7181 = vmatprep.subr.mxu0 0.0
  %7182 = vmatpush1.msra.mxu0 0.0
  %7183 = vmatprep.subr.mxu0 0.0
  %7184 = vmatpush1.msra.mxu0 0.0
  %7185 = vmatprep.subr.mxu0 0.0
  %7186 = vmatpush1.msra.mxu0 0.0
  %7187 = vmatprep.subr.mxu0 0.0
  %7188 = vmatpush1.msra.mxu0 0.0
  %7189 = vmatprep.subr.mxu0 0.0
  %7190 = vmatpush1.msra.mxu0 0.0
  %7191 = vmatprep.mubr.f32.mxu0 0.0
  %7192 = vmatmul.mubr.f32.gmra.mrb[0].mxu0 %v7125
  %v7193 = vpop.f32.mrb[0].mxu0
  %v7194 = vadd.f32 0.0, %v7193
  %v7195 = vpop.f32.mrb[0].mxu0
  %7196 = vdwg.mxu0
  %7197 = vmatprep.subr.mxu0 0.0
  %7198 = vmatpush1.msra.mxu0 %v6294
  %7199 = vmatprep.subr.mxu0 0.0
  %7200 = vmatpush1.msra.mxu0 %v6295
  %7201 = vmatprep.subr.mxu0 0.0
  %7202 = vmatpush1.msra.mxu0 0.0
  %7203 = vmatprep.subr.mxu0 0.0
  %7204 = vmatpush1.msra.mxu0 0.0
  %7205 = vmatprep.subr.mxu0 0.0
  %7206 = vmatpush1.msra.mxu0 0.0
  %7207 = vmatprep.subr.mxu0 0.0
  %7208 = vmatpush1.msra.mxu0 0.0
  %7209 = vmatprep.subr.mxu0 0.0
  %7210 = vmatpush1.msra.mxu0 0.0
  %7211 = vmatprep.subr.mxu0 0.0
  %7212 = vmatpush1.msra.mxu0 0.0
  %7213 = vmatprep.subr.mxu0 0.0
  %7214 = vmatpush1.msra.mxu0 0.0
  %7215 = vmatprep.subr.mxu0 0.0
  %7216 = vmatpush1.msra.mxu0 0.0
  %7217 = vmatprep.subr.mxu0 0.0
  %7218 = vmatpush1.msra.mxu0 0.0
  %7219 = vmatprep.subr.mxu0 0.0
  %7220 = vmatpush1.msra.mxu0 0.0
  %7221 = vmatprep.subr.mxu0 0.0
  %7222 = vmatpush1.msra.mxu0 0.0
  %7223 = vmatprep.subr.mxu0 0.0
  %7224 = vmatpush1.msra.mxu0 0.0
  %7225 = vmatprep.subr.mxu0 0.0
  %7226 = vmatpush1.msra.mxu0 0.0
  %7227 = vmatprep.subr.mxu0 0.0
  %7228 = vmatpush1.msra.mxu0 0.0
  %7229 = vmatprep.subr.mxu0 0.0
  %7230 = vmatpush1.msra.mxu0 0.0
  %7231 = vmatprep.subr.mxu0 0.0
  %7232 = vmatpush1.msra.mxu0 0.0
  %7233 = vmatprep.subr.mxu0 0.0
  %7234 = vmatpush1.msra.mxu0 0.0
  %7235 = vmatprep.subr.mxu0 0.0
  %7236 = vmatpush1.msra.mxu0 0.0
  %7237 = vmatprep.subr.mxu0 0.0
  %7238 = vmatpush1.msra.mxu0 0.0
  %7239 = vmatprep.subr.mxu0 0.0
  %7240 = vmatpush1.msra.mxu0 0.0
  %7241 = vmatprep.subr.mxu0 0.0
  %7242 = vmatpush1.msra.mxu0 0.0
  %7243 = vmatprep.subr.mxu0 0.0
  %7244 = vmatpush1.msra.mxu0 0.0
  %7245 = vmatprep.subr.mxu0 0.0
  %7246 = vmatpush1.msra.mxu0 0.0
  %7247 = vmatprep.subr.mxu0 0.0
  %7248 = vmatpush1.msra.mxu0 0.0
  %7249 = vmatprep.subr.mxu0 0.0
  %7250 = vmatpush1.msra.mxu0 0.0
  %7251 = vmatprep.subr.mxu0 0.0
  %7252 = vmatpush1.msra.mxu0 0.0
  %7253 = vmatprep.subr.mxu0 0.0
  %7254 = vmatpush1.msra.mxu0 0.0
  %7255 = vmatprep.subr.mxu0 0.0
  %7256 = vmatpush1.msra.mxu0 0.0
  %7257 = vmatprep.subr.mxu0 0.0
  %7258 = vmatpush1.msra.mxu0 0.0
  %7259 = vmatprep.subr.mxu0 0.0
  %7260 = vmatpush1.msra.mxu0 0.0
  %7261 = vmatprep.mubr.f32.mxu0 0.0
  %7262 = vmatmul.mubr.f32.gmra.mrb[0].mxu0 %v7125
  %v7263 = vpop.f32.mrb[0].mxu0
  %v7264 = vadd.f32 0.0, %v7263
  %v7265 = vpop.f32.mrb[0].mxu0
  %7266 = vdwg.mxu0
  %v7268 = vrot.slane %v7264, 4
  %v7270 = vsel %vm6534, %v7194, %v7268
  %v7272 = vsel %vm6387, %v6311, 0
  %7274 = vmatprep.subr.mxu0 0.0
  %7275 = vmatpush1.msra.mxu0 %v6292
  %7276 = vmatprep.subr.mxu0 0.0
  %7277 = vmatpush1.msra.mxu0 %v6293
  %7278 = vmatprep.subr.mxu0 0.0
  %7279 = vmatpush1.msra.mxu0 0.0
  %7280 = vmatprep.subr.mxu0 0.0
  %7281 = vmatpush1.msra.mxu0 0.0
  %7282 = vmatprep.subr.mxu0 0.0
  %7283 = vmatpush1.msra.mxu0 0.0
  %7284 = vmatprep.subr.mxu0 0.0
  %7285 = vmatpush1.msra.mxu0 0.0
  %7286 = vmatprep.subr.mxu0 0.0
  %7287 = vmatpush1.msra.mxu0 0.0
  %7288 = vmatprep.subr.mxu0 0.0
  %7289 = vmatpush1.msra.mxu0 0.0
  %7290 = vmatprep.subr.mxu0 0.0
  %7291 = vmatpush1.msra.mxu0 0.0
  %7292 = vmatprep.subr.mxu0 0.0
  %7293 = vmatpush1.msra.mxu0 0.0
  %7294 = vmatprep.subr.mxu0 0.0
  %7295 = vmatpush1.msra.mxu0 0.0
  %7296 = vmatprep.subr.mxu0 0.0
  %7297 = vmatpush1.msra.mxu0 0.0
  %7298 = vmatprep.subr.mxu0 0.0
  %7299 = vmatpush1.msra.mxu0 0.0
  %7300 = vmatprep.subr.mxu0 0.0
  %7301 = vmatpush1.msra.mxu0 0.0
  %7302 = vmatprep.subr.mxu0 0.0
  %7303 = vmatpush1.msra.mxu0 0.0
  %7304 = vmatprep.subr.mxu0 0.0
  %7305 = vmatpush1.msra.mxu0 0.0
  %7306 = vmatprep.subr.mxu0 0.0
  %7307 = vmatpush1.msra.mxu0 0.0
  %7308 = vmatprep.subr.mxu0 0.0
  %7309 = vmatpush1.msra.mxu0 0.0
  %7310 = vmatprep.subr.mxu0 0.0
  %7311 = vmatpush1.msra.mxu0 0.0
  %7312 = vmatprep.subr.mxu0 0.0
  %7313 = vmatpush1.msra.mxu0 0.0
  %7314 = vmatprep.subr.mxu0 0.0
  %7315 = vmatpush1.msra.mxu0 0.0
  %7316 = vmatprep.subr.mxu0 0.0
  %7317 = vmatpush1.msra.mxu0 0.0
  %7318 = vmatprep.subr.mxu0 0.0
  %7319 = vmatpush1.msra.mxu0 0.0
  %7320 = vmatprep.subr.mxu0 0.0
  %7321 = vmatpush1.msra.mxu0 0.0
  %7322 = vmatprep.subr.mxu0 0.0
  %7323 = vmatpush1.msra.mxu0 0.0
  %7324 = vmatprep.subr.mxu0 0.0
  %7325 = vmatpush1.msra.mxu0 0.0
  %7326 = vmatprep.subr.mxu0 0.0
  %7327 = vmatpush1.msra.mxu0 0.0
  %7328 = vmatprep.subr.mxu0 0.0
  %7329 = vmatpush1.msra.mxu0 0.0
  %7330 = vmatprep.subr.mxu0 0.0
  %7331 = vmatpush1.msra.mxu0 0.0
  %7332 = vmatprep.subr.mxu0 0.0
  %7333 = vmatpush1.msra.mxu0 0.0
  %7334 = vmatprep.subr.mxu0 0.0
  %7335 = vmatpush1.msra.mxu0 0.0
  %7336 = vmatprep.subr.mxu0 0.0
  %7337 = vmatpush1.msra.mxu0 0.0
  %7338 = vmatprep.mubr.f32.mxu0 0.0
  %7339 = vmatmul.mubr.f32.gmra.mrb[0].mxu0 %v7272
  %v7340 = vpop.f32.mrb[0].mxu0
  %v7341 = vadd.f32 0.0, %v7340
  %v7342 = vpop.f32.mrb[0].mxu0
  %7343 = vdwg.mxu0
  %7344 = vmatprep.subr.mxu0 0.0
  %7345 = vmatpush1.msra.mxu0 %v6294
  %7346 = vmatprep.subr.mxu0 0.0
  %7347 = vmatpush1.msra.mxu0 %v6295
  %7348 = vmatprep.subr.mxu0 0.0
  %7349 = vmatpush1.msra.mxu0 0.0
  %7350 = vmatprep.subr.mxu0 0.0
  %7351 = vmatpush1.msra.mxu0 0.0
  %7352 = vmatprep.subr.mxu0 0.0
  %7353 = vmatpush1.msra.mxu0 0.0
  %7354 = vmatprep.subr.mxu0 0.0
  %7355 = vmatpush1.msra.mxu0 0.0
  %7356 = vmatprep.subr.mxu0 0.0
  %7357 = vmatpush1.msra.mxu0 0.0
  %7358 = vmatprep.subr.mxu0 0.0
  %7359 = vmatpush1.msra.mxu0 0.0
  %7360 = vmatprep.subr.mxu0 0.0
  %7361 = vmatpush1.msra.mxu0 0.0
  %7362 = vmatprep.subr.mxu0 0.0
  %7363 = vmatpush1.msra.mxu0 0.0
  %7364 = vmatprep.subr.mxu0 0.0
  %7365 = vmatpush1.msra.mxu0 0.0
  %7366 = vmatprep.subr.mxu0 0.0
  %7367 = vmatpush1.msra.mxu0 0.0
  %7368 = vmatprep.subr.mxu0 0.0
  %7369 = vmatpush1.msra.mxu0 0.0
  %7370 = vmatprep.subr.mxu0 0.0
  %7371 = vmatpush1.msra.mxu0 0.0
  %7372 = vmatprep.subr.mxu0 0.0
  %7373 = vmatpush1.msra.mxu0 0.0
  %7374 = vmatprep.subr.mxu0 0.0
  %7375 = vmatpush1.msra.mxu0 0.0
  %7376 = vmatprep.subr.mxu0 0.0
  %7377 = vmatpush1.msra.mxu0 0.0
  %7378 = vmatprep.subr.mxu0 0.0
  %7379 = vmatpush1.msra.mxu0 0.0
  %7380 = vmatprep.subr.mxu0 0.0
  %7381 = vmatpush1.msra.mxu0 0.0
  %7382 = vmatprep.subr.mxu0 0.0
  %7383 = vmatpush1.msra.mxu0 0.0
  %7384 = vmatprep.subr.mxu0 0.0
  %7385 = vmatpush1.msra.mxu0 0.0
  %7386 = vmatprep.subr.mxu0 0.0
  %7387 = vmatpush1.msra.mxu0 0.0
  %7388 = vmatprep.subr.mxu0 0.0
  %7389 = vmatpush1.msra.mxu0 0.0
  %7390 = vmatprep.subr.mxu0 0.0
  %7391 = vmatpush1.msra.mxu0 0.0
  %7392 = vmatprep.subr.mxu0 0.0
  %7393 = vmatpush1.msra.mxu0 0.0
  %7394 = vmatprep.subr.mxu0 0.0
  %7395 = vmatpush1.msra.mxu0 0.0
  %7396 = vmatprep.subr.mxu0 0.0
  %7397 = vmatpush1.msra.mxu0 0.0
  %7398 = vmatprep.subr.mxu0 0.0
  %7399 = vmatpush1.msra.mxu0 0.0
  %7400 = vmatprep.subr.mxu0 0.0
  %7401 = vmatpush1.msra.mxu0 0.0
  %7402 = vmatprep.subr.mxu0 0.0
  %7403 = vmatpush1.msra.mxu0 0.0
  %7404 = vmatprep.subr.mxu0 0.0
  %7405 = vmatpush1.msra.mxu0 0.0
  %7406 = vmatprep.subr.mxu0 0.0
  %7407 = vmatpush1.msra.mxu0 0.0
  %7408 = vmatprep.mubr.f32.mxu0 0.0
  %7409 = vmatmul.mubr.f32.gmra.mrb[0].mxu0 %v7272
  %v7410 = vpop.f32.mrb[0].mxu0
  %v7411 = vadd.f32 0.0, %v7410
  %v7412 = vpop.f32.mrb[0].mxu0
  %7413 = vdwg.mxu0
  %v7415 = vrot.slane %v7411, 4
  %v7417 = vsel %vm6534, %v7341, %v7415
  %v7419 = vsel %vm6387, %v6312, 0
  %7421 = vmatprep.subr.mxu0 0.0
  %7422 = vmatpush1.msra.mxu0 %v6292
  %7423 = vmatprep.subr.mxu0 0.0
  %7424 = vmatpush1.msra.mxu0 %v6293
  %7425 = vmatprep.subr.mxu0 0.0
  %7426 = vmatpush1.msra.mxu0 0.0
  %7427 = vmatprep.subr.mxu0 0.0
  %7428 = vmatpush1.msra.mxu0 0.0
  %7429 = vmatprep.subr.mxu0 0.0
  %7430 = vmatpush1.msra.mxu0 0.0
  %7431 = vmatprep.subr.mxu0 0.0
  %7432 = vmatpush1.msra.mxu0 0.0
  %7433 = vmatprep.subr.mxu0 0.0
  %7434 = vmatpush1.msra.mxu0 0.0
  %7435 = vmatprep.subr.mxu0 0.0
  %7436 = vmatpush1.msra.mxu0 0.0
  %7437 = vmatprep.subr.mxu0 0.0
  %7438 = vmatpush1.msra.mxu0 0.0
  %7439 = vmatprep.subr.mxu0 0.0
  %7440 = vmatpush1.msra.mxu0 0.0
  %7441 = vmatprep.subr.mxu0 0.0
  %7442 = vmatpush1.msra.mxu0 0.0
  %7443 = vmatprep.subr.mxu0 0.0
  %7444 = vmatpush1.msra.mxu0 0.0
  %7445 = vmatprep.subr.mxu0 0.0
  %7446 = vmatpush1.msra.mxu0 0.0
  %7447 = vmatprep.subr.mxu0 0.0
  %7448 = vmatpush1.msra.mxu0 0.0
  %7449 = vmatprep.subr.mxu0 0.0
  %7450 = vmatpush1.msra.mxu0 0.0
  %7451 = vmatprep.subr.mxu0 0.0
  %7452 = vmatpush1.msra.mxu0 0.0
  %7453 = vmatprep.subr.mxu0 0.0
  %7454 = vmatpush1.msra.mxu0 0.0
  %7455 = vmatprep.subr.mxu0 0.0
  %7456 = vmatpush1.msra.mxu0 0.0
  %7457 = vmatprep.subr.mxu0 0.0
  %7458 = vmatpush1.msra.mxu0 0.0
  %7459 = vmatprep.subr.mxu0 0.0
  %7460 = vmatpush1.msra.mxu0 0.0
  %7461 = vmatprep.subr.mxu0 0.0
  %7462 = vmatpush1.msra.mxu0 0.0
  %7463 = vmatprep.subr.mxu0 0.0
  %7464 = vmatpush1.msra.mxu0 0.0
  %7465 = vmatprep.subr.mxu0 0.0
  %7466 = vmatpush1.msra.mxu0 0.0
  %7467 = vmatprep.subr.mxu0 0.0
  %7468 = vmatpush1.msra.mxu0 0.0
  %7469 = vmatprep.subr.mxu0 0.0
  %7470 = vmatpush1.msra.mxu0 0.0
  %7471 = vmatprep.subr.mxu0 0.0
  %7472 = vmatpush1.msra.mxu0 0.0
  %7473 = vmatprep.subr.mxu0 0.0
  %7474 = vmatpush1.msra.mxu0 0.0
  %7475 = vmatprep.subr.mxu0 0.0
  %7476 = vmatpush1.msra.mxu0 0.0
  %7477 = vmatprep.subr.mxu0 0.0
  %7478 = vmatpush1.msra.mxu0 0.0
  %7479 = vmatprep.subr.mxu0 0.0
  %7480 = vmatpush1.msra.mxu0 0.0
  %7481 = vmatprep.subr.mxu0 0.0
  %7482 = vmatpush1.msra.mxu0 0.0
  %7483 = vmatprep.subr.mxu0 0.0
  %7484 = vmatpush1.msra.mxu0 0.0
  %7485 = vmatprep.mubr.f32.mxu0 0.0
  %7486 = vmatmul.mubr.f32.gmra.mrb[0].mxu0 %v7419
  %v7487 = vpop.f32.mrb[0].mxu0
  %v7488 = vadd.f32 0.0, %v7487
  %v7489 = vpop.f32.mrb[0].mxu0
  %7490 = vdwg.mxu0
  %7491 = vmatprep.subr.mxu0 0.0
  %7492 = vmatpush1.msra.mxu0 %v6294
  %7493 = vmatprep.subr.mxu0 0.0
  %7494 = vmatpush1.msra.mxu0 %v6295
  %7495 = vmatprep.subr.mxu0 0.0
  %7496 = vmatpush1.msra.mxu0 0.0
  %7497 = vmatprep.subr.mxu0 0.0
  %7498 = vmatpush1.msra.mxu0 0.0
  %7499 = vmatprep.subr.mxu0 0.0
  %7500 = vmatpush1.msra.mxu0 0.0
  %7501 = vmatprep.subr.mxu0 0.0
  %7502 = vmatpush1.msra.mxu0 0.0
  %7503 = vmatprep.subr.mxu0 0.0
  %7504 = vmatpush1.msra.mxu0 0.0
  %7505 = vmatprep.subr.mxu0 0.0
  %7506 = vmatpush1.msra.mxu0 0.0
  %7507 = vmatprep.subr.mxu0 0.0
  %7508 = vmatpush1.msra.mxu0 0.0
  %7509 = vmatprep.subr.mxu0 0.0
  %7510 = vmatpush1.msra.mxu0 0.0
  %7511 = vmatprep.subr.mxu0 0.0
  %7512 = vmatpush1.msra.mxu0 0.0
  %7513 = vmatprep.subr.mxu0 0.0
  %7514 = vmatpush1.msra.mxu0 0.0
  %7515 = vmatprep.subr.mxu0 0.0
  %7516 = vmatpush1.msra.mxu0 0.0
  %7517 = vmatprep.subr.mxu0 0.0
  %7518 = vmatpush1.msra.mxu0 0.0
  %7519 = vmatprep.subr.mxu0 0.0
  %7520 = vmatpush1.msra.mxu0 0.0
  %7521 = vmatprep.subr.mxu0 0.0
  %7522 = vmatpush1.msra.mxu0 0.0
  %7523 = vmatprep.subr.mxu0 0.0
  %7524 = vmatpush1.msra.mxu0 0.0
  %7525 = vmatprep.subr.mxu0 0.0
  %7526 = vmatpush1.msra.mxu0 0.0
  %7527 = vmatprep.subr.mxu0 0.0
  %7528 = vmatpush1.msra.mxu0 0.0
  %7529 = vmatprep.subr.mxu0 0.0
  %7530 = vmatpush1.msra.mxu0 0.0
  %7531 = vmatprep.subr.mxu0 0.0
  %7532 = vmatpush1.msra.mxu0 0.0
  %7533 = vmatprep.subr.mxu0 0.0
  %7534 = vmatpush1.msra.mxu0 0.0
  %7535 = vmatprep.subr.mxu0 0.0
  %7536 = vmatpush1.msra.mxu0 0.0
  %7537 = vmatprep.subr.mxu0 0.0
  %7538 = vmatpush1.msra.mxu0 0.0
  %7539 = vmatprep.subr.mxu0 0.0
  %7540 = vmatpush1.msra.mxu0 0.0
  %7541 = vmatprep.subr.mxu0 0.0
  %7542 = vmatpush1.msra.mxu0 0.0
  %7543 = vmatprep.subr.mxu0 0.0
  %7544 = vmatpush1.msra.mxu0 0.0
  %7545 = vmatprep.subr.mxu0 0.0
  %7546 = vmatpush1.msra.mxu0 0.0
  %7547 = vmatprep.subr.mxu0 0.0
  %7548 = vmatpush1.msra.mxu0 0.0
  %7549 = vmatprep.subr.mxu0 0.0
  %7550 = vmatpush1.msra.mxu0 0.0
  %7551 = vmatprep.subr.mxu0 0.0
  %7552 = vmatpush1.msra.mxu0 0.0
  %7553 = vmatprep.subr.mxu0 0.0
  %7554 = vmatpush1.msra.mxu0 0.0
  %7555 = vmatprep.mubr.f32.mxu0 0.0
  %7556 = vmatmul.mubr.f32.gmra.mrb[0].mxu0 %v7419
  %v7557 = vpop.f32.mrb[0].mxu0
  %v7558 = vadd.f32 0.0, %v7557
  %v7559 = vpop.f32.mrb[0].mxu0
  %7560 = vdwg.mxu0
  %v7562 = vrot.slane %v7558, 4
  %v7564 = vsel %vm6534, %v7488, %v7562
  %v7566 = vsel %vm6387, %v6313, 0
  %7568 = vmatprep.subr.mxu0 0.0
  %7569 = vmatpush1.msra.mxu0 %v6292
  %7570 = vmatprep.subr.mxu0 0.0
  %7571 = vmatpush1.msra.mxu0 %v6293
  %7572 = vmatprep.subr.mxu0 0.0
  %7573 = vmatpush1.msra.mxu0 0.0
  %7574 = vmatprep.subr.mxu0 0.0
  %7575 = vmatpush1.msra.mxu0 0.0
  %7576 = vmatprep.subr.mxu0 0.0
  %7577 = vmatpush1.msra.mxu0 0.0
  %7578 = vmatprep.subr.mxu0 0.0
  %7579 = vmatpush1.msra.mxu0 0.0
  %7580 = vmatprep.subr.mxu0 0.0
  %7581 = vmatpush1.msra.mxu0 0.0
  %7582 = vmatprep.subr.mxu0 0.0
  %7583 = vmatpush1.msra.mxu0 0.0
  %7584 = vmatprep.subr.mxu0 0.0
  %7585 = vmatpush1.msra.mxu0 0.0
  %7586 = vmatprep.subr.mxu0 0.0
  %7587 = vmatpush1.msra.mxu0 0.0
  %7588 = vmatprep.subr.mxu0 0.0
  %7589 = vmatpush1.msra.mxu0 0.0
  %7590 = vmatprep.subr.mxu0 0.0
  %7591 = vmatpush1.msra.mxu0 0.0
  %7592 = vmatprep.subr.mxu0 0.0
  %7593 = vmatpush1.msra.mxu0 0.0
  %7594 = vmatprep.subr.mxu0 0.0
  %7595 = vmatpush1.msra.mxu0 0.0
  %7596 = vmatprep.subr.mxu0 0.0
  %7597 = vmatpush1.msra.mxu0 0.0
  %7598 = vmatprep.subr.mxu0 0.0
  %7599 = vmatpush1.msra.mxu0 0.0
  %7600 = vmatprep.subr.mxu0 0.0
  %7601 = vmatpush1.msra.mxu0 0.0
  %7602 = vmatprep.subr.mxu0 0.0
  %7603 = vmatpush1.msra.mxu0 0.0
  %7604 = vmatprep.subr.mxu0 0.0
  %7605 = vmatpush1.msra.mxu0 0.0
  %7606 = vmatprep.subr.mxu0 0.0
  %7607 = vmatpush1.msra.mxu0 0.0
  %7608 = vmatprep.subr.mxu0 0.0
  %7609 = vmatpush1.msra.mxu0 0.0
  %7610 = vmatprep.subr.mxu0 0.0
  %7611 = vmatpush1.msra.mxu0 0.0
  %7612 = vmatprep.subr.mxu0 0.0
  %7613 = vmatpush1.msra.mxu0 0.0
  %7614 = vmatprep.subr.mxu0 0.0
  %7615 = vmatpush1.msra.mxu0 0.0
  %7616 = vmatprep.subr.mxu0 0.0
  %7617 = vmatpush1.msra.mxu0 0.0
  %7618 = vmatprep.subr.mxu0 0.0
  %7619 = vmatpush1.msra.mxu0 0.0
  %7620 = vmatprep.subr.mxu0 0.0
  %7621 = vmatpush1.msra.mxu0 0.0
  %7622 = vmatprep.subr.mxu0 0.0
  %7623 = vmatpush1.msra.mxu0 0.0
  %7624 = vmatprep.subr.mxu0 0.0
  %7625 = vmatpush1.msra.mxu0 0.0
  %7626 = vmatprep.subr.mxu0 0.0
  %7627 = vmatpush1.msra.mxu0 0.0
  %7628 = vmatprep.subr.mxu0 0.0
  %7629 = vmatpush1.msra.mxu0 0.0
  %7630 = vmatprep.subr.mxu0 0.0
  %7631 = vmatpush1.msra.mxu0 0.0
  %7632 = vmatprep.mubr.f32.mxu0 0.0
  %7633 = vmatmul.mubr.f32.gmra.mrb[0].mxu0 %v7566
  %v7634 = vpop.f32.mrb[0].mxu0
  %v7635 = vadd.f32 0.0, %v7634
  %v7636 = vpop.f32.mrb[0].mxu0
  %7637 = vdwg.mxu0
  %7638 = vmatprep.subr.mxu0 0.0
  %7639 = vmatpush1.msra.mxu0 %v6294
  %7640 = vmatprep.subr.mxu0 0.0
  %7641 = vmatpush1.msra.mxu0 %v6295
  %7642 = vmatprep.subr.mxu0 0.0
  %7643 = vmatpush1.msra.mxu0 0.0
  %7644 = vmatprep.subr.mxu0 0.0
  %7645 = vmatpush1.msra.mxu0 0.0
  %7646 = vmatprep.subr.mxu0 0.0
  %7647 = vmatpush1.msra.mxu0 0.0
  %7648 = vmatprep.subr.mxu0 0.0
  %7649 = vmatpush1.msra.mxu0 0.0
  %7650 = vmatprep.subr.mxu0 0.0
  %7651 = vmatpush1.msra.mxu0 0.0
  %7652 = vmatprep.subr.mxu0 0.0
  %7653 = vmatpush1.msra.mxu0 0.0
  %7654 = vmatprep.subr.mxu0 0.0
  %7655 = vmatpush1.msra.mxu0 0.0
  %7656 = vmatprep.subr.mxu0 0.0
  %7657 = vmatpush1.msra.mxu0 0.0
  %7658 = vmatprep.subr.mxu0 0.0
  %7659 = vmatpush1.msra.mxu0 0.0
  %7660 = vmatprep.subr.mxu0 0.0
  %7661 = vmatpush1.msra.mxu0 0.0
  %7662 = vmatprep.subr.mxu0 0.0
  %7663 = vmatpush1.msra.mxu0 0.0
  %7664 = vmatprep.subr.mxu0 0.0
  %7665 = vmatpush1.msra.mxu0 0.0
  %7666 = vmatprep.subr.mxu0 0.0
  %7667 = vmatpush1.msra.mxu0 0.0
  %7668 = vmatprep.subr.mxu0 0.0
  %7669 = vmatpush1.msra.mxu0 0.0
  %7670 = vmatprep.subr.mxu0 0.0
  %7671 = vmatpush1.msra.mxu0 0.0
  %7672 = vmatprep.subr.mxu0 0.0
  %7673 = vmatpush1.msra.mxu0 0.0
  %7674 = vmatprep.subr.mxu0 0.0
  %7675 = vmatpush1.msra.mxu0 0.0
  %7676 = vmatprep.subr.mxu0 0.0
  %7677 = vmatpush1.msra.mxu0 0.0
  %7678 = vmatprep.subr.mxu0 0.0
  %7679 = vmatpush1.msra.mxu0 0.0
  %7680 = vmatprep.subr.mxu0 0.0
  %7681 = vmatpush1.msra.mxu0 0.0
  %7682 = vmatprep.subr.mxu0 0.0
  %7683 = vmatpush1.msra.mxu0 0.0
  %7684 = vmatprep.subr.mxu0 0.0
  %7685 = vmatpush1.msra.mxu0 0.0
  %7686 = vmatprep.subr.mxu0 0.0
  %7687 = vmatpush1.msra.mxu0 0.0
  %7688 = vmatprep.subr.mxu0 0.0
  %7689 = vmatpush1.msra.mxu0 0.0
  %7690 = vmatprep.subr.mxu0 0.0
  %7691 = vmatpush1.msra.mxu0 0.0
  %7692 = vmatprep.subr.mxu0 0.0
  %7693 = vmatpush1.msra.mxu0 0.0
  %7694 = vmatprep.subr.mxu0 0.0
  %7695 = vmatpush1.msra.mxu0 0.0
  %7696 = vmatprep.subr.mxu0 0.0
  %7697 = vmatpush1.msra.mxu0 0.0
  %7698 = vmatprep.subr.mxu0 0.0
  %7699 = vmatpush1.msra.mxu0 0.0
  %7700 = vmatprep.subr.mxu0 0.0
  %7701 = vmatpush1.msra.mxu0 0.0
  %7702 = vmatprep.mubr.f32.mxu0 0.0
  %7703 = vmatmul.mubr.f32.gmra.mrb[0].mxu0 %v7566
  %v7704 = vpop.f32.mrb[0].mxu0
  %v7705 = vadd.f32 0.0, %v7704
  %v7706 = vpop.f32.mrb[0].mxu0
  %7707 = vdwg.mxu0
  %v7709 = vrot.slane %v7705, 4
  %v7711 = vsel %vm6534, %v7635, %v7709
  %7713 = vrot.lane.b32.xlu0 %v6682, 32
  %v7714 = vpop.permute.xlu0 %7713
  %7717 = vrot.lane.b32.xlu0 %v6829, 64
  %v7718 = vpop.permute.xlu0 %7717
  %7721 = vrot.lane.b32.xlu0 %v6976, 96
  %v7722 = vpop.permute.xlu0 %7721
  %7725 = vrot.lane.b32.xlu0 %v7270, 32
  %v7726 = vpop.permute.xlu0 %7725
  %7729 = vrot.lane.b32.xlu0 %v7417, 64
  %v7730 = vpop.permute.xlu0 %7729
  %7733 = vrot.lane.b32.xlu0 %v7564, 96
  %v7734 = vpop.permute.xlu0 %7733
  %v7736 = vsel %vm113, %v6535, %v7714
  %v7737 = vsel %vm3813, %v7736, %v7718
  %v7738 = vsel %vm3830, %v7737, %v7722
  %v7739 = vsel %vm113, %v7123, %v7726
  %v7740 = vsel %vm3813, %v7739, %v7730
  %v7741 = vsel %vm3830, %v7740, %v7734
  %s7742 = scalar_lea.vmem %s6, 3
  %v7743 = vld [vmem:[%s7742] sm:$0x1]
  %s7744 = scalar_lea.vmem %s7, 3
  %v7745 = vld [vmem:[%s7744] sm:$0x1]
  %s7746 = scalar_lea.vmem %s8, 3
  %v7747 = vld [vmem:[%s7746] sm:$0x1]
  %v7749 = vlaneseq
  %v7750 = vshrl.u32 %v7749, 7
  %v7751 = vsub.s32 0, %v7750
  %v7752 = vrot.slane %v7743, %v7751
  %v7755 = vsel %vm113, %v7711, 0
  %7757 = vmatprep.subr.mxu0 0.0
  %7758 = vmatpush1.msra.mxu0 %v6351
  %7759 = vmatprep.subr.mxu0 0.0
  %7760 = vmatpush1.msra.mxu0 %v6352
  %7761 = vmatprep.subr.mxu0 0.0
  %7762 = vmatpush1.msra.mxu0 %v6353
  %7763 = vmatprep.subr.mxu0 0.0
  %7764 = vmatpush1.msra.mxu0 %v6354
  %7765 = vmatprep.subr.mxu0 0.0
  %7766 = vmatpush1.msra.mxu0 %v6355
  %7767 = vmatprep.subr.mxu0 0.0
  %7768 = vmatpush1.msra.mxu0 %v6356
  %7769 = vmatprep.subr.mxu0 0.0
  %7770 = vmatpush1.msra.mxu0 %v6357
  %7771 = vmatprep.subr.mxu0 0.0
  %7772 = vmatpush1.msra.mxu0 %v6358
  %7773 = vmatprep.subr.mxu0 0.0
  %7774 = vmatpush1.msra.mxu0 %v6359
  %7775 = vmatprep.subr.mxu0 0.0
  %7776 = vmatpush1.msra.mxu0 %v6360
  %7777 = vmatprep.subr.mxu0 0.0
  %7778 = vmatpush1.msra.mxu0 %v6361
  %7779 = vmatprep.subr.mxu0 0.0
  %7780 = vmatpush1.msra.mxu0 %v6362
  %7781 = vmatprep.subr.mxu0 0.0
  %7782 = vmatpush1.msra.mxu0 %v6363
  %7783 = vmatprep.subr.mxu0 0.0
  %7784 = vmatpush1.msra.mxu0 %v6364
  %7785 = vmatprep.subr.mxu0 0.0
  %7786 = vmatpush1.msra.mxu0 %v6365
  %7787 = vmatprep.subr.mxu0 0.0
  %7788 = vmatpush1.msra.mxu0 %v6366
  %7789 = vmatprep.subr.mxu0 0.0
  %7790 = vmatpush1.msra.mxu0 %v6367
  %7791 = vmatprep.subr.mxu0 0.0
  %7792 = vmatpush1.msra.mxu0 %v6368
  %7793 = vmatprep.subr.mxu0 0.0
  %7794 = vmatpush1.msra.mxu0 %v6369
  %7795 = vmatprep.subr.mxu0 0.0
  %7796 = vmatpush1.msra.mxu0 %v6370
  %7797 = vmatprep.subr.mxu0 0.0
  %7798 = vmatpush1.msra.mxu0 %v6371
  %7799 = vmatprep.subr.mxu0 0.0
  %7800 = vmatpush1.msra.mxu0 %v6372
  %7801 = vmatprep.subr.mxu0 0.0
  %7802 = vmatpush1.msra.mxu0 %v6373
  %7803 = vmatprep.subr.mxu0 0.0
  %7804 = vmatpush1.msra.mxu0 %v6374
  %7805 = vmatprep.subr.mxu0 0.0
  %7806 = vmatpush1.msra.mxu0 %v6375
  %7807 = vmatprep.subr.mxu0 0.0
  %7808 = vmatpush1.msra.mxu0 %v6376
  %7809 = vmatprep.subr.mxu0 0.0
  %7810 = vmatpush1.msra.mxu0 %v6377
  %7811 = vmatprep.subr.mxu0 0.0
  %7812 = vmatpush1.msra.mxu0 %v6378
  %7813 = vmatprep.subr.mxu0 0.0
  %7814 = vmatpush1.msra.mxu0 %v6379
  %7815 = vmatprep.subr.mxu0 0.0
  %7816 = vmatpush1.msra.mxu0 %v6380
  %7817 = vmatprep.subr.mxu0 0.0
  %7818 = vmatpush1.msra.mxu0 %v6381
  %7819 = vmatprep.subr.mxu0 0.0
  %7820 = vmatpush1.msra.mxu0 %v6382
  %7821 = vmatprep.mubr.f32.mxu0 %v7741
  %7822 = vmatmul.mubr.f32.gmra.mrb[0].mxu0 %v7738
  %v7823 = vpop.f32.mrb[0].mxu0
  %v7824 = vadd.f32 %v7752, %v7823
  %v7825 = vpop.f32.mrb[0].mxu0
  %7826 = vdwg.mxu0
  %7827 = vmatprep.subr.mxu0 0.0
  %7828 = vmatpush1.msra.mxu0 %v6383
  %7829 = vmatprep.subr.mxu0 0.0
  %7830 = vmatpush1.msra.mxu0 %v6384
  %7831 = vmatprep.subr.mxu0 0.0
  %7832 = vmatpush1.msra.mxu0 %v6385
  %7833 = vmatprep.subr.mxu0 0.0
  %7834 = vmatpush1.msra.mxu0 %v6386
  %7835 = vmatprep.subr.mxu0 0.0
  %7836 = vmatpush1.msra.mxu0 0.0
  %7837 = vmatprep.subr.mxu0 0.0
  %7838 = vmatpush1.msra.mxu0 0.0
  %7839 = vmatprep.subr.mxu0 0.0
  %7840 = vmatpush1.msra.mxu0 0.0
  %7841 = vmatprep.subr.mxu0 0.0
  %7842 = vmatpush1.msra.mxu0 0.0
  %7843 = vmatprep.subr.mxu0 0.0
  %7844 = vmatpush1.msra.mxu0 0.0
  %7845 = vmatprep.subr.mxu0 0.0
  %7846 = vmatpush1.msra.mxu0 0.0
  %7847 = vmatprep.subr.mxu0 0.0
  %7848 = vmatpush1.msra.mxu0 0.0
  %7849 = vmatprep.subr.mxu0 0.0
  %7850 = vmatpush1.msra.mxu0 0.0
  %7851 = vmatprep.subr.mxu0 0.0
  %7852 = vmatpush1.msra.mxu0 0.0
  %7853 = vmatprep.subr.mxu0 0.0
  %7854 = vmatpush1.msra.mxu0 0.0
  %7855 = vmatprep.subr.mxu0 0.0
  %7856 = vmatpush1.msra.mxu0 0.0
  %7857 = vmatprep.subr.mxu0 0.0
  %7858 = vmatpush1.msra.mxu0 0.0
  %7859 = vmatprep.subr.mxu0 0.0
  %7860 = vmatpush1.msra.mxu0 0.0
  %7861 = vmatprep.subr.mxu0 0.0
  %7862 = vmatpush1.msra.mxu0 0.0
  %7863 = vmatprep.subr.mxu0 0.0
  %7864 = vmatpush1.msra.mxu0 0.0
  %7865 = vmatprep.subr.mxu0 0.0
  %7866 = vmatpush1.msra.mxu0 0.0
  %7867 = vmatprep.subr.mxu0 0.0
  %7868 = vmatpush1.msra.mxu0 0.0
  %7869 = vmatprep.subr.mxu0 0.0
  %7870 = vmatpush1.msra.mxu0 0.0
  %7871 = vmatprep.subr.mxu0 0.0
  %7872 = vmatpush1.msra.mxu0 0.0
  %7873 = vmatprep.subr.mxu0 0.0
  %7874 = vmatpush1.msra.mxu0 0.0
  %7875 = vmatprep.subr.mxu0 0.0
  %7876 = vmatpush1.msra.mxu0 0.0
  %7877 = vmatprep.subr.mxu0 0.0
  %7878 = vmatpush1.msra.mxu0 0.0
  %7879 = vmatprep.subr.mxu0 0.0
  %7880 = vmatpush1.msra.mxu0 0.0
  %7881 = vmatprep.subr.mxu0 0.0
  %7882 = vmatpush1.msra.mxu0 0.0
  %7883 = vmatprep.subr.mxu0 0.0
  %7884 = vmatpush1.msra.mxu0 0.0
  %7885 = vmatprep.subr.mxu0 0.0
  %7886 = vmatpush1.msra.mxu0 0.0
  %7887 = vmatprep.subr.mxu0 0.0
  %7888 = vmatpush1.msra.mxu0 0.0
  %7889 = vmatprep.subr.mxu0 0.0
  %7890 = vmatpush1.msra.mxu0 0.0
  %7891 = vmatprep.mubr.f32.mxu0 0.0
  %7892 = vmatmul.mubr.f32.gmra.mrb[0].mxu0 %v7755
  %v7893 = vpop.f32.mrb[0].mxu0
  %v7894 = vadd.f32 %v7824, %v7893
  %v7895 = vpop.f32.mrb[0].mxu0
  %7896 = vdwg.mxu0
  %v7897 = vmax.f32 %v7894, 0.0
  %v7898 = vsel %vm113, %v7897, 0.0
  %v7899 = vrot.slane %v7898, 4
  %v7900 = vadd.f32 %v7898, %v7899
  %v7901 = vrot.slane %v7900, 2
  %v7902 = vadd.f32 %v7900, %v7901
  %v7903 = vrot.slane %v7902, 1
  %v7904 = vadd.f32 %v7902, %v7903
  %v7905 = vmul.f32 %v7904, 0.125
  %v7906 = vmul.f32 %v7897, %v7897
  %v7907 = vsel %vm113, %v7906, 0.0
  %v7908 = vrot.slane %v7907, 4
  %v7909 = vadd.f32 %v7907, %v7908
  %v7910 = vrot.slane %v7909, 2
  %v7911 = vadd.f32 %v7909, %v7910
  %v7912 = vrot.slane %v7911, 1
  %v7913 = vadd.f32 %v7911, %v7912
  %v7914 = vmul.f32 %v7913, 0.125
  %v7915 = vmul.f32 %v7905, %v7905
  %v7916 = vsub.f32 %v7914, %v7915
  %v7917 = vmax.f32 %v7916, 0.0
  %v7918 = vadd.f32 %v7917, 1e-05
  %v7919 = vrsqrt.pop %v7918
  %v7920 = vmul.f32 %v7745, %v7919
  %v7921 = vmul.f32 %v7905, %v7920
  %v7922 = vsub.f32 %v7747, %v7921
  %v7924 = vlaneseq
  %v7925 = vshrl.u32 %v7924, 7
  %v7926 = vsub.s32 0, %v7925
  %v7927 = vrot.slane %v7920, %v7926
  %v7929 = vmul.f32 %v7897, %v7927
  %v7931 = vlaneseq
  %v7932 = vshrl.u32 %v7931, 7
  %v7933 = vsub.s32 0, %v7932
  %v7934 = vrot.slane %v7922, %v7933
  %v7936 = vadd.f32 %v7929, %v7934
  %7937 = vst.msk [vmem:[%s9] sm:$0xff] %vm113, %v7936
  // Predicated region
  $region38: #{conv_input_model.1} parent=0 // pred_check
    _
  $region39: #{conv_input_model.1} parent=0 // pred_check_branch
    %7939 = sbr.rel (0) target = $region41
  $region40: #{conv_input_model.1} parent=0 // pred_region
    _
  $region41: #{conv_input_model.1} parent=0 // pred_fallthru
    _
  // Predicated region
  $region42: #{conv_input_model.1} parent=0 // pred_check
    _
  $region43: #{conv_input_model.1} parent=0 // pred_check_branch
    %7941 = sbr.rel (0) target = $region45
  $region44: #{conv_input_model.1} parent=0 // pred_region
    _
  $region45: #{conv_input_model.1} parent=0 // pred_fallthru
    _

</llo_original>
